<compile_context>
chip_gen: v7x
topology: tpu7x:2x2x1
jax: 0.10.0
libtpu: 0.0.40
codegen_flags: <defaults>
</compile_context>

<pallas_src>
import jax
import jax.numpy as jnp
import numpy as np
from jax import lax
from jax.experimental import pallas as pl
from jax.experimental.pallas import tpu as pltpu


# ----------------------------------------------------------------------------
# One-time parameter preparation (pure numpy, outside the hot path).
# ----------------------------------------------------------------------------
def _conv_out(d, k, s):
    return (d - k) // s + 1


def _toeplitz(w_oihw, stride, in_w, out_w):
    """Per-kernel-row block-Toeplitz weights.

    T[kh] maps a flattened input row (in_w*Cin, channel-fastest) to a flattened
    output row (out_w*Cout), encoding the horizontal taps + stride.
    """
    OC, C, KH, KW = w_oihw.shape
    T = np.zeros((KH, in_w * C, out_w * OC), np.float32)
    wt = np.transpose(w_oihw, (2, 3, 1, 0))  # (KH, KW, Cin, Cout)
    for kh in range(KH):
        for ow in range(out_w):
            for kw in range(KW):
                col = stride * ow + kw
                T[kh, col * C:(col + 1) * C, ow * OC:(ow + 1) * OC] = wt[kh, kw]
    return T


def _row_select(out_h, in_h, stride, kh):
    """0/1 matrix picking input rows stride*oh + kh (vertical stride as a matmul)."""
    S = np.zeros((out_h, in_h), np.float32)
    idx = stride * np.arange(out_h) + kh
    assert idx.max() < in_h
    S[np.arange(out_h), idx] = 1.0
    return S


def prepare_params(params, in_channels, H, W, embed, n_pad=128):
    """Fold scale / flatten-permute / Toeplitz-expand the PyTorch weights once."""
    C = in_channels
    C1, C2, C3 = 32, 64, 32
    OH1, OW1 = _conv_out(H, 8, 4), _conv_out(W, 8, 4)
    OH2, OW2 = _conv_out(OH1, 4, 2), _conv_out(OW1, 4, 2)
    OH3, OW3 = _conv_out(OH2, 3, 1), _conv_out(OW2, 3, 1)
    assert min(OH3, OW3) >= 1 and embed <= n_pad

    w1 = np.asarray(params["w1"], np.float32) / 255.0      # fold /255 into conv1
    w2 = np.asarray(params["w2"], np.float32)
    w3 = np.asarray(params["w3"], np.float32)
    wl = np.asarray(params["wl"], np.float32)               # (embed, C3*OH3*OW3)
    b1 = np.asarray(params["b1"], np.float32)
    b2 = np.asarray(params["b2"], np.float32)
    b3 = np.asarray(params["b3"], np.float32)
    bl = np.asarray(params["bl"], np.float32)

    t1 = _toeplitz(w1, 4, W, OW1)        # (8, W*C,     OW1*C1)
    t2 = _toeplitz(w2, 2, OW1, OW2)      # (4, OW1*C1,  OW2*C2)
    t3 = _toeplitz(w3, 1, OW2, OW3)      # (3, OW2*C2,  OW3*C3)

    # PyTorch NCHW flatten (c,h,w) -> in-kernel (h, w*C3+c) row layout, padded to
    # 128 output lanes so every store is lane-dense.
    wl_r = wl.reshape(embed, C3, OH3, OW3)
    wl_p = np.transpose(wl_r, (2, 3, 1, 0)).reshape(OH3, OW3 * C3, embed)
    wl_pad = np.zeros((OH3, OW3 * C3, n_pad), np.float32)
    wl_pad[:, :, :embed] = wl_p
    bl_pad = np.zeros((n_pad,), np.float32)
    bl_pad[:embed] = bl

    sel1 = np.stack([_row_select(OH1, H, 4, kh) for kh in range(8)])
    sel2 = np.stack([_row_select(OH2, OH1, 2, kh) for kh in range(4)])

    bf16 = jnp.bfloat16
    prep = {
        "t1": jnp.asarray(t1, bf16), "t2": jnp.asarray(t2, bf16),
        "t3": jnp.asarray(t3, bf16), "wl": jnp.asarray(wl_pad, bf16),
        "sel1": jnp.asarray(sel1, bf16), "sel2": jnp.asarray(sel2, bf16),
        "b1": jnp.asarray(np.tile(b1, OW1)[None], jnp.float32),
        "b2": jnp.asarray(np.tile(b2, OW2)[None], jnp.float32),
        "b3": jnp.asarray(np.tile(b3, OW3)[None], jnp.float32),
        "bl": jnp.asarray(bl_pad[None], jnp.float32),
    }
    geom = dict(H=H, W=W, C=C, C1=C1, C2=C2, C3=C3,
                OH1=OH1, OW1=OW1, OH2=OH2, OW2=OW2, OH3=OH3, OW3=OW3,
                embed=embed, n_pad=n_pad)
    return prep, geom


# ----------------------------------------------------------------------------
# Fused forward: one pallas_call, grid over the batch.
# ----------------------------------------------------------------------------
def build_forward(prep, geom):
    H, W = geom["H"], geom["W"]
    C = geom["C"]
    C1, C2, C3 = geom["C1"], geom["C2"], geom["C3"]
    OH1, OW1 = geom["OH1"], geom["OW1"]
    OH2, OW2 = geom["OH2"], geom["OW2"]
    OH3, OW3 = geom["OH3"], geom["OW3"]
    NP, E = geom["n_pad"], geom["embed"]
    KH1, KH2, KH3 = 8, 4, 3

    def kernel(x_ref, t1_ref, t2_ref, t3_ref, wl_ref, s1_ref, s2_ref,
               b1_ref, b2_ref, b3_ref, bl_ref, o_ref):
        f32, bf16 = jnp.float32, jnp.bfloat16

        xb = x_ref[0]                                          # (H, W*C) bf16, raw 0..255

        # ---- conv1 (k=8, s=4) + ReLU : /255 folded into t1 ----
        acc = jnp.zeros((OH1, OW1 * C1), f32)
        for kh in range(KH1):
            rows = jnp.dot(s1_ref[kh], xb,
                           preferred_element_type=f32).astype(bf16)     # (OH1, W*C)
            acc = acc + jnp.dot(rows, t1_ref[kh], preferred_element_type=f32)
        y1 = jnp.maximum(acc + b1_ref[...], 0.0).astype(bf16)           # (OH1, OW1*C1)

        # ---- conv2 (k=4, s=2) + ReLU ----
        acc = jnp.zeros((OH2, OW2 * C2), f32)
        for kh in range(KH2):
            rows = jnp.dot(s2_ref[kh], y1,
                           preferred_element_type=f32).astype(bf16)     # (OH2, OW1*C1)
            acc = acc + jnp.dot(rows, t2_ref[kh], preferred_element_type=f32)
        y2 = jnp.maximum(acc + b2_ref[...], 0.0)                         # (OH2, OW2*C2) f32

        # ---- conv3 (k=3, s=1), no ReLU : stride 1 -> contiguous row slices ----
        acc = jnp.zeros((OH3, OW3 * C3), f32)
        for kh in range(KH3):
            lhs = y2[kh:kh + OH3, :].astype(bf16)
            acc = acc + jnp.dot(lhs, t3_ref[kh], preferred_element_type=f32)
        y3 = acc + b3_ref[...]                                           # (OH3, OW3*C3) f32

        # ---- Linear + ReLU (NCHW flatten folded into the wl K permutation) ----
        acc = jnp.zeros((1, NP), f32)
        for h in range(OH3):
            lhs = y3[h:h + 1, :].astype(bf16)
            acc = acc + jnp.dot(lhs, wl_ref[h], preferred_element_type=f32)
        o_ref[0] = jnp.maximum(acc + bl_ref[...], 0.0)

    def forward(observations):
        rgb = observations["rgb"]                                        # (B, H, W, C) u8
        B = rgb.shape[0]
        # /255 is folded into conv1; u8 -> bf16 is exact for 0..255.
        x = rgb.astype(jnp.bfloat16).reshape(B, H, W * C)
        out = pl.pallas_call(
            kernel,
            out_shape=jax.ShapeDtypeStruct((B, 1, NP), jnp.float32),
            grid=(B,),
            in_specs=[
                pl.BlockSpec((1, H, W * C), lambda b: (b, 0, 0)),
                pl.BlockSpec(prep["t1"].shape, lambda b: (0, 0, 0)),
                pl.BlockSpec(prep["t2"].shape, lambda b: (0, 0, 0)),
                pl.BlockSpec(prep["t3"].shape, lambda b: (0, 0, 0)),
                pl.BlockSpec(prep["wl"].shape, lambda b: (0, 0, 0)),
                pl.BlockSpec(prep["sel1"].shape, lambda b: (0, 0, 0)),
                pl.BlockSpec(prep["sel2"].shape, lambda b: (0, 0, 0)),
                pl.BlockSpec(prep["b1"].shape, lambda b: (0, 0)),
                pl.BlockSpec(prep["b2"].shape, lambda b: (0, 0)),
                pl.BlockSpec(prep["b3"].shape, lambda b: (0, 0)),
                pl.BlockSpec(prep["bl"].shape, lambda b: (0, 0)),
            ],
            out_specs=pl.BlockSpec((1, 1, NP), lambda b: (b, 0, 0)),
            compiler_params=pltpu.CompilerParams(
                dimension_semantics=("parallel",)),
        )(x, prep["t1"], prep["t2"], prep["t3"], prep["wl"],
          prep["sel1"], prep["sel2"],
          prep["b1"], prep["b2"], prep["b3"], prep["bl"])
        # Single slice at the very end drops the 128-lane output padding.
        cam_visual = None
        return out.reshape(B, NP)[:, :E], cam_visual

    return forward


# ----------------------------------------------------------------------------
# Deterministic parameter init (kaiming_normal_ with ReLU gain, zero bias),
# matching EarlyFuseCNNEncoder.layer_init().
# ----------------------------------------------------------------------------
def init_params(key, in_channels, spatial, embed):
    def kaiming(k, shape, fan_in):
        std = np.sqrt(2.0 / fan_in)
        return std * jax.random.normal(k, shape, dtype=jnp.float32)

    h1 = _conv_out(spatial, 8, 4)
    h2 = _conv_out(h1, 4, 2)
    h3 = _conv_out(h2, 3, 1)
    flat = 32 * h3 * h3

    ks = jax.random.split(key, 4)
    return {
        "w1": kaiming(ks[0], (32, in_channels, 8, 8), in_channels * 64),
        "b1": jnp.zeros((32,), jnp.float32),
        "w2": kaiming(ks[1], (64, 32, 4, 4), 32 * 16),
        "b2": jnp.zeros((64,), jnp.float32),
        "w3": kaiming(ks[2], (32, 64, 3, 3), 64 * 9),
        "b3": jnp.zeros((32,), jnp.float32),
        "wl": kaiming(ks[3], (embed, flat), flat),
        "bl": jnp.zeros((embed,), jnp.float32),
    }


# ----------------------------------------------------------------------------
# Pure-JAX f32 reference (lax.conv) for correctness checking.
# ----------------------------------------------------------------------------
def reference_forward(observations, params):
    x = observations["rgb"].astype(jnp.float32) / 255.0
    x = jnp.transpose(x, (0, 3, 1, 2))

    def conv(x, w, b, s):
        y = lax.conv_general_dilated(
            x, w, (s, s), "VALID", dimension_numbers=("NCHW", "OIHW", "NCHW"))
        return y + b[None, :, None, None]

    x = jax.nn.relu(conv(x, params["w1"], params["b1"], 4))
    x = jax.nn.relu(conv(x, params["w2"], params["b2"], 2))
    x = conv(x, params["w3"], params["b3"], 1)
    x = x.reshape(x.shape[0], -1)
    x = jax.nn.relu(x @ params["wl"].T + params["bl"])
    return x


if __name__ == "__main__":
    key = jax.random.PRNGKey(0)
    k_img, k_par = jax.random.split(key)

    B, H, W, C = 2, 64, 64, 3        # small but large enough for the 3-conv stack
    EMBED = 32                        # visual_encoder_embedding_size (small)

    rgb = jax.random.randint(k_img, (B, H, W, C), 0, 256,
                             dtype=jnp.int32).astype(jnp.uint8)
    observations = {"rgb": rgb}
    params = init_params(k_par, C, H, EMBED)

    prep, geom = prepare_params(params, C, H, W, EMBED)
    forward = build_forward(prep, geom)

    out, cam_visual = forward(observations)
    out = jax.block_until_ready(out)

    ref = jax.block_until_ready(reference_forward(observations, params))
    assert out.shape == (B, EMBED), out.shape
    assert cam_visual is None
    # bf16 MXU operands (f32 accumulation / f32 elementwise) vs. f32 reference.
    np.testing.assert_allclose(np.asarray(out), np.asarray(ref),
                               rtol=2e-2, atol=2e-2)

    print("KERNEL_OK")
</pallas_src>

<mosaic_0001>
module attributes {stable_mosaic.version = 11 : i64} {
  func.func @kernel(%arg0: i32, %arg1: memref<1x64x192xbf16, #tpu.memory_space<vmem>>, %arg2: memref<8x192x480xbf16, #tpu.memory_space<vmem>>, %arg3: memref<4x480x384xbf16, #tpu.memory_space<vmem>>, %arg4: memref<3x384x128xbf16, #tpu.memory_space<vmem>>, %arg5: memref<4x128x128xbf16, #tpu.memory_space<vmem>>, %arg6: memref<8x15x64xbf16, #tpu.memory_space<vmem>>, %arg7: memref<4x6x15xbf16, #tpu.memory_space<vmem>>, %arg8: memref<1x480xf32, #tpu.memory_space<vmem>>, %arg9: memref<1x384xf32, #tpu.memory_space<vmem>>, %arg10: memref<1x128xf32, #tpu.memory_space<vmem>>, %arg11: memref<1x128xf32, #tpu.memory_space<vmem>>, %arg12: memref<1x1x128xf32, #tpu.memory_space<vmem>>) attributes {dimension_semantics = [#tpu.dimension_semantics<parallel>], iteration_bounds = array<i64: 2>, scalar_prefetch = 0 : i64, scratch_operands = 0 : i64, tpu.core_type = #tpu.core_type<tc>, window_params = [{transform_indices = @transform_0, window_bounds = array<i64: 1, 64, 192>}, {pipeline_mode = #tpu.pipeline_mode<synchronous>, transform_indices = @transform_1, window_bounds = array<i64: 8, 192, 480>}, {pipeline_mode = #tpu.pipeline_mode<synchronous>, transform_indices = @transform_2, window_bounds = array<i64: 4, 480, 384>}, {pipeline_mode = #tpu.pipeline_mode<synchronous>, transform_indices = @transform_3, window_bounds = array<i64: 3, 384, 128>}, {pipeline_mode = #tpu.pipeline_mode<synchronous>, transform_indices = @transform_4, window_bounds = array<i64: 4, 128, 128>}, {pipeline_mode = #tpu.pipeline_mode<synchronous>, transform_indices = @transform_5, window_bounds = array<i64: 8, 15, 64>}, {pipeline_mode = #tpu.pipeline_mode<synchronous>, transform_indices = @transform_6, window_bounds = array<i64: 4, 6, 15>}, {pipeline_mode = #tpu.pipeline_mode<synchronous>, transform_indices = @transform_7, window_bounds = array<i64: 1, 480>}, {pipeline_mode = #tpu.pipeline_mode<synchronous>, transform_indices = @transform_8, window_bounds = array<i64: 1, 384>}, {pipeline_mode = #tpu.pipeline_mode<synchronous>, transform_indices = @transform_9, window_bounds = array<i64: 1, 128>}, {pipeline_mode = #tpu.pipeline_mode<synchronous>, transform_indices = @transform_10, window_bounds = array<i64: 1, 128>}, {transform_indices = @transform_11, window_bounds = array<i64: 1, 1, 128>}]} {
    %c0 = arith.constant 0 : index
    %c0_0 = arith.constant 0 : index
    %c0_1 = arith.constant 0 : index
    %0 = vector.load %arg1[%c0, %c0_0, %c0_1] : memref<1x64x192xbf16, #tpu.memory_space<vmem>>, vector<1x64x192xbf16>
    %1 = vector.shape_cast %0 : vector<1x64x192xbf16> to vector<64x192xbf16>
    %cst = arith.constant 0.000000e+00 : f32
    %2 = vector.broadcast %cst : f32 to vector<15x480xf32>
    %c0_2 = arith.constant 0 : index
    %c0_3 = arith.constant 0 : index
    %c0_4 = arith.constant 0 : index
    %3 = vector.load %arg6[%c0_2, %c0_3, %c0_4] : memref<8x15x64xbf16, #tpu.memory_space<vmem>>, vector<1x15x64xbf16>
    %4 = vector.shape_cast %3 : vector<1x15x64xbf16> to vector<15x64xbf16>
    %cst_5 = arith.constant dense<0.000000e+00> : vector<15x192xf32>
    %5 = tpu.matmul %4, %1, %cst_5 {dimension_numbers = #tpu.dot_dimension_numbers<[1], [0], [0], [1], [0, 0, 1, 1], [], []>} : vector<15x64xbf16>, vector<64x192xbf16>, vector<15x192xf32> -> vector<15x192xf32>
    %6 = arith.truncf %5 : vector<15x192xf32> to vector<15x192xbf16>
    %c0_6 = arith.constant 0 : index
    %c0_7 = arith.constant 0 : index
    %c0_8 = arith.constant 0 : index
    %7 = vector.load %arg2[%c0_6, %c0_7, %c0_8] : memref<8x192x480xbf16, #tpu.memory_space<vmem>>, vector<1x192x480xbf16>
    %8 = vector.shape_cast %7 : vector<1x192x480xbf16> to vector<192x480xbf16>
    %cst_9 = arith.constant dense<0.000000e+00> : vector<15x480xf32>
    %9 = tpu.matmul %6, %8, %cst_9 {dimension_numbers = #tpu.dot_dimension_numbers<[1], [0], [0], [1], [0, 0, 1, 1], [], []>} : vector<15x192xbf16>, vector<192x480xbf16>, vector<15x480xf32> -> vector<15x480xf32>
    %10 = arith.addf %2, %9 : vector<15x480xf32>
    %c1 = arith.constant 1 : index
    %c0_10 = arith.constant 0 : index
    %c0_11 = arith.constant 0 : index
    %11 = vector.load %arg6[%c1, %c0_10, %c0_11] : memref<8x15x64xbf16, #tpu.memory_space<vmem>>, vector<1x15x64xbf16>
    %12 = vector.shape_cast %11 : vector<1x15x64xbf16> to vector<15x64xbf16>
    %cst_12 = arith.constant dense<0.000000e+00> : vector<15x192xf32>
    %13 = tpu.matmul %12, %1, %cst_12 {dimension_numbers = #tpu.dot_dimension_numbers<[1], [0], [0], [1], [0, 0, 1, 1], [], []>} : vector<15x64xbf16>, vector<64x192xbf16>, vector<15x192xf32> -> vector<15x192xf32>
    %14 = arith.truncf %13 : vector<15x192xf32> to vector<15x192xbf16>
    %c1_13 = arith.constant 1 : index
    %c0_14 = arith.constant 0 : index
    %c0_15 = arith.constant 0 : index
    %15 = vector.load %arg2[%c1_13, %c0_14, %c0_15] : memref<8x192x480xbf16, #tpu.memory_space<vmem>>, vector<1x192x480xbf16>
    %16 = vector.shape_cast %15 : vector<1x192x480xbf16> to vector<192x480xbf16>
    %cst_16 = arith.constant dense<0.000000e+00> : vector<15x480xf32>
    %17 = tpu.matmul %14, %16, %cst_16 {dimension_numbers = #tpu.dot_dimension_numbers<[1], [0], [0], [1], [0, 0, 1, 1], [], []>} : vector<15x192xbf16>, vector<192x480xbf16>, vector<15x480xf32> -> vector<15x480xf32>
    %18 = arith.addf %10, %17 : vector<15x480xf32>
    %c2 = arith.constant 2 : index
    %c0_17 = arith.constant 0 : index
    %c0_18 = arith.constant 0 : index
    %19 = vector.load %arg6[%c2, %c0_17, %c0_18] : memref<8x15x64xbf16, #tpu.memory_space<vmem>>, vector<1x15x64xbf16>
    %20 = vector.shape_cast %19 : vector<1x15x64xbf16> to vector<15x64xbf16>
    %cst_19 = arith.constant dense<0.000000e+00> : vector<15x192xf32>
    %21 = tpu.matmul %20, %1, %cst_19 {dimension_numbers = #tpu.dot_dimension_numbers<[1], [0], [0], [1], [0, 0, 1, 1], [], []>} : vector<15x64xbf16>, vector<64x192xbf16>, vector<15x192xf32> -> vector<15x192xf32>
    %22 = arith.truncf %21 : vector<15x192xf32> to vector<15x192xbf16>
    %c2_20 = arith.constant 2 : index
    %c0_21 = arith.constant 0 : index
    %c0_22 = arith.constant 0 : index
    %23 = vector.load %arg2[%c2_20, %c0_21, %c0_22] : memref<8x192x480xbf16, #tpu.memory_space<vmem>>, vector<1x192x480xbf16>
    %24 = vector.shape_cast %23 : vector<1x192x480xbf16> to vector<192x480xbf16>
    %cst_23 = arith.constant dense<0.000000e+00> : vector<15x480xf32>
    %25 = tpu.matmul %22, %24, %cst_23 {dimension_numbers = #tpu.dot_dimension_numbers<[1], [0], [0], [1], [0, 0, 1, 1], [], []>} : vector<15x192xbf16>, vector<192x480xbf16>, vector<15x480xf32> -> vector<15x480xf32>
    %26 = arith.addf %18, %25 : vector<15x480xf32>
    %c3 = arith.constant 3 : index
    %c0_24 = arith.constant 0 : index
    %c0_25 = arith.constant 0 : index
    %27 = vector.load %arg6[%c3, %c0_24, %c0_25] : memref<8x15x64xbf16, #tpu.memory_space<vmem>>, vector<1x15x64xbf16>
    %28 = vector.shape_cast %27 : vector<1x15x64xbf16> to vector<15x64xbf16>
    %cst_26 = arith.constant dense<0.000000e+00> : vector<15x192xf32>
    %29 = tpu.matmul %28, %1, %cst_26 {dimension_numbers = #tpu.dot_dimension_numbers<[1], [0], [0], [1], [0, 0, 1, 1], [], []>} : vector<15x64xbf16>, vector<64x192xbf16>, vector<15x192xf32> -> vector<15x192xf32>
    %30 = arith.truncf %29 : vector<15x192xf32> to vector<15x192xbf16>
    %c3_27 = arith.constant 3 : index
    %c0_28 = arith.constant 0 : index
    %c0_29 = arith.constant 0 : index
    %31 = vector.load %arg2[%c3_27, %c0_28, %c0_29] : memref<8x192x480xbf16, #tpu.memory_space<vmem>>, vector<1x192x480xbf16>
    %32 = vector.shape_cast %31 : vector<1x192x480xbf16> to vector<192x480xbf16>
    %cst_30 = arith.constant dense<0.000000e+00> : vector<15x480xf32>
    %33 = tpu.matmul %30, %32, %cst_30 {dimension_numbers = #tpu.dot_dimension_numbers<[1], [0], [0], [1], [0, 0, 1, 1], [], []>} : vector<15x192xbf16>, vector<192x480xbf16>, vector<15x480xf32> -> vector<15x480xf32>
    %34 = arith.addf %26, %33 : vector<15x480xf32>
    %c4 = arith.constant 4 : index
    %c0_31 = arith.constant 0 : index
    %c0_32 = arith.constant 0 : index
    %35 = vector.load %arg6[%c4, %c0_31, %c0_32] : memref<8x15x64xbf16, #tpu.memory_space<vmem>>, vector<1x15x64xbf16>
    %36 = vector.shape_cast %35 : vector<1x15x64xbf16> to vector<15x64xbf16>
    %cst_33 = arith.constant dense<0.000000e+00> : vector<15x192xf32>
    %37 = tpu.matmul %36, %1, %cst_33 {dimension_numbers = #tpu.dot_dimension_numbers<[1], [0], [0], [1], [0, 0, 1, 1], [], []>} : vector<15x64xbf16>, vector<64x192xbf16>, vector<15x192xf32> -> vector<15x192xf32>
    %38 = arith.truncf %37 : vector<15x192xf32> to vector<15x192xbf16>
    %c4_34 = arith.constant 4 : index
    %c0_35 = arith.constant 0 : index
    %c0_36 = arith.constant 0 : index
    %39 = vector.load %arg2[%c4_34, %c0_35, %c0_36] : memref<8x192x480xbf16, #tpu.memory_space<vmem>>, vector<1x192x480xbf16>
    %40 = vector.shape_cast %39 : vector<1x192x480xbf16> to vector<192x480xbf16>
    %cst_37 = arith.constant dense<0.000000e+00> : vector<15x480xf32>
    %41 = tpu.matmul %38, %40, %cst_37 {dimension_numbers = #tpu.dot_dimension_numbers<[1], [0], [0], [1], [0, 0, 1, 1], [], []>} : vector<15x192xbf16>, vector<192x480xbf16>, vector<15x480xf32> -> vector<15x480xf32>
    %42 = arith.addf %34, %41 : vector<15x480xf32>
    %c5 = arith.constant 5 : index
    %c0_38 = arith.constant 0 : index
    %c0_39 = arith.constant 0 : index
    %43 = vector.load %arg6[%c5, %c0_38, %c0_39] : memref<8x15x64xbf16, #tpu.memory_space<vmem>>, vector<1x15x64xbf16>
    %44 = vector.shape_cast %43 : vector<1x15x64xbf16> to vector<15x64xbf16>
    %cst_40 = arith.constant dense<0.000000e+00> : vector<15x192xf32>
    %45 = tpu.matmul %44, %1, %cst_40 {dimension_numbers = #tpu.dot_dimension_numbers<[1], [0], [0], [1], [0, 0, 1, 1], [], []>} : vector<15x64xbf16>, vector<64x192xbf16>, vector<15x192xf32> -> vector<15x192xf32>
    %46 = arith.truncf %45 : vector<15x192xf32> to vector<15x192xbf16>
    %c5_41 = arith.constant 5 : index
    %c0_42 = arith.constant 0 : index
    %c0_43 = arith.constant 0 : index
    %47 = vector.load %arg2[%c5_41, %c0_42, %c0_43] : memref<8x192x480xbf16, #tpu.memory_space<vmem>>, vector<1x192x480xbf16>
    %48 = vector.shape_cast %47 : vector<1x192x480xbf16> to vector<192x480xbf16>
    %cst_44 = arith.constant dense<0.000000e+00> : vector<15x480xf32>
    %49 = tpu.matmul %46, %48, %cst_44 {dimension_numbers = #tpu.dot_dimension_numbers<[1], [0], [0], [1], [0, 0, 1, 1], [], []>} : vector<15x192xbf16>, vector<192x480xbf16>, vector<15x480xf32> -> vector<15x480xf32>
    %50 = arith.addf %42, %49 : vector<15x480xf32>
    %c6 = arith.constant 6 : index
    %c0_45 = arith.constant 0 : index
    %c0_46 = arith.constant 0 : index
    %51 = vector.load %arg6[%c6, %c0_45, %c0_46] : memref<8x15x64xbf16, #tpu.memory_space<vmem>>, vector<1x15x64xbf16>
    %52 = vector.shape_cast %51 : vector<1x15x64xbf16> to vector<15x64xbf16>
    %cst_47 = arith.constant dense<0.000000e+00> : vector<15x192xf32>
    %53 = tpu.matmul %52, %1, %cst_47 {dimension_numbers = #tpu.dot_dimension_numbers<[1], [0], [0], [1], [0, 0, 1, 1], [], []>} : vector<15x64xbf16>, vector<64x192xbf16>, vector<15x192xf32> -> vector<15x192xf32>
    %54 = arith.truncf %53 : vector<15x192xf32> to vector<15x192xbf16>
    %c6_48 = arith.constant 6 : index
    %c0_49 = arith.constant 0 : index
    %c0_50 = arith.constant 0 : index
    %55 = vector.load %arg2[%c6_48, %c0_49, %c0_50] : memref<8x192x480xbf16, #tpu.memory_space<vmem>>, vector<1x192x480xbf16>
    %56 = vector.shape_cast %55 : vector<1x192x480xbf16> to vector<192x480xbf16>
    %cst_51 = arith.constant dense<0.000000e+00> : vector<15x480xf32>
    %57 = tpu.matmul %54, %56, %cst_51 {dimension_numbers = #tpu.dot_dimension_numbers<[1], [0], [0], [1], [0, 0, 1, 1], [], []>} : vector<15x192xbf16>, vector<192x480xbf16>, vector<15x480xf32> -> vector<15x480xf32>
    %58 = arith.addf %50, %57 : vector<15x480xf32>
    %c7 = arith.constant 7 : index
    %c0_52 = arith.constant 0 : index
    %c0_53 = arith.constant 0 : index
    %59 = vector.load %arg6[%c7, %c0_52, %c0_53] : memref<8x15x64xbf16, #tpu.memory_space<vmem>>, vector<1x15x64xbf16>
    %60 = vector.shape_cast %59 : vector<1x15x64xbf16> to vector<15x64xbf16>
    %cst_54 = arith.constant dense<0.000000e+00> : vector<15x192xf32>
    %61 = tpu.matmul %60, %1, %cst_54 {dimension_numbers = #tpu.dot_dimension_numbers<[1], [0], [0], [1], [0, 0, 1, 1], [], []>} : vector<15x64xbf16>, vector<64x192xbf16>, vector<15x192xf32> -> vector<15x192xf32>
    %62 = arith.truncf %61 : vector<15x192xf32> to vector<15x192xbf16>
    %c7_55 = arith.constant 7 : index
    %c0_56 = arith.constant 0 : index
    %c0_57 = arith.constant 0 : index
    %63 = vector.load %arg2[%c7_55, %c0_56, %c0_57] : memref<8x192x480xbf16, #tpu.memory_space<vmem>>, vector<1x192x480xbf16>
    %64 = vector.shape_cast %63 : vector<1x192x480xbf16> to vector<192x480xbf16>
    %cst_58 = arith.constant dense<0.000000e+00> : vector<15x480xf32>
    %65 = tpu.matmul %62, %64, %cst_58 {dimension_numbers = #tpu.dot_dimension_numbers<[1], [0], [0], [1], [0, 0, 1, 1], [], []>} : vector<15x192xbf16>, vector<192x480xbf16>, vector<15x480xf32> -> vector<15x480xf32>
    %66 = arith.addf %58, %65 : vector<15x480xf32>
    %c0_59 = arith.constant 0 : index
    %c0_60 = arith.constant 0 : index
    %67 = vector.load %arg8[%c0_59, %c0_60] : memref<1x480xf32, #tpu.memory_space<vmem>>, vector<1x480xf32>
    %68 = vector.broadcast %67 : vector<1x480xf32> to vector<15x480xf32>
    %69 = arith.addf %66, %68 : vector<15x480xf32>
    %cst_61 = arith.constant 0.000000e+00 : f32
    %70 = vector.broadcast %cst_61 : f32 to vector<15x480xf32>
    %71 = arith.maximumf %69, %70 : vector<15x480xf32>
    %72 = arith.truncf %71 : vector<15x480xf32> to vector<15x480xbf16>
    %cst_62 = arith.constant 0.000000e+00 : f32
    %73 = vector.broadcast %cst_62 : f32 to vector<6x384xf32>
    %c0_63 = arith.constant 0 : index
    %c0_64 = arith.constant 0 : index
    %c0_65 = arith.constant 0 : index
    %74 = vector.load %arg7[%c0_63, %c0_64, %c0_65] : memref<4x6x15xbf16, #tpu.memory_space<vmem>>, vector<1x6x15xbf16>
    %75 = vector.shape_cast %74 : vector<1x6x15xbf16> to vector<6x15xbf16>
    %cst_66 = arith.constant dense<0.000000e+00> : vector<6x480xf32>
    %76 = tpu.matmul %75, %72, %cst_66 {dimension_numbers = #tpu.dot_dimension_numbers<[1], [0], [0], [1], [0, 0, 1, 1], [], []>} : vector<6x15xbf16>, vector<15x480xbf16>, vector<6x480xf32> -> vector<6x480xf32>
    %77 = arith.truncf %76 : vector<6x480xf32> to vector<6x480xbf16>
    %c0_67 = arith.constant 0 : index
    %c0_68 = arith.constant 0 : index
    %c0_69 = arith.constant 0 : index
    %78 = vector.load %arg3[%c0_67, %c0_68, %c0_69] : memref<4x480x384xbf16, #tpu.memory_space<vmem>>, vector<1x480x384xbf16>
    %79 = vector.shape_cast %78 : vector<1x480x384xbf16> to vector<480x384xbf16>
    %cst_70 = arith.constant dense<0.000000e+00> : vector<6x384xf32>
    %80 = tpu.matmul %77, %79, %cst_70 {dimension_numbers = #tpu.dot_dimension_numbers<[1], [0], [0], [1], [0, 0, 1, 1], [], []>} : vector<6x480xbf16>, vector<480x384xbf16>, vector<6x384xf32> -> vector<6x384xf32>
    %81 = arith.addf %73, %80 : vector<6x384xf32>
    %c1_71 = arith.constant 1 : index
    %c0_72 = arith.constant 0 : index
    %c0_73 = arith.constant 0 : index
    %82 = vector.load %arg7[%c1_71, %c0_72, %c0_73] : memref<4x6x15xbf16, #tpu.memory_space<vmem>>, vector<1x6x15xbf16>
    %83 = vector.shape_cast %82 : vector<1x6x15xbf16> to vector<6x15xbf16>
    %cst_74 = arith.constant dense<0.000000e+00> : vector<6x480xf32>
    %84 = tpu.matmul %83, %72, %cst_74 {dimension_numbers = #tpu.dot_dimension_numbers<[1], [0], [0], [1], [0, 0, 1, 1], [], []>} : vector<6x15xbf16>, vector<15x480xbf16>, vector<6x480xf32> -> vector<6x480xf32>
    %85 = arith.truncf %84 : vector<6x480xf32> to vector<6x480xbf16>
    %c1_75 = arith.constant 1 : index
    %c0_76 = arith.constant 0 : index
    %c0_77 = arith.constant 0 : index
    %86 = vector.load %arg3[%c1_75, %c0_76, %c0_77] : memref<4x480x384xbf16, #tpu.memory_space<vmem>>, vector<1x480x384xbf16>
    %87 = vector.shape_cast %86 : vector<1x480x384xbf16> to vector<480x384xbf16>
    %cst_78 = arith.constant dense<0.000000e+00> : vector<6x384xf32>
    %88 = tpu.matmul %85, %87, %cst_78 {dimension_numbers = #tpu.dot_dimension_numbers<[1], [0], [0], [1], [0, 0, 1, 1], [], []>} : vector<6x480xbf16>, vector<480x384xbf16>, vector<6x384xf32> -> vector<6x384xf32>
    %89 = arith.addf %81, %88 : vector<6x384xf32>
    %c2_79 = arith.constant 2 : index
    %c0_80 = arith.constant 0 : index
    %c0_81 = arith.constant 0 : index
    %90 = vector.load %arg7[%c2_79, %c0_80, %c0_81] : memref<4x6x15xbf16, #tpu.memory_space<vmem>>, vector<1x6x15xbf16>
    %91 = vector.shape_cast %90 : vector<1x6x15xbf16> to vector<6x15xbf16>
    %cst_82 = arith.constant dense<0.000000e+00> : vector<6x480xf32>
    %92 = tpu.matmul %91, %72, %cst_82 {dimension_numbers = #tpu.dot_dimension_numbers<[1], [0], [0], [1], [0, 0, 1, 1], [], []>} : vector<6x15xbf16>, vector<15x480xbf16>, vector<6x480xf32> -> vector<6x480xf32>
    %93 = arith.truncf %92 : vector<6x480xf32> to vector<6x480xbf16>
    %c2_83 = arith.constant 2 : index
    %c0_84 = arith.constant 0 : index
    %c0_85 = arith.constant 0 : index
    %94 = vector.load %arg3[%c2_83, %c0_84, %c0_85] : memref<4x480x384xbf16, #tpu.memory_space<vmem>>, vector<1x480x384xbf16>
    %95 = vector.shape_cast %94 : vector<1x480x384xbf16> to vector<480x384xbf16>
    %cst_86 = arith.constant dense<0.000000e+00> : vector<6x384xf32>
    %96 = tpu.matmul %93, %95, %cst_86 {dimension_numbers = #tpu.dot_dimension_numbers<[1], [0], [0], [1], [0, 0, 1, 1], [], []>} : vector<6x480xbf16>, vector<480x384xbf16>, vector<6x384xf32> -> vector<6x384xf32>
    %97 = arith.addf %89, %96 : vector<6x384xf32>
    %c3_87 = arith.constant 3 : index
    %c0_88 = arith.constant 0 : index
    %c0_89 = arith.constant 0 : index
    %98 = vector.load %arg7[%c3_87, %c0_88, %c0_89] : memref<4x6x15xbf16, #tpu.memory_space<vmem>>, vector<1x6x15xbf16>
    %99 = vector.shape_cast %98 : vector<1x6x15xbf16> to vector<6x15xbf16>
    %cst_90 = arith.constant dense<0.000000e+00> : vector<6x480xf32>
    %100 = tpu.matmul %99, %72, %cst_90 {dimension_numbers = #tpu.dot_dimension_numbers<[1], [0], [0], [1], [0, 0, 1, 1], [], []>} : vector<6x15xbf16>, vector<15x480xbf16>, vector<6x480xf32> -> vector<6x480xf32>
    %101 = arith.truncf %100 : vector<6x480xf32> to vector<6x480xbf16>
    %c3_91 = arith.constant 3 : index
    %c0_92 = arith.constant 0 : index
    %c0_93 = arith.constant 0 : index
    %102 = vector.load %arg3[%c3_91, %c0_92, %c0_93] : memref<4x480x384xbf16, #tpu.memory_space<vmem>>, vector<1x480x384xbf16>
    %103 = vector.shape_cast %102 : vector<1x480x384xbf16> to vector<480x384xbf16>
    %cst_94 = arith.constant dense<0.000000e+00> : vector<6x384xf32>
    %104 = tpu.matmul %101, %103, %cst_94 {dimension_numbers = #tpu.dot_dimension_numbers<[1], [0], [0], [1], [0, 0, 1, 1], [], []>} : vector<6x480xbf16>, vector<480x384xbf16>, vector<6x384xf32> -> vector<6x384xf32>
    %105 = arith.addf %97, %104 : vector<6x384xf32>
    %c0_95 = arith.constant 0 : index
    %c0_96 = arith.constant 0 : index
    %106 = vector.load %arg9[%c0_95, %c0_96] : memref<1x384xf32, #tpu.memory_space<vmem>>, vector<1x384xf32>
    %107 = vector.broadcast %106 : vector<1x384xf32> to vector<6x384xf32>
    %108 = arith.addf %105, %107 : vector<6x384xf32>
    %cst_97 = arith.constant 0.000000e+00 : f32
    %109 = vector.broadcast %cst_97 : f32 to vector<6x384xf32>
    %110 = arith.maximumf %108, %109 : vector<6x384xf32>
    %cst_98 = arith.constant 0.000000e+00 : f32
    %111 = vector.broadcast %cst_98 : f32 to vector<4x128xf32>
    %112 = vector.extract_strided_slice %110 {offsets = [0, 0], sizes = [4, 384], strides = [1, 1]} : vector<6x384xf32> to vector<4x384xf32>
    %113 = arith.truncf %112 : vector<4x384xf32> to vector<4x384xbf16>
    %c0_99 = arith.constant 0 : index
    %c0_100 = arith.constant 0 : index
    %c0_101 = arith.constant 0 : index
    %114 = vector.load %arg4[%c0_99, %c0_100, %c0_101] : memref<3x384x128xbf16, #tpu.memory_space<vmem>>, vector<1x384x128xbf16>
    %115 = vector.shape_cast %114 : vector<1x384x128xbf16> to vector<384x128xbf16>
    %cst_102 = arith.constant dense<0.000000e+00> : vector<4x128xf32>
    %116 = tpu.matmul %113, %115, %cst_102 {dimension_numbers = #tpu.dot_dimension_numbers<[1], [0], [0], [1], [0, 0, 1, 1], [], []>} : vector<4x384xbf16>, vector<384x128xbf16>, vector<4x128xf32> -> vector<4x128xf32>
    %117 = arith.addf %111, %116 : vector<4x128xf32>
    %118 = vector.extract_strided_slice %110 {offsets = [1, 0], sizes = [4, 384], strides = [1, 1]} : vector<6x384xf32> to vector<4x384xf32>
    %119 = arith.truncf %118 : vector<4x384xf32> to vector<4x384xbf16>
    %c1_103 = arith.constant 1 : index
    %c0_104 = arith.constant 0 : index
    %c0_105 = arith.constant 0 : index
    %120 = vector.load %arg4[%c1_103, %c0_104, %c0_105] : memref<3x384x128xbf16, #tpu.memory_space<vmem>>, vector<1x384x128xbf16>
    %121 = vector.shape_cast %120 : vector<1x384x128xbf16> to vector<384x128xbf16>
    %cst_106 = arith.constant dense<0.000000e+00> : vector<4x128xf32>
    %122 = tpu.matmul %119, %121, %cst_106 {dimension_numbers = #tpu.dot_dimension_numbers<[1], [0], [0], [1], [0, 0, 1, 1], [], []>} : vector<4x384xbf16>, vector<384x128xbf16>, vector<4x128xf32> -> vector<4x128xf32>
    %123 = arith.addf %117, %122 : vector<4x128xf32>
    %124 = vector.extract_strided_slice %110 {offsets = [2, 0], sizes = [4, 384], strides = [1, 1]} : vector<6x384xf32> to vector<4x384xf32>
    %125 = arith.truncf %124 : vector<4x384xf32> to vector<4x384xbf16>
    %c2_107 = arith.constant 2 : index
    %c0_108 = arith.constant 0 : index
    %c0_109 = arith.constant 0 : index
    %126 = vector.load %arg4[%c2_107, %c0_108, %c0_109] : memref<3x384x128xbf16, #tpu.memory_space<vmem>>, vector<1x384x128xbf16>
    %127 = vector.shape_cast %126 : vector<1x384x128xbf16> to vector<384x128xbf16>
    %cst_110 = arith.constant dense<0.000000e+00> : vector<4x128xf32>
    %128 = tpu.matmul %125, %127, %cst_110 {dimension_numbers = #tpu.dot_dimension_numbers<[1], [0], [0], [1], [0, 0, 1, 1], [], []>} : vector<4x384xbf16>, vector<384x128xbf16>, vector<4x128xf32> -> vector<4x128xf32>
    %129 = arith.addf %123, %128 : vector<4x128xf32>
    %c0_111 = arith.constant 0 : index
    %c0_112 = arith.constant 0 : index
    %130 = vector.load %arg10[%c0_111, %c0_112] : memref<1x128xf32, #tpu.memory_space<vmem>>, vector<1x128xf32>
    %131 = vector.broadcast %130 : vector<1x128xf32> to vector<4x128xf32>
    %132 = arith.addf %129, %131 : vector<4x128xf32>
    %cst_113 = arith.constant 0.000000e+00 : f32
    %133 = vector.broadcast %cst_113 : f32 to vector<1x128xf32>
    %134 = vector.extract_strided_slice %132 {offsets = [0, 0], sizes = [1, 128], strides = [1, 1]} : vector<4x128xf32> to vector<1x128xf32>
    %135 = arith.truncf %134 : vector<1x128xf32> to vector<1x128xbf16>
    %c0_114 = arith.constant 0 : index
    %c0_115 = arith.constant 0 : index
    %c0_116 = arith.constant 0 : index
    %136 = vector.load %arg5[%c0_114, %c0_115, %c0_116] : memref<4x128x128xbf16, #tpu.memory_space<vmem>>, vector<1x128x128xbf16>
    %137 = vector.shape_cast %136 : vector<1x128x128xbf16> to vector<128x128xbf16>
    %cst_117 = arith.constant dense<0.000000e+00> : vector<1x128xf32>
    %138 = tpu.matmul %135, %137, %cst_117 {dimension_numbers = #tpu.dot_dimension_numbers<[1], [0], [0], [1], [0, 0, 1, 1], [], []>} : vector<1x128xbf16>, vector<128x128xbf16>, vector<1x128xf32> -> vector<1x128xf32>
    %139 = arith.addf %133, %138 : vector<1x128xf32>
    %140 = vector.extract_strided_slice %132 {offsets = [1, 0], sizes = [1, 128], strides = [1, 1]} : vector<4x128xf32> to vector<1x128xf32>
    %141 = arith.truncf %140 : vector<1x128xf32> to vector<1x128xbf16>
    %c1_118 = arith.constant 1 : index
    %c0_119 = arith.constant 0 : index
    %c0_120 = arith.constant 0 : index
    %142 = vector.load %arg5[%c1_118, %c0_119, %c0_120] : memref<4x128x128xbf16, #tpu.memory_space<vmem>>, vector<1x128x128xbf16>
    %143 = vector.shape_cast %142 : vector<1x128x128xbf16> to vector<128x128xbf16>
    %cst_121 = arith.constant dense<0.000000e+00> : vector<1x128xf32>
    %144 = tpu.matmul %141, %143, %cst_121 {dimension_numbers = #tpu.dot_dimension_numbers<[1], [0], [0], [1], [0, 0, 1, 1], [], []>} : vector<1x128xbf16>, vector<128x128xbf16>, vector<1x128xf32> -> vector<1x128xf32>
    %145 = arith.addf %139, %144 : vector<1x128xf32>
    %146 = vector.extract_strided_slice %132 {offsets = [2, 0], sizes = [1, 128], strides = [1, 1]} : vector<4x128xf32> to vector<1x128xf32>
    %147 = arith.truncf %146 : vector<1x128xf32> to vector<1x128xbf16>
    %c2_122 = arith.constant 2 : index
    %c0_123 = arith.constant 0 : index
    %c0_124 = arith.constant 0 : index
    %148 = vector.load %arg5[%c2_122, %c0_123, %c0_124] : memref<4x128x128xbf16, #tpu.memory_space<vmem>>, vector<1x128x128xbf16>
    %149 = vector.shape_cast %148 : vector<1x128x128xbf16> to vector<128x128xbf16>
    %cst_125 = arith.constant dense<0.000000e+00> : vector<1x128xf32>
    %150 = tpu.matmul %147, %149, %cst_125 {dimension_numbers = #tpu.dot_dimension_numbers<[1], [0], [0], [1], [0, 0, 1, 1], [], []>} : vector<1x128xbf16>, vector<128x128xbf16>, vector<1x128xf32> -> vector<1x128xf32>
    %151 = arith.addf %145, %150 : vector<1x128xf32>
    %152 = vector.extract_strided_slice %132 {offsets = [3, 0], sizes = [1, 128], strides = [1, 1]} : vector<4x128xf32> to vector<1x128xf32>
    %153 = arith.truncf %152 : vector<1x128xf32> to vector<1x128xbf16>
    %c3_126 = arith.constant 3 : index
    %c0_127 = arith.constant 0 : index
    %c0_128 = arith.constant 0 : index
    %154 = vector.load %arg5[%c3_126, %c0_127, %c0_128] : memref<4x128x128xbf16, #tpu.memory_space<vmem>>, vector<1x128x128xbf16>
    %155 = vector.shape_cast %154 : vector<1x128x128xbf16> to vector<128x128xbf16>
    %cst_129 = arith.constant dense<0.000000e+00> : vector<1x128xf32>
    %156 = tpu.matmul %153, %155, %cst_129 {dimension_numbers = #tpu.dot_dimension_numbers<[1], [0], [0], [1], [0, 0, 1, 1], [], []>} : vector<1x128xbf16>, vector<128x128xbf16>, vector<1x128xf32> -> vector<1x128xf32>
    %157 = arith.addf %151, %156 : vector<1x128xf32>
    %c0_130 = arith.constant 0 : index
    %c0_131 = arith.constant 0 : index
    %158 = vector.load %arg11[%c0_130, %c0_131] : memref<1x128xf32, #tpu.memory_space<vmem>>, vector<1x128xf32>
    %159 = arith.addf %157, %158 : vector<1x128xf32>
    %cst_132 = arith.constant 0.000000e+00 : f32
    %160 = vector.broadcast %cst_132 : f32 to vector<1x128xf32>
    %161 = arith.maximumf %159, %160 : vector<1x128xf32>
    %c0_133 = arith.constant 0 : index
    %c0_134 = arith.constant 0 : index
    %c0_135 = arith.constant 0 : index
    %162 = vector.load %arg12[%c0_133, %c0_134, %c0_135] : memref<1x1x128xf32, #tpu.memory_space<vmem>>, vector<1x1x128xf32>
    %163 = vector.shape_cast %162 : vector<1x1x128xf32> to vector<1x128xf32>
    %164 = vector.shape_cast %161 : vector<1x128xf32> to vector<1x1x128xf32>
    tpu.vector_store %arg12[%c0_133, %c0_134, %c0_135], %164 {strides = array<i32>} : memref<1x1x128xf32, #tpu.memory_space<vmem>>, vector<1x1x128xf32>,
    return
  }
  func.func @transform_0(%arg0: i32) -> (i32, i32, i32) {
    %c0_i32 = arith.constant 0 : i32
    %c0_i32_0 = arith.constant 0 : i32
    %c0_i32_1 = arith.constant 0 : i32
    return %arg0, %c0_i32, %c0_i32_0 : i32, i32, i32
  }
  func.func @transform_1(%arg0: i32) -> (i32, i32, i32) {
    %c0_i32 = arith.constant 0 : i32
    %c0_i32_0 = arith.constant 0 : i32
    %c0_i32_1 = arith.constant 0 : i32
    %c0_i32_2 = arith.constant 0 : i32
    return %c0_i32, %c0_i32_0, %c0_i32_1 : i32, i32, i32
  }
  func.func @transform_2(%arg0: i32) -> (i32, i32, i32) {
    %c0_i32 = arith.constant 0 : i32
    %c0_i32_0 = arith.constant 0 : i32
    %c0_i32_1 = arith.constant 0 : i32
    %c0_i32_2 = arith.constant 0 : i32
    return %c0_i32, %c0_i32_0, %c0_i32_1 : i32, i32, i32
  }
  func.func @transform_3(%arg0: i32) -> (i32, i32, i32) {
    %c0_i32 = arith.constant 0 : i32
    %c0_i32_0 = arith.constant 0 : i32
    %c0_i32_1 = arith.constant 0 : i32
    %c0_i32_2 = arith.constant 0 : i32
    return %c0_i32, %c0_i32_0, %c0_i32_1 : i32, i32, i32
  }
  func.func @transform_4(%arg0: i32) -> (i32, i32, i32) {
    %c0_i32 = arith.constant 0 : i32
    %c0_i32_0 = arith.constant 0 : i32
    %c0_i32_1 = arith.constant 0 : i32
    %c0_i32_2 = arith.constant 0 : i32
    return %c0_i32, %c0_i32_0, %c0_i32_1 : i32, i32, i32
  }
  func.func @transform_5(%arg0: i32) -> (i32, i32, i32) {
    %c0_i32 = arith.constant 0 : i32
    %c0_i32_0 = arith.constant 0 : i32
    %c0_i32_1 = arith.constant 0 : i32
    %c0_i32_2 = arith.constant 0 : i32
    return %c0_i32, %c0_i32_0, %c0_i32_1 : i32, i32, i32
  }
  func.func @transform_6(%arg0: i32) -> (i32, i32, i32) {
    %c0_i32 = arith.constant 0 : i32
    %c0_i32_0 = arith.constant 0 : i32
    %c0_i32_1 = arith.constant 0 : i32
    %c0_i32_2 = arith.constant 0 : i32
    return %c0_i32, %c0_i32_0, %c0_i32_1 : i32, i32, i32
  }
  func.func @transform_7(%arg0: i32) -> (i32, i32) {
    %c0_i32 = arith.constant 0 : i32
    %c0_i32_0 = arith.constant 0 : i32
    %c0_i32_1 = arith.constant 0 : i32
    return %c0_i32, %c0_i32_0 : i32, i32
  }
  func.func @transform_8(%arg0: i32) -> (i32, i32) {
    %c0_i32 = arith.constant 0 : i32
    %c0_i32_0 = arith.constant 0 : i32
    %c0_i32_1 = arith.constant 0 : i32
    return %c0_i32, %c0_i32_0 : i32, i32
  }
  func.func @transform_9(%arg0: i32) -> (i32, i32) {
    %c0_i32 = arith.constant 0 : i32
    %c0_i32_0 = arith.constant 0 : i32
    %c0_i32_1 = arith.constant 0 : i32
    return %c0_i32, %c0_i32_0 : i32, i32
  }
  func.func @transform_10(%arg0: i32) -> (i32, i32) {
    %c0_i32 = arith.constant 0 : i32
    %c0_i32_0 = arith.constant 0 : i32
    %c0_i32_1 = arith.constant 0 : i32
    return %c0_i32, %c0_i32_0 : i32, i32
  }
  func.func @transform_11(%arg0: i32) -> (i32, i32, i32) {
    %c0_i32 = arith.constant 0 : i32
    %c0_i32_0 = arith.constant 0 : i32
    %c0_i32_1 = arith.constant 0 : i32
    return %arg0, %c0_i32, %c0_i32_0 : i32, i32, i32
  }
}

</mosaic_0001>

<llo_original>
// kernel: tpu_custom_call.1
$region0: #{tpu_custom_call.1}
  #allocation0 [shape = 'u32[]', space=smem, size = 0x4, offset = 0x4, fixed_abs, tag = 'smem constant byte address 0x4 - core index']
  #allocation1 [shape = 'u32[144,128]{1,0:T(1,128)}', space=vmem, size = 0x12000, scoped, tag = 'internal scratch']
  %s0 = inlined_call_operand.hbm [shape: bf16[2,64,192], index: 0, kind: input, shape index: {}]
  %s1 = inlined_call_operand.hbm [shape: bf16[8,192,480], index: 1, kind: input, shape index: {}]
  %s2 = inlined_call_operand.hbm [shape: bf16[4,480,384], index: 2, kind: input, shape index: {}]
  %s3 = inlined_call_operand.hbm [shape: bf16[3,384,128], index: 3, kind: input, shape index: {}]
  %s4 = inlined_call_operand.hbm [shape: bf16[4,128,128], index: 4, kind: input, shape index: {}]
  %s5 = inlined_call_operand.vmem [shape: bf16[8,15,64], index: 5, kind: input, shape index: {}]
  %s6 = inlined_call_operand.vmem [shape: bf16[4,6,15], index: 6, kind: input, shape index: {}]
  %s7 = inlined_call_operand.hbm [shape: f32[1,480], index: 7, kind: input, shape index: {}]
  %s8 = inlined_call_operand.hbm [shape: f32[1,384], index: 8, kind: input, shape index: {}]
  %s9 = inlined_call_operand.hbm [shape: f32[1,128], index: 9, kind: input, shape index: {}]
  %s10 = inlined_call_operand.hbm [shape: f32[1,128], index: 10, kind: input, shape index: {}]
  %s11 = inlined_call_operand.hbm [shape: f32[2,1,128], index: 11, kind: output, shape index: {}]
  %s12 = sld [smem:[#allocation0]]
  $region113: #{tpu_custom_call.1} parent=0
    _
  %s14 = ssub.s32 1, %s12
  %s15 = scalar_select 0, %s14, %s12
  $region1: #{tpu_custom_call.1} parent=0
    #allocation2 [shape = 'u8[65536]{0}', space=vmem, size = 0x10000, scoped, tag = 'input window, operand 0']
    #allocation3 [shape = 's32[2]{0}', space=sflag, size = 0x8, scoped, tag = 'scoped memory for tpu_custom_call.1']
    #allocation4 [shape = 's32[2]{0}', space=sflag, size = 0x8, scoped, tag = 'scoped memory for tpu_custom_call.1']
    #allocation5 [shape = 'u8[1572864]{0}', space=vmem, size = 0x180000, scoped, tag = 'input window, operand 1, single buffered']
    #allocation6 [shape = 's32[1]{0}', space=sflag, size = 0x4, scoped, tag = 'scoped memory for tpu_custom_call.1']
    #allocation7 [shape = 'u8[1474560]{0}', space=vmem, size = 0x168000, scoped, tag = 'input window, operand 2, single buffered']
    #allocation8 [shape = 'u8[294912]{0}', space=vmem, size = 0x48000, scoped, tag = 'input window, operand 3, single buffered']
    #allocation9 [shape = 's32[1]{0}', space=sflag, size = 0x4, scoped, tag = 'scoped memory for tpu_custom_call.1']
    #allocation10 [shape = 'u8[131072]{0}', space=vmem, size = 0x20000, scoped, tag = 'input window, operand 4, single buffered']
    #allocation11 [shape = 'u8[2048]{0}', space=vmem, size = 0x800, scoped, tag = 'input window, operand 7, single buffered']
    #allocation12 [shape = 's32[1]{0}', space=sflag, size = 0x4, scoped, tag = 'scoped memory for tpu_custom_call.1']
    #allocation13 [shape = 'u8[1536]{0}', space=vmem, size = 0x800, scoped, tag = 'input window, operand 8, single buffered']
    #allocation14 [shape = 'u8[512]{0}', space=vmem, size = 0x400, scoped, tag = 'input window, operand 9, single buffered']
    #allocation15 [shape = 's32[1]{0}', space=sflag, size = 0x4, scoped, tag = 'scoped memory for tpu_custom_call.1']
    #allocation16 [shape = 'u8[512]{0}', space=vmem, size = 0x400, scoped, tag = 'input window, operand 10, single buffered']
    #allocation17 [shape = 'u8[1024]{0}', space=vmem, size = 0x400, scoped, tag = 'output window, operand 0']
    %16 = vsyncpa [#allocation3], 0
    %s17 = scalar_lea.sflag [#allocation3], 1
    %18 = vsyncpa %s17, 0
    %19 = vsyncpa [#allocation6], 0
    %20 = vsyncpa [#allocation9], 0
    %21 = vsyncpa [#allocation12], 0
    %22 = vsyncpa [#allocation15], 0
    %23 = vsyncpa [#allocation4], 0
    %s24 = scalar_lea.sflag [#allocation4], 1
    %25 = vsyncpa %s24, 0
    loop: start=0, step=1, limit=4
    $region2: #{tpu_custom_call.1} parent=1 // loop_pre_header
      _
    $region3: #{tpu_custom_call.1} parent=1 // loop_header
      %s27 = sphi 0, %s31
      %p28 = scmp.ge.s32.totalorder %s27, 4
      %s37 = sphi 0, %s39
      %s40 = sphi 0, %s37
      %s41 = sphi 0, %s40
      %s57 = sphi 0, %s41
      %s61 = sphi 0, %s61
      %s63 = sphi 0, %s61
      %s64 = sphi 0, %s63
      %s78 = sphi 0, %s64
      %s82 = sphi 0, %s82
      %s84 = sphi 0, %s82
      %s85 = sphi 0, %s84
      %s99 = sphi 0, %s85
      %s103 = sphi 0, %s103
      %s105 = sphi 0, %s103
      %s106 = sphi 0, %s105
      %s120 = sphi 0, %s106
      %s124 = sphi 0, %s124
      %s126 = sphi 0, %s124
      %s127 = sphi 0, %s126
      %s141 = sphi 0, %s127
      %s145 = sphi 0, %s145
      %s147 = sphi 0, %s145
      %s148 = sphi 0, %s147
      %s162 = sphi 0, %s148
      %s166 = sphi 0, %s166
      %s168 = sphi 0, %s166
      %s169 = sphi 0, %s168
      %s183 = sphi 0, %s169
      %s187 = sphi 0, %s187
      %s189 = sphi 0, %s187
      %s190 = sphi 0, %s189
      %s204 = sphi 0, %s190
      %s208 = sphi 0, %s208
      %s210 = sphi 0, %s208
      %s211 = sphi 0, %s210
      %s225 = sphi 0, %s211
      %s229 = sphi 0, %s229
      %s231 = sphi 0, %s229
      %s232 = sphi 0, %s231
      %s246 = sphi 0, %s232
      %s250 = sphi 0, %s250
      %s252 = sphi 0, %s250
      %s253 = sphi 0, %s252
      %s267 = sphi 0, %s253
      %s273 = sphi 0, %s275
      %s276 = sphi 0, %s273
      %s277 = sphi 0, %s276
      %s293 = sphi 0, %s277
    $region4: #{tpu_custom_call.1} parent=1 // loop_header_branch
      %30 = sbr.rel (%p28) target = $region8
    $region5: #{tpu_custom_call.1} parent=1 // loop_body
      %s32 = ssub.s32 %s27, 1
      %s33 = ssub.s32 %s27, 2
      %s34 = sadd.s32 %s27, 1
      %s35 = ssub.s32 %s27, %s34
      %p36 = scmp.eq.s32.totalorder %s35, 0
      %s38 = sadd.s32 %s37, 1
      %s39 = scalar_select %p36, %s37, %s38
      %p42 = pneg %p36
      %p43 = scmp.eq.s32.totalorder %s27, 1
      %p44 = por %p42, %p43
      %p45 = scmp.ne.s32.totalorder %s37, %s40
      %p46 = scmp.eq.s32.totalorder %s27, 0
      %p47 = por %p45, %p46
      %p48 = scmp.ne.s32.totalorder %s37, %s40
      %p49 = scmp.eq.s32.totalorder %s32, 1
      %p50 = por %p48, %p49
      %p51 = scmp.ne.s32.totalorder %s40, %s41
      %p52 = scmp.eq.s32.totalorder %s32, 0
      %p53 = por %p51, %p52
      %p54 = scmp.ne.s32.totalorder %s40, %s41
      %p55 = scmp.eq.s32.totalorder %s33, 1
      %p56 = por %p54, %p55
      %p58 = scmp.ne.s32.totalorder %s41, %s57
      %p59 = scmp.eq.s32.totalorder %s33, 0
      %p60 = por %p58, %p59
      %s62 = sadd.s32 %s61, 1
      %p65 = scmp.eq.s32.totalorder %s27, 1
      %p66 = scmp.ne.s32.totalorder %s61, %s63
      %p67 = scmp.eq.s32.totalorder %s27, 0
      %p68 = por %p66, %p67
      %p69 = scmp.ne.s32.totalorder %s61, %s63
      %p70 = scmp.eq.s32.totalorder %s32, 1
      %p71 = por %p69, %p70
      %p72 = scmp.ne.s32.totalorder %s63, %s64
      %p73 = scmp.eq.s32.totalorder %s32, 0
      %p74 = por %p72, %p73
      %p75 = scmp.ne.s32.totalorder %s63, %s64
      %p76 = scmp.eq.s32.totalorder %s33, 1
      %p77 = por %p75, %p76
      %p79 = scmp.ne.s32.totalorder %s64, %s78
      %p80 = scmp.eq.s32.totalorder %s33, 0
      %p81 = por %p79, %p80
      %s83 = sadd.s32 %s82, 1
      %p86 = scmp.eq.s32.totalorder %s27, 1
      %p87 = scmp.ne.s32.totalorder %s82, %s84
      %p88 = scmp.eq.s32.totalorder %s27, 0
      %p89 = por %p87, %p88
      %p90 = scmp.ne.s32.totalorder %s82, %s84
      %p91 = scmp.eq.s32.totalorder %s32, 1
      %p92 = por %p90, %p91
      %p93 = scmp.ne.s32.totalorder %s84, %s85
      %p94 = scmp.eq.s32.totalorder %s32, 0
      %p95 = por %p93, %p94
      %p96 = scmp.ne.s32.totalorder %s84, %s85
      %p97 = scmp.eq.s32.totalorder %s33, 1
      %p98 = por %p96, %p97
      %p100 = scmp.ne.s32.totalorder %s85, %s99
      %p101 = scmp.eq.s32.totalorder %s33, 0
      %p102 = por %p100, %p101
      %s104 = sadd.s32 %s103, 1
      %p107 = scmp.eq.s32.totalorder %s27, 1
      %p108 = scmp.ne.s32.totalorder %s103, %s105
      %p109 = scmp.eq.s32.totalorder %s27, 0
      %p110 = por %p108, %p109
      %p111 = scmp.ne.s32.totalorder %s103, %s105
      %p112 = scmp.eq.s32.totalorder %s32, 1
      %p113 = por %p111, %p112
      %p114 = scmp.ne.s32.totalorder %s105, %s106
      %p115 = scmp.eq.s32.totalorder %s32, 0
      %p116 = por %p114, %p115
      %p117 = scmp.ne.s32.totalorder %s105, %s106
      %p118 = scmp.eq.s32.totalorder %s33, 1
      %p119 = por %p117, %p118
      %p121 = scmp.ne.s32.totalorder %s106, %s120
      %p122 = scmp.eq.s32.totalorder %s33, 0
      %p123 = por %p121, %p122
      %s125 = sadd.s32 %s124, 1
      %p128 = scmp.eq.s32.totalorder %s27, 1
      %p129 = scmp.ne.s32.totalorder %s124, %s126
      %p130 = scmp.eq.s32.totalorder %s27, 0
      %p131 = por %p129, %p130
      %p132 = scmp.ne.s32.totalorder %s124, %s126
      %p133 = scmp.eq.s32.totalorder %s32, 1
      %p134 = por %p132, %p133
      %p135 = scmp.ne.s32.totalorder %s126, %s127
      %p136 = scmp.eq.s32.totalorder %s32, 0
      %p137 = por %p135, %p136
      %p138 = scmp.ne.s32.totalorder %s126, %s127
      %p139 = scmp.eq.s32.totalorder %s33, 1
      %p140 = por %p138, %p139
      %p142 = scmp.ne.s32.totalorder %s127, %s141
      %p143 = scmp.eq.s32.totalorder %s33, 0
      %p144 = por %p142, %p143
      %s146 = sadd.s32 %s145, 1
      %p149 = scmp.eq.s32.totalorder %s27, 1
      %p150 = scmp.ne.s32.totalorder %s145, %s147
      %p151 = scmp.eq.s32.totalorder %s27, 0
      %p152 = por %p150, %p151
      %p153 = scmp.ne.s32.totalorder %s145, %s147
      %p154 = scmp.eq.s32.totalorder %s32, 1
      %p155 = por %p153, %p154
      %p156 = scmp.ne.s32.totalorder %s147, %s148
      %p157 = scmp.eq.s32.totalorder %s32, 0
      %p158 = por %p156, %p157
      %p159 = scmp.ne.s32.totalorder %s147, %s148
      %p160 = scmp.eq.s32.totalorder %s33, 1
      %p161 = por %p159, %p160
      %p163 = scmp.ne.s32.totalorder %s148, %s162
      %p164 = scmp.eq.s32.totalorder %s33, 0
      %p165 = por %p163, %p164
      %s167 = sadd.s32 %s166, 1
      %p170 = scmp.eq.s32.totalorder %s27, 1
      %p171 = scmp.ne.s32.totalorder %s166, %s168
      %p172 = scmp.eq.s32.totalorder %s27, 0
      %p173 = por %p171, %p172
      %p174 = scmp.ne.s32.totalorder %s166, %s168
      %p175 = scmp.eq.s32.totalorder %s32, 1
      %p176 = por %p174, %p175
      %p177 = scmp.ne.s32.totalorder %s168, %s169
      %p178 = scmp.eq.s32.totalorder %s32, 0
      %p179 = por %p177, %p178
      %p180 = scmp.ne.s32.totalorder %s168, %s169
      %p181 = scmp.eq.s32.totalorder %s33, 1
      %p182 = por %p180, %p181
      %p184 = scmp.ne.s32.totalorder %s169, %s183
      %p185 = scmp.eq.s32.totalorder %s33, 0
      %p186 = por %p184, %p185
      %s188 = sadd.s32 %s187, 1
      %p191 = scmp.eq.s32.totalorder %s27, 1
      %p192 = scmp.ne.s32.totalorder %s187, %s189
      %p193 = scmp.eq.s32.totalorder %s27, 0
      %p194 = por %p192, %p193
      %p195 = scmp.ne.s32.totalorder %s187, %s189
      %p196 = scmp.eq.s32.totalorder %s32, 1
      %p197 = por %p195, %p196
      %p198 = scmp.ne.s32.totalorder %s189, %s190
      %p199 = scmp.eq.s32.totalorder %s32, 0
      %p200 = por %p198, %p199
      %p201 = scmp.ne.s32.totalorder %s189, %s190
      %p202 = scmp.eq.s32.totalorder %s33, 1
      %p203 = por %p201, %p202
      %p205 = scmp.ne.s32.totalorder %s190, %s204
      %p206 = scmp.eq.s32.totalorder %s33, 0
      %p207 = por %p205, %p206
      %s209 = sadd.s32 %s208, 1
      %p212 = scmp.eq.s32.totalorder %s27, 1
      %p213 = scmp.ne.s32.totalorder %s208, %s210
      %p214 = scmp.eq.s32.totalorder %s27, 0
      %p215 = por %p213, %p214
      %p216 = scmp.ne.s32.totalorder %s208, %s210
      %p217 = scmp.eq.s32.totalorder %s32, 1
      %p218 = por %p216, %p217
      %p219 = scmp.ne.s32.totalorder %s210, %s211
      %p220 = scmp.eq.s32.totalorder %s32, 0
      %p221 = por %p219, %p220
      %p222 = scmp.ne.s32.totalorder %s210, %s211
      %p223 = scmp.eq.s32.totalorder %s33, 1
      %p224 = por %p222, %p223
      %p226 = scmp.ne.s32.totalorder %s211, %s225
      %p227 = scmp.eq.s32.totalorder %s33, 0
      %p228 = por %p226, %p227
      %s230 = sadd.s32 %s229, 1
      %p233 = scmp.eq.s32.totalorder %s27, 1
      %p234 = scmp.ne.s32.totalorder %s229, %s231
      %p235 = scmp.eq.s32.totalorder %s27, 0
      %p236 = por %p234, %p235
      %p237 = scmp.ne.s32.totalorder %s229, %s231
      %p238 = scmp.eq.s32.totalorder %s32, 1
      %p239 = por %p237, %p238
      %p240 = scmp.ne.s32.totalorder %s231, %s232
      %p241 = scmp.eq.s32.totalorder %s32, 0
      %p242 = por %p240, %p241
      %p243 = scmp.ne.s32.totalorder %s231, %s232
      %p244 = scmp.eq.s32.totalorder %s33, 1
      %p245 = por %p243, %p244
      %p247 = scmp.ne.s32.totalorder %s232, %s246
      %p248 = scmp.eq.s32.totalorder %s33, 0
      %p249 = por %p247, %p248
      %s251 = sadd.s32 %s250, 1
      %p254 = scmp.eq.s32.totalorder %s27, 1
      %p255 = scmp.ne.s32.totalorder %s250, %s252
      %p256 = scmp.eq.s32.totalorder %s27, 0
      %p257 = por %p255, %p256
      %p258 = scmp.ne.s32.totalorder %s250, %s252
      %p259 = scmp.eq.s32.totalorder %s32, 1
      %p260 = por %p258, %p259
      %p261 = scmp.ne.s32.totalorder %s252, %s253
      %p262 = scmp.eq.s32.totalorder %s32, 0
      %p263 = por %p261, %p262
      %p264 = scmp.ne.s32.totalorder %s252, %s253
      %p265 = scmp.eq.s32.totalorder %s33, 1
      %p266 = por %p264, %p265
      %p268 = scmp.ne.s32.totalorder %s253, %s267
      %p269 = scmp.eq.s32.totalorder %s33, 0
      %p270 = por %p268, %p269
      %s271 = ssub.s32 %s27, %s34
      %p272 = scmp.eq.s32.totalorder %s271, 0
      %s274 = sadd.s32 %s273, 1
      %s275 = scalar_select %p272, %s273, %s274
      %p278 = pneg %p272
      %p279 = scmp.eq.s32.totalorder %s27, 1
      %p280 = por %p278, %p279
      %p281 = scmp.ne.s32.totalorder %s273, %s276
      %p282 = scmp.eq.s32.totalorder %s27, 0
      %p283 = por %p281, %p282
      %p284 = scmp.ne.s32.totalorder %s273, %s276
      %p285 = scmp.eq.s32.totalorder %s32, 1
      %p286 = por %p284, %p285
      %p287 = scmp.ne.s32.totalorder %s276, %s277
      %p288 = scmp.eq.s32.totalorder %s32, 0
      %p289 = por %p287, %p288
      %p290 = scmp.ne.s32.totalorder %s276, %s277
      %p291 = scmp.eq.s32.totalorder %s33, 1
      %p292 = por %p290, %p291
      %p294 = scmp.ne.s32.totalorder %s277, %s293
      %p295 = scmp.eq.s32.totalorder %s33, 0
      %p296 = por %p294, %p295
      %p297 = scmp.le.s32.totalorder 1, %s27
      %p298 = scmp.lt.s32.totalorder %s27, 3
      %p299 = pnand %p297, %p298
      %p300 = pneg %p299
      // Predicated region
      $region9: #{tpu_custom_call.1} parent=5 // pred_check
        _
      $region10: #{tpu_custom_call.1} parent=5 // pred_check_branch
        %302 = sbr.rel (%p299) target = $region12
      $region11: #{tpu_custom_call.1} parent=5 // pred_region
        %s303 = ssub.s32 %s27, 1
        // Predicated region
        $region13: #{tpu_custom_call.1} parent=11 // pred_check
          %p304 = pneg %p74
        $region14: #{tpu_custom_call.1} parent=11 // pred_check_branch
          %306 = sbr.rel (%p304) target = $region16
        $region15: #{tpu_custom_call.1} parent=11 // pred_region
          %s308 = ssub.s32 49152, 49152
          %309 = vsyncadd [#allocation6], %s308
          %s310 = sshll.u32 [#allocation5], 4
          %s311 = int_to_ptr.vmem [resolvable:$true] %s310
          %316 = dma.hbm_to_vmem [thread:$0]  %s1, 49152, %s311, [#allocation6], 256, 256, 16
        $region16: #{tpu_custom_call.1} parent=11 // pred_fallthru
          _
        // Predicated region
        $region17: #{tpu_custom_call.1} parent=11 // pred_check
          %p317 = pneg %p95
        $region18: #{tpu_custom_call.1} parent=11 // pred_check_branch
          %319 = sbr.rel (%p317) target = $region20
        $region19: #{tpu_custom_call.1} parent=11 // pred_region
          %s321 = ssub.s32 46080, 46080
          %322 = vsyncadd [#allocation6], %s321
          %s323 = sshll.u32 [#allocation7], 4
          %s324 = int_to_ptr.vmem [resolvable:$true] %s323
          %329 = dma.hbm_to_vmem [thread:$0]  %s2, 46080, %s324, [#allocation6], 192, 192, 12
        $region20: #{tpu_custom_call.1} parent=11 // pred_fallthru
          _
        // Predicated region
        $region21: #{tpu_custom_call.1} parent=11 // pred_check
          %p330 = pneg %p116
        $region22: #{tpu_custom_call.1} parent=11 // pred_check_branch
          %332 = sbr.rel (%p330) target = $region24
        $region23: #{tpu_custom_call.1} parent=11 // pred_region
          %s334 = ssub.s32 9216, 9216
          %335 = vsyncadd [#allocation9], %s334
          %s336 = sshll.u32 [#allocation8], 4
          %s337 = int_to_ptr.vmem [resolvable:$true] %s336
          %342 = dma.hbm_to_vmem [thread:$0]  %s3, 9216, %s337, [#allocation9], 64, 64, 4
        $region24: #{tpu_custom_call.1} parent=11 // pred_fallthru
          _
        // Predicated region
        $region25: #{tpu_custom_call.1} parent=11 // pred_check
          %p343 = pneg %p137
        $region26: #{tpu_custom_call.1} parent=11 // pred_check_branch
          %345 = sbr.rel (%p343) target = $region28
        $region27: #{tpu_custom_call.1} parent=11 // pred_region
          %s347 = ssub.s32 4096, 4096
          %348 = vsyncadd [#allocation9], %s347
          %s349 = sshll.u32 [#allocation10], 4
          %s350 = int_to_ptr.vmem [resolvable:$true] %s349
          %355 = dma.hbm_to_vmem [thread:$0]  %s4, 4096, %s350, [#allocation9], 64, 64, 4
        $region28: #{tpu_custom_call.1} parent=11 // pred_fallthru
          _
        // Predicated region
        $region29: #{tpu_custom_call.1} parent=11 // pred_check
          %p356 = pneg %p158
        $region30: #{tpu_custom_call.1} parent=11 // pred_check_branch
          %358 = sbr.rel (%p356) target = $region32
        $region31: #{tpu_custom_call.1} parent=11 // pred_region
          _
        $region32: #{tpu_custom_call.1} parent=11 // pred_fallthru
          _
        // Predicated region
        $region33: #{tpu_custom_call.1} parent=11 // pred_check
          %p359 = pneg %p179
        $region34: #{tpu_custom_call.1} parent=11 // pred_check_branch
          %361 = sbr.rel (%p359) target = $region36
        $region35: #{tpu_custom_call.1} parent=11 // pred_region
          _
        $region36: #{tpu_custom_call.1} parent=11 // pred_fallthru
          _
        // Predicated region
        $region37: #{tpu_custom_call.1} parent=11 // pred_check
          %p362 = pneg %p200
        $region38: #{tpu_custom_call.1} parent=11 // pred_check_branch
          %364 = sbr.rel (%p362) target = $region40
        $region39: #{tpu_custom_call.1} parent=11 // pred_region
          %s366 = ssub.s32 64, 64
          %367 = vsyncadd [#allocation12], %s366
          %s369 = sshll.u32 [#allocation11], 4
          %s370 = int_to_ptr.vmem [resolvable:$true] %s369
          %372 = dma.hbm_to_vmem [thread:$0]  %s7, 64, %s370, [#allocation12]
        $region40: #{tpu_custom_call.1} parent=11 // pred_fallthru
          _
        // Predicated region
        $region41: #{tpu_custom_call.1} parent=11 // pred_check
          %p373 = pneg %p221
        $region42: #{tpu_custom_call.1} parent=11 // pred_check_branch
          %375 = sbr.rel (%p373) target = $region44
        $region43: #{tpu_custom_call.1} parent=11 // pred_region
          %s377 = ssub.s32 48, 48
          %378 = vsyncadd [#allocation12], %s377
          %s380 = sshll.u32 [#allocation13], 4
          %s381 = int_to_ptr.vmem [resolvable:$true] %s380
          %383 = dma.hbm_to_vmem [thread:$0]  %s8, 48, %s381, [#allocation12]
        $region44: #{tpu_custom_call.1} parent=11 // pred_fallthru
          _
        // Predicated region
        $region45: #{tpu_custom_call.1} parent=11 // pred_check
          %p384 = pneg %p242
        $region46: #{tpu_custom_call.1} parent=11 // pred_check_branch
          %386 = sbr.rel (%p384) target = $region48
        $region47: #{tpu_custom_call.1} parent=11 // pred_region
          %s388 = ssub.s32 16, 16
          %389 = vsyncadd [#allocation15], %s388
          %s391 = sshll.u32 [#allocation14], 4
          %s392 = int_to_ptr.vmem [resolvable:$true] %s391
          %394 = dma.hbm_to_vmem [thread:$0]  %s9, 16, %s392, [#allocation15]
        $region48: #{tpu_custom_call.1} parent=11 // pred_fallthru
          _
        // Predicated region
        $region49: #{tpu_custom_call.1} parent=11 // pred_check
          %p395 = pneg %p263
        $region50: #{tpu_custom_call.1} parent=11 // pred_check_branch
          %397 = sbr.rel (%p395) target = $region52
        $region51: #{tpu_custom_call.1} parent=11 // pred_region
          %s399 = ssub.s32 16, 16
          %400 = vsyncadd [#allocation15], %s399
          %s402 = sshll.u32 [#allocation16], 4
          %s403 = int_to_ptr.vmem [resolvable:$true] %s402
          %405 = dma.hbm_to_vmem [thread:$0]  %s10, 16, %s403, [#allocation15]
        $region52: #{tpu_custom_call.1} parent=11 // pred_fallthru
          _
      $region12: #{tpu_custom_call.1} parent=5 // pred_fallthru
        _
      %p406 = scmp.lt.s32.totalorder %s27, 2
      // Predicated region
      $region53: #{tpu_custom_call.1} parent=5 // pred_check
        %p407 = pneg %p406
      $region54: #{tpu_custom_call.1} parent=5 // pred_check_branch
        %409 = sbr.rel (%p407) target = $region56
      $region55: #{tpu_custom_call.1} parent=5 // pred_region
        // Predicated region
        $region57: #{tpu_custom_call.1} parent=55 // pred_check
          %p410 = pneg %p47
        $region58: #{tpu_custom_call.1} parent=55 // pred_check_branch
          %412 = sbr.rel (%p410) target = $region60
        $region59: #{tpu_custom_call.1} parent=55 // pred_region
          %s413 = sand.u32 %s37, 1
          %s414 = scalar_lea.sflag [#allocation3], %s413
          %s415 = sand.u32 %s37, 1
          %s416 = smul.addr %s415, 64
          %s417 = scalar_lea.vmem [#allocation2], %s416
          %s419 = ssub.s32 1024, 1024
          %420 = vsyncadd %s414, %s419
          %s421 = smul.addr %s27, 16
          %s422 = smul.addr %s421, 64
          %s423 = scalar_lea.hbm %s0, %s422
          %s424 = sshll.u32 %s417, 4
          %s425 = int_to_ptr.vmem [resolvable:$true] %s424
          %430 = dma.hbm_to_vmem [thread:$0]  %s423, 1024, %s425, %s414, 128, 128, 8
        $region60: #{tpu_custom_call.1} parent=55 // pred_fallthru
          _
      $region56: #{tpu_custom_call.1} parent=5 // pred_fallthru
        _
      %p431 = scmp.le.s32.totalorder 1, %s27
      %p432 = scmp.lt.s32.totalorder %s27, 3
      %p433 = pnand %p431, %p432
      %p434 = pneg %p433
      // Predicated region
      $region61: #{tpu_custom_call.1} parent=5 // pred_check
        _
      $region62: #{tpu_custom_call.1} parent=5 // pred_check_branch
        %436 = sbr.rel (%p433) target = $region64
      $region63: #{tpu_custom_call.1} parent=5 // pred_region
        %s437 = ssub.s32 %s27, 1
        %s438 = sand.u32 %s40, 1
        %s439 = scalar_lea.sflag [#allocation3], %s438
        %s440 = sand.u32 %s40, 1
        %s441 = smul.addr %s440, 64
        %s442 = scalar_lea.vmem [#allocation2], %s441
        // Predicated region
        $region65: #{tpu_custom_call.1} parent=63 // pred_check
          %p443 = pneg %p53
        $region66: #{tpu_custom_call.1} parent=63 // pred_check_branch
          %445 = sbr.rel (%p443) target = $region68
        $region67: #{tpu_custom_call.1} parent=63 // pred_region
          %446 = dma.done %s439, 1024
        $region68: #{tpu_custom_call.1} parent=63 // pred_fallthru
          _
        // Predicated region
        $region69: #{tpu_custom_call.1} parent=63 // pred_check
          %p447 = pneg %p74
        $region70: #{tpu_custom_call.1} parent=63 // pred_check_branch
          %449 = sbr.rel (%p447) target = $region72
        $region71: #{tpu_custom_call.1} parent=63 // pred_region
          %450 = dma.done [#allocation6], 49152
        $region72: #{tpu_custom_call.1} parent=63 // pred_fallthru
          _
        // Predicated region
        $region73: #{tpu_custom_call.1} parent=63 // pred_check
          %p451 = pneg %p95
        $region74: #{tpu_custom_call.1} parent=63 // pred_check_branch
          %453 = sbr.rel (%p451) target = $region76
        $region75: #{tpu_custom_call.1} parent=63 // pred_region
          %454 = dma.done [#allocation6], 46080
        $region76: #{tpu_custom_call.1} parent=63 // pred_fallthru
          _
        // Predicated region
        $region77: #{tpu_custom_call.1} parent=63 // pred_check
          %p455 = pneg %p116
        $region78: #{tpu_custom_call.1} parent=63 // pred_check_branch
          %457 = sbr.rel (%p455) target = $region80
        $region79: #{tpu_custom_call.1} parent=63 // pred_region
          %458 = dma.done [#allocation9], 9216
        $region80: #{tpu_custom_call.1} parent=63 // pred_fallthru
          _
        // Predicated region
        $region81: #{tpu_custom_call.1} parent=63 // pred_check
          %p459 = pneg %p137
        $region82: #{tpu_custom_call.1} parent=63 // pred_check_branch
          %461 = sbr.rel (%p459) target = $region84
        $region83: #{tpu_custom_call.1} parent=63 // pred_region
          %462 = dma.done [#allocation9], 4096
        $region84: #{tpu_custom_call.1} parent=63 // pred_fallthru
          _
        // Predicated region
        $region85: #{tpu_custom_call.1} parent=63 // pred_check
          %p463 = pneg %p200
        $region86: #{tpu_custom_call.1} parent=63 // pred_check_branch
          %465 = sbr.rel (%p463) target = $region88
        $region87: #{tpu_custom_call.1} parent=63 // pred_region
          %466 = dma.done [#allocation12], 64
        $region88: #{tpu_custom_call.1} parent=63 // pred_fallthru
          _
        // Predicated region
        $region89: #{tpu_custom_call.1} parent=63 // pred_check
          %p467 = pneg %p221
        $region90: #{tpu_custom_call.1} parent=63 // pred_check_branch
          %469 = sbr.rel (%p467) target = $region92
        $region91: #{tpu_custom_call.1} parent=63 // pred_region
          %470 = dma.done [#allocation12], 48
        $region92: #{tpu_custom_call.1} parent=63 // pred_fallthru
          _
        // Predicated region
        $region93: #{tpu_custom_call.1} parent=63 // pred_check
          %p471 = pneg %p242
        $region94: #{tpu_custom_call.1} parent=63 // pred_check_branch
          %473 = sbr.rel (%p471) target = $region96
        $region95: #{tpu_custom_call.1} parent=63 // pred_region
          %474 = dma.done [#allocation15], 16
        $region96: #{tpu_custom_call.1} parent=63 // pred_fallthru
          _
        // Predicated region
        $region97: #{tpu_custom_call.1} parent=63 // pred_check
          %p475 = pneg %p263
        $region98: #{tpu_custom_call.1} parent=63 // pred_check_branch
          %477 = sbr.rel (%p475) target = $region100
        $region99: #{tpu_custom_call.1} parent=63 // pred_region
          %478 = dma.done [#allocation15], 16
        $region100: #{tpu_custom_call.1} parent=63 // pred_fallthru
          _
        %s479 = sand.u32 %s40, 1
        %s480 = scalar_lea.sflag [#allocation3], %s479
        %s481 = sand.u32 %s40, 1
        %s482 = smul.addr %s481, 64
        %s483 = scalar_lea.vmem [#allocation2], %s482
        %p484 = pneg %p53
        %p485 = pneg %p50
        %p486 = pneg %p74
        %p487 = pneg %p71
        %p488 = pneg %p95
        %p489 = pneg %p92
        %p490 = pneg %p116
        %p491 = pneg %p113
        %p492 = pneg %p137
        %p493 = pneg %p134
        %p494 = pneg %p158
        %p495 = pneg %p155
        %p496 = pneg %p179
        %p497 = pneg %p176
        %p498 = pneg %p200
        %p499 = pneg %p197
        %p500 = pneg %p221
        %p501 = pneg %p218
        %p502 = pneg %p242
        %p503 = pneg %p239
        %p504 = pneg %p263
        %p505 = pneg %p260
        %p506 = pneg %p289
        %p507 = pneg %p286
        %s508 = sand.u32 %s276, 1
        %s509 = scalar_lea.sflag [#allocation4], %s508
        %s510 = sand.u32 %s276, 1
        %s511 = scalar_lea.vmem [#allocation17], %s510
        %v513 = vld [vmem:[%s442] sm:$0xff]
        %v514 = vld [vmem:[%s442 + $0x8] sm:$0xff]
        %v515 = vld [vmem:[%s442 + $0x10] sm:$0xff]
        %v516 = vld [vmem:[%s442 + $0x18] sm:$0xff]
        %v517 = vld [vmem:[%s442 + $0x20] sm:$0xff]
        %v518 = vld [vmem:[%s442 + $0x28] sm:$0xff]
        %v519 = vld [vmem:[%s442 + $0x30] sm:$0xff]
        %v520 = vld [vmem:[%s442 + $0x38] sm:$0xff]
        %v521 = vld [vmem:[%s5] sm:$0xf]
        %v522 = vld [vmem:[%s5 + $0x4] sm:$0xf]
        %v525 = vunpack.c.l.b16 %v521
        %v526 = vunpack.c.l.b16 %v522
        %v527 = vpack.c.b16 %v526, %v525
        %v536 = vunpack.c.l.b16 %v513
        %v537 = vunpack.c.h.b16 %v513
        %v538 = vunpack.c.l.b16 %v514
        %v539 = vunpack.c.h.b16 %v514
        %v540 = vunpack.c.l.b16 %v515
        %v541 = vunpack.c.h.b16 %v515
        %v542 = vunpack.c.l.b16 %v516
        %v543 = vunpack.c.h.b16 %v516
        %v544 = vunpack.c.l.b16 %v517
        %v545 = vunpack.c.h.b16 %v517
        %v546 = vunpack.c.l.b16 %v518
        %v547 = vunpack.c.h.b16 %v518
        %v548 = vunpack.c.l.b16 %v519
        %v549 = vunpack.c.h.b16 %v519
        %v550 = vunpack.c.l.b16 %v520
        %v551 = vunpack.c.h.b16 %v520
        %v552 = vpack.c.b16 %v538, %v536
        %v553 = vpack.c.b16 %v539, %v537
        %v554 = vpack.c.b16 %v542, %v540
        %v555 = vpack.c.b16 %v543, %v541
        %v556 = vpack.c.b16 %v546, %v544
        %v557 = vpack.c.b16 %v547, %v545
        %v558 = vpack.c.b16 %v550, %v548
        %v559 = vpack.c.b16 %v551, %v549
        %vm568 = vcmask 523264
        %v570 = vsel %vm568, %v527, 0
        %572 = vmatprep.subr.bf16.mxu0 %v553
        %573 = vmatpush1.bf16.msra.mxu0 %v552
        %574 = vmatprep.subr.bf16.mxu0 %v555
        %575 = vmatpush1.bf16.msra.mxu0 %v554
        %576 = vmatprep.subr.bf16.mxu0 %v557
        %577 = vmatpush1.bf16.msra.mxu0 %v556
        %578 = vmatprep.subr.bf16.mxu0 %v559
        %579 = vmatpush1.bf16.msra.mxu0 %v558
        %580 = vmatprep.subr.bf16.mxu0 0
        %581 = vmatpush1.bf16.msra.mxu0 0
        %582 = vmatprep.subr.bf16.mxu0 0
        %583 = vmatpush1.bf16.msra.mxu0 0
        %584 = vmatprep.subr.bf16.mxu0 0
        %585 = vmatpush1.bf16.msra.mxu0 0
        %586 = vmatprep.subr.bf16.mxu0 0
        %587 = vmatpush1.bf16.msra.mxu0 0
        %588 = vmatprep.subr.bf16.mxu0 0
        %589 = vmatpush1.bf16.msra.mxu0 0
        %590 = vmatprep.subr.bf16.mxu0 0
        %591 = vmatpush1.bf16.msra.mxu0 0
        %592 = vmatprep.subr.bf16.mxu0 0
        %593 = vmatpush1.bf16.msra.mxu0 0
        %594 = vmatprep.subr.bf16.mxu0 0
        %595 = vmatpush1.bf16.msra.mxu0 0
        %596 = vmatprep.subr.bf16.mxu0 0
        %597 = vmatpush1.bf16.msra.mxu0 0
        %598 = vmatprep.subr.bf16.mxu0 0
        %599 = vmatpush1.bf16.msra.mxu0 0
        %600 = vmatprep.subr.bf16.mxu0 0
        %601 = vmatpush1.bf16.msra.mxu0 0
        %602 = vmatprep.subr.bf16.mxu0 0
        %603 = vmatpush1.bf16.msra.mxu0 0
        %604 = vmatprep.mubr.bf16.mxu0 0
        %605 = vmatmul.mubr.bf16.gmra.mrb[0].mxu0 %v570
        %v606 = vpop.f32.mrb[0].mxu0
        %v607 = vadd.f32 0.0, %v606
        %v608 = vpop.f32.mrb[0].mxu0
        %v609 = vadd.f32 0.0, %v608
        %v610 = vpop.f32.mrb[0].mxu0
        %v611 = vadd.f32 0.0, %v610
        %v612 = vpop.f32.mrb[0].mxu0
        %v613 = vadd.f32 0.0, %v612
        %614 = vdwg.mxu0
        %v615 = vpack.c.bf16 %v611, %v607
        %v616 = vpack.c.bf16 %v613, %v609
        %v617 = vld [vmem:[#allocation5] sm:$0xff]
        %v618 = vld [vmem:[#allocation5 + $0x8] sm:$0xff]
        %v619 = vld [vmem:[#allocation5 + $0x10] sm:$0xff]
        %v620 = vld [vmem:[#allocation5 + $0x18] sm:$0xff]
        %v621 = vld [vmem:[#allocation5 + $0x20] sm:$0xff]
        %v622 = vld [vmem:[#allocation5 + $0x28] sm:$0xff]
        %v623 = vld [vmem:[#allocation5 + $0x30] sm:$0xff]
        %v624 = vld [vmem:[#allocation5 + $0x38] sm:$0xff]
        %v625 = vld [vmem:[#allocation5 + $0x40] sm:$0xff]
        %v626 = vld [vmem:[#allocation5 + $0x48] sm:$0xff]
        %v627 = vld [vmem:[#allocation5 + $0x50] sm:$0xff]
        %v628 = vld [vmem:[#allocation5 + $0x58] sm:$0xff]
        %v629 = vld [vmem:[#allocation5 + $0x60] sm:$0xff]
        %v630 = vld [vmem:[#allocation5 + $0x68] sm:$0xff]
        %v631 = vld [vmem:[#allocation5 + $0x70] sm:$0xff]
        %v632 = vld [vmem:[#allocation5 + $0x78] sm:$0xff]
        %v633 = vld [vmem:[#allocation5 + $0x80] sm:$0xff]
        %v634 = vld [vmem:[#allocation5 + $0x88] sm:$0xff]
        %v635 = vld [vmem:[#allocation5 + $0x90] sm:$0xff]
        %v636 = vld [vmem:[#allocation5 + $0x98] sm:$0xff]
        %v637 = vld [vmem:[#allocation5 + $0xa0] sm:$0xff]
        %v638 = vld [vmem:[#allocation5 + $0xa8] sm:$0xff]
        %v639 = vld [vmem:[#allocation5 + $0xb0] sm:$0xff]
        %v640 = vld [vmem:[#allocation5 + $0xb8] sm:$0xff]
        %v641 = vld [vmem:[#allocation5 + $0xc0] sm:$0xff]
        %v642 = vld [vmem:[#allocation5 + $0xc8] sm:$0xff]
        %v643 = vld [vmem:[#allocation5 + $0xd0] sm:$0xff]
        %v644 = vld [vmem:[#allocation5 + $0xd8] sm:$0xff]
        %v645 = vld [vmem:[#allocation5 + $0xe0] sm:$0xff]
        %v646 = vld [vmem:[#allocation5 + $0xe8] sm:$0xff]
        %v647 = vld [vmem:[#allocation5 + $0xf0] sm:$0xff]
        %v648 = vld [vmem:[#allocation5 + $0xf8] sm:$0xff]
        %v649 = vld [vmem:[#allocation5 + $0x100] sm:$0xff]
        %v650 = vld [vmem:[#allocation5 + $0x108] sm:$0xff]
        %v651 = vld [vmem:[#allocation5 + $0x110] sm:$0xff]
        %v652 = vld [vmem:[#allocation5 + $0x118] sm:$0xff]
        %v653 = vld [vmem:[#allocation5 + $0x120] sm:$0xff]
        %v654 = vld [vmem:[#allocation5 + $0x128] sm:$0xff]
        %v655 = vld [vmem:[#allocation5 + $0x130] sm:$0xff]
        %v656 = vld [vmem:[#allocation5 + $0x138] sm:$0xff]
        %v657 = vld [vmem:[#allocation5 + $0x140] sm:$0xff]
        %v658 = vld [vmem:[#allocation5 + $0x148] sm:$0xff]
        %v659 = vld [vmem:[#allocation5 + $0x150] sm:$0xff]
        %v660 = vld [vmem:[#allocation5 + $0x158] sm:$0xff]
        %v661 = vld [vmem:[#allocation5 + $0x160] sm:$0xff]
        %v662 = vld [vmem:[#allocation5 + $0x168] sm:$0xff]
        %v663 = vld [vmem:[#allocation5 + $0x170] sm:$0xff]
        %v664 = vld [vmem:[#allocation5 + $0x178] sm:$0xff]
        %s665 = scalar_lea.vmem %s5, 8
        %v666 = vld [vmem:[%s665] sm:$0xf]
        %v667 = vld [vmem:[%s665 + $0x4] sm:$0xf]
        %v670 = vunpack.c.l.b16 %v666
        %v671 = vunpack.c.l.b16 %v667
        %v672 = vpack.c.b16 %v671, %v670
        %v674 = vsel %vm568, %v672, 0
        %676 = vmatprep.subr.bf16.mxu0 %v553
        %677 = vmatpush1.bf16.msra.mxu0 %v552
        %678 = vmatprep.subr.bf16.mxu0 %v555
        %679 = vmatpush1.bf16.msra.mxu0 %v554
        %680 = vmatprep.subr.bf16.mxu0 %v557
        %681 = vmatpush1.bf16.msra.mxu0 %v556
        %682 = vmatprep.subr.bf16.mxu0 %v559
        %683 = vmatpush1.bf16.msra.mxu0 %v558
        %684 = vmatprep.subr.bf16.mxu0 0
        %685 = vmatpush1.bf16.msra.mxu0 0
        %686 = vmatprep.subr.bf16.mxu0 0
        %687 = vmatpush1.bf16.msra.mxu0 0
        %688 = vmatprep.subr.bf16.mxu0 0
        %689 = vmatpush1.bf16.msra.mxu0 0
        %690 = vmatprep.subr.bf16.mxu0 0
        %691 = vmatpush1.bf16.msra.mxu0 0
        %692 = vmatprep.subr.bf16.mxu0 0
        %693 = vmatpush1.bf16.msra.mxu0 0
        %694 = vmatprep.subr.bf16.mxu0 0
        %695 = vmatpush1.bf16.msra.mxu0 0
        %696 = vmatprep.subr.bf16.mxu0 0
        %697 = vmatpush1.bf16.msra.mxu0 0
        %698 = vmatprep.subr.bf16.mxu0 0
        %699 = vmatpush1.bf16.msra.mxu0 0
        %700 = vmatprep.subr.bf16.mxu0 0
        %701 = vmatpush1.bf16.msra.mxu0 0
        %702 = vmatprep.subr.bf16.mxu0 0
        %703 = vmatpush1.bf16.msra.mxu0 0
        %704 = vmatprep.subr.bf16.mxu0 0
        %705 = vmatpush1.bf16.msra.mxu0 0
        %706 = vmatprep.subr.bf16.mxu0 0
        %707 = vmatpush1.bf16.msra.mxu0 0
        %708 = vmatprep.mubr.bf16.mxu0 0
        %709 = vmatmul.mubr.bf16.gmra.mrb[0].mxu0 %v674
        %v710 = vpop.f32.mrb[0].mxu0
        %v711 = vadd.f32 0.0, %v710
        %v712 = vpop.f32.mrb[0].mxu0
        %v713 = vadd.f32 0.0, %v712
        %v714 = vpop.f32.mrb[0].mxu0
        %v715 = vadd.f32 0.0, %v714
        %v716 = vpop.f32.mrb[0].mxu0
        %v717 = vadd.f32 0.0, %v716
        %718 = vdwg.mxu0
        %v719 = vpack.c.bf16 %v715, %v711
        %v720 = vpack.c.bf16 %v717, %v713
        %s721 = scalar_lea.vmem [#allocation5], 384
        %v722 = vld [vmem:[%s721] sm:$0xff]
        %v723 = vld [vmem:[%s721 + $0x8] sm:$0xff]
        %v724 = vld [vmem:[%s721 + $0x10] sm:$0xff]
        %v725 = vld [vmem:[%s721 + $0x18] sm:$0xff]
        %v726 = vld [vmem:[%s721 + $0x20] sm:$0xff]
        %v727 = vld [vmem:[%s721 + $0x28] sm:$0xff]
        %v728 = vld [vmem:[%s721 + $0x30] sm:$0xff]
        %v729 = vld [vmem:[%s721 + $0x38] sm:$0xff]
        %v730 = vld [vmem:[%s721 + $0x40] sm:$0xff]
        %v731 = vld [vmem:[%s721 + $0x48] sm:$0xff]
        %v732 = vld [vmem:[%s721 + $0x50] sm:$0xff]
        %v733 = vld [vmem:[%s721 + $0x58] sm:$0xff]
        %v734 = vld [vmem:[%s721 + $0x60] sm:$0xff]
        %v735 = vld [vmem:[%s721 + $0x68] sm:$0xff]
        %v736 = vld [vmem:[%s721 + $0x70] sm:$0xff]
        %v737 = vld [vmem:[%s721 + $0x78] sm:$0xff]
        %v738 = vld [vmem:[%s721 + $0x80] sm:$0xff]
        %v739 = vld [vmem:[%s721 + $0x88] sm:$0xff]
        %v740 = vld [vmem:[%s721 + $0x90] sm:$0xff]
        %v741 = vld [vmem:[%s721 + $0x98] sm:$0xff]
        %v742 = vld [vmem:[%s721 + $0xa0] sm:$0xff]
        %v743 = vld [vmem:[%s721 + $0xa8] sm:$0xff]
        %v744 = vld [vmem:[%s721 + $0xb0] sm:$0xff]
        %v745 = vld [vmem:[%s721 + $0xb8] sm:$0xff]
        %v746 = vld [vmem:[%s721 + $0xc0] sm:$0xff]
        %v747 = vld [vmem:[%s721 + $0xc8] sm:$0xff]
        %v748 = vld [vmem:[%s721 + $0xd0] sm:$0xff]
        %v749 = vld [vmem:[%s721 + $0xd8] sm:$0xff]
        %v750 = vld [vmem:[%s721 + $0xe0] sm:$0xff]
        %v751 = vld [vmem:[%s721 + $0xe8] sm:$0xff]
        %v752 = vld [vmem:[%s721 + $0xf0] sm:$0xff]
        %v753 = vld [vmem:[%s721 + $0xf8] sm:$0xff]
        %v754 = vld [vmem:[%s721 + $0x100] sm:$0xff]
        %v755 = vld [vmem:[%s721 + $0x108] sm:$0xff]
        %v756 = vld [vmem:[%s721 + $0x110] sm:$0xff]
        %v757 = vld [vmem:[%s721 + $0x118] sm:$0xff]
        %v758 = vld [vmem:[%s721 + $0x120] sm:$0xff]
        %v759 = vld [vmem:[%s721 + $0x128] sm:$0xff]
        %v760 = vld [vmem:[%s721 + $0x130] sm:$0xff]
        %v761 = vld [vmem:[%s721 + $0x138] sm:$0xff]
        %v762 = vld [vmem:[%s721 + $0x140] sm:$0xff]
        %v763 = vld [vmem:[%s721 + $0x148] sm:$0xff]
        %v764 = vld [vmem:[%s721 + $0x150] sm:$0xff]
        %v765 = vld [vmem:[%s721 + $0x158] sm:$0xff]
        %v766 = vld [vmem:[%s721 + $0x160] sm:$0xff]
        %v767 = vld [vmem:[%s721 + $0x168] sm:$0xff]
        %v768 = vld [vmem:[%s721 + $0x170] sm:$0xff]
        %v769 = vld [vmem:[%s721 + $0x178] sm:$0xff]
        %v818 = vunpack.c.l.b16 %v722
        %v819 = vunpack.c.h.b16 %v722
        %v820 = vunpack.c.l.b16 %v723
        %v821 = vunpack.c.h.b16 %v723
        %v822 = vunpack.c.l.b16 %v724
        %v823 = vunpack.c.h.b16 %v724
        %v824 = vunpack.c.l.b16 %v725
        %v825 = vunpack.c.h.b16 %v725
        %v826 = vunpack.c.l.b16 %v726
        %v827 = vunpack.c.h.b16 %v726
        %v828 = vunpack.c.l.b16 %v727
        %v829 = vunpack.c.h.b16 %v727
        %v830 = vunpack.c.l.b16 %v728
        %v831 = vunpack.c.h.b16 %v728
        %v832 = vunpack.c.l.b16 %v729
        %v833 = vunpack.c.h.b16 %v729
        %v834 = vunpack.c.l.b16 %v730
        %v835 = vunpack.c.h.b16 %v730
        %v836 = vunpack.c.l.b16 %v731
        %v837 = vunpack.c.h.b16 %v731
        %v838 = vunpack.c.l.b16 %v732
        %v839 = vunpack.c.h.b16 %v732
        %v840 = vunpack.c.l.b16 %v733
        %v841 = vunpack.c.h.b16 %v733
        %v842 = vunpack.c.l.b16 %v734
        %v843 = vunpack.c.h.b16 %v734
        %v844 = vunpack.c.l.b16 %v735
        %v845 = vunpack.c.h.b16 %v735
        %v846 = vunpack.c.l.b16 %v736
        %v847 = vunpack.c.h.b16 %v736
        %v848 = vunpack.c.l.b16 %v737
        %v849 = vunpack.c.h.b16 %v737
        %v850 = vunpack.c.l.b16 %v738
        %v851 = vunpack.c.h.b16 %v738
        %v852 = vunpack.c.l.b16 %v739
        %v853 = vunpack.c.h.b16 %v739
        %v854 = vunpack.c.l.b16 %v740
        %v855 = vunpack.c.h.b16 %v740
        %v856 = vunpack.c.l.b16 %v741
        %v857 = vunpack.c.h.b16 %v741
        %v858 = vunpack.c.l.b16 %v742
        %v859 = vunpack.c.h.b16 %v742
        %v860 = vunpack.c.l.b16 %v743
        %v861 = vunpack.c.h.b16 %v743
        %v862 = vunpack.c.l.b16 %v744
        %v863 = vunpack.c.h.b16 %v744
        %v864 = vunpack.c.l.b16 %v745
        %v865 = vunpack.c.h.b16 %v745
        %v866 = vunpack.c.l.b16 %v746
        %v867 = vunpack.c.h.b16 %v746
        %v868 = vunpack.c.l.b16 %v747
        %v869 = vunpack.c.h.b16 %v747
        %v870 = vunpack.c.l.b16 %v748
        %v871 = vunpack.c.h.b16 %v748
        %v872 = vunpack.c.l.b16 %v749
        %v873 = vunpack.c.h.b16 %v749
        %v874 = vunpack.c.l.b16 %v750
        %v875 = vunpack.c.h.b16 %v750
        %v876 = vunpack.c.l.b16 %v751
        %v877 = vunpack.c.h.b16 %v751
        %v878 = vunpack.c.l.b16 %v752
        %v879 = vunpack.c.h.b16 %v752
        %v880 = vunpack.c.l.b16 %v753
        %v881 = vunpack.c.h.b16 %v753
        %v882 = vunpack.c.l.b16 %v754
        %v883 = vunpack.c.h.b16 %v754
        %v884 = vunpack.c.l.b16 %v755
        %v885 = vunpack.c.h.b16 %v755
        %v886 = vunpack.c.l.b16 %v756
        %v887 = vunpack.c.h.b16 %v756
        %v888 = vunpack.c.l.b16 %v757
        %v889 = vunpack.c.h.b16 %v757
        %v890 = vunpack.c.l.b16 %v758
        %v891 = vunpack.c.h.b16 %v758
        %v892 = vunpack.c.l.b16 %v759
        %v893 = vunpack.c.h.b16 %v759
        %v894 = vunpack.c.l.b16 %v760
        %v895 = vunpack.c.h.b16 %v760
        %v896 = vunpack.c.l.b16 %v761
        %v897 = vunpack.c.h.b16 %v761
        %v898 = vunpack.c.l.b16 %v762
        %v899 = vunpack.c.h.b16 %v762
        %v900 = vunpack.c.l.b16 %v763
        %v901 = vunpack.c.h.b16 %v763
        %v902 = vunpack.c.l.b16 %v764
        %v903 = vunpack.c.h.b16 %v764
        %v904 = vunpack.c.l.b16 %v765
        %v905 = vunpack.c.h.b16 %v765
        %v906 = vunpack.c.l.b16 %v766
        %v907 = vunpack.c.h.b16 %v766
        %v908 = vunpack.c.l.b16 %v767
        %v909 = vunpack.c.h.b16 %v767
        %v910 = vunpack.c.l.b16 %v768
        %v911 = vunpack.c.h.b16 %v768
        %v912 = vunpack.c.l.b16 %v769
        %v913 = vunpack.c.h.b16 %v769
        %v914 = vpack.c.b16 %v822, %v818
        %v915 = vpack.c.b16 %v823, %v819
        %v916 = vpack.c.b16 %v824, %v820
        %v917 = vpack.c.b16 %v825, %v821
        %v918 = vpack.c.b16 %v830, %v826
        %v919 = vpack.c.b16 %v831, %v827
        %v920 = vpack.c.b16 %v832, %v828
        %v921 = vpack.c.b16 %v833, %v829
        %v922 = vpack.c.b16 %v838, %v834
        %v923 = vpack.c.b16 %v839, %v835
        %v924 = vpack.c.b16 %v840, %v836
        %v925 = vpack.c.b16 %v841, %v837
        %v926 = vpack.c.b16 %v846, %v842
        %v927 = vpack.c.b16 %v847, %v843
        %v928 = vpack.c.b16 %v848, %v844
        %v929 = vpack.c.b16 %v849, %v845
        %v930 = vpack.c.b16 %v854, %v850
        %v931 = vpack.c.b16 %v855, %v851
        %v932 = vpack.c.b16 %v856, %v852
        %v933 = vpack.c.b16 %v857, %v853
        %v934 = vpack.c.b16 %v862, %v858
        %v935 = vpack.c.b16 %v863, %v859
        %v936 = vpack.c.b16 %v864, %v860
        %v937 = vpack.c.b16 %v865, %v861
        %v938 = vpack.c.b16 %v870, %v866
        %v939 = vpack.c.b16 %v871, %v867
        %v940 = vpack.c.b16 %v872, %v868
        %v941 = vpack.c.b16 %v873, %v869
        %v942 = vpack.c.b16 %v878, %v874
        %v943 = vpack.c.b16 %v879, %v875
        %v944 = vpack.c.b16 %v880, %v876
        %v945 = vpack.c.b16 %v881, %v877
        %v946 = vpack.c.b16 %v886, %v882
        %v947 = vpack.c.b16 %v887, %v883
        %v948 = vpack.c.b16 %v888, %v884
        %v949 = vpack.c.b16 %v889, %v885
        %v950 = vpack.c.b16 %v894, %v890
        %v951 = vpack.c.b16 %v895, %v891
        %v952 = vpack.c.b16 %v896, %v892
        %v953 = vpack.c.b16 %v897, %v893
        %v954 = vpack.c.b16 %v902, %v898
        %v955 = vpack.c.b16 %v903, %v899
        %v956 = vpack.c.b16 %v904, %v900
        %v957 = vpack.c.b16 %v905, %v901
        %v958 = vpack.c.b16 %v910, %v906
        %v959 = vpack.c.b16 %v911, %v907
        %v960 = vpack.c.b16 %v912, %v908
        %v961 = vpack.c.b16 %v913, %v909
        %v1011 = vsel %vm568, %v720, 0
        %1013 = vmatprep.subr.bf16.mxu0 %v915
        %1014 = vmatpush1.bf16.msra.mxu0 %v914
        %1015 = vmatprep.subr.bf16.mxu0 %v919
        %1016 = vmatpush1.bf16.msra.mxu0 %v918
        %1017 = vmatprep.subr.bf16.mxu0 %v923
        %1018 = vmatpush1.bf16.msra.mxu0 %v922
        %1019 = vmatprep.subr.bf16.mxu0 %v927
        %1020 = vmatpush1.bf16.msra.mxu0 %v926
        %1021 = vmatprep.subr.bf16.mxu0 %v931
        %1022 = vmatpush1.bf16.msra.mxu0 %v930
        %1023 = vmatprep.subr.bf16.mxu0 %v935
        %1024 = vmatpush1.bf16.msra.mxu0 %v934
        %1025 = vmatprep.subr.bf16.mxu0 %v939
        %1026 = vmatpush1.bf16.msra.mxu0 %v938
        %1027 = vmatprep.subr.bf16.mxu0 %v943
        %1028 = vmatpush1.bf16.msra.mxu0 %v942
        %1029 = vmatprep.subr.bf16.mxu0 %v947
        %1030 = vmatpush1.bf16.msra.mxu0 %v946
        %1031 = vmatprep.subr.bf16.mxu0 %v951
        %1032 = vmatpush1.bf16.msra.mxu0 %v950
        %1033 = vmatprep.subr.bf16.mxu0 %v955
        %1034 = vmatpush1.bf16.msra.mxu0 %v954
        %1035 = vmatprep.subr.bf16.mxu0 %v959
        %1036 = vmatpush1.bf16.msra.mxu0 %v958
        %1037 = vmatprep.subr.bf16.mxu0 0
        %1038 = vmatpush1.bf16.msra.mxu0 0
        %1039 = vmatprep.subr.bf16.mxu0 0
        %1040 = vmatpush1.bf16.msra.mxu0 0
        %1041 = vmatprep.subr.bf16.mxu0 0
        %1042 = vmatpush1.bf16.msra.mxu0 0
        %1043 = vmatprep.subr.bf16.mxu0 0
        %1044 = vmatpush1.bf16.msra.mxu0 0
        %1045 = vmatprep.mubr.bf16.mxu0 %v1011
        %1046 = vmatmul.mubr.bf16.gmra.mrb[0].mxu0 %v719
        %v1047 = vpop.f32.mrb[0].mxu0
        %v1048 = vadd.f32 0.0, %v1047
        %v1049 = vpop.f32.mrb[0].mxu0
        %v1050 = vadd.f32 0.0, %v1049
        %v1051 = vpop.f32.mrb[0].mxu0
        %v1052 = vadd.f32 0.0, %v1051
        %v1053 = vpop.f32.mrb[0].mxu0
        %v1054 = vadd.f32 0.0, %v1053
        %1055 = vdwg.mxu0
        %1056 = vmatprep.subr.bf16.mxu0 %v917
        %1057 = vmatpush1.bf16.msra.mxu0 %v916
        %1058 = vmatprep.subr.bf16.mxu0 %v921
        %1059 = vmatpush1.bf16.msra.mxu0 %v920
        %1060 = vmatprep.subr.bf16.mxu0 %v925
        %1061 = vmatpush1.bf16.msra.mxu0 %v924
        %1062 = vmatprep.subr.bf16.mxu0 %v929
        %1063 = vmatpush1.bf16.msra.mxu0 %v928
        %1064 = vmatprep.subr.bf16.mxu0 %v933
        %1065 = vmatpush1.bf16.msra.mxu0 %v932
        %1066 = vmatprep.subr.bf16.mxu0 %v937
        %1067 = vmatpush1.bf16.msra.mxu0 %v936
        %1068 = vmatprep.subr.bf16.mxu0 %v941
        %1069 = vmatpush1.bf16.msra.mxu0 %v940
        %1070 = vmatprep.subr.bf16.mxu0 %v945
        %1071 = vmatpush1.bf16.msra.mxu0 %v944
        %1072 = vmatprep.subr.bf16.mxu0 %v949
        %1073 = vmatpush1.bf16.msra.mxu0 %v948
        %1074 = vmatprep.subr.bf16.mxu0 %v953
        %1075 = vmatpush1.bf16.msra.mxu0 %v952
        %1076 = vmatprep.subr.bf16.mxu0 %v957
        %1077 = vmatpush1.bf16.msra.mxu0 %v956
        %1078 = vmatprep.subr.bf16.mxu0 %v961
        %1079 = vmatpush1.bf16.msra.mxu0 %v960
        %1080 = vmatprep.subr.bf16.mxu0 0
        %1081 = vmatpush1.bf16.msra.mxu0 0
        %1082 = vmatprep.subr.bf16.mxu0 0
        %1083 = vmatpush1.bf16.msra.mxu0 0
        %1084 = vmatprep.subr.bf16.mxu0 0
        %1085 = vmatpush1.bf16.msra.mxu0 0
        %1086 = vmatprep.subr.bf16.mxu0 0
        %1087 = vmatpush1.bf16.msra.mxu0 0
        %1088 = vmatprep.mubr.bf16.mxu0 %v1011
        %1089 = vmatmul.mubr.bf16.gmra.mrb[0].mxu0 %v719
        %v1090 = vpop.f32.mrb[0].mxu0
        %v1091 = vadd.f32 0.0, %v1090
        %v1092 = vpop.f32.mrb[0].mxu0
        %v1093 = vadd.f32 0.0, %v1092
        %v1094 = vpop.f32.mrb[0].mxu0
        %v1095 = vadd.f32 0.0, %v1094
        %v1096 = vpop.f32.mrb[0].mxu0
        %v1097 = vadd.f32 0.0, %v1096
        %1098 = vdwg.mxu0
        %v1147 = vunpack.c.l.b16 %v617
        %v1148 = vunpack.c.h.b16 %v617
        %v1149 = vunpack.c.l.b16 %v618
        %v1150 = vunpack.c.h.b16 %v618
        %v1151 = vunpack.c.l.b16 %v619
        %v1152 = vunpack.c.h.b16 %v619
        %v1153 = vunpack.c.l.b16 %v620
        %v1154 = vunpack.c.h.b16 %v620
        %v1155 = vunpack.c.l.b16 %v621
        %v1156 = vunpack.c.h.b16 %v621
        %v1157 = vunpack.c.l.b16 %v622
        %v1158 = vunpack.c.h.b16 %v622
        %v1159 = vunpack.c.l.b16 %v623
        %v1160 = vunpack.c.h.b16 %v623
        %v1161 = vunpack.c.l.b16 %v624
        %v1162 = vunpack.c.h.b16 %v624
        %v1163 = vunpack.c.l.b16 %v625
        %v1164 = vunpack.c.h.b16 %v625
        %v1165 = vunpack.c.l.b16 %v626
        %v1166 = vunpack.c.h.b16 %v626
        %v1167 = vunpack.c.l.b16 %v627
        %v1168 = vunpack.c.h.b16 %v627
        %v1169 = vunpack.c.l.b16 %v628
        %v1170 = vunpack.c.h.b16 %v628
        %v1171 = vunpack.c.l.b16 %v629
        %v1172 = vunpack.c.h.b16 %v629
        %v1173 = vunpack.c.l.b16 %v630
        %v1174 = vunpack.c.h.b16 %v630
        %v1175 = vunpack.c.l.b16 %v631
        %v1176 = vunpack.c.h.b16 %v631
        %v1177 = vunpack.c.l.b16 %v632
        %v1178 = vunpack.c.h.b16 %v632
        %v1179 = vunpack.c.l.b16 %v633
        %v1180 = vunpack.c.h.b16 %v633
        %v1181 = vunpack.c.l.b16 %v634
        %v1182 = vunpack.c.h.b16 %v634
        %v1183 = vunpack.c.l.b16 %v635
        %v1184 = vunpack.c.h.b16 %v635
        %v1185 = vunpack.c.l.b16 %v636
        %v1186 = vunpack.c.h.b16 %v636
        %v1187 = vunpack.c.l.b16 %v637
        %v1188 = vunpack.c.h.b16 %v637
        %v1189 = vunpack.c.l.b16 %v638
        %v1190 = vunpack.c.h.b16 %v638
        %v1191 = vunpack.c.l.b16 %v639
        %v1192 = vunpack.c.h.b16 %v639
        %v1193 = vunpack.c.l.b16 %v640
        %v1194 = vunpack.c.h.b16 %v640
        %v1195 = vunpack.c.l.b16 %v641
        %v1196 = vunpack.c.h.b16 %v641
        %v1197 = vunpack.c.l.b16 %v642
        %v1198 = vunpack.c.h.b16 %v642
        %v1199 = vunpack.c.l.b16 %v643
        %v1200 = vunpack.c.h.b16 %v643
        %v1201 = vunpack.c.l.b16 %v644
        %v1202 = vunpack.c.h.b16 %v644
        %v1203 = vunpack.c.l.b16 %v645
        %v1204 = vunpack.c.h.b16 %v645
        %v1205 = vunpack.c.l.b16 %v646
        %v1206 = vunpack.c.h.b16 %v646
        %v1207 = vunpack.c.l.b16 %v647
        %v1208 = vunpack.c.h.b16 %v647
        %v1209 = vunpack.c.l.b16 %v648
        %v1210 = vunpack.c.h.b16 %v648
        %v1211 = vunpack.c.l.b16 %v649
        %v1212 = vunpack.c.h.b16 %v649
        %v1213 = vunpack.c.l.b16 %v650
        %v1214 = vunpack.c.h.b16 %v650
        %v1215 = vunpack.c.l.b16 %v651
        %v1216 = vunpack.c.h.b16 %v651
        %v1217 = vunpack.c.l.b16 %v652
        %v1218 = vunpack.c.h.b16 %v652
        %v1219 = vunpack.c.l.b16 %v653
        %v1220 = vunpack.c.h.b16 %v653
        %v1221 = vunpack.c.l.b16 %v654
        %v1222 = vunpack.c.h.b16 %v654
        %v1223 = vunpack.c.l.b16 %v655
        %v1224 = vunpack.c.h.b16 %v655
        %v1225 = vunpack.c.l.b16 %v656
        %v1226 = vunpack.c.h.b16 %v656
        %v1227 = vunpack.c.l.b16 %v657
        %v1228 = vunpack.c.h.b16 %v657
        %v1229 = vunpack.c.l.b16 %v658
        %v1230 = vunpack.c.h.b16 %v658
        %v1231 = vunpack.c.l.b16 %v659
        %v1232 = vunpack.c.h.b16 %v659
        %v1233 = vunpack.c.l.b16 %v660
        %v1234 = vunpack.c.h.b16 %v660
        %v1235 = vunpack.c.l.b16 %v661
        %v1236 = vunpack.c.h.b16 %v661
        %v1237 = vunpack.c.l.b16 %v662
        %v1238 = vunpack.c.h.b16 %v662
        %v1239 = vunpack.c.l.b16 %v663
        %v1240 = vunpack.c.h.b16 %v663
        %v1241 = vunpack.c.l.b16 %v664
        %v1242 = vunpack.c.h.b16 %v664
        %v1243 = vpack.c.b16 %v1151, %v1147
        %v1244 = vpack.c.b16 %v1152, %v1148
        %v1245 = vpack.c.b16 %v1153, %v1149
        %v1246 = vpack.c.b16 %v1154, %v1150
        %v1247 = vpack.c.b16 %v1159, %v1155
        %v1248 = vpack.c.b16 %v1160, %v1156
        %v1249 = vpack.c.b16 %v1161, %v1157
        %v1250 = vpack.c.b16 %v1162, %v1158
        %v1251 = vpack.c.b16 %v1167, %v1163
        %v1252 = vpack.c.b16 %v1168, %v1164
        %v1253 = vpack.c.b16 %v1169, %v1165
        %v1254 = vpack.c.b16 %v1170, %v1166
        %v1255 = vpack.c.b16 %v1175, %v1171
        %v1256 = vpack.c.b16 %v1176, %v1172
        %v1257 = vpack.c.b16 %v1177, %v1173
        %v1258 = vpack.c.b16 %v1178, %v1174
        %v1259 = vpack.c.b16 %v1183, %v1179
        %v1260 = vpack.c.b16 %v1184, %v1180
        %v1261 = vpack.c.b16 %v1185, %v1181
        %v1262 = vpack.c.b16 %v1186, %v1182
        %v1263 = vpack.c.b16 %v1191, %v1187
        %v1264 = vpack.c.b16 %v1192, %v1188
        %v1265 = vpack.c.b16 %v1193, %v1189
        %v1266 = vpack.c.b16 %v1194, %v1190
        %v1267 = vpack.c.b16 %v1199, %v1195
        %v1268 = vpack.c.b16 %v1200, %v1196
        %v1269 = vpack.c.b16 %v1201, %v1197
        %v1270 = vpack.c.b16 %v1202, %v1198
        %v1271 = vpack.c.b16 %v1207, %v1203
        %v1272 = vpack.c.b16 %v1208, %v1204
        %v1273 = vpack.c.b16 %v1209, %v1205
        %v1274 = vpack.c.b16 %v1210, %v1206
        %v1275 = vpack.c.b16 %v1215, %v1211
        %v1276 = vpack.c.b16 %v1216, %v1212
        %v1277 = vpack.c.b16 %v1217, %v1213
        %v1278 = vpack.c.b16 %v1218, %v1214
        %v1279 = vpack.c.b16 %v1223, %v1219
        %v1280 = vpack.c.b16 %v1224, %v1220
        %v1281 = vpack.c.b16 %v1225, %v1221
        %v1282 = vpack.c.b16 %v1226, %v1222
        %v1283 = vpack.c.b16 %v1231, %v1227
        %v1284 = vpack.c.b16 %v1232, %v1228
        %v1285 = vpack.c.b16 %v1233, %v1229
        %v1286 = vpack.c.b16 %v1234, %v1230
        %v1287 = vpack.c.b16 %v1239, %v1235
        %v1288 = vpack.c.b16 %v1240, %v1236
        %v1289 = vpack.c.b16 %v1241, %v1237
        %v1290 = vpack.c.b16 %v1242, %v1238
        %v1340 = vsel %vm568, %v616, 0
        %1342 = vmatprep.subr.bf16.mxu0 %v1244
        %1343 = vmatpush1.bf16.msra.mxu0 %v1243
        %1344 = vmatprep.subr.bf16.mxu0 %v1248
        %1345 = vmatpush1.bf16.msra.mxu0 %v1247
        %1346 = vmatprep.subr.bf16.mxu0 %v1252
        %1347 = vmatpush1.bf16.msra.mxu0 %v1251
        %1348 = vmatprep.subr.bf16.mxu0 %v1256
        %1349 = vmatpush1.bf16.msra.mxu0 %v1255
        %1350 = vmatprep.subr.bf16.mxu0 %v1260
        %1351 = vmatpush1.bf16.msra.mxu0 %v1259
        %1352 = vmatprep.subr.bf16.mxu0 %v1264
        %1353 = vmatpush1.bf16.msra.mxu0 %v1263
        %1354 = vmatprep.subr.bf16.mxu0 %v1268
        %1355 = vmatpush1.bf16.msra.mxu0 %v1267
        %1356 = vmatprep.subr.bf16.mxu0 %v1272
        %1357 = vmatpush1.bf16.msra.mxu0 %v1271
        %1358 = vmatprep.subr.bf16.mxu0 %v1276
        %1359 = vmatpush1.bf16.msra.mxu0 %v1275
        %1360 = vmatprep.subr.bf16.mxu0 %v1280
        %1361 = vmatpush1.bf16.msra.mxu0 %v1279
        %1362 = vmatprep.subr.bf16.mxu0 %v1284
        %1363 = vmatpush1.bf16.msra.mxu0 %v1283
        %1364 = vmatprep.subr.bf16.mxu0 %v1288
        %1365 = vmatpush1.bf16.msra.mxu0 %v1287
        %1366 = vmatprep.subr.bf16.mxu0 0
        %1367 = vmatpush1.bf16.msra.mxu0 0
        %1368 = vmatprep.subr.bf16.mxu0 0
        %1369 = vmatpush1.bf16.msra.mxu0 0
        %1370 = vmatprep.subr.bf16.mxu0 0
        %1371 = vmatpush1.bf16.msra.mxu0 0
        %1372 = vmatprep.subr.bf16.mxu0 0
        %1373 = vmatpush1.bf16.msra.mxu0 0
        %1374 = vmatprep.mubr.bf16.mxu0 %v1340
        %1375 = vmatmul.mubr.bf16.gmra.mrb[0].mxu0 %v615
        %v1376 = vpop.f32.mrb[0].mxu0
        %v1377 = vadd.f32 %v1048, %v1376
        %v1378 = vpop.f32.mrb[0].mxu0
        %v1379 = vadd.f32 %v1050, %v1378
        %v1380 = vpop.f32.mrb[0].mxu0
        %v1381 = vadd.f32 %v1052, %v1380
        %v1382 = vpop.f32.mrb[0].mxu0
        %v1383 = vadd.f32 %v1054, %v1382
        %1384 = vdwg.mxu0
        %1385 = vmatprep.subr.bf16.mxu0 %v1246
        %1386 = vmatpush1.bf16.msra.mxu0 %v1245
        %1387 = vmatprep.subr.bf16.mxu0 %v1250
        %1388 = vmatpush1.bf16.msra.mxu0 %v1249
        %1389 = vmatprep.subr.bf16.mxu0 %v1254
        %1390 = vmatpush1.bf16.msra.mxu0 %v1253
        %1391 = vmatprep.subr.bf16.mxu0 %v1258
        %1392 = vmatpush1.bf16.msra.mxu0 %v1257
        %1393 = vmatprep.subr.bf16.mxu0 %v1262
        %1394 = vmatpush1.bf16.msra.mxu0 %v1261
        %1395 = vmatprep.subr.bf16.mxu0 %v1266
        %1396 = vmatpush1.bf16.msra.mxu0 %v1265
        %1397 = vmatprep.subr.bf16.mxu0 %v1270
        %1398 = vmatpush1.bf16.msra.mxu0 %v1269
        %1399 = vmatprep.subr.bf16.mxu0 %v1274
        %1400 = vmatpush1.bf16.msra.mxu0 %v1273
        %1401 = vmatprep.subr.bf16.mxu0 %v1278
        %1402 = vmatpush1.bf16.msra.mxu0 %v1277
        %1403 = vmatprep.subr.bf16.mxu0 %v1282
        %1404 = vmatpush1.bf16.msra.mxu0 %v1281
        %1405 = vmatprep.subr.bf16.mxu0 %v1286
        %1406 = vmatpush1.bf16.msra.mxu0 %v1285
        %1407 = vmatprep.subr.bf16.mxu0 %v1290
        %1408 = vmatpush1.bf16.msra.mxu0 %v1289
        %1409 = vmatprep.subr.bf16.mxu0 0
        %1410 = vmatpush1.bf16.msra.mxu0 0
        %1411 = vmatprep.subr.bf16.mxu0 0
        %1412 = vmatpush1.bf16.msra.mxu0 0
        %1413 = vmatprep.subr.bf16.mxu0 0
        %1414 = vmatpush1.bf16.msra.mxu0 0
        %1415 = vmatprep.subr.bf16.mxu0 0
        %1416 = vmatpush1.bf16.msra.mxu0 0
        %1417 = vmatprep.mubr.bf16.mxu0 %v1340
        %1418 = vmatmul.mubr.bf16.gmra.mrb[0].mxu0 %v615
        %v1419 = vpop.f32.mrb[0].mxu0
        %v1420 = vadd.f32 %v1091, %v1419
        %v1421 = vpop.f32.mrb[0].mxu0
        %v1422 = vadd.f32 %v1093, %v1421
        %v1423 = vpop.f32.mrb[0].mxu0
        %v1424 = vadd.f32 %v1095, %v1423
        %v1425 = vpop.f32.mrb[0].mxu0
        %v1426 = vadd.f32 %v1097, %v1425
        %1427 = vdwg.mxu0
        %s1428 = scalar_lea.vmem %s5, 16
        %v1429 = vld [vmem:[%s1428] sm:$0xf]
        %v1430 = vld [vmem:[%s1428 + $0x4] sm:$0xf]
        %v1433 = vunpack.c.l.b16 %v1429
        %v1434 = vunpack.c.l.b16 %v1430
        %v1435 = vpack.c.b16 %v1434, %v1433
        %v1437 = vsel %vm568, %v1435, 0
        %1439 = vmatprep.subr.bf16.mxu0 %v553
        %1440 = vmatpush1.bf16.msra.mxu0 %v552
        %1441 = vmatprep.subr.bf16.mxu0 %v555
        %1442 = vmatpush1.bf16.msra.mxu0 %v554
        %1443 = vmatprep.subr.bf16.mxu0 %v557
        %1444 = vmatpush1.bf16.msra.mxu0 %v556
        %1445 = vmatprep.subr.bf16.mxu0 %v559
        %1446 = vmatpush1.bf16.msra.mxu0 %v558
        %1447 = vmatprep.subr.bf16.mxu0 0
        %1448 = vmatpush1.bf16.msra.mxu0 0
        %1449 = vmatprep.subr.bf16.mxu0 0
        %1450 = vmatpush1.bf16.msra.mxu0 0
        %1451 = vmatprep.subr.bf16.mxu0 0
        %1452 = vmatpush1.bf16.msra.mxu0 0
        %1453 = vmatprep.subr.bf16.mxu0 0
        %1454 = vmatpush1.bf16.msra.mxu0 0
        %1455 = vmatprep.subr.bf16.mxu0 0
        %1456 = vmatpush1.bf16.msra.mxu0 0
        %1457 = vmatprep.subr.bf16.mxu0 0
        %1458 = vmatpush1.bf16.msra.mxu0 0
        %1459 = vmatprep.subr.bf16.mxu0 0
        %1460 = vmatpush1.bf16.msra.mxu0 0
        %1461 = vmatprep.subr.bf16.mxu0 0
        %1462 = vmatpush1.bf16.msra.mxu0 0
        %1463 = vmatprep.subr.bf16.mxu0 0
        %1464 = vmatpush1.bf16.msra.mxu0 0
        %1465 = vmatprep.subr.bf16.mxu0 0
        %1466 = vmatpush1.bf16.msra.mxu0 0
        %1467 = vmatprep.subr.bf16.mxu0 0
        %1468 = vmatpush1.bf16.msra.mxu0 0
        %1469 = vmatprep.subr.bf16.mxu0 0
        %1470 = vmatpush1.bf16.msra.mxu0 0
        %1471 = vmatprep.mubr.bf16.mxu0 0
        %1472 = vmatmul.mubr.bf16.gmra.mrb[0].mxu0 %v1437
        %v1473 = vpop.f32.mrb[0].mxu0
        %v1474 = vadd.f32 0.0, %v1473
        %v1475 = vpop.f32.mrb[0].mxu0
        %v1476 = vadd.f32 0.0, %v1475
        %v1477 = vpop.f32.mrb[0].mxu0
        %v1478 = vadd.f32 0.0, %v1477
        %v1479 = vpop.f32.mrb[0].mxu0
        %v1480 = vadd.f32 0.0, %v1479
        %1481 = vdwg.mxu0
        %v1482 = vpack.c.bf16 %v1478, %v1474
        %v1483 = vpack.c.bf16 %v1480, %v1476
        %s1484 = scalar_lea.vmem [#allocation5], 768
        %v1485 = vld [vmem:[%s1484] sm:$0xff]
        %v1486 = vld [vmem:[%s1484 + $0x8] sm:$0xff]
        %v1487 = vld [vmem:[%s1484 + $0x10] sm:$0xff]
        %v1488 = vld [vmem:[%s1484 + $0x18] sm:$0xff]
        %v1489 = vld [vmem:[%s1484 + $0x20] sm:$0xff]
        %v1490 = vld [vmem:[%s1484 + $0x28] sm:$0xff]
        %v1491 = vld [vmem:[%s1484 + $0x30] sm:$0xff]
        %v1492 = vld [vmem:[%s1484 + $0x38] sm:$0xff]
        %v1493 = vld [vmem:[%s1484 + $0x40] sm:$0xff]
        %v1494 = vld [vmem:[%s1484 + $0x48] sm:$0xff]
        %v1495 = vld [vmem:[%s1484 + $0x50] sm:$0xff]
        %v1496 = vld [vmem:[%s1484 + $0x58] sm:$0xff]
        %v1497 = vld [vmem:[%s1484 + $0x60] sm:$0xff]
        %v1498 = vld [vmem:[%s1484 + $0x68] sm:$0xff]
        %v1499 = vld [vmem:[%s1484 + $0x70] sm:$0xff]
        %v1500 = vld [vmem:[%s1484 + $0x78] sm:$0xff]
        %v1501 = vld [vmem:[%s1484 + $0x80] sm:$0xff]
        %v1502 = vld [vmem:[%s1484 + $0x88] sm:$0xff]
        %v1503 = vld [vmem:[%s1484 + $0x90] sm:$0xff]
        %v1504 = vld [vmem:[%s1484 + $0x98] sm:$0xff]
        %v1505 = vld [vmem:[%s1484 + $0xa0] sm:$0xff]
        %v1506 = vld [vmem:[%s1484 + $0xa8] sm:$0xff]
        %v1507 = vld [vmem:[%s1484 + $0xb0] sm:$0xff]
        %v1508 = vld [vmem:[%s1484 + $0xb8] sm:$0xff]
        %v1509 = vld [vmem:[%s1484 + $0xc0] sm:$0xff]
        %v1510 = vld [vmem:[%s1484 + $0xc8] sm:$0xff]
        %v1511 = vld [vmem:[%s1484 + $0xd0] sm:$0xff]
        %v1512 = vld [vmem:[%s1484 + $0xd8] sm:$0xff]
        %v1513 = vld [vmem:[%s1484 + $0xe0] sm:$0xff]
        %v1514 = vld [vmem:[%s1484 + $0xe8] sm:$0xff]
        %v1515 = vld [vmem:[%s1484 + $0xf0] sm:$0xff]
        %v1516 = vld [vmem:[%s1484 + $0xf8] sm:$0xff]
        %v1517 = vld [vmem:[%s1484 + $0x100] sm:$0xff]
        %v1518 = vld [vmem:[%s1484 + $0x108] sm:$0xff]
        %v1519 = vld [vmem:[%s1484 + $0x110] sm:$0xff]
        %v1520 = vld [vmem:[%s1484 + $0x118] sm:$0xff]
        %v1521 = vld [vmem:[%s1484 + $0x120] sm:$0xff]
        %v1522 = vld [vmem:[%s1484 + $0x128] sm:$0xff]
        %v1523 = vld [vmem:[%s1484 + $0x130] sm:$0xff]
        %v1524 = vld [vmem:[%s1484 + $0x138] sm:$0xff]
        %v1525 = vld [vmem:[%s1484 + $0x140] sm:$0xff]
        %v1526 = vld [vmem:[%s1484 + $0x148] sm:$0xff]
        %v1527 = vld [vmem:[%s1484 + $0x150] sm:$0xff]
        %v1528 = vld [vmem:[%s1484 + $0x158] sm:$0xff]
        %v1529 = vld [vmem:[%s1484 + $0x160] sm:$0xff]
        %v1530 = vld [vmem:[%s1484 + $0x168] sm:$0xff]
        %v1531 = vld [vmem:[%s1484 + $0x170] sm:$0xff]
        %v1532 = vld [vmem:[%s1484 + $0x178] sm:$0xff]
        %v1581 = vunpack.c.l.b16 %v1485
        %v1582 = vunpack.c.h.b16 %v1485
        %v1583 = vunpack.c.l.b16 %v1486
        %v1584 = vunpack.c.h.b16 %v1486
        %v1585 = vunpack.c.l.b16 %v1487
        %v1586 = vunpack.c.h.b16 %v1487
        %v1587 = vunpack.c.l.b16 %v1488
        %v1588 = vunpack.c.h.b16 %v1488
        %v1589 = vunpack.c.l.b16 %v1489
        %v1590 = vunpack.c.h.b16 %v1489
        %v1591 = vunpack.c.l.b16 %v1490
        %v1592 = vunpack.c.h.b16 %v1490
        %v1593 = vunpack.c.l.b16 %v1491
        %v1594 = vunpack.c.h.b16 %v1491
        %v1595 = vunpack.c.l.b16 %v1492
        %v1596 = vunpack.c.h.b16 %v1492
        %v1597 = vunpack.c.l.b16 %v1493
        %v1598 = vunpack.c.h.b16 %v1493
        %v1599 = vunpack.c.l.b16 %v1494
        %v1600 = vunpack.c.h.b16 %v1494
        %v1601 = vunpack.c.l.b16 %v1495
        %v1602 = vunpack.c.h.b16 %v1495
        %v1603 = vunpack.c.l.b16 %v1496
        %v1604 = vunpack.c.h.b16 %v1496
        %v1605 = vunpack.c.l.b16 %v1497
        %v1606 = vunpack.c.h.b16 %v1497
        %v1607 = vunpack.c.l.b16 %v1498
        %v1608 = vunpack.c.h.b16 %v1498
        %v1609 = vunpack.c.l.b16 %v1499
        %v1610 = vunpack.c.h.b16 %v1499
        %v1611 = vunpack.c.l.b16 %v1500
        %v1612 = vunpack.c.h.b16 %v1500
        %v1613 = vunpack.c.l.b16 %v1501
        %v1614 = vunpack.c.h.b16 %v1501
        %v1615 = vunpack.c.l.b16 %v1502
        %v1616 = vunpack.c.h.b16 %v1502
        %v1617 = vunpack.c.l.b16 %v1503
        %v1618 = vunpack.c.h.b16 %v1503
        %v1619 = vunpack.c.l.b16 %v1504
        %v1620 = vunpack.c.h.b16 %v1504
        %v1621 = vunpack.c.l.b16 %v1505
        %v1622 = vunpack.c.h.b16 %v1505
        %v1623 = vunpack.c.l.b16 %v1506
        %v1624 = vunpack.c.h.b16 %v1506
        %v1625 = vunpack.c.l.b16 %v1507
        %v1626 = vunpack.c.h.b16 %v1507
        %v1627 = vunpack.c.l.b16 %v1508
        %v1628 = vunpack.c.h.b16 %v1508
        %v1629 = vunpack.c.l.b16 %v1509
        %v1630 = vunpack.c.h.b16 %v1509
        %v1631 = vunpack.c.l.b16 %v1510
        %v1632 = vunpack.c.h.b16 %v1510
        %v1633 = vunpack.c.l.b16 %v1511
        %v1634 = vunpack.c.h.b16 %v1511
        %v1635 = vunpack.c.l.b16 %v1512
        %v1636 = vunpack.c.h.b16 %v1512
        %v1637 = vunpack.c.l.b16 %v1513
        %v1638 = vunpack.c.h.b16 %v1513
        %v1639 = vunpack.c.l.b16 %v1514
        %v1640 = vunpack.c.h.b16 %v1514
        %v1641 = vunpack.c.l.b16 %v1515
        %v1642 = vunpack.c.h.b16 %v1515
        %v1643 = vunpack.c.l.b16 %v1516
        %v1644 = vunpack.c.h.b16 %v1516
        %v1645 = vunpack.c.l.b16 %v1517
        %v1646 = vunpack.c.h.b16 %v1517
        %v1647 = vunpack.c.l.b16 %v1518
        %v1648 = vunpack.c.h.b16 %v1518
        %v1649 = vunpack.c.l.b16 %v1519
        %v1650 = vunpack.c.h.b16 %v1519
        %v1651 = vunpack.c.l.b16 %v1520
        %v1652 = vunpack.c.h.b16 %v1520
        %v1653 = vunpack.c.l.b16 %v1521
        %v1654 = vunpack.c.h.b16 %v1521
        %v1655 = vunpack.c.l.b16 %v1522
        %v1656 = vunpack.c.h.b16 %v1522
        %v1657 = vunpack.c.l.b16 %v1523
        %v1658 = vunpack.c.h.b16 %v1523
        %v1659 = vunpack.c.l.b16 %v1524
        %v1660 = vunpack.c.h.b16 %v1524
        %v1661 = vunpack.c.l.b16 %v1525
        %v1662 = vunpack.c.h.b16 %v1525
        %v1663 = vunpack.c.l.b16 %v1526
        %v1664 = vunpack.c.h.b16 %v1526
        %v1665 = vunpack.c.l.b16 %v1527
        %v1666 = vunpack.c.h.b16 %v1527
        %v1667 = vunpack.c.l.b16 %v1528
        %v1668 = vunpack.c.h.b16 %v1528
        %v1669 = vunpack.c.l.b16 %v1529
        %v1670 = vunpack.c.h.b16 %v1529
        %v1671 = vunpack.c.l.b16 %v1530
        %v1672 = vunpack.c.h.b16 %v1530
        %v1673 = vunpack.c.l.b16 %v1531
        %v1674 = vunpack.c.h.b16 %v1531
        %v1675 = vunpack.c.l.b16 %v1532
        %v1676 = vunpack.c.h.b16 %v1532
        %v1677 = vpack.c.b16 %v1585, %v1581
        %v1678 = vpack.c.b16 %v1586, %v1582
        %v1679 = vpack.c.b16 %v1587, %v1583
        %v1680 = vpack.c.b16 %v1588, %v1584
        %v1681 = vpack.c.b16 %v1593, %v1589
        %v1682 = vpack.c.b16 %v1594, %v1590
        %v1683 = vpack.c.b16 %v1595, %v1591
        %v1684 = vpack.c.b16 %v1596, %v1592
        %v1685 = vpack.c.b16 %v1601, %v1597
        %v1686 = vpack.c.b16 %v1602, %v1598
        %v1687 = vpack.c.b16 %v1603, %v1599
        %v1688 = vpack.c.b16 %v1604, %v1600
        %v1689 = vpack.c.b16 %v1609, %v1605
        %v1690 = vpack.c.b16 %v1610, %v1606
        %v1691 = vpack.c.b16 %v1611, %v1607
        %v1692 = vpack.c.b16 %v1612, %v1608
        %v1693 = vpack.c.b16 %v1617, %v1613
        %v1694 = vpack.c.b16 %v1618, %v1614
        %v1695 = vpack.c.b16 %v1619, %v1615
        %v1696 = vpack.c.b16 %v1620, %v1616
        %v1697 = vpack.c.b16 %v1625, %v1621
        %v1698 = vpack.c.b16 %v1626, %v1622
        %v1699 = vpack.c.b16 %v1627, %v1623
        %v1700 = vpack.c.b16 %v1628, %v1624
        %v1701 = vpack.c.b16 %v1633, %v1629
        %v1702 = vpack.c.b16 %v1634, %v1630
        %v1703 = vpack.c.b16 %v1635, %v1631
        %v1704 = vpack.c.b16 %v1636, %v1632
        %v1705 = vpack.c.b16 %v1641, %v1637
        %v1706 = vpack.c.b16 %v1642, %v1638
        %v1707 = vpack.c.b16 %v1643, %v1639
        %v1708 = vpack.c.b16 %v1644, %v1640
        %v1709 = vpack.c.b16 %v1649, %v1645
        %v1710 = vpack.c.b16 %v1650, %v1646
        %v1711 = vpack.c.b16 %v1651, %v1647
        %v1712 = vpack.c.b16 %v1652, %v1648
        %v1713 = vpack.c.b16 %v1657, %v1653
        %v1714 = vpack.c.b16 %v1658, %v1654
        %v1715 = vpack.c.b16 %v1659, %v1655
        %v1716 = vpack.c.b16 %v1660, %v1656
        %v1717 = vpack.c.b16 %v1665, %v1661
        %v1718 = vpack.c.b16 %v1666, %v1662
        %v1719 = vpack.c.b16 %v1667, %v1663
        %v1720 = vpack.c.b16 %v1668, %v1664
        %v1721 = vpack.c.b16 %v1673, %v1669
        %v1722 = vpack.c.b16 %v1674, %v1670
        %v1723 = vpack.c.b16 %v1675, %v1671
        %v1724 = vpack.c.b16 %v1676, %v1672
        %v1774 = vsel %vm568, %v1483, 0
        %1776 = vmatprep.subr.bf16.mxu0 %v1678
        %1777 = vmatpush1.bf16.msra.mxu0 %v1677
        %1778 = vmatprep.subr.bf16.mxu0 %v1682
        %1779 = vmatpush1.bf16.msra.mxu0 %v1681
        %1780 = vmatprep.subr.bf16.mxu0 %v1686
        %1781 = vmatpush1.bf16.msra.mxu0 %v1685
        %1782 = vmatprep.subr.bf16.mxu0 %v1690
        %1783 = vmatpush1.bf16.msra.mxu0 %v1689
        %1784 = vmatprep.subr.bf16.mxu0 %v1694
        %1785 = vmatpush1.bf16.msra.mxu0 %v1693
        %1786 = vmatprep.subr.bf16.mxu0 %v1698
        %1787 = vmatpush1.bf16.msra.mxu0 %v1697
        %1788 = vmatprep.subr.bf16.mxu0 %v1702
        %1789 = vmatpush1.bf16.msra.mxu0 %v1701
        %1790 = vmatprep.subr.bf16.mxu0 %v1706
        %1791 = vmatpush1.bf16.msra.mxu0 %v1705
        %1792 = vmatprep.subr.bf16.mxu0 %v1710
        %1793 = vmatpush1.bf16.msra.mxu0 %v1709
        %1794 = vmatprep.subr.bf16.mxu0 %v1714
        %1795 = vmatpush1.bf16.msra.mxu0 %v1713
        %1796 = vmatprep.subr.bf16.mxu0 %v1718
        %1797 = vmatpush1.bf16.msra.mxu0 %v1717
        %1798 = vmatprep.subr.bf16.mxu0 %v1722
        %1799 = vmatpush1.bf16.msra.mxu0 %v1721
        %1800 = vmatprep.subr.bf16.mxu0 0
        %1801 = vmatpush1.bf16.msra.mxu0 0
        %1802 = vmatprep.subr.bf16.mxu0 0
        %1803 = vmatpush1.bf16.msra.mxu0 0
        %1804 = vmatprep.subr.bf16.mxu0 0
        %1805 = vmatpush1.bf16.msra.mxu0 0
        %1806 = vmatprep.subr.bf16.mxu0 0
        %1807 = vmatpush1.bf16.msra.mxu0 0
        %1808 = vmatprep.mubr.bf16.mxu0 %v1774
        %1809 = vmatmul.mubr.bf16.gmra.mrb[0].mxu0 %v1482
        %v1810 = vpop.f32.mrb[0].mxu0
        %v1811 = vadd.f32 0.0, %v1810
        %v1812 = vpop.f32.mrb[0].mxu0
        %v1813 = vadd.f32 0.0, %v1812
        %v1814 = vpop.f32.mrb[0].mxu0
        %v1815 = vadd.f32 0.0, %v1814
        %v1816 = vpop.f32.mrb[0].mxu0
        %v1817 = vadd.f32 0.0, %v1816
        %1818 = vdwg.mxu0
        %1819 = vmatprep.subr.bf16.mxu0 %v1680
        %1820 = vmatpush1.bf16.msra.mxu0 %v1679
        %1821 = vmatprep.subr.bf16.mxu0 %v1684
        %1822 = vmatpush1.bf16.msra.mxu0 %v1683
        %1823 = vmatprep.subr.bf16.mxu0 %v1688
        %1824 = vmatpush1.bf16.msra.mxu0 %v1687
        %1825 = vmatprep.subr.bf16.mxu0 %v1692
        %1826 = vmatpush1.bf16.msra.mxu0 %v1691
        %1827 = vmatprep.subr.bf16.mxu0 %v1696
        %1828 = vmatpush1.bf16.msra.mxu0 %v1695
        %1829 = vmatprep.subr.bf16.mxu0 %v1700
        %1830 = vmatpush1.bf16.msra.mxu0 %v1699
        %1831 = vmatprep.subr.bf16.mxu0 %v1704
        %1832 = vmatpush1.bf16.msra.mxu0 %v1703
        %1833 = vmatprep.subr.bf16.mxu0 %v1708
        %1834 = vmatpush1.bf16.msra.mxu0 %v1707
        %1835 = vmatprep.subr.bf16.mxu0 %v1712
        %1836 = vmatpush1.bf16.msra.mxu0 %v1711
        %1837 = vmatprep.subr.bf16.mxu0 %v1716
        %1838 = vmatpush1.bf16.msra.mxu0 %v1715
        %1839 = vmatprep.subr.bf16.mxu0 %v1720
        %1840 = vmatpush1.bf16.msra.mxu0 %v1719
        %1841 = vmatprep.subr.bf16.mxu0 %v1724
        %1842 = vmatpush1.bf16.msra.mxu0 %v1723
        %1843 = vmatprep.subr.bf16.mxu0 0
        %1844 = vmatpush1.bf16.msra.mxu0 0
        %1845 = vmatprep.subr.bf16.mxu0 0
        %1846 = vmatpush1.bf16.msra.mxu0 0
        %1847 = vmatprep.subr.bf16.mxu0 0
        %1848 = vmatpush1.bf16.msra.mxu0 0
        %1849 = vmatprep.subr.bf16.mxu0 0
        %1850 = vmatpush1.bf16.msra.mxu0 0
        %1851 = vmatprep.mubr.bf16.mxu0 %v1774
        %1852 = vmatmul.mubr.bf16.gmra.mrb[0].mxu0 %v1482
        %v1853 = vpop.f32.mrb[0].mxu0
        %v1854 = vadd.f32 0.0, %v1853
        %v1855 = vpop.f32.mrb[0].mxu0
        %v1856 = vadd.f32 0.0, %v1855
        %v1857 = vpop.f32.mrb[0].mxu0
        %v1858 = vadd.f32 0.0, %v1857
        %v1859 = vpop.f32.mrb[0].mxu0
        %v1860 = vadd.f32 0.0, %v1859
        %1861 = vdwg.mxu0
        %v1862 = vadd.f32 %v1377, %v1811
        %v1863 = vadd.f32 %v1379, %v1813
        %v1864 = vadd.f32 %v1420, %v1854
        %v1865 = vadd.f32 %v1422, %v1856
        %v1866 = vadd.f32 %v1381, %v1815
        %v1867 = vadd.f32 %v1383, %v1817
        %v1868 = vadd.f32 %v1424, %v1858
        %v1869 = vadd.f32 %v1426, %v1860
        %s1870 = scalar_lea.vmem %s5, 24
        %v1871 = vld [vmem:[%s1870] sm:$0xf]
        %v1872 = vld [vmem:[%s1870 + $0x4] sm:$0xf]
        %v1875 = vunpack.c.l.b16 %v1871
        %v1876 = vunpack.c.l.b16 %v1872
        %v1877 = vpack.c.b16 %v1876, %v1875
        %v1879 = vsel %vm568, %v1877, 0
        %1881 = vmatprep.subr.bf16.mxu0 %v553
        %1882 = vmatpush1.bf16.msra.mxu0 %v552
        %1883 = vmatprep.subr.bf16.mxu0 %v555
        %1884 = vmatpush1.bf16.msra.mxu0 %v554
        %1885 = vmatprep.subr.bf16.mxu0 %v557
        %1886 = vmatpush1.bf16.msra.mxu0 %v556
        %1887 = vmatprep.subr.bf16.mxu0 %v559
        %1888 = vmatpush1.bf16.msra.mxu0 %v558
        %1889 = vmatprep.subr.bf16.mxu0 0
        %1890 = vmatpush1.bf16.msra.mxu0 0
        %1891 = vmatprep.subr.bf16.mxu0 0
        %1892 = vmatpush1.bf16.msra.mxu0 0
        %1893 = vmatprep.subr.bf16.mxu0 0
        %1894 = vmatpush1.bf16.msra.mxu0 0
        %1895 = vmatprep.subr.bf16.mxu0 0
        %1896 = vmatpush1.bf16.msra.mxu0 0
        %1897 = vmatprep.subr.bf16.mxu0 0
        %1898 = vmatpush1.bf16.msra.mxu0 0
        %1899 = vmatprep.subr.bf16.mxu0 0
        %1900 = vmatpush1.bf16.msra.mxu0 0
        %1901 = vmatprep.subr.bf16.mxu0 0
        %1902 = vmatpush1.bf16.msra.mxu0 0
        %1903 = vmatprep.subr.bf16.mxu0 0
        %1904 = vmatpush1.bf16.msra.mxu0 0
        %1905 = vmatprep.subr.bf16.mxu0 0
        %1906 = vmatpush1.bf16.msra.mxu0 0
        %1907 = vmatprep.subr.bf16.mxu0 0
        %1908 = vmatpush1.bf16.msra.mxu0 0
        %1909 = vmatprep.subr.bf16.mxu0 0
        %1910 = vmatpush1.bf16.msra.mxu0 0
        %1911 = vmatprep.subr.bf16.mxu0 0
        %1912 = vmatpush1.bf16.msra.mxu0 0
        %1913 = vmatprep.mubr.bf16.mxu0 0
        %1914 = vmatmul.mubr.bf16.gmra.mrb[0].mxu0 %v1879
        %v1915 = vpop.f32.mrb[0].mxu0
        %v1916 = vadd.f32 0.0, %v1915
        %v1917 = vpop.f32.mrb[0].mxu0
        %v1918 = vadd.f32 0.0, %v1917
        %v1919 = vpop.f32.mrb[0].mxu0
        %v1920 = vadd.f32 0.0, %v1919
        %v1921 = vpop.f32.mrb[0].mxu0
        %v1922 = vadd.f32 0.0, %v1921
        %1923 = vdwg.mxu0
        %v1924 = vpack.c.bf16 %v1920, %v1916
        %v1925 = vpack.c.bf16 %v1922, %v1918
        %s1926 = scalar_lea.vmem [#allocation5], 1152
        %v1927 = vld [vmem:[%s1926] sm:$0xff]
        %v1928 = vld [vmem:[%s1926 + $0x8] sm:$0xff]
        %v1929 = vld [vmem:[%s1926 + $0x10] sm:$0xff]
        %v1930 = vld [vmem:[%s1926 + $0x18] sm:$0xff]
        %v1931 = vld [vmem:[%s1926 + $0x20] sm:$0xff]
        %v1932 = vld [vmem:[%s1926 + $0x28] sm:$0xff]
        %v1933 = vld [vmem:[%s1926 + $0x30] sm:$0xff]
        %v1934 = vld [vmem:[%s1926 + $0x38] sm:$0xff]
        %v1935 = vld [vmem:[%s1926 + $0x40] sm:$0xff]
        %v1936 = vld [vmem:[%s1926 + $0x48] sm:$0xff]
        %v1937 = vld [vmem:[%s1926 + $0x50] sm:$0xff]
        %v1938 = vld [vmem:[%s1926 + $0x58] sm:$0xff]
        %v1939 = vld [vmem:[%s1926 + $0x60] sm:$0xff]
        %v1940 = vld [vmem:[%s1926 + $0x68] sm:$0xff]
        %v1941 = vld [vmem:[%s1926 + $0x70] sm:$0xff]
        %v1942 = vld [vmem:[%s1926 + $0x78] sm:$0xff]
        %v1943 = vld [vmem:[%s1926 + $0x80] sm:$0xff]
        %v1944 = vld [vmem:[%s1926 + $0x88] sm:$0xff]
        %v1945 = vld [vmem:[%s1926 + $0x90] sm:$0xff]
        %v1946 = vld [vmem:[%s1926 + $0x98] sm:$0xff]
        %v1947 = vld [vmem:[%s1926 + $0xa0] sm:$0xff]
        %v1948 = vld [vmem:[%s1926 + $0xa8] sm:$0xff]
        %v1949 = vld [vmem:[%s1926 + $0xb0] sm:$0xff]
        %v1950 = vld [vmem:[%s1926 + $0xb8] sm:$0xff]
        %v1951 = vld [vmem:[%s1926 + $0xc0] sm:$0xff]
        %v1952 = vld [vmem:[%s1926 + $0xc8] sm:$0xff]
        %v1953 = vld [vmem:[%s1926 + $0xd0] sm:$0xff]
        %v1954 = vld [vmem:[%s1926 + $0xd8] sm:$0xff]
        %v1955 = vld [vmem:[%s1926 + $0xe0] sm:$0xff]
        %v1956 = vld [vmem:[%s1926 + $0xe8] sm:$0xff]
        %v1957 = vld [vmem:[%s1926 + $0xf0] sm:$0xff]
        %v1958 = vld [vmem:[%s1926 + $0xf8] sm:$0xff]
        %v1959 = vld [vmem:[%s1926 + $0x100] sm:$0xff]
        %v1960 = vld [vmem:[%s1926 + $0x108] sm:$0xff]
        %v1961 = vld [vmem:[%s1926 + $0x110] sm:$0xff]
        %v1962 = vld [vmem:[%s1926 + $0x118] sm:$0xff]
        %v1963 = vld [vmem:[%s1926 + $0x120] sm:$0xff]
        %v1964 = vld [vmem:[%s1926 + $0x128] sm:$0xff]
        %v1965 = vld [vmem:[%s1926 + $0x130] sm:$0xff]
        %v1966 = vld [vmem:[%s1926 + $0x138] sm:$0xff]
        %v1967 = vld [vmem:[%s1926 + $0x140] sm:$0xff]
        %v1968 = vld [vmem:[%s1926 + $0x148] sm:$0xff]
        %v1969 = vld [vmem:[%s1926 + $0x150] sm:$0xff]
        %v1970 = vld [vmem:[%s1926 + $0x158] sm:$0xff]
        %v1971 = vld [vmem:[%s1926 + $0x160] sm:$0xff]
        %v1972 = vld [vmem:[%s1926 + $0x168] sm:$0xff]
        %v1973 = vld [vmem:[%s1926 + $0x170] sm:$0xff]
        %v1974 = vld [vmem:[%s1926 + $0x178] sm:$0xff]
        %v2023 = vunpack.c.l.b16 %v1927
        %v2024 = vunpack.c.h.b16 %v1927
        %v2025 = vunpack.c.l.b16 %v1928
        %v2026 = vunpack.c.h.b16 %v1928
        %v2027 = vunpack.c.l.b16 %v1929
        %v2028 = vunpack.c.h.b16 %v1929
        %v2029 = vunpack.c.l.b16 %v1930
        %v2030 = vunpack.c.h.b16 %v1930
        %v2031 = vunpack.c.l.b16 %v1931
        %v2032 = vunpack.c.h.b16 %v1931
        %v2033 = vunpack.c.l.b16 %v1932
        %v2034 = vunpack.c.h.b16 %v1932
        %v2035 = vunpack.c.l.b16 %v1933
        %v2036 = vunpack.c.h.b16 %v1933
        %v2037 = vunpack.c.l.b16 %v1934
        %v2038 = vunpack.c.h.b16 %v1934
        %v2039 = vunpack.c.l.b16 %v1935
        %v2040 = vunpack.c.h.b16 %v1935
        %v2041 = vunpack.c.l.b16 %v1936
        %v2042 = vunpack.c.h.b16 %v1936
        %v2043 = vunpack.c.l.b16 %v1937
        %v2044 = vunpack.c.h.b16 %v1937
        %v2045 = vunpack.c.l.b16 %v1938
        %v2046 = vunpack.c.h.b16 %v1938
        %v2047 = vunpack.c.l.b16 %v1939
        %v2048 = vunpack.c.h.b16 %v1939
        %v2049 = vunpack.c.l.b16 %v1940
        %v2050 = vunpack.c.h.b16 %v1940
        %v2051 = vunpack.c.l.b16 %v1941
        %v2052 = vunpack.c.h.b16 %v1941
        %v2053 = vunpack.c.l.b16 %v1942
        %v2054 = vunpack.c.h.b16 %v1942
        %v2055 = vunpack.c.l.b16 %v1943
        %v2056 = vunpack.c.h.b16 %v1943
        %v2057 = vunpack.c.l.b16 %v1944
        %v2058 = vunpack.c.h.b16 %v1944
        %v2059 = vunpack.c.l.b16 %v1945
        %v2060 = vunpack.c.h.b16 %v1945
        %v2061 = vunpack.c.l.b16 %v1946
        %v2062 = vunpack.c.h.b16 %v1946
        %v2063 = vunpack.c.l.b16 %v1947
        %v2064 = vunpack.c.h.b16 %v1947
        %v2065 = vunpack.c.l.b16 %v1948
        %v2066 = vunpack.c.h.b16 %v1948
        %v2067 = vunpack.c.l.b16 %v1949
        %v2068 = vunpack.c.h.b16 %v1949
        %v2069 = vunpack.c.l.b16 %v1950
        %v2070 = vunpack.c.h.b16 %v1950
        %v2071 = vunpack.c.l.b16 %v1951
        %v2072 = vunpack.c.h.b16 %v1951
        %v2073 = vunpack.c.l.b16 %v1952
        %v2074 = vunpack.c.h.b16 %v1952
        %v2075 = vunpack.c.l.b16 %v1953
        %v2076 = vunpack.c.h.b16 %v1953
        %v2077 = vunpack.c.l.b16 %v1954
        %v2078 = vunpack.c.h.b16 %v1954
        %v2079 = vunpack.c.l.b16 %v1955
        %v2080 = vunpack.c.h.b16 %v1955
        %v2081 = vunpack.c.l.b16 %v1956
        %v2082 = vunpack.c.h.b16 %v1956
        %v2083 = vunpack.c.l.b16 %v1957
        %v2084 = vunpack.c.h.b16 %v1957
        %v2085 = vunpack.c.l.b16 %v1958
        %v2086 = vunpack.c.h.b16 %v1958
        %v2087 = vunpack.c.l.b16 %v1959
        %v2088 = vunpack.c.h.b16 %v1959
        %v2089 = vunpack.c.l.b16 %v1960
        %v2090 = vunpack.c.h.b16 %v1960
        %v2091 = vunpack.c.l.b16 %v1961
        %v2092 = vunpack.c.h.b16 %v1961
        %v2093 = vunpack.c.l.b16 %v1962
        %v2094 = vunpack.c.h.b16 %v1962
        %v2095 = vunpack.c.l.b16 %v1963
        %v2096 = vunpack.c.h.b16 %v1963
        %v2097 = vunpack.c.l.b16 %v1964
        %v2098 = vunpack.c.h.b16 %v1964
        %v2099 = vunpack.c.l.b16 %v1965
        %v2100 = vunpack.c.h.b16 %v1965
        %v2101 = vunpack.c.l.b16 %v1966
        %v2102 = vunpack.c.h.b16 %v1966
        %v2103 = vunpack.c.l.b16 %v1967
        %v2104 = vunpack.c.h.b16 %v1967
        %v2105 = vunpack.c.l.b16 %v1968
        %v2106 = vunpack.c.h.b16 %v1968
        %v2107 = vunpack.c.l.b16 %v1969
        %v2108 = vunpack.c.h.b16 %v1969
        %v2109 = vunpack.c.l.b16 %v1970
        %v2110 = vunpack.c.h.b16 %v1970
        %v2111 = vunpack.c.l.b16 %v1971
        %v2112 = vunpack.c.h.b16 %v1971
        %v2113 = vunpack.c.l.b16 %v1972
        %v2114 = vunpack.c.h.b16 %v1972
        %v2115 = vunpack.c.l.b16 %v1973
        %v2116 = vunpack.c.h.b16 %v1973
        %v2117 = vunpack.c.l.b16 %v1974
        %v2118 = vunpack.c.h.b16 %v1974
        %v2119 = vpack.c.b16 %v2027, %v2023
        %v2120 = vpack.c.b16 %v2028, %v2024
        %v2121 = vpack.c.b16 %v2029, %v2025
        %v2122 = vpack.c.b16 %v2030, %v2026
        %v2123 = vpack.c.b16 %v2035, %v2031
        %v2124 = vpack.c.b16 %v2036, %v2032
        %v2125 = vpack.c.b16 %v2037, %v2033
        %v2126 = vpack.c.b16 %v2038, %v2034
        %v2127 = vpack.c.b16 %v2043, %v2039
        %v2128 = vpack.c.b16 %v2044, %v2040
        %v2129 = vpack.c.b16 %v2045, %v2041
        %v2130 = vpack.c.b16 %v2046, %v2042
        %v2131 = vpack.c.b16 %v2051, %v2047
        %v2132 = vpack.c.b16 %v2052, %v2048
        %v2133 = vpack.c.b16 %v2053, %v2049
        %v2134 = vpack.c.b16 %v2054, %v2050
        %v2135 = vpack.c.b16 %v2059, %v2055
        %v2136 = vpack.c.b16 %v2060, %v2056
        %v2137 = vpack.c.b16 %v2061, %v2057
        %v2138 = vpack.c.b16 %v2062, %v2058
        %v2139 = vpack.c.b16 %v2067, %v2063
        %v2140 = vpack.c.b16 %v2068, %v2064
        %v2141 = vpack.c.b16 %v2069, %v2065
        %v2142 = vpack.c.b16 %v2070, %v2066
        %v2143 = vpack.c.b16 %v2075, %v2071
        %v2144 = vpack.c.b16 %v2076, %v2072
        %v2145 = vpack.c.b16 %v2077, %v2073
        %v2146 = vpack.c.b16 %v2078, %v2074
        %v2147 = vpack.c.b16 %v2083, %v2079
        %v2148 = vpack.c.b16 %v2084, %v2080
        %v2149 = vpack.c.b16 %v2085, %v2081
        %v2150 = vpack.c.b16 %v2086, %v2082
        %v2151 = vpack.c.b16 %v2091, %v2087
        %v2152 = vpack.c.b16 %v2092, %v2088
        %v2153 = vpack.c.b16 %v2093, %v2089
        %v2154 = vpack.c.b16 %v2094, %v2090
        %v2155 = vpack.c.b16 %v2099, %v2095
        %v2156 = vpack.c.b16 %v2100, %v2096
        %v2157 = vpack.c.b16 %v2101, %v2097
        %v2158 = vpack.c.b16 %v2102, %v2098
        %v2159 = vpack.c.b16 %v2107, %v2103
        %v2160 = vpack.c.b16 %v2108, %v2104
        %v2161 = vpack.c.b16 %v2109, %v2105
        %v2162 = vpack.c.b16 %v2110, %v2106
        %v2163 = vpack.c.b16 %v2115, %v2111
        %v2164 = vpack.c.b16 %v2116, %v2112
        %v2165 = vpack.c.b16 %v2117, %v2113
        %v2166 = vpack.c.b16 %v2118, %v2114
        %v2216 = vsel %vm568, %v1925, 0
        %2218 = vmatprep.subr.bf16.mxu0 %v2120
        %2219 = vmatpush1.bf16.msra.mxu0 %v2119
        %2220 = vmatprep.subr.bf16.mxu0 %v2124
        %2221 = vmatpush1.bf16.msra.mxu0 %v2123
        %2222 = vmatprep.subr.bf16.mxu0 %v2128
        %2223 = vmatpush1.bf16.msra.mxu0 %v2127
        %2224 = vmatprep.subr.bf16.mxu0 %v2132
        %2225 = vmatpush1.bf16.msra.mxu0 %v2131
        %2226 = vmatprep.subr.bf16.mxu0 %v2136
        %2227 = vmatpush1.bf16.msra.mxu0 %v2135
        %2228 = vmatprep.subr.bf16.mxu0 %v2140
        %2229 = vmatpush1.bf16.msra.mxu0 %v2139
        %2230 = vmatprep.subr.bf16.mxu0 %v2144
        %2231 = vmatpush1.bf16.msra.mxu0 %v2143
        %2232 = vmatprep.subr.bf16.mxu0 %v2148
        %2233 = vmatpush1.bf16.msra.mxu0 %v2147
        %2234 = vmatprep.subr.bf16.mxu0 %v2152
        %2235 = vmatpush1.bf16.msra.mxu0 %v2151
        %2236 = vmatprep.subr.bf16.mxu0 %v2156
        %2237 = vmatpush1.bf16.msra.mxu0 %v2155
        %2238 = vmatprep.subr.bf16.mxu0 %v2160
        %2239 = vmatpush1.bf16.msra.mxu0 %v2159
        %2240 = vmatprep.subr.bf16.mxu0 %v2164
        %2241 = vmatpush1.bf16.msra.mxu0 %v2163
        %2242 = vmatprep.subr.bf16.mxu0 0
        %2243 = vmatpush1.bf16.msra.mxu0 0
        %2244 = vmatprep.subr.bf16.mxu0 0
        %2245 = vmatpush1.bf16.msra.mxu0 0
        %2246 = vmatprep.subr.bf16.mxu0 0
        %2247 = vmatpush1.bf16.msra.mxu0 0
        %2248 = vmatprep.subr.bf16.mxu0 0
        %2249 = vmatpush1.bf16.msra.mxu0 0
        %2250 = vmatprep.mubr.bf16.mxu0 %v2216
        %2251 = vmatmul.mubr.bf16.gmra.mrb[0].mxu0 %v1924
        %v2252 = vpop.f32.mrb[0].mxu0
        %v2253 = vadd.f32 0.0, %v2252
        %v2254 = vpop.f32.mrb[0].mxu0
        %v2255 = vadd.f32 0.0, %v2254
        %v2256 = vpop.f32.mrb[0].mxu0
        %v2257 = vadd.f32 0.0, %v2256
        %v2258 = vpop.f32.mrb[0].mxu0
        %v2259 = vadd.f32 0.0, %v2258
        %2260 = vdwg.mxu0
        %2261 = vmatprep.subr.bf16.mxu0 %v2122
        %2262 = vmatpush1.bf16.msra.mxu0 %v2121
        %2263 = vmatprep.subr.bf16.mxu0 %v2126
        %2264 = vmatpush1.bf16.msra.mxu0 %v2125
        %2265 = vmatprep.subr.bf16.mxu0 %v2130
        %2266 = vmatpush1.bf16.msra.mxu0 %v2129
        %2267 = vmatprep.subr.bf16.mxu0 %v2134
        %2268 = vmatpush1.bf16.msra.mxu0 %v2133
        %2269 = vmatprep.subr.bf16.mxu0 %v2138
        %2270 = vmatpush1.bf16.msra.mxu0 %v2137
        %2271 = vmatprep.subr.bf16.mxu0 %v2142
        %2272 = vmatpush1.bf16.msra.mxu0 %v2141
        %2273 = vmatprep.subr.bf16.mxu0 %v2146
        %2274 = vmatpush1.bf16.msra.mxu0 %v2145
        %2275 = vmatprep.subr.bf16.mxu0 %v2150
        %2276 = vmatpush1.bf16.msra.mxu0 %v2149
        %2277 = vmatprep.subr.bf16.mxu0 %v2154
        %2278 = vmatpush1.bf16.msra.mxu0 %v2153
        %2279 = vmatprep.subr.bf16.mxu0 %v2158
        %2280 = vmatpush1.bf16.msra.mxu0 %v2157
        %2281 = vmatprep.subr.bf16.mxu0 %v2162
        %2282 = vmatpush1.bf16.msra.mxu0 %v2161
        %2283 = vmatprep.subr.bf16.mxu0 %v2166
        %2284 = vmatpush1.bf16.msra.mxu0 %v2165
        %2285 = vmatprep.subr.bf16.mxu0 0
        %2286 = vmatpush1.bf16.msra.mxu0 0
        %2287 = vmatprep.subr.bf16.mxu0 0
        %2288 = vmatpush1.bf16.msra.mxu0 0
        %2289 = vmatprep.subr.bf16.mxu0 0
        %2290 = vmatpush1.bf16.msra.mxu0 0
        %2291 = vmatprep.subr.bf16.mxu0 0
        %2292 = vmatpush1.bf16.msra.mxu0 0
        %2293 = vmatprep.mubr.bf16.mxu0 %v2216
        %2294 = vmatmul.mubr.bf16.gmra.mrb[0].mxu0 %v1924
        %v2295 = vpop.f32.mrb[0].mxu0
        %v2296 = vadd.f32 0.0, %v2295
        %v2297 = vpop.f32.mrb[0].mxu0
        %v2298 = vadd.f32 0.0, %v2297
        %v2299 = vpop.f32.mrb[0].mxu0
        %v2300 = vadd.f32 0.0, %v2299
        %v2301 = vpop.f32.mrb[0].mxu0
        %v2302 = vadd.f32 0.0, %v2301
        %2303 = vdwg.mxu0
        %v2304 = vadd.f32 %v1862, %v2253
        %v2305 = vadd.f32 %v1863, %v2255
        %v2306 = vadd.f32 %v1864, %v2296
        %v2307 = vadd.f32 %v1865, %v2298
        %v2308 = vadd.f32 %v1866, %v2257
        %v2309 = vadd.f32 %v1867, %v2259
        %v2310 = vadd.f32 %v1868, %v2300
        %v2311 = vadd.f32 %v1869, %v2302
        %s2312 = scalar_lea.vmem %s5, 32
        %v2313 = vld [vmem:[%s2312] sm:$0xf]
        %v2314 = vld [vmem:[%s2312 + $0x4] sm:$0xf]
        %v2317 = vunpack.c.l.b16 %v2313
        %v2318 = vunpack.c.l.b16 %v2314
        %v2319 = vpack.c.b16 %v2318, %v2317
        %v2321 = vsel %vm568, %v2319, 0
        %2323 = vmatprep.subr.bf16.mxu0 %v553
        %2324 = vmatpush1.bf16.msra.mxu0 %v552
        %2325 = vmatprep.subr.bf16.mxu0 %v555
        %2326 = vmatpush1.bf16.msra.mxu0 %v554
        %2327 = vmatprep.subr.bf16.mxu0 %v557
        %2328 = vmatpush1.bf16.msra.mxu0 %v556
        %2329 = vmatprep.subr.bf16.mxu0 %v559
        %2330 = vmatpush1.bf16.msra.mxu0 %v558
        %2331 = vmatprep.subr.bf16.mxu0 0
        %2332 = vmatpush1.bf16.msra.mxu0 0
        %2333 = vmatprep.subr.bf16.mxu0 0
        %2334 = vmatpush1.bf16.msra.mxu0 0
        %2335 = vmatprep.subr.bf16.mxu0 0
        %2336 = vmatpush1.bf16.msra.mxu0 0
        %2337 = vmatprep.subr.bf16.mxu0 0
        %2338 = vmatpush1.bf16.msra.mxu0 0
        %2339 = vmatprep.subr.bf16.mxu0 0
        %2340 = vmatpush1.bf16.msra.mxu0 0
        %2341 = vmatprep.subr.bf16.mxu0 0
        %2342 = vmatpush1.bf16.msra.mxu0 0
        %2343 = vmatprep.subr.bf16.mxu0 0
        %2344 = vmatpush1.bf16.msra.mxu0 0
        %2345 = vmatprep.subr.bf16.mxu0 0
        %2346 = vmatpush1.bf16.msra.mxu0 0
        %2347 = vmatprep.subr.bf16.mxu0 0
        %2348 = vmatpush1.bf16.msra.mxu0 0
        %2349 = vmatprep.subr.bf16.mxu0 0
        %2350 = vmatpush1.bf16.msra.mxu0 0
        %2351 = vmatprep.subr.bf16.mxu0 0
        %2352 = vmatpush1.bf16.msra.mxu0 0
        %2353 = vmatprep.subr.bf16.mxu0 0
        %2354 = vmatpush1.bf16.msra.mxu0 0
        %2355 = vmatprep.mubr.bf16.mxu0 0
        %2356 = vmatmul.mubr.bf16.gmra.mrb[0].mxu0 %v2321
        %v2357 = vpop.f32.mrb[0].mxu0
        %v2358 = vadd.f32 0.0, %v2357
        %v2359 = vpop.f32.mrb[0].mxu0
        %v2360 = vadd.f32 0.0, %v2359
        %v2361 = vpop.f32.mrb[0].mxu0
        %v2362 = vadd.f32 0.0, %v2361
        %v2363 = vpop.f32.mrb[0].mxu0
        %v2364 = vadd.f32 0.0, %v2363
        %2365 = vdwg.mxu0
        %v2366 = vpack.c.bf16 %v2362, %v2358
        %v2367 = vpack.c.bf16 %v2364, %v2360
        %s2368 = scalar_lea.vmem [#allocation5], 1536
        %v2369 = vld [vmem:[%s2368] sm:$0xff]
        %v2370 = vld [vmem:[%s2368 + $0x8] sm:$0xff]
        %v2371 = vld [vmem:[%s2368 + $0x10] sm:$0xff]
        %v2372 = vld [vmem:[%s2368 + $0x18] sm:$0xff]
        %v2373 = vld [vmem:[%s2368 + $0x20] sm:$0xff]
        %v2374 = vld [vmem:[%s2368 + $0x28] sm:$0xff]
        %v2375 = vld [vmem:[%s2368 + $0x30] sm:$0xff]
        %v2376 = vld [vmem:[%s2368 + $0x38] sm:$0xff]
        %v2377 = vld [vmem:[%s2368 + $0x40] sm:$0xff]
        %v2378 = vld [vmem:[%s2368 + $0x48] sm:$0xff]
        %v2379 = vld [vmem:[%s2368 + $0x50] sm:$0xff]
        %v2380 = vld [vmem:[%s2368 + $0x58] sm:$0xff]
        %v2381 = vld [vmem:[%s2368 + $0x60] sm:$0xff]
        %v2382 = vld [vmem:[%s2368 + $0x68] sm:$0xff]
        %v2383 = vld [vmem:[%s2368 + $0x70] sm:$0xff]
        %v2384 = vld [vmem:[%s2368 + $0x78] sm:$0xff]
        %v2385 = vld [vmem:[%s2368 + $0x80] sm:$0xff]
        %v2386 = vld [vmem:[%s2368 + $0x88] sm:$0xff]
        %v2387 = vld [vmem:[%s2368 + $0x90] sm:$0xff]
        %v2388 = vld [vmem:[%s2368 + $0x98] sm:$0xff]
        %v2389 = vld [vmem:[%s2368 + $0xa0] sm:$0xff]
        %v2390 = vld [vmem:[%s2368 + $0xa8] sm:$0xff]
        %v2391 = vld [vmem:[%s2368 + $0xb0] sm:$0xff]
        %v2392 = vld [vmem:[%s2368 + $0xb8] sm:$0xff]
        %v2393 = vld [vmem:[%s2368 + $0xc0] sm:$0xff]
        %v2394 = vld [vmem:[%s2368 + $0xc8] sm:$0xff]
        %v2395 = vld [vmem:[%s2368 + $0xd0] sm:$0xff]
        %v2396 = vld [vmem:[%s2368 + $0xd8] sm:$0xff]
        %v2397 = vld [vmem:[%s2368 + $0xe0] sm:$0xff]
        %v2398 = vld [vmem:[%s2368 + $0xe8] sm:$0xff]
        %v2399 = vld [vmem:[%s2368 + $0xf0] sm:$0xff]
        %v2400 = vld [vmem:[%s2368 + $0xf8] sm:$0xff]
        %v2401 = vld [vmem:[%s2368 + $0x100] sm:$0xff]
        %v2402 = vld [vmem:[%s2368 + $0x108] sm:$0xff]
        %v2403 = vld [vmem:[%s2368 + $0x110] sm:$0xff]
        %v2404 = vld [vmem:[%s2368 + $0x118] sm:$0xff]
        %v2405 = vld [vmem:[%s2368 + $0x120] sm:$0xff]
        %v2406 = vld [vmem:[%s2368 + $0x128] sm:$0xff]
        %v2407 = vld [vmem:[%s2368 + $0x130] sm:$0xff]
        %v2408 = vld [vmem:[%s2368 + $0x138] sm:$0xff]
        %v2409 = vld [vmem:[%s2368 + $0x140] sm:$0xff]
        %v2410 = vld [vmem:[%s2368 + $0x148] sm:$0xff]
        %v2411 = vld [vmem:[%s2368 + $0x150] sm:$0xff]
        %v2412 = vld [vmem:[%s2368 + $0x158] sm:$0xff]
        %v2413 = vld [vmem:[%s2368 + $0x160] sm:$0xff]
        %v2414 = vld [vmem:[%s2368 + $0x168] sm:$0xff]
        %v2415 = vld [vmem:[%s2368 + $0x170] sm:$0xff]
        %v2416 = vld [vmem:[%s2368 + $0x178] sm:$0xff]
        %v2465 = vunpack.c.l.b16 %v2369
        %v2466 = vunpack.c.h.b16 %v2369
        %v2467 = vunpack.c.l.b16 %v2370
        %v2468 = vunpack.c.h.b16 %v2370
        %v2469 = vunpack.c.l.b16 %v2371
        %v2470 = vunpack.c.h.b16 %v2371
        %v2471 = vunpack.c.l.b16 %v2372
        %v2472 = vunpack.c.h.b16 %v2372
        %v2473 = vunpack.c.l.b16 %v2373
        %v2474 = vunpack.c.h.b16 %v2373
        %v2475 = vunpack.c.l.b16 %v2374
        %v2476 = vunpack.c.h.b16 %v2374
        %v2477 = vunpack.c.l.b16 %v2375
        %v2478 = vunpack.c.h.b16 %v2375
        %v2479 = vunpack.c.l.b16 %v2376
        %v2480 = vunpack.c.h.b16 %v2376
        %v2481 = vunpack.c.l.b16 %v2377
        %v2482 = vunpack.c.h.b16 %v2377
        %v2483 = vunpack.c.l.b16 %v2378
        %v2484 = vunpack.c.h.b16 %v2378
        %v2485 = vunpack.c.l.b16 %v2379
        %v2486 = vunpack.c.h.b16 %v2379
        %v2487 = vunpack.c.l.b16 %v2380
        %v2488 = vunpack.c.h.b16 %v2380
        %v2489 = vunpack.c.l.b16 %v2381
        %v2490 = vunpack.c.h.b16 %v2381
        %v2491 = vunpack.c.l.b16 %v2382
        %v2492 = vunpack.c.h.b16 %v2382
        %v2493 = vunpack.c.l.b16 %v2383
        %v2494 = vunpack.c.h.b16 %v2383
        %v2495 = vunpack.c.l.b16 %v2384
        %v2496 = vunpack.c.h.b16 %v2384
        %v2497 = vunpack.c.l.b16 %v2385
        %v2498 = vunpack.c.h.b16 %v2385
        %v2499 = vunpack.c.l.b16 %v2386
        %v2500 = vunpack.c.h.b16 %v2386
        %v2501 = vunpack.c.l.b16 %v2387
        %v2502 = vunpack.c.h.b16 %v2387
        %v2503 = vunpack.c.l.b16 %v2388
        %v2504 = vunpack.c.h.b16 %v2388
        %v2505 = vunpack.c.l.b16 %v2389
        %v2506 = vunpack.c.h.b16 %v2389
        %v2507 = vunpack.c.l.b16 %v2390
        %v2508 = vunpack.c.h.b16 %v2390
        %v2509 = vunpack.c.l.b16 %v2391
        %v2510 = vunpack.c.h.b16 %v2391
        %v2511 = vunpack.c.l.b16 %v2392
        %v2512 = vunpack.c.h.b16 %v2392
        %v2513 = vunpack.c.l.b16 %v2393
        %v2514 = vunpack.c.h.b16 %v2393
        %v2515 = vunpack.c.l.b16 %v2394
        %v2516 = vunpack.c.h.b16 %v2394
        %v2517 = vunpack.c.l.b16 %v2395
        %v2518 = vunpack.c.h.b16 %v2395
        %v2519 = vunpack.c.l.b16 %v2396
        %v2520 = vunpack.c.h.b16 %v2396
        %v2521 = vunpack.c.l.b16 %v2397
        %v2522 = vunpack.c.h.b16 %v2397
        %v2523 = vunpack.c.l.b16 %v2398
        %v2524 = vunpack.c.h.b16 %v2398
        %v2525 = vunpack.c.l.b16 %v2399
        %v2526 = vunpack.c.h.b16 %v2399
        %v2527 = vunpack.c.l.b16 %v2400
        %v2528 = vunpack.c.h.b16 %v2400
        %v2529 = vunpack.c.l.b16 %v2401
        %v2530 = vunpack.c.h.b16 %v2401
        %v2531 = vunpack.c.l.b16 %v2402
        %v2532 = vunpack.c.h.b16 %v2402
        %v2533 = vunpack.c.l.b16 %v2403
        %v2534 = vunpack.c.h.b16 %v2403
        %v2535 = vunpack.c.l.b16 %v2404
        %v2536 = vunpack.c.h.b16 %v2404
        %v2537 = vunpack.c.l.b16 %v2405
        %v2538 = vunpack.c.h.b16 %v2405
        %v2539 = vunpack.c.l.b16 %v2406
        %v2540 = vunpack.c.h.b16 %v2406
        %v2541 = vunpack.c.l.b16 %v2407
        %v2542 = vunpack.c.h.b16 %v2407
        %v2543 = vunpack.c.l.b16 %v2408
        %v2544 = vunpack.c.h.b16 %v2408
        %v2545 = vunpack.c.l.b16 %v2409
        %v2546 = vunpack.c.h.b16 %v2409
        %v2547 = vunpack.c.l.b16 %v2410
        %v2548 = vunpack.c.h.b16 %v2410
        %v2549 = vunpack.c.l.b16 %v2411
        %v2550 = vunpack.c.h.b16 %v2411
        %v2551 = vunpack.c.l.b16 %v2412
        %v2552 = vunpack.c.h.b16 %v2412
        %v2553 = vunpack.c.l.b16 %v2413
        %v2554 = vunpack.c.h.b16 %v2413
        %v2555 = vunpack.c.l.b16 %v2414
        %v2556 = vunpack.c.h.b16 %v2414
        %v2557 = vunpack.c.l.b16 %v2415
        %v2558 = vunpack.c.h.b16 %v2415
        %v2559 = vunpack.c.l.b16 %v2416
        %v2560 = vunpack.c.h.b16 %v2416
        %v2561 = vpack.c.b16 %v2469, %v2465
        %v2562 = vpack.c.b16 %v2470, %v2466
        %v2563 = vpack.c.b16 %v2471, %v2467
        %v2564 = vpack.c.b16 %v2472, %v2468
        %v2565 = vpack.c.b16 %v2477, %v2473
        %v2566 = vpack.c.b16 %v2478, %v2474
        %v2567 = vpack.c.b16 %v2479, %v2475
        %v2568 = vpack.c.b16 %v2480, %v2476
        %v2569 = vpack.c.b16 %v2485, %v2481
        %v2570 = vpack.c.b16 %v2486, %v2482
        %v2571 = vpack.c.b16 %v2487, %v2483
        %v2572 = vpack.c.b16 %v2488, %v2484
        %v2573 = vpack.c.b16 %v2493, %v2489
        %v2574 = vpack.c.b16 %v2494, %v2490
        %v2575 = vpack.c.b16 %v2495, %v2491
        %v2576 = vpack.c.b16 %v2496, %v2492
        %v2577 = vpack.c.b16 %v2501, %v2497
        %v2578 = vpack.c.b16 %v2502, %v2498
        %v2579 = vpack.c.b16 %v2503, %v2499
        %v2580 = vpack.c.b16 %v2504, %v2500
        %v2581 = vpack.c.b16 %v2509, %v2505
        %v2582 = vpack.c.b16 %v2510, %v2506
        %v2583 = vpack.c.b16 %v2511, %v2507
        %v2584 = vpack.c.b16 %v2512, %v2508
        %v2585 = vpack.c.b16 %v2517, %v2513
        %v2586 = vpack.c.b16 %v2518, %v2514
        %v2587 = vpack.c.b16 %v2519, %v2515
        %v2588 = vpack.c.b16 %v2520, %v2516
        %v2589 = vpack.c.b16 %v2525, %v2521
        %v2590 = vpack.c.b16 %v2526, %v2522
        %v2591 = vpack.c.b16 %v2527, %v2523
        %v2592 = vpack.c.b16 %v2528, %v2524
        %v2593 = vpack.c.b16 %v2533, %v2529
        %v2594 = vpack.c.b16 %v2534, %v2530
        %v2595 = vpack.c.b16 %v2535, %v2531
        %v2596 = vpack.c.b16 %v2536, %v2532
        %v2597 = vpack.c.b16 %v2541, %v2537
        %v2598 = vpack.c.b16 %v2542, %v2538
        %v2599 = vpack.c.b16 %v2543, %v2539
        %v2600 = vpack.c.b16 %v2544, %v2540
        %v2601 = vpack.c.b16 %v2549, %v2545
        %v2602 = vpack.c.b16 %v2550, %v2546
        %v2603 = vpack.c.b16 %v2551, %v2547
        %v2604 = vpack.c.b16 %v2552, %v2548
        %v2605 = vpack.c.b16 %v2557, %v2553
        %v2606 = vpack.c.b16 %v2558, %v2554
        %v2607 = vpack.c.b16 %v2559, %v2555
        %v2608 = vpack.c.b16 %v2560, %v2556
        %v2658 = vsel %vm568, %v2367, 0
        %2660 = vmatprep.subr.bf16.mxu0 %v2562
        %2661 = vmatpush1.bf16.msra.mxu0 %v2561
        %2662 = vmatprep.subr.bf16.mxu0 %v2566
        %2663 = vmatpush1.bf16.msra.mxu0 %v2565
        %2664 = vmatprep.subr.bf16.mxu0 %v2570
        %2665 = vmatpush1.bf16.msra.mxu0 %v2569
        %2666 = vmatprep.subr.bf16.mxu0 %v2574
        %2667 = vmatpush1.bf16.msra.mxu0 %v2573
        %2668 = vmatprep.subr.bf16.mxu0 %v2578
        %2669 = vmatpush1.bf16.msra.mxu0 %v2577
        %2670 = vmatprep.subr.bf16.mxu0 %v2582
        %2671 = vmatpush1.bf16.msra.mxu0 %v2581
        %2672 = vmatprep.subr.bf16.mxu0 %v2586
        %2673 = vmatpush1.bf16.msra.mxu0 %v2585
        %2674 = vmatprep.subr.bf16.mxu0 %v2590
        %2675 = vmatpush1.bf16.msra.mxu0 %v2589
        %2676 = vmatprep.subr.bf16.mxu0 %v2594
        %2677 = vmatpush1.bf16.msra.mxu0 %v2593
        %2678 = vmatprep.subr.bf16.mxu0 %v2598
        %2679 = vmatpush1.bf16.msra.mxu0 %v2597
        %2680 = vmatprep.subr.bf16.mxu0 %v2602
        %2681 = vmatpush1.bf16.msra.mxu0 %v2601
        %2682 = vmatprep.subr.bf16.mxu0 %v2606
        %2683 = vmatpush1.bf16.msra.mxu0 %v2605
        %2684 = vmatprep.subr.bf16.mxu0 0
        %2685 = vmatpush1.bf16.msra.mxu0 0
        %2686 = vmatprep.subr.bf16.mxu0 0
        %2687 = vmatpush1.bf16.msra.mxu0 0
        %2688 = vmatprep.subr.bf16.mxu0 0
        %2689 = vmatpush1.bf16.msra.mxu0 0
        %2690 = vmatprep.subr.bf16.mxu0 0
        %2691 = vmatpush1.bf16.msra.mxu0 0
        %2692 = vmatprep.mubr.bf16.mxu0 %v2658
        %2693 = vmatmul.mubr.bf16.gmra.mrb[0].mxu0 %v2366
        %v2694 = vpop.f32.mrb[0].mxu0
        %v2695 = vadd.f32 0.0, %v2694
        %v2696 = vpop.f32.mrb[0].mxu0
        %v2697 = vadd.f32 0.0, %v2696
        %v2698 = vpop.f32.mrb[0].mxu0
        %v2699 = vadd.f32 0.0, %v2698
        %v2700 = vpop.f32.mrb[0].mxu0
        %v2701 = vadd.f32 0.0, %v2700
        %2702 = vdwg.mxu0
        %2703 = vmatprep.subr.bf16.mxu0 %v2564
        %2704 = vmatpush1.bf16.msra.mxu0 %v2563
        %2705 = vmatprep.subr.bf16.mxu0 %v2568
        %2706 = vmatpush1.bf16.msra.mxu0 %v2567
        %2707 = vmatprep.subr.bf16.mxu0 %v2572
        %2708 = vmatpush1.bf16.msra.mxu0 %v2571
        %2709 = vmatprep.subr.bf16.mxu0 %v2576
        %2710 = vmatpush1.bf16.msra.mxu0 %v2575
        %2711 = vmatprep.subr.bf16.mxu0 %v2580
        %2712 = vmatpush1.bf16.msra.mxu0 %v2579
        %2713 = vmatprep.subr.bf16.mxu0 %v2584
        %2714 = vmatpush1.bf16.msra.mxu0 %v2583
        %2715 = vmatprep.subr.bf16.mxu0 %v2588
        %2716 = vmatpush1.bf16.msra.mxu0 %v2587
        %2717 = vmatprep.subr.bf16.mxu0 %v2592
        %2718 = vmatpush1.bf16.msra.mxu0 %v2591
        %2719 = vmatprep.subr.bf16.mxu0 %v2596
        %2720 = vmatpush1.bf16.msra.mxu0 %v2595
        %2721 = vmatprep.subr.bf16.mxu0 %v2600
        %2722 = vmatpush1.bf16.msra.mxu0 %v2599
        %2723 = vmatprep.subr.bf16.mxu0 %v2604
        %2724 = vmatpush1.bf16.msra.mxu0 %v2603
        %2725 = vmatprep.subr.bf16.mxu0 %v2608
        %2726 = vmatpush1.bf16.msra.mxu0 %v2607
        %2727 = vmatprep.subr.bf16.mxu0 0
        %2728 = vmatpush1.bf16.msra.mxu0 0
        %2729 = vmatprep.subr.bf16.mxu0 0
        %2730 = vmatpush1.bf16.msra.mxu0 0
        %2731 = vmatprep.subr.bf16.mxu0 0
        %2732 = vmatpush1.bf16.msra.mxu0 0
        %2733 = vmatprep.subr.bf16.mxu0 0
        %2734 = vmatpush1.bf16.msra.mxu0 0
        %2735 = vmatprep.mubr.bf16.mxu0 %v2658
        %2736 = vmatmul.mubr.bf16.gmra.mrb[0].mxu0 %v2366
        %v2737 = vpop.f32.mrb[0].mxu0
        %v2738 = vadd.f32 0.0, %v2737
        %v2739 = vpop.f32.mrb[0].mxu0
        %v2740 = vadd.f32 0.0, %v2739
        %v2741 = vpop.f32.mrb[0].mxu0
        %v2742 = vadd.f32 0.0, %v2741
        %v2743 = vpop.f32.mrb[0].mxu0
        %v2744 = vadd.f32 0.0, %v2743
        %2745 = vdwg.mxu0
        %v2746 = vadd.f32 %v2304, %v2695
        %v2747 = vadd.f32 %v2305, %v2697
        %v2748 = vadd.f32 %v2306, %v2738
        %v2749 = vadd.f32 %v2307, %v2740
        %v2750 = vadd.f32 %v2308, %v2699
        %v2751 = vadd.f32 %v2309, %v2701
        %v2752 = vadd.f32 %v2310, %v2742
        %v2753 = vadd.f32 %v2311, %v2744
        %s2754 = scalar_lea.vmem %s5, 40
        %v2755 = vld [vmem:[%s2754] sm:$0xf]
        %v2756 = vld [vmem:[%s2754 + $0x4] sm:$0xf]
        %v2759 = vunpack.c.l.b16 %v2755
        %v2760 = vunpack.c.l.b16 %v2756
        %v2761 = vpack.c.b16 %v2760, %v2759
        %v2763 = vsel %vm568, %v2761, 0
        %2765 = vmatprep.subr.bf16.mxu0 %v553
        %2766 = vmatpush1.bf16.msra.mxu0 %v552
        %2767 = vmatprep.subr.bf16.mxu0 %v555
        %2768 = vmatpush1.bf16.msra.mxu0 %v554
        %2769 = vmatprep.subr.bf16.mxu0 %v557
        %2770 = vmatpush1.bf16.msra.mxu0 %v556
        %2771 = vmatprep.subr.bf16.mxu0 %v559
        %2772 = vmatpush1.bf16.msra.mxu0 %v558
        %2773 = vmatprep.subr.bf16.mxu0 0
        %2774 = vmatpush1.bf16.msra.mxu0 0
        %2775 = vmatprep.subr.bf16.mxu0 0
        %2776 = vmatpush1.bf16.msra.mxu0 0
        %2777 = vmatprep.subr.bf16.mxu0 0
        %2778 = vmatpush1.bf16.msra.mxu0 0
        %2779 = vmatprep.subr.bf16.mxu0 0
        %2780 = vmatpush1.bf16.msra.mxu0 0
        %2781 = vmatprep.subr.bf16.mxu0 0
        %2782 = vmatpush1.bf16.msra.mxu0 0
        %2783 = vmatprep.subr.bf16.mxu0 0
        %2784 = vmatpush1.bf16.msra.mxu0 0
        %2785 = vmatprep.subr.bf16.mxu0 0
        %2786 = vmatpush1.bf16.msra.mxu0 0
        %2787 = vmatprep.subr.bf16.mxu0 0
        %2788 = vmatpush1.bf16.msra.mxu0 0
        %2789 = vmatprep.subr.bf16.mxu0 0
        %2790 = vmatpush1.bf16.msra.mxu0 0
        %2791 = vmatprep.subr.bf16.mxu0 0
        %2792 = vmatpush1.bf16.msra.mxu0 0
        %2793 = vmatprep.subr.bf16.mxu0 0
        %2794 = vmatpush1.bf16.msra.mxu0 0
        %2795 = vmatprep.subr.bf16.mxu0 0
        %2796 = vmatpush1.bf16.msra.mxu0 0
        %2797 = vmatprep.mubr.bf16.mxu0 0
        %2798 = vmatmul.mubr.bf16.gmra.mrb[0].mxu0 %v2763
        %v2799 = vpop.f32.mrb[0].mxu0
        %v2800 = vadd.f32 0.0, %v2799
        %v2801 = vpop.f32.mrb[0].mxu0
        %v2802 = vadd.f32 0.0, %v2801
        %v2803 = vpop.f32.mrb[0].mxu0
        %v2804 = vadd.f32 0.0, %v2803
        %v2805 = vpop.f32.mrb[0].mxu0
        %v2806 = vadd.f32 0.0, %v2805
        %2807 = vdwg.mxu0
        %v2808 = vpack.c.bf16 %v2804, %v2800
        %v2809 = vpack.c.bf16 %v2806, %v2802
        %s2810 = scalar_lea.vmem [#allocation5], 1920
        %v2811 = vld [vmem:[%s2810] sm:$0xff]
        %v2812 = vld [vmem:[%s2810 + $0x8] sm:$0xff]
        %v2813 = vld [vmem:[%s2810 + $0x10] sm:$0xff]
        %v2814 = vld [vmem:[%s2810 + $0x18] sm:$0xff]
        %v2815 = vld [vmem:[%s2810 + $0x20] sm:$0xff]
        %v2816 = vld [vmem:[%s2810 + $0x28] sm:$0xff]
        %v2817 = vld [vmem:[%s2810 + $0x30] sm:$0xff]
        %v2818 = vld [vmem:[%s2810 + $0x38] sm:$0xff]
        %v2819 = vld [vmem:[%s2810 + $0x40] sm:$0xff]
        %v2820 = vld [vmem:[%s2810 + $0x48] sm:$0xff]
        %v2821 = vld [vmem:[%s2810 + $0x50] sm:$0xff]
        %v2822 = vld [vmem:[%s2810 + $0x58] sm:$0xff]
        %v2823 = vld [vmem:[%s2810 + $0x60] sm:$0xff]
        %v2824 = vld [vmem:[%s2810 + $0x68] sm:$0xff]
        %v2825 = vld [vmem:[%s2810 + $0x70] sm:$0xff]
        %v2826 = vld [vmem:[%s2810 + $0x78] sm:$0xff]
        %v2827 = vld [vmem:[%s2810 + $0x80] sm:$0xff]
        %v2828 = vld [vmem:[%s2810 + $0x88] sm:$0xff]
        %v2829 = vld [vmem:[%s2810 + $0x90] sm:$0xff]
        %v2830 = vld [vmem:[%s2810 + $0x98] sm:$0xff]
        %v2831 = vld [vmem:[%s2810 + $0xa0] sm:$0xff]
        %v2832 = vld [vmem:[%s2810 + $0xa8] sm:$0xff]
        %v2833 = vld [vmem:[%s2810 + $0xb0] sm:$0xff]
        %v2834 = vld [vmem:[%s2810 + $0xb8] sm:$0xff]
        %v2835 = vld [vmem:[%s2810 + $0xc0] sm:$0xff]
        %v2836 = vld [vmem:[%s2810 + $0xc8] sm:$0xff]
        %v2837 = vld [vmem:[%s2810 + $0xd0] sm:$0xff]
        %v2838 = vld [vmem:[%s2810 + $0xd8] sm:$0xff]
        %v2839 = vld [vmem:[%s2810 + $0xe0] sm:$0xff]
        %v2840 = vld [vmem:[%s2810 + $0xe8] sm:$0xff]
        %v2841 = vld [vmem:[%s2810 + $0xf0] sm:$0xff]
        %v2842 = vld [vmem:[%s2810 + $0xf8] sm:$0xff]
        %v2843 = vld [vmem:[%s2810 + $0x100] sm:$0xff]
        %v2844 = vld [vmem:[%s2810 + $0x108] sm:$0xff]
        %v2845 = vld [vmem:[%s2810 + $0x110] sm:$0xff]
        %v2846 = vld [vmem:[%s2810 + $0x118] sm:$0xff]
        %v2847 = vld [vmem:[%s2810 + $0x120] sm:$0xff]
        %v2848 = vld [vmem:[%s2810 + $0x128] sm:$0xff]
        %v2849 = vld [vmem:[%s2810 + $0x130] sm:$0xff]
        %v2850 = vld [vmem:[%s2810 + $0x138] sm:$0xff]
        %v2851 = vld [vmem:[%s2810 + $0x140] sm:$0xff]
        %v2852 = vld [vmem:[%s2810 + $0x148] sm:$0xff]
        %v2853 = vld [vmem:[%s2810 + $0x150] sm:$0xff]
        %v2854 = vld [vmem:[%s2810 + $0x158] sm:$0xff]
        %v2855 = vld [vmem:[%s2810 + $0x160] sm:$0xff]
        %v2856 = vld [vmem:[%s2810 + $0x168] sm:$0xff]
        %v2857 = vld [vmem:[%s2810 + $0x170] sm:$0xff]
        %v2858 = vld [vmem:[%s2810 + $0x178] sm:$0xff]
        %v2907 = vunpack.c.l.b16 %v2811
        %v2908 = vunpack.c.h.b16 %v2811
        %v2909 = vunpack.c.l.b16 %v2812
        %v2910 = vunpack.c.h.b16 %v2812
        %v2911 = vunpack.c.l.b16 %v2813
        %v2912 = vunpack.c.h.b16 %v2813
        %v2913 = vunpack.c.l.b16 %v2814
        %v2914 = vunpack.c.h.b16 %v2814
        %v2915 = vunpack.c.l.b16 %v2815
        %v2916 = vunpack.c.h.b16 %v2815
        %v2917 = vunpack.c.l.b16 %v2816
        %v2918 = vunpack.c.h.b16 %v2816
        %v2919 = vunpack.c.l.b16 %v2817
        %v2920 = vunpack.c.h.b16 %v2817
        %v2921 = vunpack.c.l.b16 %v2818
        %v2922 = vunpack.c.h.b16 %v2818
        %v2923 = vunpack.c.l.b16 %v2819
        %v2924 = vunpack.c.h.b16 %v2819
        %v2925 = vunpack.c.l.b16 %v2820
        %v2926 = vunpack.c.h.b16 %v2820
        %v2927 = vunpack.c.l.b16 %v2821
        %v2928 = vunpack.c.h.b16 %v2821
        %v2929 = vunpack.c.l.b16 %v2822
        %v2930 = vunpack.c.h.b16 %v2822
        %v2931 = vunpack.c.l.b16 %v2823
        %v2932 = vunpack.c.h.b16 %v2823
        %v2933 = vunpack.c.l.b16 %v2824
        %v2934 = vunpack.c.h.b16 %v2824
        %v2935 = vunpack.c.l.b16 %v2825
        %v2936 = vunpack.c.h.b16 %v2825
        %v2937 = vunpack.c.l.b16 %v2826
        %v2938 = vunpack.c.h.b16 %v2826
        %v2939 = vunpack.c.l.b16 %v2827
        %v2940 = vunpack.c.h.b16 %v2827
        %v2941 = vunpack.c.l.b16 %v2828
        %v2942 = vunpack.c.h.b16 %v2828
        %v2943 = vunpack.c.l.b16 %v2829
        %v2944 = vunpack.c.h.b16 %v2829
        %v2945 = vunpack.c.l.b16 %v2830
        %v2946 = vunpack.c.h.b16 %v2830
        %v2947 = vunpack.c.l.b16 %v2831
        %v2948 = vunpack.c.h.b16 %v2831
        %v2949 = vunpack.c.l.b16 %v2832
        %v2950 = vunpack.c.h.b16 %v2832
        %v2951 = vunpack.c.l.b16 %v2833
        %v2952 = vunpack.c.h.b16 %v2833
        %v2953 = vunpack.c.l.b16 %v2834
        %v2954 = vunpack.c.h.b16 %v2834
        %v2955 = vunpack.c.l.b16 %v2835
        %v2956 = vunpack.c.h.b16 %v2835
        %v2957 = vunpack.c.l.b16 %v2836
        %v2958 = vunpack.c.h.b16 %v2836
        %v2959 = vunpack.c.l.b16 %v2837
        %v2960 = vunpack.c.h.b16 %v2837
        %v2961 = vunpack.c.l.b16 %v2838
        %v2962 = vunpack.c.h.b16 %v2838
        %v2963 = vunpack.c.l.b16 %v2839
        %v2964 = vunpack.c.h.b16 %v2839
        %v2965 = vunpack.c.l.b16 %v2840
        %v2966 = vunpack.c.h.b16 %v2840
        %v2967 = vunpack.c.l.b16 %v2841
        %v2968 = vunpack.c.h.b16 %v2841
        %v2969 = vunpack.c.l.b16 %v2842
        %v2970 = vunpack.c.h.b16 %v2842
        %v2971 = vunpack.c.l.b16 %v2843
        %v2972 = vunpack.c.h.b16 %v2843
        %v2973 = vunpack.c.l.b16 %v2844
        %v2974 = vunpack.c.h.b16 %v2844
        %v2975 = vunpack.c.l.b16 %v2845
        %v2976 = vunpack.c.h.b16 %v2845
        %v2977 = vunpack.c.l.b16 %v2846
        %v2978 = vunpack.c.h.b16 %v2846
        %v2979 = vunpack.c.l.b16 %v2847
        %v2980 = vunpack.c.h.b16 %v2847
        %v2981 = vunpack.c.l.b16 %v2848
        %v2982 = vunpack.c.h.b16 %v2848
        %v2983 = vunpack.c.l.b16 %v2849
        %v2984 = vunpack.c.h.b16 %v2849
        %v2985 = vunpack.c.l.b16 %v2850
        %v2986 = vunpack.c.h.b16 %v2850
        %v2987 = vunpack.c.l.b16 %v2851
        %v2988 = vunpack.c.h.b16 %v2851
        %v2989 = vunpack.c.l.b16 %v2852
        %v2990 = vunpack.c.h.b16 %v2852
        %v2991 = vunpack.c.l.b16 %v2853
        %v2992 = vunpack.c.h.b16 %v2853
        %v2993 = vunpack.c.l.b16 %v2854
        %v2994 = vunpack.c.h.b16 %v2854
        %v2995 = vunpack.c.l.b16 %v2855
        %v2996 = vunpack.c.h.b16 %v2855
        %v2997 = vunpack.c.l.b16 %v2856
        %v2998 = vunpack.c.h.b16 %v2856
        %v2999 = vunpack.c.l.b16 %v2857
        %v3000 = vunpack.c.h.b16 %v2857
        %v3001 = vunpack.c.l.b16 %v2858
        %v3002 = vunpack.c.h.b16 %v2858
        %v3003 = vpack.c.b16 %v2911, %v2907
        %v3004 = vpack.c.b16 %v2912, %v2908
        %v3005 = vpack.c.b16 %v2913, %v2909
        %v3006 = vpack.c.b16 %v2914, %v2910
        %v3007 = vpack.c.b16 %v2919, %v2915
        %v3008 = vpack.c.b16 %v2920, %v2916
        %v3009 = vpack.c.b16 %v2921, %v2917
        %v3010 = vpack.c.b16 %v2922, %v2918
        %v3011 = vpack.c.b16 %v2927, %v2923
        %v3012 = vpack.c.b16 %v2928, %v2924
        %v3013 = vpack.c.b16 %v2929, %v2925
        %v3014 = vpack.c.b16 %v2930, %v2926
        %v3015 = vpack.c.b16 %v2935, %v2931
        %v3016 = vpack.c.b16 %v2936, %v2932
        %v3017 = vpack.c.b16 %v2937, %v2933
        %v3018 = vpack.c.b16 %v2938, %v2934
        %v3019 = vpack.c.b16 %v2943, %v2939
        %v3020 = vpack.c.b16 %v2944, %v2940
        %v3021 = vpack.c.b16 %v2945, %v2941
        %v3022 = vpack.c.b16 %v2946, %v2942
        %v3023 = vpack.c.b16 %v2951, %v2947
        %v3024 = vpack.c.b16 %v2952, %v2948
        %v3025 = vpack.c.b16 %v2953, %v2949
        %v3026 = vpack.c.b16 %v2954, %v2950
        %v3027 = vpack.c.b16 %v2959, %v2955
        %v3028 = vpack.c.b16 %v2960, %v2956
        %v3029 = vpack.c.b16 %v2961, %v2957
        %v3030 = vpack.c.b16 %v2962, %v2958
        %v3031 = vpack.c.b16 %v2967, %v2963
        %v3032 = vpack.c.b16 %v2968, %v2964
        %v3033 = vpack.c.b16 %v2969, %v2965
        %v3034 = vpack.c.b16 %v2970, %v2966
        %v3035 = vpack.c.b16 %v2975, %v2971
        %v3036 = vpack.c.b16 %v2976, %v2972
        %v3037 = vpack.c.b16 %v2977, %v2973
        %v3038 = vpack.c.b16 %v2978, %v2974
        %v3039 = vpack.c.b16 %v2983, %v2979
        %v3040 = vpack.c.b16 %v2984, %v2980
        %v3041 = vpack.c.b16 %v2985, %v2981
        %v3042 = vpack.c.b16 %v2986, %v2982
        %v3043 = vpack.c.b16 %v2991, %v2987
        %v3044 = vpack.c.b16 %v2992, %v2988
        %v3045 = vpack.c.b16 %v2993, %v2989
        %v3046 = vpack.c.b16 %v2994, %v2990
        %v3047 = vpack.c.b16 %v2999, %v2995
        %v3048 = vpack.c.b16 %v3000, %v2996
        %v3049 = vpack.c.b16 %v3001, %v2997
        %v3050 = vpack.c.b16 %v3002, %v2998
        %v3100 = vsel %vm568, %v2809, 0
        %3102 = vmatprep.subr.bf16.mxu0 %v3004
        %3103 = vmatpush1.bf16.msra.mxu0 %v3003
        %3104 = vmatprep.subr.bf16.mxu0 %v3008
        %3105 = vmatpush1.bf16.msra.mxu0 %v3007
        %3106 = vmatprep.subr.bf16.mxu0 %v3012
        %3107 = vmatpush1.bf16.msra.mxu0 %v3011
        %3108 = vmatprep.subr.bf16.mxu0 %v3016
        %3109 = vmatpush1.bf16.msra.mxu0 %v3015
        %3110 = vmatprep.subr.bf16.mxu0 %v3020
        %3111 = vmatpush1.bf16.msra.mxu0 %v3019
        %3112 = vmatprep.subr.bf16.mxu0 %v3024
        %3113 = vmatpush1.bf16.msra.mxu0 %v3023
        %3114 = vmatprep.subr.bf16.mxu0 %v3028
        %3115 = vmatpush1.bf16.msra.mxu0 %v3027
        %3116 = vmatprep.subr.bf16.mxu0 %v3032
        %3117 = vmatpush1.bf16.msra.mxu0 %v3031
        %3118 = vmatprep.subr.bf16.mxu0 %v3036
        %3119 = vmatpush1.bf16.msra.mxu0 %v3035
        %3120 = vmatprep.subr.bf16.mxu0 %v3040
        %3121 = vmatpush1.bf16.msra.mxu0 %v3039
        %3122 = vmatprep.subr.bf16.mxu0 %v3044
        %3123 = vmatpush1.bf16.msra.mxu0 %v3043
        %3124 = vmatprep.subr.bf16.mxu0 %v3048
        %3125 = vmatpush1.bf16.msra.mxu0 %v3047
        %3126 = vmatprep.subr.bf16.mxu0 0
        %3127 = vmatpush1.bf16.msra.mxu0 0
        %3128 = vmatprep.subr.bf16.mxu0 0
        %3129 = vmatpush1.bf16.msra.mxu0 0
        %3130 = vmatprep.subr.bf16.mxu0 0
        %3131 = vmatpush1.bf16.msra.mxu0 0
        %3132 = vmatprep.subr.bf16.mxu0 0
        %3133 = vmatpush1.bf16.msra.mxu0 0
        %3134 = vmatprep.mubr.bf16.mxu0 %v3100
        %3135 = vmatmul.mubr.bf16.gmra.mrb[0].mxu0 %v2808
        %v3136 = vpop.f32.mrb[0].mxu0
        %v3137 = vadd.f32 0.0, %v3136
        %v3138 = vpop.f32.mrb[0].mxu0
        %v3139 = vadd.f32 0.0, %v3138
        %v3140 = vpop.f32.mrb[0].mxu0
        %v3141 = vadd.f32 0.0, %v3140
        %v3142 = vpop.f32.mrb[0].mxu0
        %v3143 = vadd.f32 0.0, %v3142
        %3144 = vdwg.mxu0
        %3145 = vmatprep.subr.bf16.mxu0 %v3006
        %3146 = vmatpush1.bf16.msra.mxu0 %v3005
        %3147 = vmatprep.subr.bf16.mxu0 %v3010
        %3148 = vmatpush1.bf16.msra.mxu0 %v3009
        %3149 = vmatprep.subr.bf16.mxu0 %v3014
        %3150 = vmatpush1.bf16.msra.mxu0 %v3013
        %3151 = vmatprep.subr.bf16.mxu0 %v3018
        %3152 = vmatpush1.bf16.msra.mxu0 %v3017
        %3153 = vmatprep.subr.bf16.mxu0 %v3022
        %3154 = vmatpush1.bf16.msra.mxu0 %v3021
        %3155 = vmatprep.subr.bf16.mxu0 %v3026
        %3156 = vmatpush1.bf16.msra.mxu0 %v3025
        %3157 = vmatprep.subr.bf16.mxu0 %v3030
        %3158 = vmatpush1.bf16.msra.mxu0 %v3029
        %3159 = vmatprep.subr.bf16.mxu0 %v3034
        %3160 = vmatpush1.bf16.msra.mxu0 %v3033
        %3161 = vmatprep.subr.bf16.mxu0 %v3038
        %3162 = vmatpush1.bf16.msra.mxu0 %v3037
        %3163 = vmatprep.subr.bf16.mxu0 %v3042
        %3164 = vmatpush1.bf16.msra.mxu0 %v3041
        %3165 = vmatprep.subr.bf16.mxu0 %v3046
        %3166 = vmatpush1.bf16.msra.mxu0 %v3045
        %3167 = vmatprep.subr.bf16.mxu0 %v3050
        %3168 = vmatpush1.bf16.msra.mxu0 %v3049
        %3169 = vmatprep.subr.bf16.mxu0 0
        %3170 = vmatpush1.bf16.msra.mxu0 0
        %3171 = vmatprep.subr.bf16.mxu0 0
        %3172 = vmatpush1.bf16.msra.mxu0 0
        %3173 = vmatprep.subr.bf16.mxu0 0
        %3174 = vmatpush1.bf16.msra.mxu0 0
        %3175 = vmatprep.subr.bf16.mxu0 0
        %3176 = vmatpush1.bf16.msra.mxu0 0
        %3177 = vmatprep.mubr.bf16.mxu0 %v3100
        %3178 = vmatmul.mubr.bf16.gmra.mrb[0].mxu0 %v2808
        %v3179 = vpop.f32.mrb[0].mxu0
        %v3180 = vadd.f32 0.0, %v3179
        %v3181 = vpop.f32.mrb[0].mxu0
        %v3182 = vadd.f32 0.0, %v3181
        %v3183 = vpop.f32.mrb[0].mxu0
        %v3184 = vadd.f32 0.0, %v3183
        %v3185 = vpop.f32.mrb[0].mxu0
        %v3186 = vadd.f32 0.0, %v3185
        %3187 = vdwg.mxu0
        %v3188 = vadd.f32 %v2746, %v3137
        %v3189 = vadd.f32 %v2747, %v3139
        %v3190 = vadd.f32 %v2748, %v3180
        %v3191 = vadd.f32 %v2749, %v3182
        %v3192 = vadd.f32 %v2750, %v3141
        %v3193 = vadd.f32 %v2751, %v3143
        %v3194 = vadd.f32 %v2752, %v3184
        %v3195 = vadd.f32 %v2753, %v3186
        %s3196 = scalar_lea.vmem %s5, 48
        %v3197 = vld [vmem:[%s3196] sm:$0xf]
        %v3198 = vld [vmem:[%s3196 + $0x4] sm:$0xf]
        %v3201 = vunpack.c.l.b16 %v3197
        %v3202 = vunpack.c.l.b16 %v3198
        %v3203 = vpack.c.b16 %v3202, %v3201
        %v3205 = vsel %vm568, %v3203, 0
        %3207 = vmatprep.subr.bf16.mxu0 %v553
        %3208 = vmatpush1.bf16.msra.mxu0 %v552
        %3209 = vmatprep.subr.bf16.mxu0 %v555
        %3210 = vmatpush1.bf16.msra.mxu0 %v554
        %3211 = vmatprep.subr.bf16.mxu0 %v557
        %3212 = vmatpush1.bf16.msra.mxu0 %v556
        %3213 = vmatprep.subr.bf16.mxu0 %v559
        %3214 = vmatpush1.bf16.msra.mxu0 %v558
        %3215 = vmatprep.subr.bf16.mxu0 0
        %3216 = vmatpush1.bf16.msra.mxu0 0
        %3217 = vmatprep.subr.bf16.mxu0 0
        %3218 = vmatpush1.bf16.msra.mxu0 0
        %3219 = vmatprep.subr.bf16.mxu0 0
        %3220 = vmatpush1.bf16.msra.mxu0 0
        %3221 = vmatprep.subr.bf16.mxu0 0
        %3222 = vmatpush1.bf16.msra.mxu0 0
        %3223 = vmatprep.subr.bf16.mxu0 0
        %3224 = vmatpush1.bf16.msra.mxu0 0
        %3225 = vmatprep.subr.bf16.mxu0 0
        %3226 = vmatpush1.bf16.msra.mxu0 0
        %3227 = vmatprep.subr.bf16.mxu0 0
        %3228 = vmatpush1.bf16.msra.mxu0 0
        %3229 = vmatprep.subr.bf16.mxu0 0
        %3230 = vmatpush1.bf16.msra.mxu0 0
        %3231 = vmatprep.subr.bf16.mxu0 0
        %3232 = vmatpush1.bf16.msra.mxu0 0
        %3233 = vmatprep.subr.bf16.mxu0 0
        %3234 = vmatpush1.bf16.msra.mxu0 0
        %3235 = vmatprep.subr.bf16.mxu0 0
        %3236 = vmatpush1.bf16.msra.mxu0 0
        %3237 = vmatprep.subr.bf16.mxu0 0
        %3238 = vmatpush1.bf16.msra.mxu0 0
        %3239 = vmatprep.mubr.bf16.mxu0 0
        %3240 = vmatmul.mubr.bf16.gmra.mrb[0].mxu0 %v3205
        %v3241 = vpop.f32.mrb[0].mxu0
        %v3242 = vadd.f32 0.0, %v3241
        %v3243 = vpop.f32.mrb[0].mxu0
        %v3244 = vadd.f32 0.0, %v3243
        %v3245 = vpop.f32.mrb[0].mxu0
        %v3246 = vadd.f32 0.0, %v3245
        %v3247 = vpop.f32.mrb[0].mxu0
        %v3248 = vadd.f32 0.0, %v3247
        %3249 = vdwg.mxu0
        %v3250 = vpack.c.bf16 %v3246, %v3242
        %v3251 = vpack.c.bf16 %v3248, %v3244
        %s3252 = scalar_lea.vmem [#allocation5], 2304
        %v3253 = vld [vmem:[%s3252] sm:$0xff]
        %v3254 = vld [vmem:[%s3252 + $0x8] sm:$0xff]
        %v3255 = vld [vmem:[%s3252 + $0x10] sm:$0xff]
        %v3256 = vld [vmem:[%s3252 + $0x18] sm:$0xff]
        %v3257 = vld [vmem:[%s3252 + $0x20] sm:$0xff]
        %v3258 = vld [vmem:[%s3252 + $0x28] sm:$0xff]
        %v3259 = vld [vmem:[%s3252 + $0x30] sm:$0xff]
        %v3260 = vld [vmem:[%s3252 + $0x38] sm:$0xff]
        %v3261 = vld [vmem:[%s3252 + $0x40] sm:$0xff]
        %v3262 = vld [vmem:[%s3252 + $0x48] sm:$0xff]
        %v3263 = vld [vmem:[%s3252 + $0x50] sm:$0xff]
        %v3264 = vld [vmem:[%s3252 + $0x58] sm:$0xff]
        %v3265 = vld [vmem:[%s3252 + $0x60] sm:$0xff]
        %v3266 = vld [vmem:[%s3252 + $0x68] sm:$0xff]
        %v3267 = vld [vmem:[%s3252 + $0x70] sm:$0xff]
        %v3268 = vld [vmem:[%s3252 + $0x78] sm:$0xff]
        %v3269 = vld [vmem:[%s3252 + $0x80] sm:$0xff]
        %v3270 = vld [vmem:[%s3252 + $0x88] sm:$0xff]
        %v3271 = vld [vmem:[%s3252 + $0x90] sm:$0xff]
        %v3272 = vld [vmem:[%s3252 + $0x98] sm:$0xff]
        %v3273 = vld [vmem:[%s3252 + $0xa0] sm:$0xff]
        %v3274 = vld [vmem:[%s3252 + $0xa8] sm:$0xff]
        %v3275 = vld [vmem:[%s3252 + $0xb0] sm:$0xff]
        %v3276 = vld [vmem:[%s3252 + $0xb8] sm:$0xff]
        %v3277 = vld [vmem:[%s3252 + $0xc0] sm:$0xff]
        %v3278 = vld [vmem:[%s3252 + $0xc8] sm:$0xff]
        %v3279 = vld [vmem:[%s3252 + $0xd0] sm:$0xff]
        %v3280 = vld [vmem:[%s3252 + $0xd8] sm:$0xff]
        %v3281 = vld [vmem:[%s3252 + $0xe0] sm:$0xff]
        %v3282 = vld [vmem:[%s3252 + $0xe8] sm:$0xff]
        %v3283 = vld [vmem:[%s3252 + $0xf0] sm:$0xff]
        %v3284 = vld [vmem:[%s3252 + $0xf8] sm:$0xff]
        %v3285 = vld [vmem:[%s3252 + $0x100] sm:$0xff]
        %v3286 = vld [vmem:[%s3252 + $0x108] sm:$0xff]
        %v3287 = vld [vmem:[%s3252 + $0x110] sm:$0xff]
        %v3288 = vld [vmem:[%s3252 + $0x118] sm:$0xff]
        %v3289 = vld [vmem:[%s3252 + $0x120] sm:$0xff]
        %v3290 = vld [vmem:[%s3252 + $0x128] sm:$0xff]
        %v3291 = vld [vmem:[%s3252 + $0x130] sm:$0xff]
        %v3292 = vld [vmem:[%s3252 + $0x138] sm:$0xff]
        %v3293 = vld [vmem:[%s3252 + $0x140] sm:$0xff]
        %v3294 = vld [vmem:[%s3252 + $0x148] sm:$0xff]
        %v3295 = vld [vmem:[%s3252 + $0x150] sm:$0xff]
        %v3296 = vld [vmem:[%s3252 + $0x158] sm:$0xff]
        %v3297 = vld [vmem:[%s3252 + $0x160] sm:$0xff]
        %v3298 = vld [vmem:[%s3252 + $0x168] sm:$0xff]
        %v3299 = vld [vmem:[%s3252 + $0x170] sm:$0xff]
        %v3300 = vld [vmem:[%s3252 + $0x178] sm:$0xff]
        %v3349 = vunpack.c.l.b16 %v3253
        %v3350 = vunpack.c.h.b16 %v3253
        %v3351 = vunpack.c.l.b16 %v3254
        %v3352 = vunpack.c.h.b16 %v3254
        %v3353 = vunpack.c.l.b16 %v3255
        %v3354 = vunpack.c.h.b16 %v3255
        %v3355 = vunpack.c.l.b16 %v3256
        %v3356 = vunpack.c.h.b16 %v3256
        %v3357 = vunpack.c.l.b16 %v3257
        %v3358 = vunpack.c.h.b16 %v3257
        %v3359 = vunpack.c.l.b16 %v3258
        %v3360 = vunpack.c.h.b16 %v3258
        %v3361 = vunpack.c.l.b16 %v3259
        %v3362 = vunpack.c.h.b16 %v3259
        %v3363 = vunpack.c.l.b16 %v3260
        %v3364 = vunpack.c.h.b16 %v3260
        %v3365 = vunpack.c.l.b16 %v3261
        %v3366 = vunpack.c.h.b16 %v3261
        %v3367 = vunpack.c.l.b16 %v3262
        %v3368 = vunpack.c.h.b16 %v3262
        %v3369 = vunpack.c.l.b16 %v3263
        %v3370 = vunpack.c.h.b16 %v3263
        %v3371 = vunpack.c.l.b16 %v3264
        %v3372 = vunpack.c.h.b16 %v3264
        %v3373 = vunpack.c.l.b16 %v3265
        %v3374 = vunpack.c.h.b16 %v3265
        %v3375 = vunpack.c.l.b16 %v3266
        %v3376 = vunpack.c.h.b16 %v3266
        %v3377 = vunpack.c.l.b16 %v3267
        %v3378 = vunpack.c.h.b16 %v3267
        %v3379 = vunpack.c.l.b16 %v3268
        %v3380 = vunpack.c.h.b16 %v3268
        %v3381 = vunpack.c.l.b16 %v3269
        %v3382 = vunpack.c.h.b16 %v3269
        %v3383 = vunpack.c.l.b16 %v3270
        %v3384 = vunpack.c.h.b16 %v3270
        %v3385 = vunpack.c.l.b16 %v3271
        %v3386 = vunpack.c.h.b16 %v3271
        %v3387 = vunpack.c.l.b16 %v3272
        %v3388 = vunpack.c.h.b16 %v3272
        %v3389 = vunpack.c.l.b16 %v3273
        %v3390 = vunpack.c.h.b16 %v3273
        %v3391 = vunpack.c.l.b16 %v3274
        %v3392 = vunpack.c.h.b16 %v3274
        %v3393 = vunpack.c.l.b16 %v3275
        %v3394 = vunpack.c.h.b16 %v3275
        %v3395 = vunpack.c.l.b16 %v3276
        %v3396 = vunpack.c.h.b16 %v3276
        %v3397 = vunpack.c.l.b16 %v3277
        %v3398 = vunpack.c.h.b16 %v3277
        %v3399 = vunpack.c.l.b16 %v3278
        %v3400 = vunpack.c.h.b16 %v3278
        %v3401 = vunpack.c.l.b16 %v3279
        %v3402 = vunpack.c.h.b16 %v3279
        %v3403 = vunpack.c.l.b16 %v3280
        %v3404 = vunpack.c.h.b16 %v3280
        %v3405 = vunpack.c.l.b16 %v3281
        %v3406 = vunpack.c.h.b16 %v3281
        %v3407 = vunpack.c.l.b16 %v3282
        %v3408 = vunpack.c.h.b16 %v3282
        %v3409 = vunpack.c.l.b16 %v3283
        %v3410 = vunpack.c.h.b16 %v3283
        %v3411 = vunpack.c.l.b16 %v3284
        %v3412 = vunpack.c.h.b16 %v3284
        %v3413 = vunpack.c.l.b16 %v3285
        %v3414 = vunpack.c.h.b16 %v3285
        %v3415 = vunpack.c.l.b16 %v3286
        %v3416 = vunpack.c.h.b16 %v3286
        %v3417 = vunpack.c.l.b16 %v3287
        %v3418 = vunpack.c.h.b16 %v3287
        %v3419 = vunpack.c.l.b16 %v3288
        %v3420 = vunpack.c.h.b16 %v3288
        %v3421 = vunpack.c.l.b16 %v3289
        %v3422 = vunpack.c.h.b16 %v3289
        %v3423 = vunpack.c.l.b16 %v3290
        %v3424 = vunpack.c.h.b16 %v3290
        %v3425 = vunpack.c.l.b16 %v3291
        %v3426 = vunpack.c.h.b16 %v3291
        %v3427 = vunpack.c.l.b16 %v3292
        %v3428 = vunpack.c.h.b16 %v3292
        %v3429 = vunpack.c.l.b16 %v3293
        %v3430 = vunpack.c.h.b16 %v3293
        %v3431 = vunpack.c.l.b16 %v3294
        %v3432 = vunpack.c.h.b16 %v3294
        %v3433 = vunpack.c.l.b16 %v3295
        %v3434 = vunpack.c.h.b16 %v3295
        %v3435 = vunpack.c.l.b16 %v3296
        %v3436 = vunpack.c.h.b16 %v3296
        %v3437 = vunpack.c.l.b16 %v3297
        %v3438 = vunpack.c.h.b16 %v3297
        %v3439 = vunpack.c.l.b16 %v3298
        %v3440 = vunpack.c.h.b16 %v3298
        %v3441 = vunpack.c.l.b16 %v3299
        %v3442 = vunpack.c.h.b16 %v3299
        %v3443 = vunpack.c.l.b16 %v3300
        %v3444 = vunpack.c.h.b16 %v3300
        %v3445 = vpack.c.b16 %v3353, %v3349
        %v3446 = vpack.c.b16 %v3354, %v3350
        %v3447 = vpack.c.b16 %v3355, %v3351
        %v3448 = vpack.c.b16 %v3356, %v3352
        %v3449 = vpack.c.b16 %v3361, %v3357
        %v3450 = vpack.c.b16 %v3362, %v3358
        %v3451 = vpack.c.b16 %v3363, %v3359
        %v3452 = vpack.c.b16 %v3364, %v3360
        %v3453 = vpack.c.b16 %v3369, %v3365
        %v3454 = vpack.c.b16 %v3370, %v3366
        %v3455 = vpack.c.b16 %v3371, %v3367
        %v3456 = vpack.c.b16 %v3372, %v3368
        %v3457 = vpack.c.b16 %v3377, %v3373
        %v3458 = vpack.c.b16 %v3378, %v3374
        %v3459 = vpack.c.b16 %v3379, %v3375
        %v3460 = vpack.c.b16 %v3380, %v3376
        %v3461 = vpack.c.b16 %v3385, %v3381
        %v3462 = vpack.c.b16 %v3386, %v3382
        %v3463 = vpack.c.b16 %v3387, %v3383
        %v3464 = vpack.c.b16 %v3388, %v3384
        %v3465 = vpack.c.b16 %v3393, %v3389
        %v3466 = vpack.c.b16 %v3394, %v3390
        %v3467 = vpack.c.b16 %v3395, %v3391
        %v3468 = vpack.c.b16 %v3396, %v3392
        %v3469 = vpack.c.b16 %v3401, %v3397
        %v3470 = vpack.c.b16 %v3402, %v3398
        %v3471 = vpack.c.b16 %v3403, %v3399
        %v3472 = vpack.c.b16 %v3404, %v3400
        %v3473 = vpack.c.b16 %v3409, %v3405
        %v3474 = vpack.c.b16 %v3410, %v3406
        %v3475 = vpack.c.b16 %v3411, %v3407
        %v3476 = vpack.c.b16 %v3412, %v3408
        %v3477 = vpack.c.b16 %v3417, %v3413
        %v3478 = vpack.c.b16 %v3418, %v3414
        %v3479 = vpack.c.b16 %v3419, %v3415
        %v3480 = vpack.c.b16 %v3420, %v3416
        %v3481 = vpack.c.b16 %v3425, %v3421
        %v3482 = vpack.c.b16 %v3426, %v3422
        %v3483 = vpack.c.b16 %v3427, %v3423
        %v3484 = vpack.c.b16 %v3428, %v3424
        %v3485 = vpack.c.b16 %v3433, %v3429
        %v3486 = vpack.c.b16 %v3434, %v3430
        %v3487 = vpack.c.b16 %v3435, %v3431
        %v3488 = vpack.c.b16 %v3436, %v3432
        %v3489 = vpack.c.b16 %v3441, %v3437
        %v3490 = vpack.c.b16 %v3442, %v3438
        %v3491 = vpack.c.b16 %v3443, %v3439
        %v3492 = vpack.c.b16 %v3444, %v3440
        %v3542 = vsel %vm568, %v3251, 0
        %3544 = vmatprep.subr.bf16.mxu0 %v3446
        %3545 = vmatpush1.bf16.msra.mxu0 %v3445
        %3546 = vmatprep.subr.bf16.mxu0 %v3450
        %3547 = vmatpush1.bf16.msra.mxu0 %v3449
        %3548 = vmatprep.subr.bf16.mxu0 %v3454
        %3549 = vmatpush1.bf16.msra.mxu0 %v3453
        %3550 = vmatprep.subr.bf16.mxu0 %v3458
        %3551 = vmatpush1.bf16.msra.mxu0 %v3457
        %3552 = vmatprep.subr.bf16.mxu0 %v3462
        %3553 = vmatpush1.bf16.msra.mxu0 %v3461
        %3554 = vmatprep.subr.bf16.mxu0 %v3466
        %3555 = vmatpush1.bf16.msra.mxu0 %v3465
        %3556 = vmatprep.subr.bf16.mxu0 %v3470
        %3557 = vmatpush1.bf16.msra.mxu0 %v3469
        %3558 = vmatprep.subr.bf16.mxu0 %v3474
        %3559 = vmatpush1.bf16.msra.mxu0 %v3473
        %3560 = vmatprep.subr.bf16.mxu0 %v3478
        %3561 = vmatpush1.bf16.msra.mxu0 %v3477
        %3562 = vmatprep.subr.bf16.mxu0 %v3482
        %3563 = vmatpush1.bf16.msra.mxu0 %v3481
        %3564 = vmatprep.subr.bf16.mxu0 %v3486
        %3565 = vmatpush1.bf16.msra.mxu0 %v3485
        %3566 = vmatprep.subr.bf16.mxu0 %v3490
        %3567 = vmatpush1.bf16.msra.mxu0 %v3489
        %3568 = vmatprep.subr.bf16.mxu0 0
        %3569 = vmatpush1.bf16.msra.mxu0 0
        %3570 = vmatprep.subr.bf16.mxu0 0
        %3571 = vmatpush1.bf16.msra.mxu0 0
        %3572 = vmatprep.subr.bf16.mxu0 0
        %3573 = vmatpush1.bf16.msra.mxu0 0
        %3574 = vmatprep.subr.bf16.mxu0 0
        %3575 = vmatpush1.bf16.msra.mxu0 0
        %3576 = vmatprep.mubr.bf16.mxu0 %v3542
        %3577 = vmatmul.mubr.bf16.gmra.mrb[0].mxu0 %v3250
        %v3578 = vpop.f32.mrb[0].mxu0
        %v3579 = vadd.f32 0.0, %v3578
        %v3580 = vpop.f32.mrb[0].mxu0
        %v3581 = vadd.f32 0.0, %v3580
        %v3582 = vpop.f32.mrb[0].mxu0
        %v3583 = vadd.f32 0.0, %v3582
        %v3584 = vpop.f32.mrb[0].mxu0
        %v3585 = vadd.f32 0.0, %v3584
        %3586 = vdwg.mxu0
        %3587 = vmatprep.subr.bf16.mxu0 %v3448
        %3588 = vmatpush1.bf16.msra.mxu0 %v3447
        %3589 = vmatprep.subr.bf16.mxu0 %v3452
        %3590 = vmatpush1.bf16.msra.mxu0 %v3451
        %3591 = vmatprep.subr.bf16.mxu0 %v3456
        %3592 = vmatpush1.bf16.msra.mxu0 %v3455
        %3593 = vmatprep.subr.bf16.mxu0 %v3460
        %3594 = vmatpush1.bf16.msra.mxu0 %v3459
        %3595 = vmatprep.subr.bf16.mxu0 %v3464
        %3596 = vmatpush1.bf16.msra.mxu0 %v3463
        %3597 = vmatprep.subr.bf16.mxu0 %v3468
        %3598 = vmatpush1.bf16.msra.mxu0 %v3467
        %3599 = vmatprep.subr.bf16.mxu0 %v3472
        %3600 = vmatpush1.bf16.msra.mxu0 %v3471
        %3601 = vmatprep.subr.bf16.mxu0 %v3476
        %3602 = vmatpush1.bf16.msra.mxu0 %v3475
        %3603 = vmatprep.subr.bf16.mxu0 %v3480
        %3604 = vmatpush1.bf16.msra.mxu0 %v3479
        %3605 = vmatprep.subr.bf16.mxu0 %v3484
        %3606 = vmatpush1.bf16.msra.mxu0 %v3483
        %3607 = vmatprep.subr.bf16.mxu0 %v3488
        %3608 = vmatpush1.bf16.msra.mxu0 %v3487
        %3609 = vmatprep.subr.bf16.mxu0 %v3492
        %3610 = vmatpush1.bf16.msra.mxu0 %v3491
        %3611 = vmatprep.subr.bf16.mxu0 0
        %3612 = vmatpush1.bf16.msra.mxu0 0
        %3613 = vmatprep.subr.bf16.mxu0 0
        %3614 = vmatpush1.bf16.msra.mxu0 0
        %3615 = vmatprep.subr.bf16.mxu0 0
        %3616 = vmatpush1.bf16.msra.mxu0 0
        %3617 = vmatprep.subr.bf16.mxu0 0
        %3618 = vmatpush1.bf16.msra.mxu0 0
        %3619 = vmatprep.mubr.bf16.mxu0 %v3542
        %3620 = vmatmul.mubr.bf16.gmra.mrb[0].mxu0 %v3250
        %v3621 = vpop.f32.mrb[0].mxu0
        %v3622 = vadd.f32 0.0, %v3621
        %v3623 = vpop.f32.mrb[0].mxu0
        %v3624 = vadd.f32 0.0, %v3623
        %v3625 = vpop.f32.mrb[0].mxu0
        %v3626 = vadd.f32 0.0, %v3625
        %v3627 = vpop.f32.mrb[0].mxu0
        %v3628 = vadd.f32 0.0, %v3627
        %3629 = vdwg.mxu0
        %v3630 = vadd.f32 %v3188, %v3579
        %v3631 = vadd.f32 %v3189, %v3581
        %v3632 = vadd.f32 %v3190, %v3622
        %v3633 = vadd.f32 %v3191, %v3624
        %v3634 = vadd.f32 %v3192, %v3583
        %v3635 = vadd.f32 %v3193, %v3585
        %v3636 = vadd.f32 %v3194, %v3626
        %v3637 = vadd.f32 %v3195, %v3628
        %s3638 = scalar_lea.vmem %s5, 56
        %v3639 = vld [vmem:[%s3638] sm:$0xf]
        %v3640 = vld [vmem:[%s3638 + $0x4] sm:$0xf]
        %v3643 = vunpack.c.l.b16 %v3639
        %v3644 = vunpack.c.l.b16 %v3640
        %v3645 = vpack.c.b16 %v3644, %v3643
        %v3647 = vsel %vm568, %v3645, 0
        %3649 = vmatprep.subr.bf16.mxu0 %v553
        %3650 = vmatpush1.bf16.msra.mxu0 %v552
        %3651 = vmatprep.subr.bf16.mxu0 %v555
        %3652 = vmatpush1.bf16.msra.mxu0 %v554
        %3653 = vmatprep.subr.bf16.mxu0 %v557
        %3654 = vmatpush1.bf16.msra.mxu0 %v556
        %3655 = vmatprep.subr.bf16.mxu0 %v559
        %3656 = vmatpush1.bf16.msra.mxu0 %v558
        %3657 = vmatprep.subr.bf16.mxu0 0
        %3658 = vmatpush1.bf16.msra.mxu0 0
        %3659 = vmatprep.subr.bf16.mxu0 0
        %3660 = vmatpush1.bf16.msra.mxu0 0
        %3661 = vmatprep.subr.bf16.mxu0 0
        %3662 = vmatpush1.bf16.msra.mxu0 0
        %3663 = vmatprep.subr.bf16.mxu0 0
        %3664 = vmatpush1.bf16.msra.mxu0 0
        %3665 = vmatprep.subr.bf16.mxu0 0
        %3666 = vmatpush1.bf16.msra.mxu0 0
        %3667 = vmatprep.subr.bf16.mxu0 0
        %3668 = vmatpush1.bf16.msra.mxu0 0
        %3669 = vmatprep.subr.bf16.mxu0 0
        %3670 = vmatpush1.bf16.msra.mxu0 0
        %3671 = vmatprep.subr.bf16.mxu0 0
        %3672 = vmatpush1.bf16.msra.mxu0 0
        %3673 = vmatprep.subr.bf16.mxu0 0
        %3674 = vmatpush1.bf16.msra.mxu0 0
        %3675 = vmatprep.subr.bf16.mxu0 0
        %3676 = vmatpush1.bf16.msra.mxu0 0
        %3677 = vmatprep.subr.bf16.mxu0 0
        %3678 = vmatpush1.bf16.msra.mxu0 0
        %3679 = vmatprep.subr.bf16.mxu0 0
        %3680 = vmatpush1.bf16.msra.mxu0 0
        %3681 = vmatprep.mubr.bf16.mxu0 0
        %3682 = vmatmul.mubr.bf16.gmra.mrb[0].mxu0 %v3647
        %v3683 = vpop.f32.mrb[0].mxu0
        %v3684 = vadd.f32 0.0, %v3683
        %v3685 = vpop.f32.mrb[0].mxu0
        %v3686 = vadd.f32 0.0, %v3685
        %v3687 = vpop.f32.mrb[0].mxu0
        %v3688 = vadd.f32 0.0, %v3687
        %v3689 = vpop.f32.mrb[0].mxu0
        %v3690 = vadd.f32 0.0, %v3689
        %3691 = vdwg.mxu0
        %v3692 = vpack.c.bf16 %v3688, %v3684
        %v3693 = vpack.c.bf16 %v3690, %v3686
        %s3694 = scalar_lea.vmem [#allocation5], 2688
        %v3695 = vld [vmem:[%s3694] sm:$0xff]
        %v3696 = vld [vmem:[%s3694 + $0x8] sm:$0xff]
        %v3697 = vld [vmem:[%s3694 + $0x10] sm:$0xff]
        %v3698 = vld [vmem:[%s3694 + $0x18] sm:$0xff]
        %v3699 = vld [vmem:[%s3694 + $0x20] sm:$0xff]
        %v3700 = vld [vmem:[%s3694 + $0x28] sm:$0xff]
        %v3701 = vld [vmem:[%s3694 + $0x30] sm:$0xff]
        %v3702 = vld [vmem:[%s3694 + $0x38] sm:$0xff]
        %v3703 = vld [vmem:[%s3694 + $0x40] sm:$0xff]
        %v3704 = vld [vmem:[%s3694 + $0x48] sm:$0xff]
        %v3705 = vld [vmem:[%s3694 + $0x50] sm:$0xff]
        %v3706 = vld [vmem:[%s3694 + $0x58] sm:$0xff]
        %v3707 = vld [vmem:[%s3694 + $0x60] sm:$0xff]
        %v3708 = vld [vmem:[%s3694 + $0x68] sm:$0xff]
        %v3709 = vld [vmem:[%s3694 + $0x70] sm:$0xff]
        %v3710 = vld [vmem:[%s3694 + $0x78] sm:$0xff]
        %v3711 = vld [vmem:[%s3694 + $0x80] sm:$0xff]
        %v3712 = vld [vmem:[%s3694 + $0x88] sm:$0xff]
        %v3713 = vld [vmem:[%s3694 + $0x90] sm:$0xff]
        %v3714 = vld [vmem:[%s3694 + $0x98] sm:$0xff]
        %v3715 = vld [vmem:[%s3694 + $0xa0] sm:$0xff]
        %v3716 = vld [vmem:[%s3694 + $0xa8] sm:$0xff]
        %v3717 = vld [vmem:[%s3694 + $0xb0] sm:$0xff]
        %v3718 = vld [vmem:[%s3694 + $0xb8] sm:$0xff]
        %v3719 = vld [vmem:[%s3694 + $0xc0] sm:$0xff]
        %v3720 = vld [vmem:[%s3694 + $0xc8] sm:$0xff]
        %v3721 = vld [vmem:[%s3694 + $0xd0] sm:$0xff]
        %v3722 = vld [vmem:[%s3694 + $0xd8] sm:$0xff]
        %v3723 = vld [vmem:[%s3694 + $0xe0] sm:$0xff]
        %v3724 = vld [vmem:[%s3694 + $0xe8] sm:$0xff]
        %v3725 = vld [vmem:[%s3694 + $0xf0] sm:$0xff]
        %v3726 = vld [vmem:[%s3694 + $0xf8] sm:$0xff]
        %v3727 = vld [vmem:[%s3694 + $0x100] sm:$0xff]
        %v3728 = vld [vmem:[%s3694 + $0x108] sm:$0xff]
        %v3729 = vld [vmem:[%s3694 + $0x110] sm:$0xff]
        %v3730 = vld [vmem:[%s3694 + $0x118] sm:$0xff]
        %v3731 = vld [vmem:[%s3694 + $0x120] sm:$0xff]
        %v3732 = vld [vmem:[%s3694 + $0x128] sm:$0xff]
        %v3733 = vld [vmem:[%s3694 + $0x130] sm:$0xff]
        %v3734 = vld [vmem:[%s3694 + $0x138] sm:$0xff]
        %v3735 = vld [vmem:[%s3694 + $0x140] sm:$0xff]
        %v3736 = vld [vmem:[%s3694 + $0x148] sm:$0xff]
        %v3737 = vld [vmem:[%s3694 + $0x150] sm:$0xff]
        %v3738 = vld [vmem:[%s3694 + $0x158] sm:$0xff]
        %v3739 = vld [vmem:[%s3694 + $0x160] sm:$0xff]
        %v3740 = vld [vmem:[%s3694 + $0x168] sm:$0xff]
        %v3741 = vld [vmem:[%s3694 + $0x170] sm:$0xff]
        %v3742 = vld [vmem:[%s3694 + $0x178] sm:$0xff]
        %v3791 = vunpack.c.l.b16 %v3695
        %v3792 = vunpack.c.h.b16 %v3695
        %v3793 = vunpack.c.l.b16 %v3696
        %v3794 = vunpack.c.h.b16 %v3696
        %v3795 = vunpack.c.l.b16 %v3697
        %v3796 = vunpack.c.h.b16 %v3697
        %v3797 = vunpack.c.l.b16 %v3698
        %v3798 = vunpack.c.h.b16 %v3698
        %v3799 = vunpack.c.l.b16 %v3699
        %v3800 = vunpack.c.h.b16 %v3699
        %v3801 = vunpack.c.l.b16 %v3700
        %v3802 = vunpack.c.h.b16 %v3700
        %v3803 = vunpack.c.l.b16 %v3701
        %v3804 = vunpack.c.h.b16 %v3701
        %v3805 = vunpack.c.l.b16 %v3702
        %v3806 = vunpack.c.h.b16 %v3702
        %v3807 = vunpack.c.l.b16 %v3703
        %v3808 = vunpack.c.h.b16 %v3703
        %v3809 = vunpack.c.l.b16 %v3704
        %v3810 = vunpack.c.h.b16 %v3704
        %v3811 = vunpack.c.l.b16 %v3705
        %v3812 = vunpack.c.h.b16 %v3705
        %v3813 = vunpack.c.l.b16 %v3706
        %v3814 = vunpack.c.h.b16 %v3706
        %v3815 = vunpack.c.l.b16 %v3707
        %v3816 = vunpack.c.h.b16 %v3707
        %v3817 = vunpack.c.l.b16 %v3708
        %v3818 = vunpack.c.h.b16 %v3708
        %v3819 = vunpack.c.l.b16 %v3709
        %v3820 = vunpack.c.h.b16 %v3709
        %v3821 = vunpack.c.l.b16 %v3710
        %v3822 = vunpack.c.h.b16 %v3710
        %v3823 = vunpack.c.l.b16 %v3711
        %v3824 = vunpack.c.h.b16 %v3711
        %v3825 = vunpack.c.l.b16 %v3712
        %v3826 = vunpack.c.h.b16 %v3712
        %v3827 = vunpack.c.l.b16 %v3713
        %v3828 = vunpack.c.h.b16 %v3713
        %v3829 = vunpack.c.l.b16 %v3714
        %v3830 = vunpack.c.h.b16 %v3714
        %v3831 = vunpack.c.l.b16 %v3715
        %v3832 = vunpack.c.h.b16 %v3715
        %v3833 = vunpack.c.l.b16 %v3716
        %v3834 = vunpack.c.h.b16 %v3716
        %v3835 = vunpack.c.l.b16 %v3717
        %v3836 = vunpack.c.h.b16 %v3717
        %v3837 = vunpack.c.l.b16 %v3718
        %v3838 = vunpack.c.h.b16 %v3718
        %v3839 = vunpack.c.l.b16 %v3719
        %v3840 = vunpack.c.h.b16 %v3719
        %v3841 = vunpack.c.l.b16 %v3720
        %v3842 = vunpack.c.h.b16 %v3720
        %v3843 = vunpack.c.l.b16 %v3721
        %v3844 = vunpack.c.h.b16 %v3721
        %v3845 = vunpack.c.l.b16 %v3722
        %v3846 = vunpack.c.h.b16 %v3722
        %v3847 = vunpack.c.l.b16 %v3723
        %v3848 = vunpack.c.h.b16 %v3723
        %v3849 = vunpack.c.l.b16 %v3724
        %v3850 = vunpack.c.h.b16 %v3724
        %v3851 = vunpack.c.l.b16 %v3725
        %v3852 = vunpack.c.h.b16 %v3725
        %v3853 = vunpack.c.l.b16 %v3726
        %v3854 = vunpack.c.h.b16 %v3726
        %v3855 = vunpack.c.l.b16 %v3727
        %v3856 = vunpack.c.h.b16 %v3727
        %v3857 = vunpack.c.l.b16 %v3728
        %v3858 = vunpack.c.h.b16 %v3728
        %v3859 = vunpack.c.l.b16 %v3729
        %v3860 = vunpack.c.h.b16 %v3729
        %v3861 = vunpack.c.l.b16 %v3730
        %v3862 = vunpack.c.h.b16 %v3730
        %v3863 = vunpack.c.l.b16 %v3731
        %v3864 = vunpack.c.h.b16 %v3731
        %v3865 = vunpack.c.l.b16 %v3732
        %v3866 = vunpack.c.h.b16 %v3732
        %v3867 = vunpack.c.l.b16 %v3733
        %v3868 = vunpack.c.h.b16 %v3733
        %v3869 = vunpack.c.l.b16 %v3734
        %v3870 = vunpack.c.h.b16 %v3734
        %v3871 = vunpack.c.l.b16 %v3735
        %v3872 = vunpack.c.h.b16 %v3735
        %v3873 = vunpack.c.l.b16 %v3736
        %v3874 = vunpack.c.h.b16 %v3736
        %v3875 = vunpack.c.l.b16 %v3737
        %v3876 = vunpack.c.h.b16 %v3737
        %v3877 = vunpack.c.l.b16 %v3738
        %v3878 = vunpack.c.h.b16 %v3738
        %v3879 = vunpack.c.l.b16 %v3739
        %v3880 = vunpack.c.h.b16 %v3739
        %v3881 = vunpack.c.l.b16 %v3740
        %v3882 = vunpack.c.h.b16 %v3740
        %v3883 = vunpack.c.l.b16 %v3741
        %v3884 = vunpack.c.h.b16 %v3741
        %v3885 = vunpack.c.l.b16 %v3742
        %v3886 = vunpack.c.h.b16 %v3742
        %v3887 = vpack.c.b16 %v3795, %v3791
        %v3888 = vpack.c.b16 %v3796, %v3792
        %v3889 = vpack.c.b16 %v3797, %v3793
        %v3890 = vpack.c.b16 %v3798, %v3794
        %v3891 = vpack.c.b16 %v3803, %v3799
        %v3892 = vpack.c.b16 %v3804, %v3800
        %v3893 = vpack.c.b16 %v3805, %v3801
        %v3894 = vpack.c.b16 %v3806, %v3802
        %v3895 = vpack.c.b16 %v3811, %v3807
        %v3896 = vpack.c.b16 %v3812, %v3808
        %v3897 = vpack.c.b16 %v3813, %v3809
        %v3898 = vpack.c.b16 %v3814, %v3810
        %v3899 = vpack.c.b16 %v3819, %v3815
        %v3900 = vpack.c.b16 %v3820, %v3816
        %v3901 = vpack.c.b16 %v3821, %v3817
        %v3902 = vpack.c.b16 %v3822, %v3818
        %v3903 = vpack.c.b16 %v3827, %v3823
        %v3904 = vpack.c.b16 %v3828, %v3824
        %v3905 = vpack.c.b16 %v3829, %v3825
        %v3906 = vpack.c.b16 %v3830, %v3826
        %v3907 = vpack.c.b16 %v3835, %v3831
        %v3908 = vpack.c.b16 %v3836, %v3832
        %v3909 = vpack.c.b16 %v3837, %v3833
        %v3910 = vpack.c.b16 %v3838, %v3834
        %v3911 = vpack.c.b16 %v3843, %v3839
        %v3912 = vpack.c.b16 %v3844, %v3840
        %v3913 = vpack.c.b16 %v3845, %v3841
        %v3914 = vpack.c.b16 %v3846, %v3842
        %v3915 = vpack.c.b16 %v3851, %v3847
        %v3916 = vpack.c.b16 %v3852, %v3848
        %v3917 = vpack.c.b16 %v3853, %v3849
        %v3918 = vpack.c.b16 %v3854, %v3850
        %v3919 = vpack.c.b16 %v3859, %v3855
        %v3920 = vpack.c.b16 %v3860, %v3856
        %v3921 = vpack.c.b16 %v3861, %v3857
        %v3922 = vpack.c.b16 %v3862, %v3858
        %v3923 = vpack.c.b16 %v3867, %v3863
        %v3924 = vpack.c.b16 %v3868, %v3864
        %v3925 = vpack.c.b16 %v3869, %v3865
        %v3926 = vpack.c.b16 %v3870, %v3866
        %v3927 = vpack.c.b16 %v3875, %v3871
        %v3928 = vpack.c.b16 %v3876, %v3872
        %v3929 = vpack.c.b16 %v3877, %v3873
        %v3930 = vpack.c.b16 %v3878, %v3874
        %v3931 = vpack.c.b16 %v3883, %v3879
        %v3932 = vpack.c.b16 %v3884, %v3880
        %v3933 = vpack.c.b16 %v3885, %v3881
        %v3934 = vpack.c.b16 %v3886, %v3882
        %v3984 = vsel %vm568, %v3693, 0
        %3986 = vmatprep.subr.bf16.mxu0 %v3888
        %3987 = vmatpush1.bf16.msra.mxu0 %v3887
        %3988 = vmatprep.subr.bf16.mxu0 %v3892
        %3989 = vmatpush1.bf16.msra.mxu0 %v3891
        %3990 = vmatprep.subr.bf16.mxu0 %v3896
        %3991 = vmatpush1.bf16.msra.mxu0 %v3895
        %3992 = vmatprep.subr.bf16.mxu0 %v3900
        %3993 = vmatpush1.bf16.msra.mxu0 %v3899
        %3994 = vmatprep.subr.bf16.mxu0 %v3904
        %3995 = vmatpush1.bf16.msra.mxu0 %v3903
        %3996 = vmatprep.subr.bf16.mxu0 %v3908
        %3997 = vmatpush1.bf16.msra.mxu0 %v3907
        %3998 = vmatprep.subr.bf16.mxu0 %v3912
        %3999 = vmatpush1.bf16.msra.mxu0 %v3911
        %4000 = vmatprep.subr.bf16.mxu0 %v3916
        %4001 = vmatpush1.bf16.msra.mxu0 %v3915
        %4002 = vmatprep.subr.bf16.mxu0 %v3920
        %4003 = vmatpush1.bf16.msra.mxu0 %v3919
        %4004 = vmatprep.subr.bf16.mxu0 %v3924
        %4005 = vmatpush1.bf16.msra.mxu0 %v3923
        %4006 = vmatprep.subr.bf16.mxu0 %v3928
        %4007 = vmatpush1.bf16.msra.mxu0 %v3927
        %4008 = vmatprep.subr.bf16.mxu0 %v3932
        %4009 = vmatpush1.bf16.msra.mxu0 %v3931
        %4010 = vmatprep.subr.bf16.mxu0 0
        %4011 = vmatpush1.bf16.msra.mxu0 0
        %4012 = vmatprep.subr.bf16.mxu0 0
        %4013 = vmatpush1.bf16.msra.mxu0 0
        %4014 = vmatprep.subr.bf16.mxu0 0
        %4015 = vmatpush1.bf16.msra.mxu0 0
        %4016 = vmatprep.subr.bf16.mxu0 0
        %4017 = vmatpush1.bf16.msra.mxu0 0
        %4018 = vmatprep.mubr.bf16.mxu0 %v3984
        %4019 = vmatmul.mubr.bf16.gmra.mrb[0].mxu0 %v3692
        %v4020 = vpop.f32.mrb[0].mxu0
        %v4021 = vadd.f32 0.0, %v4020
        %v4022 = vpop.f32.mrb[0].mxu0
        %v4023 = vadd.f32 0.0, %v4022
        %v4024 = vpop.f32.mrb[0].mxu0
        %v4025 = vadd.f32 0.0, %v4024
        %v4026 = vpop.f32.mrb[0].mxu0
        %v4027 = vadd.f32 0.0, %v4026
        %4028 = vdwg.mxu0
        %4029 = vmatprep.subr.bf16.mxu0 %v3890
        %4030 = vmatpush1.bf16.msra.mxu0 %v3889
        %4031 = vmatprep.subr.bf16.mxu0 %v3894
        %4032 = vmatpush1.bf16.msra.mxu0 %v3893
        %4033 = vmatprep.subr.bf16.mxu0 %v3898
        %4034 = vmatpush1.bf16.msra.mxu0 %v3897
        %4035 = vmatprep.subr.bf16.mxu0 %v3902
        %4036 = vmatpush1.bf16.msra.mxu0 %v3901
        %4037 = vmatprep.subr.bf16.mxu0 %v3906
        %4038 = vmatpush1.bf16.msra.mxu0 %v3905
        %4039 = vmatprep.subr.bf16.mxu0 %v3910
        %4040 = vmatpush1.bf16.msra.mxu0 %v3909
        %4041 = vmatprep.subr.bf16.mxu0 %v3914
        %4042 = vmatpush1.bf16.msra.mxu0 %v3913
        %4043 = vmatprep.subr.bf16.mxu0 %v3918
        %4044 = vmatpush1.bf16.msra.mxu0 %v3917
        %4045 = vmatprep.subr.bf16.mxu0 %v3922
        %4046 = vmatpush1.bf16.msra.mxu0 %v3921
        %4047 = vmatprep.subr.bf16.mxu0 %v3926
        %4048 = vmatpush1.bf16.msra.mxu0 %v3925
        %4049 = vmatprep.subr.bf16.mxu0 %v3930
        %4050 = vmatpush1.bf16.msra.mxu0 %v3929
        %4051 = vmatprep.subr.bf16.mxu0 %v3934
        %4052 = vmatpush1.bf16.msra.mxu0 %v3933
        %4053 = vmatprep.subr.bf16.mxu0 0
        %4054 = vmatpush1.bf16.msra.mxu0 0
        %4055 = vmatprep.subr.bf16.mxu0 0
        %4056 = vmatpush1.bf16.msra.mxu0 0
        %4057 = vmatprep.subr.bf16.mxu0 0
        %4058 = vmatpush1.bf16.msra.mxu0 0
        %4059 = vmatprep.subr.bf16.mxu0 0
        %4060 = vmatpush1.bf16.msra.mxu0 0
        %4061 = vmatprep.mubr.bf16.mxu0 %v3984
        %4062 = vmatmul.mubr.bf16.gmra.mrb[0].mxu0 %v3692
        %v4063 = vpop.f32.mrb[0].mxu0
        %v4064 = vadd.f32 0.0, %v4063
        %v4065 = vpop.f32.mrb[0].mxu0
        %v4066 = vadd.f32 0.0, %v4065
        %v4067 = vpop.f32.mrb[0].mxu0
        %v4068 = vadd.f32 0.0, %v4067
        %v4069 = vpop.f32.mrb[0].mxu0
        %v4070 = vadd.f32 0.0, %v4069
        %4071 = vdwg.mxu0
        %v4072 = vadd.f32 %v3630, %v4021
        %v4073 = vadd.f32 %v3631, %v4023
        %v4074 = vadd.f32 %v3632, %v4064
        %v4075 = vadd.f32 %v3633, %v4066
        %v4076 = vadd.f32 %v3634, %v4025
        %v4077 = vadd.f32 %v3635, %v4027
        %v4078 = vadd.f32 %v3636, %v4068
        %v4079 = vadd.f32 %v3637, %v4070
        %v4080 = vld [vmem:[#allocation11] sm:$0xf]
        %v4082 = vlaneseq
        %v4083 = vshrl.u32 %v4082, 7
        %v4084 = vsub.s32 0, %v4083
        %v4085 = vrot.slane %v4080, %v4084
        %v4086 = vlaneseq
        %v4087 = vshrl.u32 %v4086, 7
        %v4088 = vsub.s32 1, %v4087
        %v4089 = vrot.slane %v4080, %v4088
        %v4090 = vlaneseq
        %v4091 = vshrl.u32 %v4090, 7
        %v4092 = vsub.s32 2, %v4091
        %v4093 = vrot.slane %v4080, %v4092
        %v4094 = vlaneseq
        %v4095 = vshrl.u32 %v4094, 7
        %v4096 = vsub.s32 3, %v4095
        %v4097 = vrot.slane %v4080, %v4096
        %v4102 = vadd.f32 %v4072, %v4085
        %v4103 = vadd.f32 %v4073, %v4089
        %v4104 = vadd.f32 %v4074, %v4093
        %v4105 = vadd.f32 %v4075, %v4097
        %v4106 = vadd.f32 %v4076, %v4085
        %v4107 = vadd.f32 %v4077, %v4089
        %v4108 = vadd.f32 %v4078, %v4093
        %v4109 = vadd.f32 %v4079, %v4097
        %v4110 = vmax.f32 %v4102, 0.0
        %v4111 = vmax.f32 %v4103, 0.0
        %v4112 = vmax.f32 %v4104, 0.0
        %v4113 = vmax.f32 %v4105, 0.0
        %v4114 = vmax.f32 %v4106, 0.0
        %v4115 = vmax.f32 %v4107, 0.0
        %v4116 = vmax.f32 %v4108, 0.0
        %v4117 = vmax.f32 %v4109, 0.0
        %v4118 = vpack.c.bf16 %v4114, %v4110
        %v4119 = vpack.c.bf16 %v4115, %v4111
        %v4120 = vpack.c.bf16 %v4116, %v4112
        %v4121 = vpack.c.bf16 %v4117, %v4113
        %v4122 = vld [vmem:[%s6] sm:$0x7]
        %vm4123 = vcmask 121856
        %v4125 = vsel %vm4123, %v4122, 0
        %vm4127 = vcmask 1046528
        %vm4128 = vcmask 1047552
        %v4129 = vsel %vm4127, 4294967295, 65535
        %v4130 = vsel %vm4128, %v4129, 0
        %v4132 = vand.u32 %v4118, %v4130
        %v4135 = vand.u32 %v4119, %v4130
        %v4138 = vand.u32 %v4120, %v4130
        %v4141 = vand.u32 %v4121, %v4130
        %4143 = vmatprep.subr.bf16.mxu0 %v4135
        %4144 = vmatpush1.bf16.msra.mxu0 %v4132
        %4145 = vmatprep.subr.bf16.mxu0 0
        %4146 = vmatpush1.bf16.msra.mxu0 0
        %4147 = vmatprep.subr.bf16.mxu0 0
        %4148 = vmatpush1.bf16.msra.mxu0 0
        %4149 = vmatprep.subr.bf16.mxu0 0
        %4150 = vmatpush1.bf16.msra.mxu0 0
        %4151 = vmatprep.subr.bf16.mxu0 0
        %4152 = vmatpush1.bf16.msra.mxu0 0
        %4153 = vmatprep.subr.bf16.mxu0 0
        %4154 = vmatpush1.bf16.msra.mxu0 0
        %4155 = vmatprep.subr.bf16.mxu0 0
        %4156 = vmatpush1.bf16.msra.mxu0 0
        %4157 = vmatprep.subr.bf16.mxu0 0
        %4158 = vmatpush1.bf16.msra.mxu0 0
        %4159 = vmatprep.subr.bf16.mxu0 0
        %4160 = vmatpush1.bf16.msra.mxu0 0
        %4161 = vmatprep.subr.bf16.mxu0 0
        %4162 = vmatpush1.bf16.msra.mxu0 0
        %4163 = vmatprep.subr.bf16.mxu0 0
        %4164 = vmatpush1.bf16.msra.mxu0 0
        %4165 = vmatprep.subr.bf16.mxu0 0
        %4166 = vmatpush1.bf16.msra.mxu0 0
        %4167 = vmatprep.subr.bf16.mxu0 0
        %4168 = vmatpush1.bf16.msra.mxu0 0
        %4169 = vmatprep.subr.bf16.mxu0 0
        %4170 = vmatpush1.bf16.msra.mxu0 0
        %4171 = vmatprep.subr.bf16.mxu0 0
        %4172 = vmatpush1.bf16.msra.mxu0 0
        %4173 = vmatprep.subr.bf16.mxu0 0
        %4174 = vmatpush1.bf16.msra.mxu0 0
        %4175 = vmatprep.mubr.bf16.mxu0 0
        %4176 = vmatmul.mubr.bf16.gmra.mrb[0].mxu0 %v4125
        %v4177 = vpop.f32.mrb[0].mxu0
        %v4178 = vadd.f32 0.0, %v4177
        %v4179 = vpop.f32.mrb[0].mxu0
        %v4180 = vadd.f32 0.0, %v4179
        %v4181 = vpop.f32.mrb[0].mxu0
        %v4182 = vpop.f32.mrb[0].mxu0
        %4183 = vdwg.mxu0
        %4184 = vmatprep.subr.bf16.mxu0 %v4141
        %4185 = vmatpush1.bf16.msra.mxu0 %v4138
        %4186 = vmatprep.subr.bf16.mxu0 0
        %4187 = vmatpush1.bf16.msra.mxu0 0
        %4188 = vmatprep.subr.bf16.mxu0 0
        %4189 = vmatpush1.bf16.msra.mxu0 0
        %4190 = vmatprep.subr.bf16.mxu0 0
        %4191 = vmatpush1.bf16.msra.mxu0 0
        %4192 = vmatprep.subr.bf16.mxu0 0
        %4193 = vmatpush1.bf16.msra.mxu0 0
        %4194 = vmatprep.subr.bf16.mxu0 0
        %4195 = vmatpush1.bf16.msra.mxu0 0
        %4196 = vmatprep.subr.bf16.mxu0 0
        %4197 = vmatpush1.bf16.msra.mxu0 0
        %4198 = vmatprep.subr.bf16.mxu0 0
        %4199 = vmatpush1.bf16.msra.mxu0 0
        %4200 = vmatprep.subr.bf16.mxu0 0
        %4201 = vmatpush1.bf16.msra.mxu0 0
        %4202 = vmatprep.subr.bf16.mxu0 0
        %4203 = vmatpush1.bf16.msra.mxu0 0
        %4204 = vmatprep.subr.bf16.mxu0 0
        %4205 = vmatpush1.bf16.msra.mxu0 0
        %4206 = vmatprep.subr.bf16.mxu0 0
        %4207 = vmatpush1.bf16.msra.mxu0 0
        %4208 = vmatprep.subr.bf16.mxu0 0
        %4209 = vmatpush1.bf16.msra.mxu0 0
        %4210 = vmatprep.subr.bf16.mxu0 0
        %4211 = vmatpush1.bf16.msra.mxu0 0
        %4212 = vmatprep.subr.bf16.mxu0 0
        %4213 = vmatpush1.bf16.msra.mxu0 0
        %4214 = vmatprep.subr.bf16.mxu0 0
        %4215 = vmatpush1.bf16.msra.mxu0 0
        %4216 = vmatprep.mubr.bf16.mxu0 0
        %4217 = vmatmul.mubr.bf16.gmra.mrb[0].mxu0 %v4125
        %v4218 = vpop.f32.mrb[0].mxu0
        %v4219 = vadd.f32 0.0, %v4218
        %v4220 = vpop.f32.mrb[0].mxu0
        %v4221 = vadd.f32 0.0, %v4220
        %v4222 = vpop.f32.mrb[0].mxu0
        %v4223 = vpop.f32.mrb[0].mxu0
        %4224 = vdwg.mxu0
        %v4225 = vpack.c.bf16 %v4178, %v4178
        %v4226 = vpack.c.bf16 %v4180, %v4180
        %v4227 = vpack.c.bf16 %v4219, %v4219
        %v4228 = vpack.c.bf16 %v4221, %v4221
        %v4229 = vld [vmem:[#allocation7] sm:$0xff]
        %v4230 = vld [vmem:[#allocation7 + $0x8] sm:$0xf]
        %v4231 = vld [vmem:[#allocation7 + $0xc] sm:$0xff]
        %v4232 = vld [vmem:[#allocation7 + $0x14] sm:$0xf]
        %v4233 = vld [vmem:[#allocation7 + $0x18] sm:$0xff]
        %v4234 = vld [vmem:[#allocation7 + $0x20] sm:$0xf]
        %v4235 = vld [vmem:[#allocation7 + $0x24] sm:$0xff]
        %v4236 = vld [vmem:[#allocation7 + $0x2c] sm:$0xf]
        %v4237 = vld [vmem:[#allocation7 + $0x30] sm:$0xff]
        %v4238 = vld [vmem:[#allocation7 + $0x38] sm:$0xf]
        %v4239 = vld [vmem:[#allocation7 + $0x3c] sm:$0xff]
        %v4240 = vld [vmem:[#allocation7 + $0x44] sm:$0xf]
        %v4241 = vld [vmem:[#allocation7 + $0x48] sm:$0xff]
        %v4242 = vld [vmem:[#allocation7 + $0x50] sm:$0xf]
        %v4243 = vld [vmem:[#allocation7 + $0x54] sm:$0xff]
        %v4244 = vld [vmem:[#allocation7 + $0x5c] sm:$0xf]
        %v4245 = vld [vmem:[#allocation7 + $0x60] sm:$0xff]
        %v4246 = vld [vmem:[#allocation7 + $0x68] sm:$0xf]
        %v4247 = vld [vmem:[#allocation7 + $0x6c] sm:$0xff]
        %v4248 = vld [vmem:[#allocation7 + $0x74] sm:$0xf]
        %v4249 = vld [vmem:[#allocation7 + $0x78] sm:$0xff]
        %v4250 = vld [vmem:[#allocation7 + $0x80] sm:$0xf]
        %v4251 = vld [vmem:[#allocation7 + $0x84] sm:$0xff]
        %v4252 = vld [vmem:[#allocation7 + $0x8c] sm:$0xf]
        %v4253 = vld [vmem:[#allocation7 + $0x90] sm:$0xff]
        %v4254 = vld [vmem:[#allocation7 + $0x98] sm:$0xf]
        %v4255 = vld [vmem:[#allocation7 + $0x9c] sm:$0xff]
        %v4256 = vld [vmem:[#allocation7 + $0xa4] sm:$0xf]
        %v4257 = vld [vmem:[#allocation7 + $0xa8] sm:$0xff]
        %v4258 = vld [vmem:[#allocation7 + $0xb0] sm:$0xf]
        %v4259 = vld [vmem:[#allocation7 + $0xb4] sm:$0xff]
        %v4260 = vld [vmem:[#allocation7 + $0xbc] sm:$0xf]
        %v4261 = vld [vmem:[#allocation7 + $0xc0] sm:$0xff]
        %v4262 = vld [vmem:[#allocation7 + $0xc8] sm:$0xf]
        %v4263 = vld [vmem:[#allocation7 + $0xcc] sm:$0xff]
        %v4264 = vld [vmem:[#allocation7 + $0xd4] sm:$0xf]
        %v4265 = vld [vmem:[#allocation7 + $0xd8] sm:$0xff]
        %v4266 = vld [vmem:[#allocation7 + $0xe0] sm:$0xf]
        %v4267 = vld [vmem:[#allocation7 + $0xe4] sm:$0xff]
        %v4268 = vld [vmem:[#allocation7 + $0xec] sm:$0xf]
        %v4269 = vld [vmem:[#allocation7 + $0xf0] sm:$0xff]
        %v4270 = vld [vmem:[#allocation7 + $0xf8] sm:$0xf]
        %v4271 = vld [vmem:[#allocation7 + $0xfc] sm:$0xff]
        %v4272 = vld [vmem:[#allocation7 + $0x104] sm:$0xf]
        %v4273 = vld [vmem:[#allocation7 + $0x108] sm:$0xff]
        %v4274 = vld [vmem:[#allocation7 + $0x110] sm:$0xf]
        %v4275 = vld [vmem:[#allocation7 + $0x114] sm:$0xff]
        %v4276 = vld [vmem:[#allocation7 + $0x11c] sm:$0xf]
        %v4277 = vld [vmem:[#allocation7 + $0x120] sm:$0xff]
        %v4278 = vld [vmem:[#allocation7 + $0x128] sm:$0xf]
        %v4279 = vld [vmem:[#allocation7 + $0x12c] sm:$0xff]
        %v4280 = vld [vmem:[#allocation7 + $0x134] sm:$0xf]
        %v4281 = vld [vmem:[#allocation7 + $0x138] sm:$0xff]
        %v4282 = vld [vmem:[#allocation7 + $0x140] sm:$0xf]
        %v4283 = vld [vmem:[#allocation7 + $0x144] sm:$0xff]
        %v4284 = vld [vmem:[#allocation7 + $0x14c] sm:$0xf]
        %v4285 = vld [vmem:[#allocation7 + $0x150] sm:$0xff]
        %v4286 = vld [vmem:[#allocation7 + $0x158] sm:$0xf]
        %v4287 = vld [vmem:[#allocation7 + $0x15c] sm:$0xff]
        %v4288 = vld [vmem:[#allocation7 + $0x164] sm:$0xf]
        %v4289 = vld [vmem:[#allocation7 + $0x168] sm:$0xff]
        %v4290 = vld [vmem:[#allocation7 + $0x170] sm:$0xf]
        %v4291 = vld [vmem:[#allocation7 + $0x174] sm:$0xff]
        %v4292 = vld [vmem:[#allocation7 + $0x17c] sm:$0xf]
        %v4293 = vld [vmem:[#allocation7 + $0x180] sm:$0xff]
        %v4294 = vld [vmem:[#allocation7 + $0x188] sm:$0xf]
        %v4295 = vld [vmem:[#allocation7 + $0x18c] sm:$0xff]
        %v4296 = vld [vmem:[#allocation7 + $0x194] sm:$0xf]
        %v4297 = vld [vmem:[#allocation7 + $0x198] sm:$0xff]
        %v4298 = vld [vmem:[#allocation7 + $0x1a0] sm:$0xf]
        %v4299 = vld [vmem:[#allocation7 + $0x1a4] sm:$0xff]
        %v4300 = vld [vmem:[#allocation7 + $0x1ac] sm:$0xf]
        %v4301 = vld [vmem:[#allocation7 + $0x1b0] sm:$0xff]
        %v4302 = vld [vmem:[#allocation7 + $0x1b8] sm:$0xf]
        %v4303 = vld [vmem:[#allocation7 + $0x1bc] sm:$0xff]
        %v4304 = vld [vmem:[#allocation7 + $0x1c4] sm:$0xf]
        %v4305 = vld [vmem:[#allocation7 + $0x1c8] sm:$0xff]
        %v4306 = vld [vmem:[#allocation7 + $0x1d0] sm:$0xf]
        %v4307 = vld [vmem:[#allocation7 + $0x1d4] sm:$0xff]
        %v4308 = vld [vmem:[#allocation7 + $0x1dc] sm:$0xf]
        %v4309 = vld [vmem:[#allocation7 + $0x1e0] sm:$0xff]
        %v4310 = vld [vmem:[#allocation7 + $0x1e8] sm:$0xf]
        %v4311 = vld [vmem:[#allocation7 + $0x1ec] sm:$0xff]
        %v4312 = vld [vmem:[#allocation7 + $0x1f4] sm:$0xf]
        %v4313 = vld [vmem:[#allocation7 + $0x1f8] sm:$0xff]
        %v4314 = vld [vmem:[#allocation7 + $0x200] sm:$0xf]
        %v4315 = vld [vmem:[#allocation7 + $0x204] sm:$0xff]
        %v4316 = vld [vmem:[#allocation7 + $0x20c] sm:$0xf]
        %v4317 = vld [vmem:[#allocation7 + $0x210] sm:$0xff]
        %v4318 = vld [vmem:[#allocation7 + $0x218] sm:$0xf]
        %v4319 = vld [vmem:[#allocation7 + $0x21c] sm:$0xff]
        %v4320 = vld [vmem:[#allocation7 + $0x224] sm:$0xf]
        %v4321 = vld [vmem:[#allocation7 + $0x228] sm:$0xff]
        %v4322 = vld [vmem:[#allocation7 + $0x230] sm:$0xf]
        %v4323 = vld [vmem:[#allocation7 + $0x234] sm:$0xff]
        %v4324 = vld [vmem:[#allocation7 + $0x23c] sm:$0xf]
        %v4325 = vld [vmem:[#allocation7 + $0x240] sm:$0xff]
        %v4326 = vld [vmem:[#allocation7 + $0x248] sm:$0xf]
        %v4327 = vld [vmem:[#allocation7 + $0x24c] sm:$0xff]
        %v4328 = vld [vmem:[#allocation7 + $0x254] sm:$0xf]
        %v4329 = vld [vmem:[#allocation7 + $0x258] sm:$0xff]
        %v4330 = vld [vmem:[#allocation7 + $0x260] sm:$0xf]
        %v4331 = vld [vmem:[#allocation7 + $0x264] sm:$0xff]
        %v4332 = vld [vmem:[#allocation7 + $0x26c] sm:$0xf]
        %v4333 = vld [vmem:[#allocation7 + $0x270] sm:$0xff]
        %v4334 = vld [vmem:[#allocation7 + $0x278] sm:$0xf]
        %v4335 = vld [vmem:[#allocation7 + $0x27c] sm:$0xff]
        %v4336 = vld [vmem:[#allocation7 + $0x284] sm:$0xf]
        %v4337 = vld [vmem:[#allocation7 + $0x288] sm:$0xff]
        %v4338 = vld [vmem:[#allocation7 + $0x290] sm:$0xf]
        %v4339 = vld [vmem:[#allocation7 + $0x294] sm:$0xff]
        %v4340 = vld [vmem:[#allocation7 + $0x29c] sm:$0xf]
        %v4341 = vld [vmem:[#allocation7 + $0x2a0] sm:$0xff]
        %v4342 = vld [vmem:[#allocation7 + $0x2a8] sm:$0xf]
        %v4343 = vld [vmem:[#allocation7 + $0x2ac] sm:$0xff]
        %v4344 = vld [vmem:[#allocation7 + $0x2b4] sm:$0xf]
        %v4345 = vld [vmem:[#allocation7 + $0x2b8] sm:$0xff]
        %v4346 = vld [vmem:[#allocation7 + $0x2c0] sm:$0xf]
        %v4347 = vld [vmem:[#allocation7 + $0x2c4] sm:$0xff]
        %v4348 = vld [vmem:[#allocation7 + $0x2cc] sm:$0xf]
        %s4349 = scalar_lea.vmem %s6, 4
        %v4350 = vld [vmem:[%s4349] sm:$0x7]
        %v4352 = vsel %vm4123, %v4350, 0
        %4354 = vmatprep.subr.bf16.mxu0 %v4135
        %4355 = vmatpush1.bf16.msra.mxu0 %v4132
        %4356 = vmatprep.subr.bf16.mxu0 0
        %4357 = vmatpush1.bf16.msra.mxu0 0
        %4358 = vmatprep.subr.bf16.mxu0 0
        %4359 = vmatpush1.bf16.msra.mxu0 0
        %4360 = vmatprep.subr.bf16.mxu0 0
        %4361 = vmatpush1.bf16.msra.mxu0 0
        %4362 = vmatprep.subr.bf16.mxu0 0
        %4363 = vmatpush1.bf16.msra.mxu0 0
        %4364 = vmatprep.subr.bf16.mxu0 0
        %4365 = vmatpush1.bf16.msra.mxu0 0
        %4366 = vmatprep.subr.bf16.mxu0 0
        %4367 = vmatpush1.bf16.msra.mxu0 0
        %4368 = vmatprep.subr.bf16.mxu0 0
        %4369 = vmatpush1.bf16.msra.mxu0 0
        %4370 = vmatprep.subr.bf16.mxu0 0
        %4371 = vmatpush1.bf16.msra.mxu0 0
        %4372 = vmatprep.subr.bf16.mxu0 0
        %4373 = vmatpush1.bf16.msra.mxu0 0
        %4374 = vmatprep.subr.bf16.mxu0 0
        %4375 = vmatpush1.bf16.msra.mxu0 0
        %4376 = vmatprep.subr.bf16.mxu0 0
        %4377 = vmatpush1.bf16.msra.mxu0 0
        %4378 = vmatprep.subr.bf16.mxu0 0
        %4379 = vmatpush1.bf16.msra.mxu0 0
        %4380 = vmatprep.subr.bf16.mxu0 0
        %4381 = vmatpush1.bf16.msra.mxu0 0
        %4382 = vmatprep.subr.bf16.mxu0 0
        %4383 = vmatpush1.bf16.msra.mxu0 0
        %4384 = vmatprep.subr.bf16.mxu0 0
        %4385 = vmatpush1.bf16.msra.mxu0 0
        %4386 = vmatprep.mubr.bf16.mxu0 0
        %4387 = vmatmul.mubr.bf16.gmra.mrb[0].mxu0 %v4352
        %v4388 = vpop.f32.mrb[0].mxu0
        %v4389 = vadd.f32 0.0, %v4388
        %v4390 = vpop.f32.mrb[0].mxu0
        %v4391 = vadd.f32 0.0, %v4390
        %v4392 = vpop.f32.mrb[0].mxu0
        %v4393 = vpop.f32.mrb[0].mxu0
        %4394 = vdwg.mxu0
        %4395 = vmatprep.subr.bf16.mxu0 %v4141
        %4396 = vmatpush1.bf16.msra.mxu0 %v4138
        %4397 = vmatprep.subr.bf16.mxu0 0
        %4398 = vmatpush1.bf16.msra.mxu0 0
        %4399 = vmatprep.subr.bf16.mxu0 0
        %4400 = vmatpush1.bf16.msra.mxu0 0
        %4401 = vmatprep.subr.bf16.mxu0 0
        %4402 = vmatpush1.bf16.msra.mxu0 0
        %4403 = vmatprep.subr.bf16.mxu0 0
        %4404 = vmatpush1.bf16.msra.mxu0 0
        %4405 = vmatprep.subr.bf16.mxu0 0
        %4406 = vmatpush1.bf16.msra.mxu0 0
        %4407 = vmatprep.subr.bf16.mxu0 0
        %4408 = vmatpush1.bf16.msra.mxu0 0
        %4409 = vmatprep.subr.bf16.mxu0 0
        %4410 = vmatpush1.bf16.msra.mxu0 0
        %4411 = vmatprep.subr.bf16.mxu0 0
        %4412 = vmatpush1.bf16.msra.mxu0 0
        %4413 = vmatprep.subr.bf16.mxu0 0
        %4414 = vmatpush1.bf16.msra.mxu0 0
        %4415 = vmatprep.subr.bf16.mxu0 0
        %4416 = vmatpush1.bf16.msra.mxu0 0
        %4417 = vmatprep.subr.bf16.mxu0 0
        %4418 = vmatpush1.bf16.msra.mxu0 0
        %4419 = vmatprep.subr.bf16.mxu0 0
        %4420 = vmatpush1.bf16.msra.mxu0 0
        %4421 = vmatprep.subr.bf16.mxu0 0
        %4422 = vmatpush1.bf16.msra.mxu0 0
        %4423 = vmatprep.subr.bf16.mxu0 0
        %4424 = vmatpush1.bf16.msra.mxu0 0
        %4425 = vmatprep.subr.bf16.mxu0 0
        %4426 = vmatpush1.bf16.msra.mxu0 0
        %4427 = vmatprep.mubr.bf16.mxu0 0
        %4428 = vmatmul.mubr.bf16.gmra.mrb[0].mxu0 %v4352
        %v4429 = vpop.f32.mrb[0].mxu0
        %v4430 = vadd.f32 0.0, %v4429
        %v4431 = vpop.f32.mrb[0].mxu0
        %v4432 = vadd.f32 0.0, %v4431
        %v4433 = vpop.f32.mrb[0].mxu0
        %v4434 = vpop.f32.mrb[0].mxu0
        %4435 = vdwg.mxu0
        %v4436 = vpack.c.bf16 %v4389, %v4389
        %v4437 = vpack.c.bf16 %v4391, %v4391
        %v4438 = vpack.c.bf16 %v4430, %v4430
        %v4439 = vpack.c.bf16 %v4432, %v4432
        %s4440 = scalar_lea.vmem [#allocation7], 720
        %v4441 = vld [vmem:[%s4440] sm:$0xff]
        %v4442 = vld [vmem:[%s4440 + $0x8] sm:$0xf]
        %v4443 = vld [vmem:[%s4440 + $0xc] sm:$0xff]
        %v4444 = vld [vmem:[%s4440 + $0x14] sm:$0xf]
        %v4445 = vld [vmem:[%s4440 + $0x18] sm:$0xff]
        %v4446 = vld [vmem:[%s4440 + $0x20] sm:$0xf]
        %v4447 = vld [vmem:[%s4440 + $0x24] sm:$0xff]
        %v4448 = vld [vmem:[%s4440 + $0x2c] sm:$0xf]
        %v4449 = vld [vmem:[%s4440 + $0x30] sm:$0xff]
        %v4450 = vld [vmem:[%s4440 + $0x38] sm:$0xf]
        %v4451 = vld [vmem:[%s4440 + $0x3c] sm:$0xff]
        %v4452 = vld [vmem:[%s4440 + $0x44] sm:$0xf]
        %v4453 = vld [vmem:[%s4440 + $0x48] sm:$0xff]
        %v4454 = vld [vmem:[%s4440 + $0x50] sm:$0xf]
        %v4455 = vld [vmem:[%s4440 + $0x54] sm:$0xff]
        %v4456 = vld [vmem:[%s4440 + $0x5c] sm:$0xf]
        %v4457 = vld [vmem:[%s4440 + $0x60] sm:$0xff]
        %v4458 = vld [vmem:[%s4440 + $0x68] sm:$0xf]
        %v4459 = vld [vmem:[%s4440 + $0x6c] sm:$0xff]
        %v4460 = vld [vmem:[%s4440 + $0x74] sm:$0xf]
        %v4461 = vld [vmem:[%s4440 + $0x78] sm:$0xff]
        %v4462 = vld [vmem:[%s4440 + $0x80] sm:$0xf]
        %v4463 = vld [vmem:[%s4440 + $0x84] sm:$0xff]
        %v4464 = vld [vmem:[%s4440 + $0x8c] sm:$0xf]
        %v4465 = vld [vmem:[%s4440 + $0x90] sm:$0xff]
        %v4466 = vld [vmem:[%s4440 + $0x98] sm:$0xf]
        %v4467 = vld [vmem:[%s4440 + $0x9c] sm:$0xff]
        %v4468 = vld [vmem:[%s4440 + $0xa4] sm:$0xf]
        %v4469 = vld [vmem:[%s4440 + $0xa8] sm:$0xff]
        %v4470 = vld [vmem:[%s4440 + $0xb0] sm:$0xf]
        %v4471 = vld [vmem:[%s4440 + $0xb4] sm:$0xff]
        %v4472 = vld [vmem:[%s4440 + $0xbc] sm:$0xf]
        %v4473 = vld [vmem:[%s4440 + $0xc0] sm:$0xff]
        %v4474 = vld [vmem:[%s4440 + $0xc8] sm:$0xf]
        %v4475 = vld [vmem:[%s4440 + $0xcc] sm:$0xff]
        %v4476 = vld [vmem:[%s4440 + $0xd4] sm:$0xf]
        %v4477 = vld [vmem:[%s4440 + $0xd8] sm:$0xff]
        %v4478 = vld [vmem:[%s4440 + $0xe0] sm:$0xf]
        %v4479 = vld [vmem:[%s4440 + $0xe4] sm:$0xff]
        %v4480 = vld [vmem:[%s4440 + $0xec] sm:$0xf]
        %v4481 = vld [vmem:[%s4440 + $0xf0] sm:$0xff]
        %v4482 = vld [vmem:[%s4440 + $0xf8] sm:$0xf]
        %v4483 = vld [vmem:[%s4440 + $0xfc] sm:$0xff]
        %v4484 = vld [vmem:[%s4440 + $0x104] sm:$0xf]
        %v4485 = vld [vmem:[%s4440 + $0x108] sm:$0xff]
        %v4486 = vld [vmem:[%s4440 + $0x110] sm:$0xf]
        %v4487 = vld [vmem:[%s4440 + $0x114] sm:$0xff]
        %v4488 = vld [vmem:[%s4440 + $0x11c] sm:$0xf]
        %v4489 = vld [vmem:[%s4440 + $0x120] sm:$0xff]
        %v4490 = vld [vmem:[%s4440 + $0x128] sm:$0xf]
        %v4491 = vld [vmem:[%s4440 + $0x12c] sm:$0xff]
        %v4492 = vld [vmem:[%s4440 + $0x134] sm:$0xf]
        %v4493 = vld [vmem:[%s4440 + $0x138] sm:$0xff]
        %v4494 = vld [vmem:[%s4440 + $0x140] sm:$0xf]
        %v4495 = vld [vmem:[%s4440 + $0x144] sm:$0xff]
        %v4496 = vld [vmem:[%s4440 + $0x14c] sm:$0xf]
        %v4497 = vld [vmem:[%s4440 + $0x150] sm:$0xff]
        %v4498 = vld [vmem:[%s4440 + $0x158] sm:$0xf]
        %v4499 = vld [vmem:[%s4440 + $0x15c] sm:$0xff]
        %v4500 = vld [vmem:[%s4440 + $0x164] sm:$0xf]
        %v4501 = vld [vmem:[%s4440 + $0x168] sm:$0xff]
        %v4502 = vld [vmem:[%s4440 + $0x170] sm:$0xf]
        %v4503 = vld [vmem:[%s4440 + $0x174] sm:$0xff]
        %v4504 = vld [vmem:[%s4440 + $0x17c] sm:$0xf]
        %v4505 = vld [vmem:[%s4440 + $0x180] sm:$0xff]
        %v4506 = vld [vmem:[%s4440 + $0x188] sm:$0xf]
        %v4507 = vld [vmem:[%s4440 + $0x18c] sm:$0xff]
        %v4508 = vld [vmem:[%s4440 + $0x194] sm:$0xf]
        %v4509 = vld [vmem:[%s4440 + $0x198] sm:$0xff]
        %v4510 = vld [vmem:[%s4440 + $0x1a0] sm:$0xf]
        %v4511 = vld [vmem:[%s4440 + $0x1a4] sm:$0xff]
        %v4512 = vld [vmem:[%s4440 + $0x1ac] sm:$0xf]
        %v4513 = vld [vmem:[%s4440 + $0x1b0] sm:$0xff]
        %v4514 = vld [vmem:[%s4440 + $0x1b8] sm:$0xf]
        %v4515 = vld [vmem:[%s4440 + $0x1bc] sm:$0xff]
        %v4516 = vld [vmem:[%s4440 + $0x1c4] sm:$0xf]
        %v4517 = vld [vmem:[%s4440 + $0x1c8] sm:$0xff]
        %v4518 = vld [vmem:[%s4440 + $0x1d0] sm:$0xf]
        %v4519 = vld [vmem:[%s4440 + $0x1d4] sm:$0xff]
        %v4520 = vld [vmem:[%s4440 + $0x1dc] sm:$0xf]
        %v4521 = vld [vmem:[%s4440 + $0x1e0] sm:$0xff]
        %v4522 = vld [vmem:[%s4440 + $0x1e8] sm:$0xf]
        %v4523 = vld [vmem:[%s4440 + $0x1ec] sm:$0xff]
        %v4524 = vld [vmem:[%s4440 + $0x1f4] sm:$0xf]
        %v4525 = vld [vmem:[%s4440 + $0x1f8] sm:$0xff]
        %v4526 = vld [vmem:[%s4440 + $0x200] sm:$0xf]
        %v4527 = vld [vmem:[%s4440 + $0x204] sm:$0xff]
        %v4528 = vld [vmem:[%s4440 + $0x20c] sm:$0xf]
        %v4529 = vld [vmem:[%s4440 + $0x210] sm:$0xff]
        %v4530 = vld [vmem:[%s4440 + $0x218] sm:$0xf]
        %v4531 = vld [vmem:[%s4440 + $0x21c] sm:$0xff]
        %v4532 = vld [vmem:[%s4440 + $0x224] sm:$0xf]
        %v4533 = vld [vmem:[%s4440 + $0x228] sm:$0xff]
        %v4534 = vld [vmem:[%s4440 + $0x230] sm:$0xf]
        %v4535 = vld [vmem:[%s4440 + $0x234] sm:$0xff]
        %v4536 = vld [vmem:[%s4440 + $0x23c] sm:$0xf]
        %v4537 = vld [vmem:[%s4440 + $0x240] sm:$0xff]
        %v4538 = vld [vmem:[%s4440 + $0x248] sm:$0xf]
        %v4539 = vld [vmem:[%s4440 + $0x24c] sm:$0xff]
        %v4540 = vld [vmem:[%s4440 + $0x254] sm:$0xf]
        %v4541 = vld [vmem:[%s4440 + $0x258] sm:$0xff]
        %v4542 = vld [vmem:[%s4440 + $0x260] sm:$0xf]
        %v4543 = vld [vmem:[%s4440 + $0x264] sm:$0xff]
        %v4544 = vld [vmem:[%s4440 + $0x26c] sm:$0xf]
        %v4545 = vld [vmem:[%s4440 + $0x270] sm:$0xff]
        %v4546 = vld [vmem:[%s4440 + $0x278] sm:$0xf]
        %v4547 = vld [vmem:[%s4440 + $0x27c] sm:$0xff]
        %v4548 = vld [vmem:[%s4440 + $0x284] sm:$0xf]
        %v4549 = vld [vmem:[%s4440 + $0x288] sm:$0xff]
        %v4550 = vld [vmem:[%s4440 + $0x290] sm:$0xf]
        %v4551 = vld [vmem:[%s4440 + $0x294] sm:$0xff]
        %v4552 = vld [vmem:[%s4440 + $0x29c] sm:$0xf]
        %v4553 = vld [vmem:[%s4440 + $0x2a0] sm:$0xff]
        %v4554 = vld [vmem:[%s4440 + $0x2a8] sm:$0xf]
        %v4555 = vld [vmem:[%s4440 + $0x2ac] sm:$0xff]
        %v4556 = vld [vmem:[%s4440 + $0x2b4] sm:$0xf]
        %v4557 = vld [vmem:[%s4440 + $0x2b8] sm:$0xff]
        %v4558 = vld [vmem:[%s4440 + $0x2c0] sm:$0xf]
        %v4559 = vld [vmem:[%s4440 + $0x2c4] sm:$0xff]
        %v4560 = vld [vmem:[%s4440 + $0x2cc] sm:$0xf]
        %v4681 = vunpack.c.l.b16 %v4441
        %v4682 = vunpack.c.h.b16 %v4441
        %v4683 = vunpack.c.l.b16 %v4442
        %v4684 = vunpack.c.l.b16 %v4443
        %v4685 = vunpack.c.h.b16 %v4443
        %v4686 = vunpack.c.l.b16 %v4444
        %v4687 = vunpack.c.l.b16 %v4445
        %v4688 = vunpack.c.h.b16 %v4445
        %v4689 = vunpack.c.l.b16 %v4446
        %v4690 = vunpack.c.l.b16 %v4447
        %v4691 = vunpack.c.h.b16 %v4447
        %v4692 = vunpack.c.l.b16 %v4448
        %v4693 = vunpack.c.l.b16 %v4449
        %v4694 = vunpack.c.h.b16 %v4449
        %v4695 = vunpack.c.l.b16 %v4450
        %v4696 = vunpack.c.l.b16 %v4451
        %v4697 = vunpack.c.h.b16 %v4451
        %v4698 = vunpack.c.l.b16 %v4452
        %v4699 = vunpack.c.l.b16 %v4453
        %v4700 = vunpack.c.h.b16 %v4453
        %v4701 = vunpack.c.l.b16 %v4454
        %v4702 = vunpack.c.l.b16 %v4455
        %v4703 = vunpack.c.h.b16 %v4455
        %v4704 = vunpack.c.l.b16 %v4456
        %v4705 = vunpack.c.l.b16 %v4457
        %v4706 = vunpack.c.h.b16 %v4457
        %v4707 = vunpack.c.l.b16 %v4458
        %v4708 = vunpack.c.l.b16 %v4459
        %v4709 = vunpack.c.h.b16 %v4459
        %v4710 = vunpack.c.l.b16 %v4460
        %v4711 = vunpack.c.l.b16 %v4461
        %v4712 = vunpack.c.h.b16 %v4461
        %v4713 = vunpack.c.l.b16 %v4462
        %v4714 = vunpack.c.l.b16 %v4463
        %v4715 = vunpack.c.h.b16 %v4463
        %v4716 = vunpack.c.l.b16 %v4464
        %v4717 = vunpack.c.l.b16 %v4465
        %v4718 = vunpack.c.h.b16 %v4465
        %v4719 = vunpack.c.l.b16 %v4466
        %v4720 = vunpack.c.l.b16 %v4467
        %v4721 = vunpack.c.h.b16 %v4467
        %v4722 = vunpack.c.l.b16 %v4468
        %v4723 = vunpack.c.l.b16 %v4469
        %v4724 = vunpack.c.h.b16 %v4469
        %v4725 = vunpack.c.l.b16 %v4470
        %v4726 = vunpack.c.l.b16 %v4471
        %v4727 = vunpack.c.h.b16 %v4471
        %v4728 = vunpack.c.l.b16 %v4472
        %v4729 = vunpack.c.l.b16 %v4473
        %v4730 = vunpack.c.h.b16 %v4473
        %v4731 = vunpack.c.l.b16 %v4474
        %v4732 = vunpack.c.l.b16 %v4475
        %v4733 = vunpack.c.h.b16 %v4475
        %v4734 = vunpack.c.l.b16 %v4476
        %v4735 = vunpack.c.l.b16 %v4477
        %v4736 = vunpack.c.h.b16 %v4477
        %v4737 = vunpack.c.l.b16 %v4478
        %v4738 = vunpack.c.l.b16 %v4479
        %v4739 = vunpack.c.h.b16 %v4479
        %v4740 = vunpack.c.l.b16 %v4480
        %v4741 = vunpack.c.l.b16 %v4481
        %v4742 = vunpack.c.h.b16 %v4481
        %v4743 = vunpack.c.l.b16 %v4482
        %v4744 = vunpack.c.l.b16 %v4483
        %v4745 = vunpack.c.h.b16 %v4483
        %v4746 = vunpack.c.l.b16 %v4484
        %v4747 = vunpack.c.l.b16 %v4485
        %v4748 = vunpack.c.h.b16 %v4485
        %v4749 = vunpack.c.l.b16 %v4486
        %v4750 = vunpack.c.l.b16 %v4487
        %v4751 = vunpack.c.h.b16 %v4487
        %v4752 = vunpack.c.l.b16 %v4488
        %v4753 = vunpack.c.l.b16 %v4489
        %v4754 = vunpack.c.h.b16 %v4489
        %v4755 = vunpack.c.l.b16 %v4490
        %v4756 = vunpack.c.l.b16 %v4491
        %v4757 = vunpack.c.h.b16 %v4491
        %v4758 = vunpack.c.l.b16 %v4492
        %v4759 = vunpack.c.l.b16 %v4493
        %v4760 = vunpack.c.h.b16 %v4493
        %v4761 = vunpack.c.l.b16 %v4494
        %v4762 = vunpack.c.l.b16 %v4495
        %v4763 = vunpack.c.h.b16 %v4495
        %v4764 = vunpack.c.l.b16 %v4496
        %v4765 = vunpack.c.l.b16 %v4497
        %v4766 = vunpack.c.h.b16 %v4497
        %v4767 = vunpack.c.l.b16 %v4498
        %v4768 = vunpack.c.l.b16 %v4499
        %v4769 = vunpack.c.h.b16 %v4499
        %v4770 = vunpack.c.l.b16 %v4500
        %v4771 = vunpack.c.l.b16 %v4501
        %v4772 = vunpack.c.h.b16 %v4501
        %v4773 = vunpack.c.l.b16 %v4502
        %v4774 = vunpack.c.l.b16 %v4503
        %v4775 = vunpack.c.h.b16 %v4503
        %v4776 = vunpack.c.l.b16 %v4504
        %v4777 = vunpack.c.l.b16 %v4505
        %v4778 = vunpack.c.h.b16 %v4505
        %v4779 = vunpack.c.l.b16 %v4506
        %v4780 = vunpack.c.l.b16 %v4507
        %v4781 = vunpack.c.h.b16 %v4507
        %v4782 = vunpack.c.l.b16 %v4508
        %v4783 = vunpack.c.l.b16 %v4509
        %v4784 = vunpack.c.h.b16 %v4509
        %v4785 = vunpack.c.l.b16 %v4510
        %v4786 = vunpack.c.l.b16 %v4511
        %v4787 = vunpack.c.h.b16 %v4511
        %v4788 = vunpack.c.l.b16 %v4512
        %v4789 = vunpack.c.l.b16 %v4513
        %v4790 = vunpack.c.h.b16 %v4513
        %v4791 = vunpack.c.l.b16 %v4514
        %v4792 = vunpack.c.l.b16 %v4515
        %v4793 = vunpack.c.h.b16 %v4515
        %v4794 = vunpack.c.l.b16 %v4516
        %v4795 = vunpack.c.l.b16 %v4517
        %v4796 = vunpack.c.h.b16 %v4517
        %v4797 = vunpack.c.l.b16 %v4518
        %v4798 = vunpack.c.l.b16 %v4519
        %v4799 = vunpack.c.h.b16 %v4519
        %v4800 = vunpack.c.l.b16 %v4520
        %v4801 = vunpack.c.l.b16 %v4521
        %v4802 = vunpack.c.h.b16 %v4521
        %v4803 = vunpack.c.l.b16 %v4522
        %v4804 = vunpack.c.l.b16 %v4523
        %v4805 = vunpack.c.h.b16 %v4523
        %v4806 = vunpack.c.l.b16 %v4524
        %v4807 = vunpack.c.l.b16 %v4525
        %v4808 = vunpack.c.h.b16 %v4525
        %v4809 = vunpack.c.l.b16 %v4526
        %v4810 = vunpack.c.l.b16 %v4527
        %v4811 = vunpack.c.h.b16 %v4527
        %v4812 = vunpack.c.l.b16 %v4528
        %v4813 = vunpack.c.l.b16 %v4529
        %v4814 = vunpack.c.h.b16 %v4529
        %v4815 = vunpack.c.l.b16 %v4530
        %v4816 = vunpack.c.l.b16 %v4531
        %v4817 = vunpack.c.h.b16 %v4531
        %v4818 = vunpack.c.l.b16 %v4532
        %v4819 = vunpack.c.l.b16 %v4533
        %v4820 = vunpack.c.h.b16 %v4533
        %v4821 = vunpack.c.l.b16 %v4534
        %v4822 = vunpack.c.l.b16 %v4535
        %v4823 = vunpack.c.h.b16 %v4535
        %v4824 = vunpack.c.l.b16 %v4536
        %v4825 = vunpack.c.l.b16 %v4537
        %v4826 = vunpack.c.h.b16 %v4537
        %v4827 = vunpack.c.l.b16 %v4538
        %v4828 = vunpack.c.l.b16 %v4539
        %v4829 = vunpack.c.h.b16 %v4539
        %v4830 = vunpack.c.l.b16 %v4540
        %v4831 = vunpack.c.l.b16 %v4541
        %v4832 = vunpack.c.h.b16 %v4541
        %v4833 = vunpack.c.l.b16 %v4542
        %v4834 = vunpack.c.l.b16 %v4543
        %v4835 = vunpack.c.h.b16 %v4543
        %v4836 = vunpack.c.l.b16 %v4544
        %v4837 = vunpack.c.l.b16 %v4545
        %v4838 = vunpack.c.h.b16 %v4545
        %v4839 = vunpack.c.l.b16 %v4546
        %v4840 = vunpack.c.l.b16 %v4547
        %v4841 = vunpack.c.h.b16 %v4547
        %v4842 = vunpack.c.l.b16 %v4548
        %v4843 = vunpack.c.l.b16 %v4549
        %v4844 = vunpack.c.h.b16 %v4549
        %v4845 = vunpack.c.l.b16 %v4550
        %v4846 = vunpack.c.l.b16 %v4551
        %v4847 = vunpack.c.h.b16 %v4551
        %v4848 = vunpack.c.l.b16 %v4552
        %v4849 = vunpack.c.l.b16 %v4553
        %v4850 = vunpack.c.h.b16 %v4553
        %v4851 = vunpack.c.l.b16 %v4554
        %v4852 = vunpack.c.l.b16 %v4555
        %v4853 = vunpack.c.h.b16 %v4555
        %v4854 = vunpack.c.l.b16 %v4556
        %v4855 = vunpack.c.l.b16 %v4557
        %v4856 = vunpack.c.h.b16 %v4557
        %v4857 = vunpack.c.l.b16 %v4558
        %v4858 = vunpack.c.l.b16 %v4559
        %v4859 = vunpack.c.h.b16 %v4559
        %v4860 = vunpack.c.l.b16 %v4560
        %v4861 = vpack.c.b16 %v4684, %v4681
        %v4862 = vpack.c.b16 %v4685, %v4682
        %v4863 = vpack.c.b16 %v4686, %v4683
        %v4864 = vpack.c.b16 %v4690, %v4687
        %v4865 = vpack.c.b16 %v4691, %v4688
        %v4866 = vpack.c.b16 %v4692, %v4689
        %v4867 = vpack.c.b16 %v4696, %v4693
        %v4868 = vpack.c.b16 %v4697, %v4694
        %v4869 = vpack.c.b16 %v4698, %v4695
        %v4870 = vpack.c.b16 %v4702, %v4699
        %v4871 = vpack.c.b16 %v4703, %v4700
        %v4872 = vpack.c.b16 %v4704, %v4701
        %v4873 = vpack.c.b16 %v4708, %v4705
        %v4874 = vpack.c.b16 %v4709, %v4706
        %v4875 = vpack.c.b16 %v4710, %v4707
        %v4876 = vpack.c.b16 %v4714, %v4711
        %v4877 = vpack.c.b16 %v4715, %v4712
        %v4878 = vpack.c.b16 %v4716, %v4713
        %v4879 = vpack.c.b16 %v4720, %v4717
        %v4880 = vpack.c.b16 %v4721, %v4718
        %v4881 = vpack.c.b16 %v4722, %v4719
        %v4882 = vpack.c.b16 %v4726, %v4723
        %v4883 = vpack.c.b16 %v4727, %v4724
        %v4884 = vpack.c.b16 %v4728, %v4725
        %v4885 = vpack.c.b16 %v4732, %v4729
        %v4886 = vpack.c.b16 %v4733, %v4730
        %v4887 = vpack.c.b16 %v4734, %v4731
        %v4888 = vpack.c.b16 %v4738, %v4735
        %v4889 = vpack.c.b16 %v4739, %v4736
        %v4890 = vpack.c.b16 %v4740, %v4737
        %v4891 = vpack.c.b16 %v4744, %v4741
        %v4892 = vpack.c.b16 %v4745, %v4742
        %v4893 = vpack.c.b16 %v4746, %v4743
        %v4894 = vpack.c.b16 %v4750, %v4747
        %v4895 = vpack.c.b16 %v4751, %v4748
        %v4896 = vpack.c.b16 %v4752, %v4749
        %v4897 = vpack.c.b16 %v4756, %v4753
        %v4898 = vpack.c.b16 %v4757, %v4754
        %v4899 = vpack.c.b16 %v4758, %v4755
        %v4900 = vpack.c.b16 %v4762, %v4759
        %v4901 = vpack.c.b16 %v4763, %v4760
        %v4902 = vpack.c.b16 %v4764, %v4761
        %v4903 = vpack.c.b16 %v4768, %v4765
        %v4904 = vpack.c.b16 %v4769, %v4766
        %v4905 = vpack.c.b16 %v4770, %v4767
        %v4906 = vpack.c.b16 %v4774, %v4771
        %v4907 = vpack.c.b16 %v4775, %v4772
        %v4908 = vpack.c.b16 %v4776, %v4773
        %v4909 = vpack.c.b16 %v4780, %v4777
        %v4910 = vpack.c.b16 %v4781, %v4778
        %v4911 = vpack.c.b16 %v4782, %v4779
        %v4912 = vpack.c.b16 %v4786, %v4783
        %v4913 = vpack.c.b16 %v4787, %v4784
        %v4914 = vpack.c.b16 %v4788, %v4785
        %v4915 = vpack.c.b16 %v4792, %v4789
        %v4916 = vpack.c.b16 %v4793, %v4790
        %v4917 = vpack.c.b16 %v4794, %v4791
        %v4918 = vpack.c.b16 %v4798, %v4795
        %v4919 = vpack.c.b16 %v4799, %v4796
        %v4920 = vpack.c.b16 %v4800, %v4797
        %v4921 = vpack.c.b16 %v4804, %v4801
        %v4922 = vpack.c.b16 %v4805, %v4802
        %v4923 = vpack.c.b16 %v4806, %v4803
        %v4924 = vpack.c.b16 %v4810, %v4807
        %v4925 = vpack.c.b16 %v4811, %v4808
        %v4926 = vpack.c.b16 %v4812, %v4809
        %v4927 = vpack.c.b16 %v4816, %v4813
        %v4928 = vpack.c.b16 %v4817, %v4814
        %v4929 = vpack.c.b16 %v4818, %v4815
        %v4930 = vpack.c.b16 %v4822, %v4819
        %v4931 = vpack.c.b16 %v4823, %v4820
        %v4932 = vpack.c.b16 %v4824, %v4821
        %v4933 = vpack.c.b16 %v4828, %v4825
        %v4934 = vpack.c.b16 %v4829, %v4826
        %v4935 = vpack.c.b16 %v4830, %v4827
        %v4936 = vpack.c.b16 %v4834, %v4831
        %v4937 = vpack.c.b16 %v4835, %v4832
        %v4938 = vpack.c.b16 %v4836, %v4833
        %v4939 = vpack.c.b16 %v4840, %v4837
        %v4940 = vpack.c.b16 %v4841, %v4838
        %v4941 = vpack.c.b16 %v4842, %v4839
        %v4942 = vpack.c.b16 %v4846, %v4843
        %v4943 = vpack.c.b16 %v4847, %v4844
        %v4944 = vpack.c.b16 %v4848, %v4845
        %v4945 = vpack.c.b16 %v4852, %v4849
        %v4946 = vpack.c.b16 %v4853, %v4850
        %v4947 = vpack.c.b16 %v4854, %v4851
        %v4948 = vpack.c.b16 %v4858, %v4855
        %v4949 = vpack.c.b16 %v4859, %v4856
        %v4950 = vpack.c.b16 %v4860, %v4857
        %vm5041 = vcmask 785408
        %v5043 = vsel %vm5041, %v4439, 0
        %5045 = vmatprep.subr.bf16.mxu0 %v4862
        %5046 = vmatpush1.bf16.msra.mxu0 %v4861
        %5047 = vmatprep.subr.bf16.mxu0 %v4865
        %5048 = vmatpush1.bf16.msra.mxu0 %v4864
        %5049 = vmatprep.subr.bf16.mxu0 %v4868
        %5050 = vmatpush1.bf16.msra.mxu0 %v4867
        %5051 = vmatprep.subr.bf16.mxu0 %v4871
        %5052 = vmatpush1.bf16.msra.mxu0 %v4870
        %5053 = vmatprep.subr.bf16.mxu0 %v4874
        %5054 = vmatpush1.bf16.msra.mxu0 %v4873
        %5055 = vmatprep.subr.bf16.mxu0 %v4877
        %5056 = vmatpush1.bf16.msra.mxu0 %v4876
        %5057 = vmatprep.subr.bf16.mxu0 %v4880
        %5058 = vmatpush1.bf16.msra.mxu0 %v4879
        %5059 = vmatprep.subr.bf16.mxu0 %v4883
        %5060 = vmatpush1.bf16.msra.mxu0 %v4882
        %5061 = vmatprep.subr.bf16.mxu0 %v4886
        %5062 = vmatpush1.bf16.msra.mxu0 %v4885
        %5063 = vmatprep.subr.bf16.mxu0 %v4889
        %5064 = vmatpush1.bf16.msra.mxu0 %v4888
        %5065 = vmatprep.subr.bf16.mxu0 %v4892
        %5066 = vmatpush1.bf16.msra.mxu0 %v4891
        %5067 = vmatprep.subr.bf16.mxu0 %v4895
        %5068 = vmatpush1.bf16.msra.mxu0 %v4894
        %5069 = vmatprep.subr.bf16.mxu0 %v4898
        %5070 = vmatpush1.bf16.msra.mxu0 %v4897
        %5071 = vmatprep.subr.bf16.mxu0 %v4901
        %5072 = vmatpush1.bf16.msra.mxu0 %v4900
        %5073 = vmatprep.subr.bf16.mxu0 %v4904
        %5074 = vmatpush1.bf16.msra.mxu0 %v4903
        %5075 = vmatprep.subr.bf16.mxu0 %v4907
        %5076 = vmatpush1.bf16.msra.mxu0 %v4906
        %5077 = vmatprep.mubr.bf16.mxu0 %v4437
        %5078 = vmatmul.mubr.bf16.gmra.mrb[0].mxu0 %v4436
        %v5079 = vpop.f32.mrb[0].mxu0
        %v5080 = vadd.f32 0.0, %v5079
        %v5081 = vpop.f32.mrb[0].mxu0
        %v5082 = vadd.f32 0.0, %v5081
        %v5083 = vpop.f32.mrb[0].mxu0
        %v5084 = vpop.f32.mrb[0].mxu0
        %5085 = vdwg.mxu0
        %5086 = vmatprep.subr.bf16.mxu0 %v4910
        %5087 = vmatpush1.bf16.msra.mxu0 %v4909
        %5088 = vmatprep.subr.bf16.mxu0 %v4913
        %5089 = vmatpush1.bf16.msra.mxu0 %v4912
        %5090 = vmatprep.subr.bf16.mxu0 %v4916
        %5091 = vmatpush1.bf16.msra.mxu0 %v4915
        %5092 = vmatprep.subr.bf16.mxu0 %v4919
        %5093 = vmatpush1.bf16.msra.mxu0 %v4918
        %5094 = vmatprep.subr.bf16.mxu0 %v4922
        %5095 = vmatpush1.bf16.msra.mxu0 %v4921
        %5096 = vmatprep.subr.bf16.mxu0 %v4925
        %5097 = vmatpush1.bf16.msra.mxu0 %v4924
        %5098 = vmatprep.subr.bf16.mxu0 %v4928
        %5099 = vmatpush1.bf16.msra.mxu0 %v4927
        %5100 = vmatprep.subr.bf16.mxu0 %v4931
        %5101 = vmatpush1.bf16.msra.mxu0 %v4930
        %5102 = vmatprep.subr.bf16.mxu0 %v4934
        %5103 = vmatpush1.bf16.msra.mxu0 %v4933
        %5104 = vmatprep.subr.bf16.mxu0 %v4937
        %5105 = vmatpush1.bf16.msra.mxu0 %v4936
        %5106 = vmatprep.subr.bf16.mxu0 %v4940
        %5107 = vmatpush1.bf16.msra.mxu0 %v4939
        %5108 = vmatprep.subr.bf16.mxu0 %v4943
        %5109 = vmatpush1.bf16.msra.mxu0 %v4942
        %5110 = vmatprep.subr.bf16.mxu0 %v4946
        %5111 = vmatpush1.bf16.msra.mxu0 %v4945
        %5112 = vmatprep.subr.bf16.mxu0 %v4949
        %5113 = vmatpush1.bf16.msra.mxu0 %v4948
        %5114 = vmatprep.subr.bf16.mxu0 0
        %5115 = vmatpush1.bf16.msra.mxu0 0
        %5116 = vmatprep.subr.bf16.mxu0 0
        %5117 = vmatpush1.bf16.msra.mxu0 0
        %5118 = vmatprep.mubr.bf16.mxu0 %v5043
        %5119 = vmatmul.mubr.bf16.gmra.mrb[0].mxu0 %v4438
        %v5120 = vpop.f32.mrb[0].mxu0
        %v5121 = vadd.f32 %v5080, %v5120
        %v5122 = vpop.f32.mrb[0].mxu0
        %v5123 = vadd.f32 %v5082, %v5122
        %v5124 = vpop.f32.mrb[0].mxu0
        %v5125 = vpop.f32.mrb[0].mxu0
        %5126 = vdwg.mxu0
        %5127 = vmatprep.subr.bf16.mxu0 0
        %5128 = vmatpush1.bf16.msra.mxu0 %v4863
        %5129 = vmatprep.subr.bf16.mxu0 0
        %5130 = vmatpush1.bf16.msra.mxu0 %v4866
        %5131 = vmatprep.subr.bf16.mxu0 0
        %5132 = vmatpush1.bf16.msra.mxu0 %v4869
        %5133 = vmatprep.subr.bf16.mxu0 0
        %5134 = vmatpush1.bf16.msra.mxu0 %v4872
        %5135 = vmatprep.subr.bf16.mxu0 0
        %5136 = vmatpush1.bf16.msra.mxu0 %v4875
        %5137 = vmatprep.subr.bf16.mxu0 0
        %5138 = vmatpush1.bf16.msra.mxu0 %v4878
        %5139 = vmatprep.subr.bf16.mxu0 0
        %5140 = vmatpush1.bf16.msra.mxu0 %v4881
        %5141 = vmatprep.subr.bf16.mxu0 0
        %5142 = vmatpush1.bf16.msra.mxu0 %v4884
        %5143 = vmatprep.subr.bf16.mxu0 0
        %5144 = vmatpush1.bf16.msra.mxu0 %v4887
        %5145 = vmatprep.subr.bf16.mxu0 0
        %5146 = vmatpush1.bf16.msra.mxu0 %v4890
        %5147 = vmatprep.subr.bf16.mxu0 0
        %5148 = vmatpush1.bf16.msra.mxu0 %v4893
        %5149 = vmatprep.subr.bf16.mxu0 0
        %5150 = vmatpush1.bf16.msra.mxu0 %v4896
        %5151 = vmatprep.subr.bf16.mxu0 0
        %5152 = vmatpush1.bf16.msra.mxu0 %v4899
        %5153 = vmatprep.subr.bf16.mxu0 0
        %5154 = vmatpush1.bf16.msra.mxu0 %v4902
        %5155 = vmatprep.subr.bf16.mxu0 0
        %5156 = vmatpush1.bf16.msra.mxu0 %v4905
        %5157 = vmatprep.subr.bf16.mxu0 0
        %5158 = vmatpush1.bf16.msra.mxu0 %v4908
        %5159 = vmatprep.mubr.bf16.mxu0 %v4437
        %5160 = vmatmul.mubr.bf16.gmra.mrb[0].mxu0 %v4436
        %v5161 = vpop.f32.mrb[0].mxu0
        %v5162 = vadd.f32 0.0, %v5161
        %v5163 = vpop.f32.mrb[0].mxu0
        %v5164 = vpop.f32.mrb[0].mxu0
        %v5165 = vpop.f32.mrb[0].mxu0
        %5166 = vdwg.mxu0
        %5167 = vmatprep.subr.bf16.mxu0 0
        %5168 = vmatpush1.bf16.msra.mxu0 %v4911
        %5169 = vmatprep.subr.bf16.mxu0 0
        %5170 = vmatpush1.bf16.msra.mxu0 %v4914
        %5171 = vmatprep.subr.bf16.mxu0 0
        %5172 = vmatpush1.bf16.msra.mxu0 %v4917
        %5173 = vmatprep.subr.bf16.mxu0 0
        %5174 = vmatpush1.bf16.msra.mxu0 %v4920
        %5175 = vmatprep.subr.bf16.mxu0 0
        %5176 = vmatpush1.bf16.msra.mxu0 %v4923
        %5177 = vmatprep.subr.bf16.mxu0 0
        %5178 = vmatpush1.bf16.msra.mxu0 %v4926
        %5179 = vmatprep.subr.bf16.mxu0 0
        %5180 = vmatpush1.bf16.msra.mxu0 %v4929
        %5181 = vmatprep.subr.bf16.mxu0 0
        %5182 = vmatpush1.bf16.msra.mxu0 %v4932
        %5183 = vmatprep.subr.bf16.mxu0 0
        %5184 = vmatpush1.bf16.msra.mxu0 %v4935
        %5185 = vmatprep.subr.bf16.mxu0 0
        %5186 = vmatpush1.bf16.msra.mxu0 %v4938
        %5187 = vmatprep.subr.bf16.mxu0 0
        %5188 = vmatpush1.bf16.msra.mxu0 %v4941
        %5189 = vmatprep.subr.bf16.mxu0 0
        %5190 = vmatpush1.bf16.msra.mxu0 %v4944
        %5191 = vmatprep.subr.bf16.mxu0 0
        %5192 = vmatpush1.bf16.msra.mxu0 %v4947
        %5193 = vmatprep.subr.bf16.mxu0 0
        %5194 = vmatpush1.bf16.msra.mxu0 %v4950
        %5195 = vmatprep.subr.bf16.mxu0 0
        %5196 = vmatpush1.bf16.msra.mxu0 0
        %5197 = vmatprep.subr.bf16.mxu0 0
        %5198 = vmatpush1.bf16.msra.mxu0 0
        %5199 = vmatprep.mubr.bf16.mxu0 %v5043
        %5200 = vmatmul.mubr.bf16.gmra.mrb[0].mxu0 %v4438
        %v5201 = vpop.f32.mrb[0].mxu0
        %v5202 = vadd.f32 %v5162, %v5201
        %v5203 = vpop.f32.mrb[0].mxu0
        %v5204 = vpop.f32.mrb[0].mxu0
        %v5205 = vpop.f32.mrb[0].mxu0
        %5206 = vdwg.mxu0
        %v5327 = vunpack.c.l.b16 %v4229
        %v5328 = vunpack.c.h.b16 %v4229
        %v5329 = vunpack.c.l.b16 %v4230
        %v5330 = vunpack.c.l.b16 %v4231
        %v5331 = vunpack.c.h.b16 %v4231
        %v5332 = vunpack.c.l.b16 %v4232
        %v5333 = vunpack.c.l.b16 %v4233
        %v5334 = vunpack.c.h.b16 %v4233
        %v5335 = vunpack.c.l.b16 %v4234
        %v5336 = vunpack.c.l.b16 %v4235
        %v5337 = vunpack.c.h.b16 %v4235
        %v5338 = vunpack.c.l.b16 %v4236
        %v5339 = vunpack.c.l.b16 %v4237
        %v5340 = vunpack.c.h.b16 %v4237
        %v5341 = vunpack.c.l.b16 %v4238
        %v5342 = vunpack.c.l.b16 %v4239
        %v5343 = vunpack.c.h.b16 %v4239
        %v5344 = vunpack.c.l.b16 %v4240
        %v5345 = vunpack.c.l.b16 %v4241
        %v5346 = vunpack.c.h.b16 %v4241
        %v5347 = vunpack.c.l.b16 %v4242
        %v5348 = vunpack.c.l.b16 %v4243
        %v5349 = vunpack.c.h.b16 %v4243
        %v5350 = vunpack.c.l.b16 %v4244
        %v5351 = vunpack.c.l.b16 %v4245
        %v5352 = vunpack.c.h.b16 %v4245
        %v5353 = vunpack.c.l.b16 %v4246
        %v5354 = vunpack.c.l.b16 %v4247
        %v5355 = vunpack.c.h.b16 %v4247
        %v5356 = vunpack.c.l.b16 %v4248
        %v5357 = vunpack.c.l.b16 %v4249
        %v5358 = vunpack.c.h.b16 %v4249
        %v5359 = vunpack.c.l.b16 %v4250
        %v5360 = vunpack.c.l.b16 %v4251
        %v5361 = vunpack.c.h.b16 %v4251
        %v5362 = vunpack.c.l.b16 %v4252
        %v5363 = vunpack.c.l.b16 %v4253
        %v5364 = vunpack.c.h.b16 %v4253
        %v5365 = vunpack.c.l.b16 %v4254
        %v5366 = vunpack.c.l.b16 %v4255
        %v5367 = vunpack.c.h.b16 %v4255
        %v5368 = vunpack.c.l.b16 %v4256
        %v5369 = vunpack.c.l.b16 %v4257
        %v5370 = vunpack.c.h.b16 %v4257
        %v5371 = vunpack.c.l.b16 %v4258
        %v5372 = vunpack.c.l.b16 %v4259
        %v5373 = vunpack.c.h.b16 %v4259
        %v5374 = vunpack.c.l.b16 %v4260
        %v5375 = vunpack.c.l.b16 %v4261
        %v5376 = vunpack.c.h.b16 %v4261
        %v5377 = vunpack.c.l.b16 %v4262
        %v5378 = vunpack.c.l.b16 %v4263
        %v5379 = vunpack.c.h.b16 %v4263
        %v5380 = vunpack.c.l.b16 %v4264
        %v5381 = vunpack.c.l.b16 %v4265
        %v5382 = vunpack.c.h.b16 %v4265
        %v5383 = vunpack.c.l.b16 %v4266
        %v5384 = vunpack.c.l.b16 %v4267
        %v5385 = vunpack.c.h.b16 %v4267
        %v5386 = vunpack.c.l.b16 %v4268
        %v5387 = vunpack.c.l.b16 %v4269
        %v5388 = vunpack.c.h.b16 %v4269
        %v5389 = vunpack.c.l.b16 %v4270
        %v5390 = vunpack.c.l.b16 %v4271
        %v5391 = vunpack.c.h.b16 %v4271
        %v5392 = vunpack.c.l.b16 %v4272
        %v5393 = vunpack.c.l.b16 %v4273
        %v5394 = vunpack.c.h.b16 %v4273
        %v5395 = vunpack.c.l.b16 %v4274
        %v5396 = vunpack.c.l.b16 %v4275
        %v5397 = vunpack.c.h.b16 %v4275
        %v5398 = vunpack.c.l.b16 %v4276
        %v5399 = vunpack.c.l.b16 %v4277
        %v5400 = vunpack.c.h.b16 %v4277
        %v5401 = vunpack.c.l.b16 %v4278
        %v5402 = vunpack.c.l.b16 %v4279
        %v5403 = vunpack.c.h.b16 %v4279
        %v5404 = vunpack.c.l.b16 %v4280
        %v5405 = vunpack.c.l.b16 %v4281
        %v5406 = vunpack.c.h.b16 %v4281
        %v5407 = vunpack.c.l.b16 %v4282
        %v5408 = vunpack.c.l.b16 %v4283
        %v5409 = vunpack.c.h.b16 %v4283
        %v5410 = vunpack.c.l.b16 %v4284
        %v5411 = vunpack.c.l.b16 %v4285
        %v5412 = vunpack.c.h.b16 %v4285
        %v5413 = vunpack.c.l.b16 %v4286
        %v5414 = vunpack.c.l.b16 %v4287
        %v5415 = vunpack.c.h.b16 %v4287
        %v5416 = vunpack.c.l.b16 %v4288
        %v5417 = vunpack.c.l.b16 %v4289
        %v5418 = vunpack.c.h.b16 %v4289
        %v5419 = vunpack.c.l.b16 %v4290
        %v5420 = vunpack.c.l.b16 %v4291
        %v5421 = vunpack.c.h.b16 %v4291
        %v5422 = vunpack.c.l.b16 %v4292
        %v5423 = vunpack.c.l.b16 %v4293
        %v5424 = vunpack.c.h.b16 %v4293
        %v5425 = vunpack.c.l.b16 %v4294
        %v5426 = vunpack.c.l.b16 %v4295
        %v5427 = vunpack.c.h.b16 %v4295
        %v5428 = vunpack.c.l.b16 %v4296
        %v5429 = vunpack.c.l.b16 %v4297
        %v5430 = vunpack.c.h.b16 %v4297
        %v5431 = vunpack.c.l.b16 %v4298
        %v5432 = vunpack.c.l.b16 %v4299
        %v5433 = vunpack.c.h.b16 %v4299
        %v5434 = vunpack.c.l.b16 %v4300
        %v5435 = vunpack.c.l.b16 %v4301
        %v5436 = vunpack.c.h.b16 %v4301
        %v5437 = vunpack.c.l.b16 %v4302
        %v5438 = vunpack.c.l.b16 %v4303
        %v5439 = vunpack.c.h.b16 %v4303
        %v5440 = vunpack.c.l.b16 %v4304
        %v5441 = vunpack.c.l.b16 %v4305
        %v5442 = vunpack.c.h.b16 %v4305
        %v5443 = vunpack.c.l.b16 %v4306
        %v5444 = vunpack.c.l.b16 %v4307
        %v5445 = vunpack.c.h.b16 %v4307
        %v5446 = vunpack.c.l.b16 %v4308
        %v5447 = vunpack.c.l.b16 %v4309
        %v5448 = vunpack.c.h.b16 %v4309
        %v5449 = vunpack.c.l.b16 %v4310
        %v5450 = vunpack.c.l.b16 %v4311
        %v5451 = vunpack.c.h.b16 %v4311
        %v5452 = vunpack.c.l.b16 %v4312
        %v5453 = vunpack.c.l.b16 %v4313
        %v5454 = vunpack.c.h.b16 %v4313
        %v5455 = vunpack.c.l.b16 %v4314
        %v5456 = vunpack.c.l.b16 %v4315
        %v5457 = vunpack.c.h.b16 %v4315
        %v5458 = vunpack.c.l.b16 %v4316
        %v5459 = vunpack.c.l.b16 %v4317
        %v5460 = vunpack.c.h.b16 %v4317
        %v5461 = vunpack.c.l.b16 %v4318
        %v5462 = vunpack.c.l.b16 %v4319
        %v5463 = vunpack.c.h.b16 %v4319
        %v5464 = vunpack.c.l.b16 %v4320
        %v5465 = vunpack.c.l.b16 %v4321
        %v5466 = vunpack.c.h.b16 %v4321
        %v5467 = vunpack.c.l.b16 %v4322
        %v5468 = vunpack.c.l.b16 %v4323
        %v5469 = vunpack.c.h.b16 %v4323
        %v5470 = vunpack.c.l.b16 %v4324
        %v5471 = vunpack.c.l.b16 %v4325
        %v5472 = vunpack.c.h.b16 %v4325
        %v5473 = vunpack.c.l.b16 %v4326
        %v5474 = vunpack.c.l.b16 %v4327
        %v5475 = vunpack.c.h.b16 %v4327
        %v5476 = vunpack.c.l.b16 %v4328
        %v5477 = vunpack.c.l.b16 %v4329
        %v5478 = vunpack.c.h.b16 %v4329
        %v5479 = vunpack.c.l.b16 %v4330
        %v5480 = vunpack.c.l.b16 %v4331
        %v5481 = vunpack.c.h.b16 %v4331
        %v5482 = vunpack.c.l.b16 %v4332
        %v5483 = vunpack.c.l.b16 %v4333
        %v5484 = vunpack.c.h.b16 %v4333
        %v5485 = vunpack.c.l.b16 %v4334
        %v5486 = vunpack.c.l.b16 %v4335
        %v5487 = vunpack.c.h.b16 %v4335
        %v5488 = vunpack.c.l.b16 %v4336
        %v5489 = vunpack.c.l.b16 %v4337
        %v5490 = vunpack.c.h.b16 %v4337
        %v5491 = vunpack.c.l.b16 %v4338
        %v5492 = vunpack.c.l.b16 %v4339
        %v5493 = vunpack.c.h.b16 %v4339
        %v5494 = vunpack.c.l.b16 %v4340
        %v5495 = vunpack.c.l.b16 %v4341
        %v5496 = vunpack.c.h.b16 %v4341
        %v5497 = vunpack.c.l.b16 %v4342
        %v5498 = vunpack.c.l.b16 %v4343
        %v5499 = vunpack.c.h.b16 %v4343
        %v5500 = vunpack.c.l.b16 %v4344
        %v5501 = vunpack.c.l.b16 %v4345
        %v5502 = vunpack.c.h.b16 %v4345
        %v5503 = vunpack.c.l.b16 %v4346
        %v5504 = vunpack.c.l.b16 %v4347
        %v5505 = vunpack.c.h.b16 %v4347
        %v5506 = vunpack.c.l.b16 %v4348
        %v5507 = vpack.c.b16 %v5330, %v5327
        %v5508 = vpack.c.b16 %v5331, %v5328
        %v5509 = vpack.c.b16 %v5332, %v5329
        %v5510 = vpack.c.b16 %v5336, %v5333
        %v5511 = vpack.c.b16 %v5337, %v5334
        %v5512 = vpack.c.b16 %v5338, %v5335
        %v5513 = vpack.c.b16 %v5342, %v5339
        %v5514 = vpack.c.b16 %v5343, %v5340
        %v5515 = vpack.c.b16 %v5344, %v5341
        %v5516 = vpack.c.b16 %v5348, %v5345
        %v5517 = vpack.c.b16 %v5349, %v5346
        %v5518 = vpack.c.b16 %v5350, %v5347
        %v5519 = vpack.c.b16 %v5354, %v5351
        %v5520 = vpack.c.b16 %v5355, %v5352
        %v5521 = vpack.c.b16 %v5356, %v5353
        %v5522 = vpack.c.b16 %v5360, %v5357
        %v5523 = vpack.c.b16 %v5361, %v5358
        %v5524 = vpack.c.b16 %v5362, %v5359
        %v5525 = vpack.c.b16 %v5366, %v5363
        %v5526 = vpack.c.b16 %v5367, %v5364
        %v5527 = vpack.c.b16 %v5368, %v5365
        %v5528 = vpack.c.b16 %v5372, %v5369
        %v5529 = vpack.c.b16 %v5373, %v5370
        %v5530 = vpack.c.b16 %v5374, %v5371
        %v5531 = vpack.c.b16 %v5378, %v5375
        %v5532 = vpack.c.b16 %v5379, %v5376
        %v5533 = vpack.c.b16 %v5380, %v5377
        %v5534 = vpack.c.b16 %v5384, %v5381
        %v5535 = vpack.c.b16 %v5385, %v5382
        %v5536 = vpack.c.b16 %v5386, %v5383
        %v5537 = vpack.c.b16 %v5390, %v5387
        %v5538 = vpack.c.b16 %v5391, %v5388
        %v5539 = vpack.c.b16 %v5392, %v5389
        %v5540 = vpack.c.b16 %v5396, %v5393
        %v5541 = vpack.c.b16 %v5397, %v5394
        %v5542 = vpack.c.b16 %v5398, %v5395
        %v5543 = vpack.c.b16 %v5402, %v5399
        %v5544 = vpack.c.b16 %v5403, %v5400
        %v5545 = vpack.c.b16 %v5404, %v5401
        %v5546 = vpack.c.b16 %v5408, %v5405
        %v5547 = vpack.c.b16 %v5409, %v5406
        %v5548 = vpack.c.b16 %v5410, %v5407
        %v5549 = vpack.c.b16 %v5414, %v5411
        %v5550 = vpack.c.b16 %v5415, %v5412
        %v5551 = vpack.c.b16 %v5416, %v5413
        %v5552 = vpack.c.b16 %v5420, %v5417
        %v5553 = vpack.c.b16 %v5421, %v5418
        %v5554 = vpack.c.b16 %v5422, %v5419
        %v5555 = vpack.c.b16 %v5426, %v5423
        %v5556 = vpack.c.b16 %v5427, %v5424
        %v5557 = vpack.c.b16 %v5428, %v5425
        %v5558 = vpack.c.b16 %v5432, %v5429
        %v5559 = vpack.c.b16 %v5433, %v5430
        %v5560 = vpack.c.b16 %v5434, %v5431
        %v5561 = vpack.c.b16 %v5438, %v5435
        %v5562 = vpack.c.b16 %v5439, %v5436
        %v5563 = vpack.c.b16 %v5440, %v5437
        %v5564 = vpack.c.b16 %v5444, %v5441
        %v5565 = vpack.c.b16 %v5445, %v5442
        %v5566 = vpack.c.b16 %v5446, %v5443
        %v5567 = vpack.c.b16 %v5450, %v5447
        %v5568 = vpack.c.b16 %v5451, %v5448
        %v5569 = vpack.c.b16 %v5452, %v5449
        %v5570 = vpack.c.b16 %v5456, %v5453
        %v5571 = vpack.c.b16 %v5457, %v5454
        %v5572 = vpack.c.b16 %v5458, %v5455
        %v5573 = vpack.c.b16 %v5462, %v5459
        %v5574 = vpack.c.b16 %v5463, %v5460
        %v5575 = vpack.c.b16 %v5464, %v5461
        %v5576 = vpack.c.b16 %v5468, %v5465
        %v5577 = vpack.c.b16 %v5469, %v5466
        %v5578 = vpack.c.b16 %v5470, %v5467
        %v5579 = vpack.c.b16 %v5474, %v5471
        %v5580 = vpack.c.b16 %v5475, %v5472
        %v5581 = vpack.c.b16 %v5476, %v5473
        %v5582 = vpack.c.b16 %v5480, %v5477
        %v5583 = vpack.c.b16 %v5481, %v5478
        %v5584 = vpack.c.b16 %v5482, %v5479
        %v5585 = vpack.c.b16 %v5486, %v5483
        %v5586 = vpack.c.b16 %v5487, %v5484
        %v5587 = vpack.c.b16 %v5488, %v5485
        %v5588 = vpack.c.b16 %v5492, %v5489
        %v5589 = vpack.c.b16 %v5493, %v5490
        %v5590 = vpack.c.b16 %v5494, %v5491
        %v5591 = vpack.c.b16 %v5498, %v5495
        %v5592 = vpack.c.b16 %v5499, %v5496
        %v5593 = vpack.c.b16 %v5500, %v5497
        %v5594 = vpack.c.b16 %v5504, %v5501
        %v5595 = vpack.c.b16 %v5505, %v5502
        %v5596 = vpack.c.b16 %v5506, %v5503
        %v5688 = vsel %vm5041, %v4228, 0
        %5690 = vmatprep.subr.bf16.mxu0 %v5508
        %5691 = vmatpush1.bf16.msra.mxu0 %v5507
        %5692 = vmatprep.subr.bf16.mxu0 %v5511
        %5693 = vmatpush1.bf16.msra.mxu0 %v5510
        %5694 = vmatprep.subr.bf16.mxu0 %v5514
        %5695 = vmatpush1.bf16.msra.mxu0 %v5513
        %5696 = vmatprep.subr.bf16.mxu0 %v5517
        %5697 = vmatpush1.bf16.msra.mxu0 %v5516
        %5698 = vmatprep.subr.bf16.mxu0 %v5520
        %5699 = vmatpush1.bf16.msra.mxu0 %v5519
        %5700 = vmatprep.subr.bf16.mxu0 %v5523
        %5701 = vmatpush1.bf16.msra.mxu0 %v5522
        %5702 = vmatprep.subr.bf16.mxu0 %v5526
        %5703 = vmatpush1.bf16.msra.mxu0 %v5525
        %5704 = vmatprep.subr.bf16.mxu0 %v5529
        %5705 = vmatpush1.bf16.msra.mxu0 %v5528
        %5706 = vmatprep.subr.bf16.mxu0 %v5532
        %5707 = vmatpush1.bf16.msra.mxu0 %v5531
        %5708 = vmatprep.subr.bf16.mxu0 %v5535
        %5709 = vmatpush1.bf16.msra.mxu0 %v5534
        %5710 = vmatprep.subr.bf16.mxu0 %v5538
        %5711 = vmatpush1.bf16.msra.mxu0 %v5537
        %5712 = vmatprep.subr.bf16.mxu0 %v5541
        %5713 = vmatpush1.bf16.msra.mxu0 %v5540
        %5714 = vmatprep.subr.bf16.mxu0 %v5544
        %5715 = vmatpush1.bf16.msra.mxu0 %v5543
        %5716 = vmatprep.subr.bf16.mxu0 %v5547
        %5717 = vmatpush1.bf16.msra.mxu0 %v5546
        %5718 = vmatprep.subr.bf16.mxu0 %v5550
        %5719 = vmatpush1.bf16.msra.mxu0 %v5549
        %5720 = vmatprep.subr.bf16.mxu0 %v5553
        %5721 = vmatpush1.bf16.msra.mxu0 %v5552
        %5722 = vmatprep.mubr.bf16.mxu0 %v4226
        %5723 = vmatmul.mubr.bf16.gmra.mrb[0].mxu0 %v4225
        %v5724 = vpop.f32.mrb[0].mxu0
        %v5725 = vadd.f32 %v5121, %v5724
        %v5726 = vpop.f32.mrb[0].mxu0
        %v5727 = vadd.f32 %v5123, %v5726
        %v5728 = vpop.f32.mrb[0].mxu0
        %v5729 = vpop.f32.mrb[0].mxu0
        %5730 = vdwg.mxu0
        %5731 = vmatprep.subr.bf16.mxu0 %v5556
        %5732 = vmatpush1.bf16.msra.mxu0 %v5555
        %5733 = vmatprep.subr.bf16.mxu0 %v5559
        %5734 = vmatpush1.bf16.msra.mxu0 %v5558
        %5735 = vmatprep.subr.bf16.mxu0 %v5562
        %5736 = vmatpush1.bf16.msra.mxu0 %v5561
        %5737 = vmatprep.subr.bf16.mxu0 %v5565
        %5738 = vmatpush1.bf16.msra.mxu0 %v5564
        %5739 = vmatprep.subr.bf16.mxu0 %v5568
        %5740 = vmatpush1.bf16.msra.mxu0 %v5567
        %5741 = vmatprep.subr.bf16.mxu0 %v5571
        %5742 = vmatpush1.bf16.msra.mxu0 %v5570
        %5743 = vmatprep.subr.bf16.mxu0 %v5574
        %5744 = vmatpush1.bf16.msra.mxu0 %v5573
        %5745 = vmatprep.subr.bf16.mxu0 %v5577
        %5746 = vmatpush1.bf16.msra.mxu0 %v5576
        %5747 = vmatprep.subr.bf16.mxu0 %v5580
        %5748 = vmatpush1.bf16.msra.mxu0 %v5579
        %5749 = vmatprep.subr.bf16.mxu0 %v5583
        %5750 = vmatpush1.bf16.msra.mxu0 %v5582
        %5751 = vmatprep.subr.bf16.mxu0 %v5586
        %5752 = vmatpush1.bf16.msra.mxu0 %v5585
        %5753 = vmatprep.subr.bf16.mxu0 %v5589
        %5754 = vmatpush1.bf16.msra.mxu0 %v5588
        %5755 = vmatprep.subr.bf16.mxu0 %v5592
        %5756 = vmatpush1.bf16.msra.mxu0 %v5591
        %5757 = vmatprep.subr.bf16.mxu0 %v5595
        %5758 = vmatpush1.bf16.msra.mxu0 %v5594
        %5759 = vmatprep.subr.bf16.mxu0 0
        %5760 = vmatpush1.bf16.msra.mxu0 0
        %5761 = vmatprep.subr.bf16.mxu0 0
        %5762 = vmatpush1.bf16.msra.mxu0 0
        %5763 = vmatprep.mubr.bf16.mxu0 %v5688
        %5764 = vmatmul.mubr.bf16.gmra.mrb[0].mxu0 %v4227
        %v5765 = vpop.f32.mrb[0].mxu0
        %v5766 = vadd.f32 %v5725, %v5765
        %v5767 = vpop.f32.mrb[0].mxu0
        %v5768 = vadd.f32 %v5727, %v5767
        %v5769 = vpop.f32.mrb[0].mxu0
        %v5770 = vpop.f32.mrb[0].mxu0
        %5771 = vdwg.mxu0
        %5772 = vmatprep.subr.bf16.mxu0 0
        %5773 = vmatpush1.bf16.msra.mxu0 %v5509
        %5774 = vmatprep.subr.bf16.mxu0 0
        %5775 = vmatpush1.bf16.msra.mxu0 %v5512
        %5776 = vmatprep.subr.bf16.mxu0 0
        %5777 = vmatpush1.bf16.msra.mxu0 %v5515
        %5778 = vmatprep.subr.bf16.mxu0 0
        %5779 = vmatpush1.bf16.msra.mxu0 %v5518
        %5780 = vmatprep.subr.bf16.mxu0 0
        %5781 = vmatpush1.bf16.msra.mxu0 %v5521
        %5782 = vmatprep.subr.bf16.mxu0 0
        %5783 = vmatpush1.bf16.msra.mxu0 %v5524
        %5784 = vmatprep.subr.bf16.mxu0 0
        %5785 = vmatpush1.bf16.msra.mxu0 %v5527
        %5786 = vmatprep.subr.bf16.mxu0 0
        %5787 = vmatpush1.bf16.msra.mxu0 %v5530
        %5788 = vmatprep.subr.bf16.mxu0 0
        %5789 = vmatpush1.bf16.msra.mxu0 %v5533
        %5790 = vmatprep.subr.bf16.mxu0 0
        %5791 = vmatpush1.bf16.msra.mxu0 %v5536
        %5792 = vmatprep.subr.bf16.mxu0 0
        %5793 = vmatpush1.bf16.msra.mxu0 %v5539
        %5794 = vmatprep.subr.bf16.mxu0 0
        %5795 = vmatpush1.bf16.msra.mxu0 %v5542
        %5796 = vmatprep.subr.bf16.mxu0 0
        %5797 = vmatpush1.bf16.msra.mxu0 %v5545
        %5798 = vmatprep.subr.bf16.mxu0 0
        %5799 = vmatpush1.bf16.msra.mxu0 %v5548
        %5800 = vmatprep.subr.bf16.mxu0 0
        %5801 = vmatpush1.bf16.msra.mxu0 %v5551
        %5802 = vmatprep.subr.bf16.mxu0 0
        %5803 = vmatpush1.bf16.msra.mxu0 %v5554
        %5804 = vmatprep.mubr.bf16.mxu0 %v4226
        %5805 = vmatmul.mubr.bf16.gmra.mrb[0].mxu0 %v4225
        %v5806 = vpop.f32.mrb[0].mxu0
        %v5807 = vadd.f32 %v5202, %v5806
        %v5808 = vpop.f32.mrb[0].mxu0
        %v5809 = vpop.f32.mrb[0].mxu0
        %v5810 = vpop.f32.mrb[0].mxu0
        %5811 = vdwg.mxu0
        %5812 = vmatprep.subr.bf16.mxu0 0
        %5813 = vmatpush1.bf16.msra.mxu0 %v5557
        %5814 = vmatprep.subr.bf16.mxu0 0
        %5815 = vmatpush1.bf16.msra.mxu0 %v5560
        %5816 = vmatprep.subr.bf16.mxu0 0
        %5817 = vmatpush1.bf16.msra.mxu0 %v5563
        %5818 = vmatprep.subr.bf16.mxu0 0
        %5819 = vmatpush1.bf16.msra.mxu0 %v5566
        %5820 = vmatprep.subr.bf16.mxu0 0
        %5821 = vmatpush1.bf16.msra.mxu0 %v5569
        %5822 = vmatprep.subr.bf16.mxu0 0
        %5823 = vmatpush1.bf16.msra.mxu0 %v5572
        %5824 = vmatprep.subr.bf16.mxu0 0
        %5825 = vmatpush1.bf16.msra.mxu0 %v5575
        %5826 = vmatprep.subr.bf16.mxu0 0
        %5827 = vmatpush1.bf16.msra.mxu0 %v5578
        %5828 = vmatprep.subr.bf16.mxu0 0
        %5829 = vmatpush1.bf16.msra.mxu0 %v5581
        %5830 = vmatprep.subr.bf16.mxu0 0
        %5831 = vmatpush1.bf16.msra.mxu0 %v5584
        %5832 = vmatprep.subr.bf16.mxu0 0
        %5833 = vmatpush1.bf16.msra.mxu0 %v5587
        %5834 = vmatprep.subr.bf16.mxu0 0
        %5835 = vmatpush1.bf16.msra.mxu0 %v5590
        %5836 = vmatprep.subr.bf16.mxu0 0
        %5837 = vmatpush1.bf16.msra.mxu0 %v5593
        %5838 = vmatprep.subr.bf16.mxu0 0
        %5839 = vmatpush1.bf16.msra.mxu0 %v5596
        %5840 = vmatprep.subr.bf16.mxu0 0
        %5841 = vmatpush1.bf16.msra.mxu0 0
        %5842 = vmatprep.subr.bf16.mxu0 0
        %5843 = vmatpush1.bf16.msra.mxu0 0
        %5844 = vmatprep.mubr.bf16.mxu0 %v5688
        %5845 = vmatmul.mubr.bf16.gmra.mrb[0].mxu0 %v4227
        %v5846 = vpop.f32.mrb[0].mxu0
        %v5847 = vadd.f32 %v5807, %v5846
        %v5848 = vpop.f32.mrb[0].mxu0
        %v5849 = vpop.f32.mrb[0].mxu0
        %v5850 = vpop.f32.mrb[0].mxu0
        %5851 = vdwg.mxu0
        %s5852 = scalar_lea.vmem %s6, 8
        %v5853 = vld [vmem:[%s5852] sm:$0x7]
        %v5855 = vsel %vm4123, %v5853, 0
        %5857 = vmatprep.subr.bf16.mxu0 %v4135
        %5858 = vmatpush1.bf16.msra.mxu0 %v4132
        %5859 = vmatprep.subr.bf16.mxu0 0
        %5860 = vmatpush1.bf16.msra.mxu0 0
        %5861 = vmatprep.subr.bf16.mxu0 0
        %5862 = vmatpush1.bf16.msra.mxu0 0
        %5863 = vmatprep.subr.bf16.mxu0 0
        %5864 = vmatpush1.bf16.msra.mxu0 0
        %5865 = vmatprep.subr.bf16.mxu0 0
        %5866 = vmatpush1.bf16.msra.mxu0 0
        %5867 = vmatprep.subr.bf16.mxu0 0
        %5868 = vmatpush1.bf16.msra.mxu0 0
        %5869 = vmatprep.subr.bf16.mxu0 0
        %5870 = vmatpush1.bf16.msra.mxu0 0
        %5871 = vmatprep.subr.bf16.mxu0 0
        %5872 = vmatpush1.bf16.msra.mxu0 0
        %5873 = vmatprep.subr.bf16.mxu0 0
        %5874 = vmatpush1.bf16.msra.mxu0 0
        %5875 = vmatprep.subr.bf16.mxu0 0
        %5876 = vmatpush1.bf16.msra.mxu0 0
        %5877 = vmatprep.subr.bf16.mxu0 0
        %5878 = vmatpush1.bf16.msra.mxu0 0
        %5879 = vmatprep.subr.bf16.mxu0 0
        %5880 = vmatpush1.bf16.msra.mxu0 0
        %5881 = vmatprep.subr.bf16.mxu0 0
        %5882 = vmatpush1.bf16.msra.mxu0 0
        %5883 = vmatprep.subr.bf16.mxu0 0
        %5884 = vmatpush1.bf16.msra.mxu0 0
        %5885 = vmatprep.subr.bf16.mxu0 0
        %5886 = vmatpush1.bf16.msra.mxu0 0
        %5887 = vmatprep.subr.bf16.mxu0 0
        %5888 = vmatpush1.bf16.msra.mxu0 0
        %5889 = vmatprep.mubr.bf16.mxu0 0
        %5890 = vmatmul.mubr.bf16.gmra.mrb[0].mxu0 %v5855
        %v5891 = vpop.f32.mrb[0].mxu0
        %v5892 = vadd.f32 0.0, %v5891
        %v5893 = vpop.f32.mrb[0].mxu0
        %v5894 = vadd.f32 0.0, %v5893
        %v5895 = vpop.f32.mrb[0].mxu0
        %v5896 = vpop.f32.mrb[0].mxu0
        %5897 = vdwg.mxu0
        %5898 = vmatprep.subr.bf16.mxu0 %v4141
        %5899 = vmatpush1.bf16.msra.mxu0 %v4138
        %5900 = vmatprep.subr.bf16.mxu0 0
        %5901 = vmatpush1.bf16.msra.mxu0 0
        %5902 = vmatprep.subr.bf16.mxu0 0
        %5903 = vmatpush1.bf16.msra.mxu0 0
        %5904 = vmatprep.subr.bf16.mxu0 0
        %5905 = vmatpush1.bf16.msra.mxu0 0
        %5906 = vmatprep.subr.bf16.mxu0 0
        %5907 = vmatpush1.bf16.msra.mxu0 0
        %5908 = vmatprep.subr.bf16.mxu0 0
        %5909 = vmatpush1.bf16.msra.mxu0 0
        %5910 = vmatprep.subr.bf16.mxu0 0
        %5911 = vmatpush1.bf16.msra.mxu0 0
        %5912 = vmatprep.subr.bf16.mxu0 0
        %5913 = vmatpush1.bf16.msra.mxu0 0
        %5914 = vmatprep.subr.bf16.mxu0 0
        %5915 = vmatpush1.bf16.msra.mxu0 0
        %5916 = vmatprep.subr.bf16.mxu0 0
        %5917 = vmatpush1.bf16.msra.mxu0 0
        %5918 = vmatprep.subr.bf16.mxu0 0
        %5919 = vmatpush1.bf16.msra.mxu0 0
        %5920 = vmatprep.subr.bf16.mxu0 0
        %5921 = vmatpush1.bf16.msra.mxu0 0
        %5922 = vmatprep.subr.bf16.mxu0 0
        %5923 = vmatpush1.bf16.msra.mxu0 0
        %5924 = vmatprep.subr.bf16.mxu0 0
        %5925 = vmatpush1.bf16.msra.mxu0 0
        %5926 = vmatprep.subr.bf16.mxu0 0
        %5927 = vmatpush1.bf16.msra.mxu0 0
        %5928 = vmatprep.subr.bf16.mxu0 0
        %5929 = vmatpush1.bf16.msra.mxu0 0
        %5930 = vmatprep.mubr.bf16.mxu0 0
        %5931 = vmatmul.mubr.bf16.gmra.mrb[0].mxu0 %v5855
        %v5932 = vpop.f32.mrb[0].mxu0
        %v5933 = vadd.f32 0.0, %v5932
        %v5934 = vpop.f32.mrb[0].mxu0
        %v5935 = vadd.f32 0.0, %v5934
        %v5936 = vpop.f32.mrb[0].mxu0
        %v5937 = vpop.f32.mrb[0].mxu0
        %5938 = vdwg.mxu0
        %v5939 = vpack.c.bf16 %v5892, %v5892
        %v5940 = vpack.c.bf16 %v5894, %v5894
        %v5941 = vpack.c.bf16 %v5933, %v5933
        %v5942 = vpack.c.bf16 %v5935, %v5935
        %s5943 = scalar_lea.vmem [#allocation7], 1440
        %v5944 = vld [vmem:[%s5943] sm:$0xff]
        %v5945 = vld [vmem:[%s5943 + $0x8] sm:$0xf]
        %v5946 = vld [vmem:[%s5943 + $0xc] sm:$0xff]
        %v5947 = vld [vmem:[%s5943 + $0x14] sm:$0xf]
        %v5948 = vld [vmem:[%s5943 + $0x18] sm:$0xff]
        %v5949 = vld [vmem:[%s5943 + $0x20] sm:$0xf]
        %v5950 = vld [vmem:[%s5943 + $0x24] sm:$0xff]
        %v5951 = vld [vmem:[%s5943 + $0x2c] sm:$0xf]
        %v5952 = vld [vmem:[%s5943 + $0x30] sm:$0xff]
        %v5953 = vld [vmem:[%s5943 + $0x38] sm:$0xf]
        %v5954 = vld [vmem:[%s5943 + $0x3c] sm:$0xff]
        %v5955 = vld [vmem:[%s5943 + $0x44] sm:$0xf]
        %v5956 = vld [vmem:[%s5943 + $0x48] sm:$0xff]
        %v5957 = vld [vmem:[%s5943 + $0x50] sm:$0xf]
        %v5958 = vld [vmem:[%s5943 + $0x54] sm:$0xff]
        %v5959 = vld [vmem:[%s5943 + $0x5c] sm:$0xf]
        %v5960 = vld [vmem:[%s5943 + $0x60] sm:$0xff]
        %v5961 = vld [vmem:[%s5943 + $0x68] sm:$0xf]
        %v5962 = vld [vmem:[%s5943 + $0x6c] sm:$0xff]
        %v5963 = vld [vmem:[%s5943 + $0x74] sm:$0xf]
        %v5964 = vld [vmem:[%s5943 + $0x78] sm:$0xff]
        %v5965 = vld [vmem:[%s5943 + $0x80] sm:$0xf]
        %v5966 = vld [vmem:[%s5943 + $0x84] sm:$0xff]
        %v5967 = vld [vmem:[%s5943 + $0x8c] sm:$0xf]
        %v5968 = vld [vmem:[%s5943 + $0x90] sm:$0xff]
        %v5969 = vld [vmem:[%s5943 + $0x98] sm:$0xf]
        %v5970 = vld [vmem:[%s5943 + $0x9c] sm:$0xff]
        %v5971 = vld [vmem:[%s5943 + $0xa4] sm:$0xf]
        %v5972 = vld [vmem:[%s5943 + $0xa8] sm:$0xff]
        %v5973 = vld [vmem:[%s5943 + $0xb0] sm:$0xf]
        %v5974 = vld [vmem:[%s5943 + $0xb4] sm:$0xff]
        %v5975 = vld [vmem:[%s5943 + $0xbc] sm:$0xf]
        %v5976 = vld [vmem:[%s5943 + $0xc0] sm:$0xff]
        %v5977 = vld [vmem:[%s5943 + $0xc8] sm:$0xf]
        %v5978 = vld [vmem:[%s5943 + $0xcc] sm:$0xff]
        %v5979 = vld [vmem:[%s5943 + $0xd4] sm:$0xf]
        %v5980 = vld [vmem:[%s5943 + $0xd8] sm:$0xff]
        %v5981 = vld [vmem:[%s5943 + $0xe0] sm:$0xf]
        %v5982 = vld [vmem:[%s5943 + $0xe4] sm:$0xff]
        %v5983 = vld [vmem:[%s5943 + $0xec] sm:$0xf]
        %v5984 = vld [vmem:[%s5943 + $0xf0] sm:$0xff]
        %v5985 = vld [vmem:[%s5943 + $0xf8] sm:$0xf]
        %v5986 = vld [vmem:[%s5943 + $0xfc] sm:$0xff]
        %v5987 = vld [vmem:[%s5943 + $0x104] sm:$0xf]
        %v5988 = vld [vmem:[%s5943 + $0x108] sm:$0xff]
        %v5989 = vld [vmem:[%s5943 + $0x110] sm:$0xf]
        %v5990 = vld [vmem:[%s5943 + $0x114] sm:$0xff]
        %v5991 = vld [vmem:[%s5943 + $0x11c] sm:$0xf]
        %v5992 = vld [vmem:[%s5943 + $0x120] sm:$0xff]
        %v5993 = vld [vmem:[%s5943 + $0x128] sm:$0xf]
        %v5994 = vld [vmem:[%s5943 + $0x12c] sm:$0xff]
        %v5995 = vld [vmem:[%s5943 + $0x134] sm:$0xf]
        %v5996 = vld [vmem:[%s5943 + $0x138] sm:$0xff]
        %v5997 = vld [vmem:[%s5943 + $0x140] sm:$0xf]
        %v5998 = vld [vmem:[%s5943 + $0x144] sm:$0xff]
        %v5999 = vld [vmem:[%s5943 + $0x14c] sm:$0xf]
        %v6000 = vld [vmem:[%s5943 + $0x150] sm:$0xff]
        %v6001 = vld [vmem:[%s5943 + $0x158] sm:$0xf]
        %v6002 = vld [vmem:[%s5943 + $0x15c] sm:$0xff]
        %v6003 = vld [vmem:[%s5943 + $0x164] sm:$0xf]
        %v6004 = vld [vmem:[%s5943 + $0x168] sm:$0xff]
        %v6005 = vld [vmem:[%s5943 + $0x170] sm:$0xf]
        %v6006 = vld [vmem:[%s5943 + $0x174] sm:$0xff]
        %v6007 = vld [vmem:[%s5943 + $0x17c] sm:$0xf]
        %v6008 = vld [vmem:[%s5943 + $0x180] sm:$0xff]
        %v6009 = vld [vmem:[%s5943 + $0x188] sm:$0xf]
        %v6010 = vld [vmem:[%s5943 + $0x18c] sm:$0xff]
        %v6011 = vld [vmem:[%s5943 + $0x194] sm:$0xf]
        %v6012 = vld [vmem:[%s5943 + $0x198] sm:$0xff]
        %v6013 = vld [vmem:[%s5943 + $0x1a0] sm:$0xf]
        %v6014 = vld [vmem:[%s5943 + $0x1a4] sm:$0xff]
        %v6015 = vld [vmem:[%s5943 + $0x1ac] sm:$0xf]
        %v6016 = vld [vmem:[%s5943 + $0x1b0] sm:$0xff]
        %v6017 = vld [vmem:[%s5943 + $0x1b8] sm:$0xf]
        %v6018 = vld [vmem:[%s5943 + $0x1bc] sm:$0xff]
        %v6019 = vld [vmem:[%s5943 + $0x1c4] sm:$0xf]
        %v6020 = vld [vmem:[%s5943 + $0x1c8] sm:$0xff]
        %v6021 = vld [vmem:[%s5943 + $0x1d0] sm:$0xf]
        %v6022 = vld [vmem:[%s5943 + $0x1d4] sm:$0xff]
        %v6023 = vld [vmem:[%s5943 + $0x1dc] sm:$0xf]
        %v6024 = vld [vmem:[%s5943 + $0x1e0] sm:$0xff]
        %v6025 = vld [vmem:[%s5943 + $0x1e8] sm:$0xf]
        %v6026 = vld [vmem:[%s5943 + $0x1ec] sm:$0xff]
        %v6027 = vld [vmem:[%s5943 + $0x1f4] sm:$0xf]
        %v6028 = vld [vmem:[%s5943 + $0x1f8] sm:$0xff]
        %v6029 = vld [vmem:[%s5943 + $0x200] sm:$0xf]
        %v6030 = vld [vmem:[%s5943 + $0x204] sm:$0xff]
        %v6031 = vld [vmem:[%s5943 + $0x20c] sm:$0xf]
        %v6032 = vld [vmem:[%s5943 + $0x210] sm:$0xff]
        %v6033 = vld [vmem:[%s5943 + $0x218] sm:$0xf]
        %v6034 = vld [vmem:[%s5943 + $0x21c] sm:$0xff]
        %v6035 = vld [vmem:[%s5943 + $0x224] sm:$0xf]
        %v6036 = vld [vmem:[%s5943 + $0x228] sm:$0xff]
        %v6037 = vld [vmem:[%s5943 + $0x230] sm:$0xf]
        %v6038 = vld [vmem:[%s5943 + $0x234] sm:$0xff]
        %v6039 = vld [vmem:[%s5943 + $0x23c] sm:$0xf]
        %v6040 = vld [vmem:[%s5943 + $0x240] sm:$0xff]
        %v6041 = vld [vmem:[%s5943 + $0x248] sm:$0xf]
        %v6042 = vld [vmem:[%s5943 + $0x24c] sm:$0xff]
        %v6043 = vld [vmem:[%s5943 + $0x254] sm:$0xf]
        %v6044 = vld [vmem:[%s5943 + $0x258] sm:$0xff]
        %v6045 = vld [vmem:[%s5943 + $0x260] sm:$0xf]
        %v6046 = vld [vmem:[%s5943 + $0x264] sm:$0xff]
        %v6047 = vld [vmem:[%s5943 + $0x26c] sm:$0xf]
        %v6048 = vld [vmem:[%s5943 + $0x270] sm:$0xff]
        %v6049 = vld [vmem:[%s5943 + $0x278] sm:$0xf]
        %v6050 = vld [vmem:[%s5943 + $0x27c] sm:$0xff]
        %v6051 = vld [vmem:[%s5943 + $0x284] sm:$0xf]
        %v6052 = vld [vmem:[%s5943 + $0x288] sm:$0xff]
        %v6053 = vld [vmem:[%s5943 + $0x290] sm:$0xf]
        %v6054 = vld [vmem:[%s5943 + $0x294] sm:$0xff]
        %v6055 = vld [vmem:[%s5943 + $0x29c] sm:$0xf]
        %v6056 = vld [vmem:[%s5943 + $0x2a0] sm:$0xff]
        %v6057 = vld [vmem:[%s5943 + $0x2a8] sm:$0xf]
        %v6058 = vld [vmem:[%s5943 + $0x2ac] sm:$0xff]
        %v6059 = vld [vmem:[%s5943 + $0x2b4] sm:$0xf]
        %v6060 = vld [vmem:[%s5943 + $0x2b8] sm:$0xff]
        %v6061 = vld [vmem:[%s5943 + $0x2c0] sm:$0xf]
        %v6062 = vld [vmem:[%s5943 + $0x2c4] sm:$0xff]
        %v6063 = vld [vmem:[%s5943 + $0x2cc] sm:$0xf]
        %v6184 = vunpack.c.l.b16 %v5944
        %v6185 = vunpack.c.h.b16 %v5944
        %v6186 = vunpack.c.l.b16 %v5945
        %v6187 = vunpack.c.l.b16 %v5946
        %v6188 = vunpack.c.h.b16 %v5946
        %v6189 = vunpack.c.l.b16 %v5947
        %v6190 = vunpack.c.l.b16 %v5948
        %v6191 = vunpack.c.h.b16 %v5948
        %v6192 = vunpack.c.l.b16 %v5949
        %v6193 = vunpack.c.l.b16 %v5950
        %v6194 = vunpack.c.h.b16 %v5950
        %v6195 = vunpack.c.l.b16 %v5951
        %v6196 = vunpack.c.l.b16 %v5952
        %v6197 = vunpack.c.h.b16 %v5952
        %v6198 = vunpack.c.l.b16 %v5953
        %v6199 = vunpack.c.l.b16 %v5954
        %v6200 = vunpack.c.h.b16 %v5954
        %v6201 = vunpack.c.l.b16 %v5955
        %v6202 = vunpack.c.l.b16 %v5956
        %v6203 = vunpack.c.h.b16 %v5956
        %v6204 = vunpack.c.l.b16 %v5957
        %v6205 = vunpack.c.l.b16 %v5958
        %v6206 = vunpack.c.h.b16 %v5958
        %v6207 = vunpack.c.l.b16 %v5959
        %v6208 = vunpack.c.l.b16 %v5960
        %v6209 = vunpack.c.h.b16 %v5960
        %v6210 = vunpack.c.l.b16 %v5961
        %v6211 = vunpack.c.l.b16 %v5962
        %v6212 = vunpack.c.h.b16 %v5962
        %v6213 = vunpack.c.l.b16 %v5963
        %v6214 = vunpack.c.l.b16 %v5964
        %v6215 = vunpack.c.h.b16 %v5964
        %v6216 = vunpack.c.l.b16 %v5965
        %v6217 = vunpack.c.l.b16 %v5966
        %v6218 = vunpack.c.h.b16 %v5966
        %v6219 = vunpack.c.l.b16 %v5967
        %v6220 = vunpack.c.l.b16 %v5968
        %v6221 = vunpack.c.h.b16 %v5968
        %v6222 = vunpack.c.l.b16 %v5969
        %v6223 = vunpack.c.l.b16 %v5970
        %v6224 = vunpack.c.h.b16 %v5970
        %v6225 = vunpack.c.l.b16 %v5971
        %v6226 = vunpack.c.l.b16 %v5972
        %v6227 = vunpack.c.h.b16 %v5972
        %v6228 = vunpack.c.l.b16 %v5973
        %v6229 = vunpack.c.l.b16 %v5974
        %v6230 = vunpack.c.h.b16 %v5974
        %v6231 = vunpack.c.l.b16 %v5975
        %v6232 = vunpack.c.l.b16 %v5976
        %v6233 = vunpack.c.h.b16 %v5976
        %v6234 = vunpack.c.l.b16 %v5977
        %v6235 = vunpack.c.l.b16 %v5978
        %v6236 = vunpack.c.h.b16 %v5978
        %v6237 = vunpack.c.l.b16 %v5979
        %v6238 = vunpack.c.l.b16 %v5980
        %v6239 = vunpack.c.h.b16 %v5980
        %v6240 = vunpack.c.l.b16 %v5981
        %v6241 = vunpack.c.l.b16 %v5982
        %v6242 = vunpack.c.h.b16 %v5982
        %v6243 = vunpack.c.l.b16 %v5983
        %v6244 = vunpack.c.l.b16 %v5984
        %v6245 = vunpack.c.h.b16 %v5984
        %v6246 = vunpack.c.l.b16 %v5985
        %v6247 = vunpack.c.l.b16 %v5986
        %v6248 = vunpack.c.h.b16 %v5986
        %v6249 = vunpack.c.l.b16 %v5987
        %v6250 = vunpack.c.l.b16 %v5988
        %v6251 = vunpack.c.h.b16 %v5988
        %v6252 = vunpack.c.l.b16 %v5989
        %v6253 = vunpack.c.l.b16 %v5990
        %v6254 = vunpack.c.h.b16 %v5990
        %v6255 = vunpack.c.l.b16 %v5991
        %v6256 = vunpack.c.l.b16 %v5992
        %v6257 = vunpack.c.h.b16 %v5992
        %v6258 = vunpack.c.l.b16 %v5993
        %v6259 = vunpack.c.l.b16 %v5994
        %v6260 = vunpack.c.h.b16 %v5994
        %v6261 = vunpack.c.l.b16 %v5995
        %v6262 = vunpack.c.l.b16 %v5996
        %v6263 = vunpack.c.h.b16 %v5996
        %v6264 = vunpack.c.l.b16 %v5997
        %v6265 = vunpack.c.l.b16 %v5998
        %v6266 = vunpack.c.h.b16 %v5998
        %v6267 = vunpack.c.l.b16 %v5999
        %v6268 = vunpack.c.l.b16 %v6000
        %v6269 = vunpack.c.h.b16 %v6000
        %v6270 = vunpack.c.l.b16 %v6001
        %v6271 = vunpack.c.l.b16 %v6002
        %v6272 = vunpack.c.h.b16 %v6002
        %v6273 = vunpack.c.l.b16 %v6003
        %v6274 = vunpack.c.l.b16 %v6004
        %v6275 = vunpack.c.h.b16 %v6004
        %v6276 = vunpack.c.l.b16 %v6005
        %v6277 = vunpack.c.l.b16 %v6006
        %v6278 = vunpack.c.h.b16 %v6006
        %v6279 = vunpack.c.l.b16 %v6007
        %v6280 = vunpack.c.l.b16 %v6008
        %v6281 = vunpack.c.h.b16 %v6008
        %v6282 = vunpack.c.l.b16 %v6009
        %v6283 = vunpack.c.l.b16 %v6010
        %v6284 = vunpack.c.h.b16 %v6010
        %v6285 = vunpack.c.l.b16 %v6011
        %v6286 = vunpack.c.l.b16 %v6012
        %v6287 = vunpack.c.h.b16 %v6012
        %v6288 = vunpack.c.l.b16 %v6013
        %v6289 = vunpack.c.l.b16 %v6014
        %v6290 = vunpack.c.h.b16 %v6014
        %v6291 = vunpack.c.l.b16 %v6015
        %v6292 = vunpack.c.l.b16 %v6016
        %v6293 = vunpack.c.h.b16 %v6016
        %v6294 = vunpack.c.l.b16 %v6017
        %v6295 = vunpack.c.l.b16 %v6018
        %v6296 = vunpack.c.h.b16 %v6018
        %v6297 = vunpack.c.l.b16 %v6019
        %v6298 = vunpack.c.l.b16 %v6020
        %v6299 = vunpack.c.h.b16 %v6020
        %v6300 = vunpack.c.l.b16 %v6021
        %v6301 = vunpack.c.l.b16 %v6022
        %v6302 = vunpack.c.h.b16 %v6022
        %v6303 = vunpack.c.l.b16 %v6023
        %v6304 = vunpack.c.l.b16 %v6024
        %v6305 = vunpack.c.h.b16 %v6024
        %v6306 = vunpack.c.l.b16 %v6025
        %v6307 = vunpack.c.l.b16 %v6026
        %v6308 = vunpack.c.h.b16 %v6026
        %v6309 = vunpack.c.l.b16 %v6027
        %v6310 = vunpack.c.l.b16 %v6028
        %v6311 = vunpack.c.h.b16 %v6028
        %v6312 = vunpack.c.l.b16 %v6029
        %v6313 = vunpack.c.l.b16 %v6030
        %v6314 = vunpack.c.h.b16 %v6030
        %v6315 = vunpack.c.l.b16 %v6031
        %v6316 = vunpack.c.l.b16 %v6032
        %v6317 = vunpack.c.h.b16 %v6032
        %v6318 = vunpack.c.l.b16 %v6033
        %v6319 = vunpack.c.l.b16 %v6034
        %v6320 = vunpack.c.h.b16 %v6034
        %v6321 = vunpack.c.l.b16 %v6035
        %v6322 = vunpack.c.l.b16 %v6036
        %v6323 = vunpack.c.h.b16 %v6036
        %v6324 = vunpack.c.l.b16 %v6037
        %v6325 = vunpack.c.l.b16 %v6038
        %v6326 = vunpack.c.h.b16 %v6038
        %v6327 = vunpack.c.l.b16 %v6039
        %v6328 = vunpack.c.l.b16 %v6040
        %v6329 = vunpack.c.h.b16 %v6040
        %v6330 = vunpack.c.l.b16 %v6041
        %v6331 = vunpack.c.l.b16 %v6042
        %v6332 = vunpack.c.h.b16 %v6042
        %v6333 = vunpack.c.l.b16 %v6043
        %v6334 = vunpack.c.l.b16 %v6044
        %v6335 = vunpack.c.h.b16 %v6044
        %v6336 = vunpack.c.l.b16 %v6045
        %v6337 = vunpack.c.l.b16 %v6046
        %v6338 = vunpack.c.h.b16 %v6046
        %v6339 = vunpack.c.l.b16 %v6047
        %v6340 = vunpack.c.l.b16 %v6048
        %v6341 = vunpack.c.h.b16 %v6048
        %v6342 = vunpack.c.l.b16 %v6049
        %v6343 = vunpack.c.l.b16 %v6050
        %v6344 = vunpack.c.h.b16 %v6050
        %v6345 = vunpack.c.l.b16 %v6051
        %v6346 = vunpack.c.l.b16 %v6052
        %v6347 = vunpack.c.h.b16 %v6052
        %v6348 = vunpack.c.l.b16 %v6053
        %v6349 = vunpack.c.l.b16 %v6054
        %v6350 = vunpack.c.h.b16 %v6054
        %v6351 = vunpack.c.l.b16 %v6055
        %v6352 = vunpack.c.l.b16 %v6056
        %v6353 = vunpack.c.h.b16 %v6056
        %v6354 = vunpack.c.l.b16 %v6057
        %v6355 = vunpack.c.l.b16 %v6058
        %v6356 = vunpack.c.h.b16 %v6058
        %v6357 = vunpack.c.l.b16 %v6059
        %v6358 = vunpack.c.l.b16 %v6060
        %v6359 = vunpack.c.h.b16 %v6060
        %v6360 = vunpack.c.l.b16 %v6061
        %v6361 = vunpack.c.l.b16 %v6062
        %v6362 = vunpack.c.h.b16 %v6062
        %v6363 = vunpack.c.l.b16 %v6063
        %v6364 = vpack.c.b16 %v6187, %v6184
        %v6365 = vpack.c.b16 %v6188, %v6185
        %v6366 = vpack.c.b16 %v6189, %v6186
        %v6367 = vpack.c.b16 %v6193, %v6190
        %v6368 = vpack.c.b16 %v6194, %v6191
        %v6369 = vpack.c.b16 %v6195, %v6192
        %v6370 = vpack.c.b16 %v6199, %v6196
        %v6371 = vpack.c.b16 %v6200, %v6197
        %v6372 = vpack.c.b16 %v6201, %v6198
        %v6373 = vpack.c.b16 %v6205, %v6202
        %v6374 = vpack.c.b16 %v6206, %v6203
        %v6375 = vpack.c.b16 %v6207, %v6204
        %v6376 = vpack.c.b16 %v6211, %v6208
        %v6377 = vpack.c.b16 %v6212, %v6209
        %v6378 = vpack.c.b16 %v6213, %v6210
        %v6379 = vpack.c.b16 %v6217, %v6214
        %v6380 = vpack.c.b16 %v6218, %v6215
        %v6381 = vpack.c.b16 %v6219, %v6216
        %v6382 = vpack.c.b16 %v6223, %v6220
        %v6383 = vpack.c.b16 %v6224, %v6221
        %v6384 = vpack.c.b16 %v6225, %v6222
        %v6385 = vpack.c.b16 %v6229, %v6226
        %v6386 = vpack.c.b16 %v6230, %v6227
        %v6387 = vpack.c.b16 %v6231, %v6228
        %v6388 = vpack.c.b16 %v6235, %v6232
        %v6389 = vpack.c.b16 %v6236, %v6233
        %v6390 = vpack.c.b16 %v6237, %v6234
        %v6391 = vpack.c.b16 %v6241, %v6238
        %v6392 = vpack.c.b16 %v6242, %v6239
        %v6393 = vpack.c.b16 %v6243, %v6240
        %v6394 = vpack.c.b16 %v6247, %v6244
        %v6395 = vpack.c.b16 %v6248, %v6245
        %v6396 = vpack.c.b16 %v6249, %v6246
        %v6397 = vpack.c.b16 %v6253, %v6250
        %v6398 = vpack.c.b16 %v6254, %v6251
        %v6399 = vpack.c.b16 %v6255, %v6252
        %v6400 = vpack.c.b16 %v6259, %v6256
        %v6401 = vpack.c.b16 %v6260, %v6257
        %v6402 = vpack.c.b16 %v6261, %v6258
        %v6403 = vpack.c.b16 %v6265, %v6262
        %v6404 = vpack.c.b16 %v6266, %v6263
        %v6405 = vpack.c.b16 %v6267, %v6264
        %v6406 = vpack.c.b16 %v6271, %v6268
        %v6407 = vpack.c.b16 %v6272, %v6269
        %v6408 = vpack.c.b16 %v6273, %v6270
        %v6409 = vpack.c.b16 %v6277, %v6274
        %v6410 = vpack.c.b16 %v6278, %v6275
        %v6411 = vpack.c.b16 %v6279, %v6276
        %v6412 = vpack.c.b16 %v6283, %v6280
        %v6413 = vpack.c.b16 %v6284, %v6281
        %v6414 = vpack.c.b16 %v6285, %v6282
        %v6415 = vpack.c.b16 %v6289, %v6286
        %v6416 = vpack.c.b16 %v6290, %v6287
        %v6417 = vpack.c.b16 %v6291, %v6288
        %v6418 = vpack.c.b16 %v6295, %v6292
        %v6419 = vpack.c.b16 %v6296, %v6293
        %v6420 = vpack.c.b16 %v6297, %v6294
        %v6421 = vpack.c.b16 %v6301, %v6298
        %v6422 = vpack.c.b16 %v6302, %v6299
        %v6423 = vpack.c.b16 %v6303, %v6300
        %v6424 = vpack.c.b16 %v6307, %v6304
        %v6425 = vpack.c.b16 %v6308, %v6305
        %v6426 = vpack.c.b16 %v6309, %v6306
        %v6427 = vpack.c.b16 %v6313, %v6310
        %v6428 = vpack.c.b16 %v6314, %v6311
        %v6429 = vpack.c.b16 %v6315, %v6312
        %v6430 = vpack.c.b16 %v6319, %v6316
        %v6431 = vpack.c.b16 %v6320, %v6317
        %v6432 = vpack.c.b16 %v6321, %v6318
        %v6433 = vpack.c.b16 %v6325, %v6322
        %v6434 = vpack.c.b16 %v6326, %v6323
        %v6435 = vpack.c.b16 %v6327, %v6324
        %v6436 = vpack.c.b16 %v6331, %v6328
        %v6437 = vpack.c.b16 %v6332, %v6329
        %v6438 = vpack.c.b16 %v6333, %v6330
        %v6439 = vpack.c.b16 %v6337, %v6334
        %v6440 = vpack.c.b16 %v6338, %v6335
        %v6441 = vpack.c.b16 %v6339, %v6336
        %v6442 = vpack.c.b16 %v6343, %v6340
        %v6443 = vpack.c.b16 %v6344, %v6341
        %v6444 = vpack.c.b16 %v6345, %v6342
        %v6445 = vpack.c.b16 %v6349, %v6346
        %v6446 = vpack.c.b16 %v6350, %v6347
        %v6447 = vpack.c.b16 %v6351, %v6348
        %v6448 = vpack.c.b16 %v6355, %v6352
        %v6449 = vpack.c.b16 %v6356, %v6353
        %v6450 = vpack.c.b16 %v6357, %v6354
        %v6451 = vpack.c.b16 %v6361, %v6358
        %v6452 = vpack.c.b16 %v6362, %v6359
        %v6453 = vpack.c.b16 %v6363, %v6360
        %v6545 = vsel %vm5041, %v5942, 0
        %6547 = vmatprep.subr.bf16.mxu0 %v6365
        %6548 = vmatpush1.bf16.msra.mxu0 %v6364
        %6549 = vmatprep.subr.bf16.mxu0 %v6368
        %6550 = vmatpush1.bf16.msra.mxu0 %v6367
        %6551 = vmatprep.subr.bf16.mxu0 %v6371
        %6552 = vmatpush1.bf16.msra.mxu0 %v6370
        %6553 = vmatprep.subr.bf16.mxu0 %v6374
        %6554 = vmatpush1.bf16.msra.mxu0 %v6373
        %6555 = vmatprep.subr.bf16.mxu0 %v6377
        %6556 = vmatpush1.bf16.msra.mxu0 %v6376
        %6557 = vmatprep.subr.bf16.mxu0 %v6380
        %6558 = vmatpush1.bf16.msra.mxu0 %v6379
        %6559 = vmatprep.subr.bf16.mxu0 %v6383
        %6560 = vmatpush1.bf16.msra.mxu0 %v6382
        %6561 = vmatprep.subr.bf16.mxu0 %v6386
        %6562 = vmatpush1.bf16.msra.mxu0 %v6385
        %6563 = vmatprep.subr.bf16.mxu0 %v6389
        %6564 = vmatpush1.bf16.msra.mxu0 %v6388
        %6565 = vmatprep.subr.bf16.mxu0 %v6392
        %6566 = vmatpush1.bf16.msra.mxu0 %v6391
        %6567 = vmatprep.subr.bf16.mxu0 %v6395
        %6568 = vmatpush1.bf16.msra.mxu0 %v6394
        %6569 = vmatprep.subr.bf16.mxu0 %v6398
        %6570 = vmatpush1.bf16.msra.mxu0 %v6397
        %6571 = vmatprep.subr.bf16.mxu0 %v6401
        %6572 = vmatpush1.bf16.msra.mxu0 %v6400
        %6573 = vmatprep.subr.bf16.mxu0 %v6404
        %6574 = vmatpush1.bf16.msra.mxu0 %v6403
        %6575 = vmatprep.subr.bf16.mxu0 %v6407
        %6576 = vmatpush1.bf16.msra.mxu0 %v6406
        %6577 = vmatprep.subr.bf16.mxu0 %v6410
        %6578 = vmatpush1.bf16.msra.mxu0 %v6409
        %6579 = vmatprep.mubr.bf16.mxu0 %v5940
        %6580 = vmatmul.mubr.bf16.gmra.mrb[0].mxu0 %v5939
        %v6581 = vpop.f32.mrb[0].mxu0
        %v6582 = vadd.f32 0.0, %v6581
        %v6583 = vpop.f32.mrb[0].mxu0
        %v6584 = vadd.f32 0.0, %v6583
        %v6585 = vpop.f32.mrb[0].mxu0
        %v6586 = vpop.f32.mrb[0].mxu0
        %6587 = vdwg.mxu0
        %6588 = vmatprep.subr.bf16.mxu0 %v6413
        %6589 = vmatpush1.bf16.msra.mxu0 %v6412
        %6590 = vmatprep.subr.bf16.mxu0 %v6416
        %6591 = vmatpush1.bf16.msra.mxu0 %v6415
        %6592 = vmatprep.subr.bf16.mxu0 %v6419
        %6593 = vmatpush1.bf16.msra.mxu0 %v6418
        %6594 = vmatprep.subr.bf16.mxu0 %v6422
        %6595 = vmatpush1.bf16.msra.mxu0 %v6421
        %6596 = vmatprep.subr.bf16.mxu0 %v6425
        %6597 = vmatpush1.bf16.msra.mxu0 %v6424
        %6598 = vmatprep.subr.bf16.mxu0 %v6428
        %6599 = vmatpush1.bf16.msra.mxu0 %v6427
        %6600 = vmatprep.subr.bf16.mxu0 %v6431
        %6601 = vmatpush1.bf16.msra.mxu0 %v6430
        %6602 = vmatprep.subr.bf16.mxu0 %v6434
        %6603 = vmatpush1.bf16.msra.mxu0 %v6433
        %6604 = vmatprep.subr.bf16.mxu0 %v6437
        %6605 = vmatpush1.bf16.msra.mxu0 %v6436
        %6606 = vmatprep.subr.bf16.mxu0 %v6440
        %6607 = vmatpush1.bf16.msra.mxu0 %v6439
        %6608 = vmatprep.subr.bf16.mxu0 %v6443
        %6609 = vmatpush1.bf16.msra.mxu0 %v6442
        %6610 = vmatprep.subr.bf16.mxu0 %v6446
        %6611 = vmatpush1.bf16.msra.mxu0 %v6445
        %6612 = vmatprep.subr.bf16.mxu0 %v6449
        %6613 = vmatpush1.bf16.msra.mxu0 %v6448
        %6614 = vmatprep.subr.bf16.mxu0 %v6452
        %6615 = vmatpush1.bf16.msra.mxu0 %v6451
        %6616 = vmatprep.subr.bf16.mxu0 0
        %6617 = vmatpush1.bf16.msra.mxu0 0
        %6618 = vmatprep.subr.bf16.mxu0 0
        %6619 = vmatpush1.bf16.msra.mxu0 0
        %6620 = vmatprep.mubr.bf16.mxu0 %v6545
        %6621 = vmatmul.mubr.bf16.gmra.mrb[0].mxu0 %v5941
        %v6622 = vpop.f32.mrb[0].mxu0
        %v6623 = vadd.f32 %v6582, %v6622
        %v6624 = vpop.f32.mrb[0].mxu0
        %v6625 = vadd.f32 %v6584, %v6624
        %v6626 = vpop.f32.mrb[0].mxu0
        %v6627 = vpop.f32.mrb[0].mxu0
        %6628 = vdwg.mxu0
        %6629 = vmatprep.subr.bf16.mxu0 0
        %6630 = vmatpush1.bf16.msra.mxu0 %v6366
        %6631 = vmatprep.subr.bf16.mxu0 0
        %6632 = vmatpush1.bf16.msra.mxu0 %v6369
        %6633 = vmatprep.subr.bf16.mxu0 0
        %6634 = vmatpush1.bf16.msra.mxu0 %v6372
        %6635 = vmatprep.subr.bf16.mxu0 0
        %6636 = vmatpush1.bf16.msra.mxu0 %v6375
        %6637 = vmatprep.subr.bf16.mxu0 0
        %6638 = vmatpush1.bf16.msra.mxu0 %v6378
        %6639 = vmatprep.subr.bf16.mxu0 0
        %6640 = vmatpush1.bf16.msra.mxu0 %v6381
        %6641 = vmatprep.subr.bf16.mxu0 0
        %6642 = vmatpush1.bf16.msra.mxu0 %v6384
        %6643 = vmatprep.subr.bf16.mxu0 0
        %6644 = vmatpush1.bf16.msra.mxu0 %v6387
        %6645 = vmatprep.subr.bf16.mxu0 0
        %6646 = vmatpush1.bf16.msra.mxu0 %v6390
        %6647 = vmatprep.subr.bf16.mxu0 0
        %6648 = vmatpush1.bf16.msra.mxu0 %v6393
        %6649 = vmatprep.subr.bf16.mxu0 0
        %6650 = vmatpush1.bf16.msra.mxu0 %v6396
        %6651 = vmatprep.subr.bf16.mxu0 0
        %6652 = vmatpush1.bf16.msra.mxu0 %v6399
        %6653 = vmatprep.subr.bf16.mxu0 0
        %6654 = vmatpush1.bf16.msra.mxu0 %v6402
        %6655 = vmatprep.subr.bf16.mxu0 0
        %6656 = vmatpush1.bf16.msra.mxu0 %v6405
        %6657 = vmatprep.subr.bf16.mxu0 0
        %6658 = vmatpush1.bf16.msra.mxu0 %v6408
        %6659 = vmatprep.subr.bf16.mxu0 0
        %6660 = vmatpush1.bf16.msra.mxu0 %v6411
        %6661 = vmatprep.mubr.bf16.mxu0 %v5940
        %6662 = vmatmul.mubr.bf16.gmra.mrb[0].mxu0 %v5939
        %v6663 = vpop.f32.mrb[0].mxu0
        %v6664 = vadd.f32 0.0, %v6663
        %v6665 = vpop.f32.mrb[0].mxu0
        %v6666 = vpop.f32.mrb[0].mxu0
        %v6667 = vpop.f32.mrb[0].mxu0
        %6668 = vdwg.mxu0
        %6669 = vmatprep.subr.bf16.mxu0 0
        %6670 = vmatpush1.bf16.msra.mxu0 %v6414
        %6671 = vmatprep.subr.bf16.mxu0 0
        %6672 = vmatpush1.bf16.msra.mxu0 %v6417
        %6673 = vmatprep.subr.bf16.mxu0 0
        %6674 = vmatpush1.bf16.msra.mxu0 %v6420
        %6675 = vmatprep.subr.bf16.mxu0 0
        %6676 = vmatpush1.bf16.msra.mxu0 %v6423
        %6677 = vmatprep.subr.bf16.mxu0 0
        %6678 = vmatpush1.bf16.msra.mxu0 %v6426
        %6679 = vmatprep.subr.bf16.mxu0 0
        %6680 = vmatpush1.bf16.msra.mxu0 %v6429
        %6681 = vmatprep.subr.bf16.mxu0 0
        %6682 = vmatpush1.bf16.msra.mxu0 %v6432
        %6683 = vmatprep.subr.bf16.mxu0 0
        %6684 = vmatpush1.bf16.msra.mxu0 %v6435
        %6685 = vmatprep.subr.bf16.mxu0 0
        %6686 = vmatpush1.bf16.msra.mxu0 %v6438
        %6687 = vmatprep.subr.bf16.mxu0 0
        %6688 = vmatpush1.bf16.msra.mxu0 %v6441
        %6689 = vmatprep.subr.bf16.mxu0 0
        %6690 = vmatpush1.bf16.msra.mxu0 %v6444
        %6691 = vmatprep.subr.bf16.mxu0 0
        %6692 = vmatpush1.bf16.msra.mxu0 %v6447
        %6693 = vmatprep.subr.bf16.mxu0 0
        %6694 = vmatpush1.bf16.msra.mxu0 %v6450
        %6695 = vmatprep.subr.bf16.mxu0 0
        %6696 = vmatpush1.bf16.msra.mxu0 %v6453
        %6697 = vmatprep.subr.bf16.mxu0 0
        %6698 = vmatpush1.bf16.msra.mxu0 0
        %6699 = vmatprep.subr.bf16.mxu0 0
        %6700 = vmatpush1.bf16.msra.mxu0 0
        %6701 = vmatprep.mubr.bf16.mxu0 %v6545
        %6702 = vmatmul.mubr.bf16.gmra.mrb[0].mxu0 %v5941
        %v6703 = vpop.f32.mrb[0].mxu0
        %v6704 = vadd.f32 %v6664, %v6703
        %v6705 = vpop.f32.mrb[0].mxu0
        %v6706 = vpop.f32.mrb[0].mxu0
        %v6707 = vpop.f32.mrb[0].mxu0
        %6708 = vdwg.mxu0
        %v6709 = vadd.f32 %v5766, %v6623
        %v6710 = vadd.f32 %v5768, %v6625
        %v6711 = vadd.f32 %v5847, %v6704
        %s6712 = scalar_lea.vmem %s6, 12
        %v6713 = vld [vmem:[%s6712] sm:$0x7]
        %v6715 = vsel %vm4123, %v6713, 0
        %6717 = vmatprep.subr.bf16.mxu0 %v4135
        %6718 = vmatpush1.bf16.msra.mxu0 %v4132
        %6719 = vmatprep.subr.bf16.mxu0 0
        %6720 = vmatpush1.bf16.msra.mxu0 0
        %6721 = vmatprep.subr.bf16.mxu0 0
        %6722 = vmatpush1.bf16.msra.mxu0 0
        %6723 = vmatprep.subr.bf16.mxu0 0
        %6724 = vmatpush1.bf16.msra.mxu0 0
        %6725 = vmatprep.subr.bf16.mxu0 0
        %6726 = vmatpush1.bf16.msra.mxu0 0
        %6727 = vmatprep.subr.bf16.mxu0 0
        %6728 = vmatpush1.bf16.msra.mxu0 0
        %6729 = vmatprep.subr.bf16.mxu0 0
        %6730 = vmatpush1.bf16.msra.mxu0 0
        %6731 = vmatprep.subr.bf16.mxu0 0
        %6732 = vmatpush1.bf16.msra.mxu0 0
        %6733 = vmatprep.subr.bf16.mxu0 0
        %6734 = vmatpush1.bf16.msra.mxu0 0
        %6735 = vmatprep.subr.bf16.mxu0 0
        %6736 = vmatpush1.bf16.msra.mxu0 0
        %6737 = vmatprep.subr.bf16.mxu0 0
        %6738 = vmatpush1.bf16.msra.mxu0 0
        %6739 = vmatprep.subr.bf16.mxu0 0
        %6740 = vmatpush1.bf16.msra.mxu0 0
        %6741 = vmatprep.subr.bf16.mxu0 0
        %6742 = vmatpush1.bf16.msra.mxu0 0
        %6743 = vmatprep.subr.bf16.mxu0 0
        %6744 = vmatpush1.bf16.msra.mxu0 0
        %6745 = vmatprep.subr.bf16.mxu0 0
        %6746 = vmatpush1.bf16.msra.mxu0 0
        %6747 = vmatprep.subr.bf16.mxu0 0
        %6748 = vmatpush1.bf16.msra.mxu0 0
        %6749 = vmatprep.mubr.bf16.mxu0 0
        %6750 = vmatmul.mubr.bf16.gmra.mrb[0].mxu0 %v6715
        %v6751 = vpop.f32.mrb[0].mxu0
        %v6752 = vadd.f32 0.0, %v6751
        %v6753 = vpop.f32.mrb[0].mxu0
        %v6754 = vadd.f32 0.0, %v6753
        %v6755 = vpop.f32.mrb[0].mxu0
        %v6756 = vpop.f32.mrb[0].mxu0
        %6757 = vdwg.mxu0
        %6758 = vmatprep.subr.bf16.mxu0 %v4141
        %6759 = vmatpush1.bf16.msra.mxu0 %v4138
        %6760 = vmatprep.subr.bf16.mxu0 0
        %6761 = vmatpush1.bf16.msra.mxu0 0
        %6762 = vmatprep.subr.bf16.mxu0 0
        %6763 = vmatpush1.bf16.msra.mxu0 0
        %6764 = vmatprep.subr.bf16.mxu0 0
        %6765 = vmatpush1.bf16.msra.mxu0 0
        %6766 = vmatprep.subr.bf16.mxu0 0
        %6767 = vmatpush1.bf16.msra.mxu0 0
        %6768 = vmatprep.subr.bf16.mxu0 0
        %6769 = vmatpush1.bf16.msra.mxu0 0
        %6770 = vmatprep.subr.bf16.mxu0 0
        %6771 = vmatpush1.bf16.msra.mxu0 0
        %6772 = vmatprep.subr.bf16.mxu0 0
        %6773 = vmatpush1.bf16.msra.mxu0 0
        %6774 = vmatprep.subr.bf16.mxu0 0
        %6775 = vmatpush1.bf16.msra.mxu0 0
        %6776 = vmatprep.subr.bf16.mxu0 0
        %6777 = vmatpush1.bf16.msra.mxu0 0
        %6778 = vmatprep.subr.bf16.mxu0 0
        %6779 = vmatpush1.bf16.msra.mxu0 0
        %6780 = vmatprep.subr.bf16.mxu0 0
        %6781 = vmatpush1.bf16.msra.mxu0 0
        %6782 = vmatprep.subr.bf16.mxu0 0
        %6783 = vmatpush1.bf16.msra.mxu0 0
        %6784 = vmatprep.subr.bf16.mxu0 0
        %6785 = vmatpush1.bf16.msra.mxu0 0
        %6786 = vmatprep.subr.bf16.mxu0 0
        %6787 = vmatpush1.bf16.msra.mxu0 0
        %6788 = vmatprep.subr.bf16.mxu0 0
        %6789 = vmatpush1.bf16.msra.mxu0 0
        %6790 = vmatprep.mubr.bf16.mxu0 0
        %6791 = vmatmul.mubr.bf16.gmra.mrb[0].mxu0 %v6715
        %v6792 = vpop.f32.mrb[0].mxu0
        %v6793 = vadd.f32 0.0, %v6792
        %v6794 = vpop.f32.mrb[0].mxu0
        %v6795 = vadd.f32 0.0, %v6794
        %v6796 = vpop.f32.mrb[0].mxu0
        %v6797 = vpop.f32.mrb[0].mxu0
        %6798 = vdwg.mxu0
        %v6799 = vpack.c.bf16 %v6752, %v6752
        %v6800 = vpack.c.bf16 %v6754, %v6754
        %v6801 = vpack.c.bf16 %v6793, %v6793
        %v6802 = vpack.c.bf16 %v6795, %v6795
        %s6803 = scalar_lea.vmem [#allocation7], 2160
        %v6804 = vld [vmem:[%s6803] sm:$0xff]
        %v6805 = vld [vmem:[%s6803 + $0x8] sm:$0xf]
        %v6806 = vld [vmem:[%s6803 + $0xc] sm:$0xff]
        %v6807 = vld [vmem:[%s6803 + $0x14] sm:$0xf]
        %v6808 = vld [vmem:[%s6803 + $0x18] sm:$0xff]
        %v6809 = vld [vmem:[%s6803 + $0x20] sm:$0xf]
        %v6810 = vld [vmem:[%s6803 + $0x24] sm:$0xff]
        %v6811 = vld [vmem:[%s6803 + $0x2c] sm:$0xf]
        %v6812 = vld [vmem:[%s6803 + $0x30] sm:$0xff]
        %v6813 = vld [vmem:[%s6803 + $0x38] sm:$0xf]
        %v6814 = vld [vmem:[%s6803 + $0x3c] sm:$0xff]
        %v6815 = vld [vmem:[%s6803 + $0x44] sm:$0xf]
        %v6816 = vld [vmem:[%s6803 + $0x48] sm:$0xff]
        %v6817 = vld [vmem:[%s6803 + $0x50] sm:$0xf]
        %v6818 = vld [vmem:[%s6803 + $0x54] sm:$0xff]
        %v6819 = vld [vmem:[%s6803 + $0x5c] sm:$0xf]
        %v6820 = vld [vmem:[%s6803 + $0x60] sm:$0xff]
        %v6821 = vld [vmem:[%s6803 + $0x68] sm:$0xf]
        %v6822 = vld [vmem:[%s6803 + $0x6c] sm:$0xff]
        %v6823 = vld [vmem:[%s6803 + $0x74] sm:$0xf]
        %v6824 = vld [vmem:[%s6803 + $0x78] sm:$0xff]
        %v6825 = vld [vmem:[%s6803 + $0x80] sm:$0xf]
        %v6826 = vld [vmem:[%s6803 + $0x84] sm:$0xff]
        %v6827 = vld [vmem:[%s6803 + $0x8c] sm:$0xf]
        %v6828 = vld [vmem:[%s6803 + $0x90] sm:$0xff]
        %v6829 = vld [vmem:[%s6803 + $0x98] sm:$0xf]
        %v6830 = vld [vmem:[%s6803 + $0x9c] sm:$0xff]
        %v6831 = vld [vmem:[%s6803 + $0xa4] sm:$0xf]
        %v6832 = vld [vmem:[%s6803 + $0xa8] sm:$0xff]
        %v6833 = vld [vmem:[%s6803 + $0xb0] sm:$0xf]
        %v6834 = vld [vmem:[%s6803 + $0xb4] sm:$0xff]
        %v6835 = vld [vmem:[%s6803 + $0xbc] sm:$0xf]
        %v6836 = vld [vmem:[%s6803 + $0xc0] sm:$0xff]
        %v6837 = vld [vmem:[%s6803 + $0xc8] sm:$0xf]
        %v6838 = vld [vmem:[%s6803 + $0xcc] sm:$0xff]
        %v6839 = vld [vmem:[%s6803 + $0xd4] sm:$0xf]
        %v6840 = vld [vmem:[%s6803 + $0xd8] sm:$0xff]
        %v6841 = vld [vmem:[%s6803 + $0xe0] sm:$0xf]
        %v6842 = vld [vmem:[%s6803 + $0xe4] sm:$0xff]
        %v6843 = vld [vmem:[%s6803 + $0xec] sm:$0xf]
        %v6844 = vld [vmem:[%s6803 + $0xf0] sm:$0xff]
        %v6845 = vld [vmem:[%s6803 + $0xf8] sm:$0xf]
        %v6846 = vld [vmem:[%s6803 + $0xfc] sm:$0xff]
        %v6847 = vld [vmem:[%s6803 + $0x104] sm:$0xf]
        %v6848 = vld [vmem:[%s6803 + $0x108] sm:$0xff]
        %v6849 = vld [vmem:[%s6803 + $0x110] sm:$0xf]
        %v6850 = vld [vmem:[%s6803 + $0x114] sm:$0xff]
        %v6851 = vld [vmem:[%s6803 + $0x11c] sm:$0xf]
        %v6852 = vld [vmem:[%s6803 + $0x120] sm:$0xff]
        %v6853 = vld [vmem:[%s6803 + $0x128] sm:$0xf]
        %v6854 = vld [vmem:[%s6803 + $0x12c] sm:$0xff]
        %v6855 = vld [vmem:[%s6803 + $0x134] sm:$0xf]
        %v6856 = vld [vmem:[%s6803 + $0x138] sm:$0xff]
        %v6857 = vld [vmem:[%s6803 + $0x140] sm:$0xf]
        %v6858 = vld [vmem:[%s6803 + $0x144] sm:$0xff]
        %v6859 = vld [vmem:[%s6803 + $0x14c] sm:$0xf]
        %v6860 = vld [vmem:[%s6803 + $0x150] sm:$0xff]
        %v6861 = vld [vmem:[%s6803 + $0x158] sm:$0xf]
        %v6862 = vld [vmem:[%s6803 + $0x15c] sm:$0xff]
        %v6863 = vld [vmem:[%s6803 + $0x164] sm:$0xf]
        %v6864 = vld [vmem:[%s6803 + $0x168] sm:$0xff]
        %v6865 = vld [vmem:[%s6803 + $0x170] sm:$0xf]
        %v6866 = vld [vmem:[%s6803 + $0x174] sm:$0xff]
        %v6867 = vld [vmem:[%s6803 + $0x17c] sm:$0xf]
        %v6868 = vld [vmem:[%s6803 + $0x180] sm:$0xff]
        %v6869 = vld [vmem:[%s6803 + $0x188] sm:$0xf]
        %v6870 = vld [vmem:[%s6803 + $0x18c] sm:$0xff]
        %v6871 = vld [vmem:[%s6803 + $0x194] sm:$0xf]
        %v6872 = vld [vmem:[%s6803 + $0x198] sm:$0xff]
        %v6873 = vld [vmem:[%s6803 + $0x1a0] sm:$0xf]
        %v6874 = vld [vmem:[%s6803 + $0x1a4] sm:$0xff]
        %v6875 = vld [vmem:[%s6803 + $0x1ac] sm:$0xf]
        %v6876 = vld [vmem:[%s6803 + $0x1b0] sm:$0xff]
        %v6877 = vld [vmem:[%s6803 + $0x1b8] sm:$0xf]
        %v6878 = vld [vmem:[%s6803 + $0x1bc] sm:$0xff]
        %v6879 = vld [vmem:[%s6803 + $0x1c4] sm:$0xf]
        %v6880 = vld [vmem:[%s6803 + $0x1c8] sm:$0xff]
        %v6881 = vld [vmem:[%s6803 + $0x1d0] sm:$0xf]
        %v6882 = vld [vmem:[%s6803 + $0x1d4] sm:$0xff]
        %v6883 = vld [vmem:[%s6803 + $0x1dc] sm:$0xf]
        %v6884 = vld [vmem:[%s6803 + $0x1e0] sm:$0xff]
        %v6885 = vld [vmem:[%s6803 + $0x1e8] sm:$0xf]
        %v6886 = vld [vmem:[%s6803 + $0x1ec] sm:$0xff]
        %v6887 = vld [vmem:[%s6803 + $0x1f4] sm:$0xf]
        %v6888 = vld [vmem:[%s6803 + $0x1f8] sm:$0xff]
        %v6889 = vld [vmem:[%s6803 + $0x200] sm:$0xf]
        %v6890 = vld [vmem:[%s6803 + $0x204] sm:$0xff]
        %v6891 = vld [vmem:[%s6803 + $0x20c] sm:$0xf]
        %v6892 = vld [vmem:[%s6803 + $0x210] sm:$0xff]
        %v6893 = vld [vmem:[%s6803 + $0x218] sm:$0xf]
        %v6894 = vld [vmem:[%s6803 + $0x21c] sm:$0xff]
        %v6895 = vld [vmem:[%s6803 + $0x224] sm:$0xf]
        %v6896 = vld [vmem:[%s6803 + $0x228] sm:$0xff]
        %v6897 = vld [vmem:[%s6803 + $0x230] sm:$0xf]
        %v6898 = vld [vmem:[%s6803 + $0x234] sm:$0xff]
        %v6899 = vld [vmem:[%s6803 + $0x23c] sm:$0xf]
        %v6900 = vld [vmem:[%s6803 + $0x240] sm:$0xff]
        %v6901 = vld [vmem:[%s6803 + $0x248] sm:$0xf]
        %v6902 = vld [vmem:[%s6803 + $0x24c] sm:$0xff]
        %v6903 = vld [vmem:[%s6803 + $0x254] sm:$0xf]
        %v6904 = vld [vmem:[%s6803 + $0x258] sm:$0xff]
        %v6905 = vld [vmem:[%s6803 + $0x260] sm:$0xf]
        %v6906 = vld [vmem:[%s6803 + $0x264] sm:$0xff]
        %v6907 = vld [vmem:[%s6803 + $0x26c] sm:$0xf]
        %v6908 = vld [vmem:[%s6803 + $0x270] sm:$0xff]
        %v6909 = vld [vmem:[%s6803 + $0x278] sm:$0xf]
        %v6910 = vld [vmem:[%s6803 + $0x27c] sm:$0xff]
        %v6911 = vld [vmem:[%s6803 + $0x284] sm:$0xf]
        %v6912 = vld [vmem:[%s6803 + $0x288] sm:$0xff]
        %v6913 = vld [vmem:[%s6803 + $0x290] sm:$0xf]
        %v6914 = vld [vmem:[%s6803 + $0x294] sm:$0xff]
        %v6915 = vld [vmem:[%s6803 + $0x29c] sm:$0xf]
        %v6916 = vld [vmem:[%s6803 + $0x2a0] sm:$0xff]
        %v6917 = vld [vmem:[%s6803 + $0x2a8] sm:$0xf]
        %v6918 = vld [vmem:[%s6803 + $0x2ac] sm:$0xff]
        %v6919 = vld [vmem:[%s6803 + $0x2b4] sm:$0xf]
        %v6920 = vld [vmem:[%s6803 + $0x2b8] sm:$0xff]
        %v6921 = vld [vmem:[%s6803 + $0x2c0] sm:$0xf]
        %v6922 = vld [vmem:[%s6803 + $0x2c4] sm:$0xff]
        %v6923 = vld [vmem:[%s6803 + $0x2cc] sm:$0xf]
        %v7044 = vunpack.c.l.b16 %v6804
        %v7045 = vunpack.c.h.b16 %v6804
        %v7046 = vunpack.c.l.b16 %v6805
        %v7047 = vunpack.c.l.b16 %v6806
        %v7048 = vunpack.c.h.b16 %v6806
        %v7049 = vunpack.c.l.b16 %v6807
        %v7050 = vunpack.c.l.b16 %v6808
        %v7051 = vunpack.c.h.b16 %v6808
        %v7052 = vunpack.c.l.b16 %v6809
        %v7053 = vunpack.c.l.b16 %v6810
        %v7054 = vunpack.c.h.b16 %v6810
        %v7055 = vunpack.c.l.b16 %v6811
        %v7056 = vunpack.c.l.b16 %v6812
        %v7057 = vunpack.c.h.b16 %v6812
        %v7058 = vunpack.c.l.b16 %v6813
        %v7059 = vunpack.c.l.b16 %v6814
        %v7060 = vunpack.c.h.b16 %v6814
        %v7061 = vunpack.c.l.b16 %v6815
        %v7062 = vunpack.c.l.b16 %v6816
        %v7063 = vunpack.c.h.b16 %v6816
        %v7064 = vunpack.c.l.b16 %v6817
        %v7065 = vunpack.c.l.b16 %v6818
        %v7066 = vunpack.c.h.b16 %v6818
        %v7067 = vunpack.c.l.b16 %v6819
        %v7068 = vunpack.c.l.b16 %v6820
        %v7069 = vunpack.c.h.b16 %v6820
        %v7070 = vunpack.c.l.b16 %v6821
        %v7071 = vunpack.c.l.b16 %v6822
        %v7072 = vunpack.c.h.b16 %v6822
        %v7073 = vunpack.c.l.b16 %v6823
        %v7074 = vunpack.c.l.b16 %v6824
        %v7075 = vunpack.c.h.b16 %v6824
        %v7076 = vunpack.c.l.b16 %v6825
        %v7077 = vunpack.c.l.b16 %v6826
        %v7078 = vunpack.c.h.b16 %v6826
        %v7079 = vunpack.c.l.b16 %v6827
        %v7080 = vunpack.c.l.b16 %v6828
        %v7081 = vunpack.c.h.b16 %v6828
        %v7082 = vunpack.c.l.b16 %v6829
        %v7083 = vunpack.c.l.b16 %v6830
        %v7084 = vunpack.c.h.b16 %v6830
        %v7085 = vunpack.c.l.b16 %v6831
        %v7086 = vunpack.c.l.b16 %v6832
        %v7087 = vunpack.c.h.b16 %v6832
        %v7088 = vunpack.c.l.b16 %v6833
        %v7089 = vunpack.c.l.b16 %v6834
        %v7090 = vunpack.c.h.b16 %v6834
        %v7091 = vunpack.c.l.b16 %v6835
        %v7092 = vunpack.c.l.b16 %v6836
        %v7093 = vunpack.c.h.b16 %v6836
        %v7094 = vunpack.c.l.b16 %v6837
        %v7095 = vunpack.c.l.b16 %v6838
        %v7096 = vunpack.c.h.b16 %v6838
        %v7097 = vunpack.c.l.b16 %v6839
        %v7098 = vunpack.c.l.b16 %v6840
        %v7099 = vunpack.c.h.b16 %v6840
        %v7100 = vunpack.c.l.b16 %v6841
        %v7101 = vunpack.c.l.b16 %v6842
        %v7102 = vunpack.c.h.b16 %v6842
        %v7103 = vunpack.c.l.b16 %v6843
        %v7104 = vunpack.c.l.b16 %v6844
        %v7105 = vunpack.c.h.b16 %v6844
        %v7106 = vunpack.c.l.b16 %v6845
        %v7107 = vunpack.c.l.b16 %v6846
        %v7108 = vunpack.c.h.b16 %v6846
        %v7109 = vunpack.c.l.b16 %v6847
        %v7110 = vunpack.c.l.b16 %v6848
        %v7111 = vunpack.c.h.b16 %v6848
        %v7112 = vunpack.c.l.b16 %v6849
        %v7113 = vunpack.c.l.b16 %v6850
        %v7114 = vunpack.c.h.b16 %v6850
        %v7115 = vunpack.c.l.b16 %v6851
        %v7116 = vunpack.c.l.b16 %v6852
        %v7117 = vunpack.c.h.b16 %v6852
        %v7118 = vunpack.c.l.b16 %v6853
        %v7119 = vunpack.c.l.b16 %v6854
        %v7120 = vunpack.c.h.b16 %v6854
        %v7121 = vunpack.c.l.b16 %v6855
        %v7122 = vunpack.c.l.b16 %v6856
        %v7123 = vunpack.c.h.b16 %v6856
        %v7124 = vunpack.c.l.b16 %v6857
        %v7125 = vunpack.c.l.b16 %v6858
        %v7126 = vunpack.c.h.b16 %v6858
        %v7127 = vunpack.c.l.b16 %v6859
        %v7128 = vunpack.c.l.b16 %v6860
        %v7129 = vunpack.c.h.b16 %v6860
        %v7130 = vunpack.c.l.b16 %v6861
        %v7131 = vunpack.c.l.b16 %v6862
        %v7132 = vunpack.c.h.b16 %v6862
        %v7133 = vunpack.c.l.b16 %v6863
        %v7134 = vunpack.c.l.b16 %v6864
        %v7135 = vunpack.c.h.b16 %v6864
        %v7136 = vunpack.c.l.b16 %v6865
        %v7137 = vunpack.c.l.b16 %v6866
        %v7138 = vunpack.c.h.b16 %v6866
        %v7139 = vunpack.c.l.b16 %v6867
        %v7140 = vunpack.c.l.b16 %v6868
        %v7141 = vunpack.c.h.b16 %v6868
        %v7142 = vunpack.c.l.b16 %v6869
        %v7143 = vunpack.c.l.b16 %v6870
        %v7144 = vunpack.c.h.b16 %v6870
        %v7145 = vunpack.c.l.b16 %v6871
        %v7146 = vunpack.c.l.b16 %v6872
        %v7147 = vunpack.c.h.b16 %v6872
        %v7148 = vunpack.c.l.b16 %v6873
        %v7149 = vunpack.c.l.b16 %v6874
        %v7150 = vunpack.c.h.b16 %v6874
        %v7151 = vunpack.c.l.b16 %v6875
        %v7152 = vunpack.c.l.b16 %v6876
        %v7153 = vunpack.c.h.b16 %v6876
        %v7154 = vunpack.c.l.b16 %v6877
        %v7155 = vunpack.c.l.b16 %v6878
        %v7156 = vunpack.c.h.b16 %v6878
        %v7157 = vunpack.c.l.b16 %v6879
        %v7158 = vunpack.c.l.b16 %v6880
        %v7159 = vunpack.c.h.b16 %v6880
        %v7160 = vunpack.c.l.b16 %v6881
        %v7161 = vunpack.c.l.b16 %v6882
        %v7162 = vunpack.c.h.b16 %v6882
        %v7163 = vunpack.c.l.b16 %v6883
        %v7164 = vunpack.c.l.b16 %v6884
        %v7165 = vunpack.c.h.b16 %v6884
        %v7166 = vunpack.c.l.b16 %v6885
        %v7167 = vunpack.c.l.b16 %v6886
        %v7168 = vunpack.c.h.b16 %v6886
        %v7169 = vunpack.c.l.b16 %v6887
        %v7170 = vunpack.c.l.b16 %v6888
        %v7171 = vunpack.c.h.b16 %v6888
        %v7172 = vunpack.c.l.b16 %v6889
        %v7173 = vunpack.c.l.b16 %v6890
        %v7174 = vunpack.c.h.b16 %v6890
        %v7175 = vunpack.c.l.b16 %v6891
        %v7176 = vunpack.c.l.b16 %v6892
        %v7177 = vunpack.c.h.b16 %v6892
        %v7178 = vunpack.c.l.b16 %v6893
        %v7179 = vunpack.c.l.b16 %v6894
        %v7180 = vunpack.c.h.b16 %v6894
        %v7181 = vunpack.c.l.b16 %v6895
        %v7182 = vunpack.c.l.b16 %v6896
        %v7183 = vunpack.c.h.b16 %v6896
        %v7184 = vunpack.c.l.b16 %v6897
        %v7185 = vunpack.c.l.b16 %v6898
        %v7186 = vunpack.c.h.b16 %v6898
        %v7187 = vunpack.c.l.b16 %v6899
        %v7188 = vunpack.c.l.b16 %v6900
        %v7189 = vunpack.c.h.b16 %v6900
        %v7190 = vunpack.c.l.b16 %v6901
        %v7191 = vunpack.c.l.b16 %v6902
        %v7192 = vunpack.c.h.b16 %v6902
        %v7193 = vunpack.c.l.b16 %v6903
        %v7194 = vunpack.c.l.b16 %v6904
        %v7195 = vunpack.c.h.b16 %v6904
        %v7196 = vunpack.c.l.b16 %v6905
        %v7197 = vunpack.c.l.b16 %v6906
        %v7198 = vunpack.c.h.b16 %v6906
        %v7199 = vunpack.c.l.b16 %v6907
        %v7200 = vunpack.c.l.b16 %v6908
        %v7201 = vunpack.c.h.b16 %v6908
        %v7202 = vunpack.c.l.b16 %v6909
        %v7203 = vunpack.c.l.b16 %v6910
        %v7204 = vunpack.c.h.b16 %v6910
        %v7205 = vunpack.c.l.b16 %v6911
        %v7206 = vunpack.c.l.b16 %v6912
        %v7207 = vunpack.c.h.b16 %v6912
        %v7208 = vunpack.c.l.b16 %v6913
        %v7209 = vunpack.c.l.b16 %v6914
        %v7210 = vunpack.c.h.b16 %v6914
        %v7211 = vunpack.c.l.b16 %v6915
        %v7212 = vunpack.c.l.b16 %v6916
        %v7213 = vunpack.c.h.b16 %v6916
        %v7214 = vunpack.c.l.b16 %v6917
        %v7215 = vunpack.c.l.b16 %v6918
        %v7216 = vunpack.c.h.b16 %v6918
        %v7217 = vunpack.c.l.b16 %v6919
        %v7218 = vunpack.c.l.b16 %v6920
        %v7219 = vunpack.c.h.b16 %v6920
        %v7220 = vunpack.c.l.b16 %v6921
        %v7221 = vunpack.c.l.b16 %v6922
        %v7222 = vunpack.c.h.b16 %v6922
        %v7223 = vunpack.c.l.b16 %v6923
        %v7224 = vpack.c.b16 %v7047, %v7044
        %v7225 = vpack.c.b16 %v7048, %v7045
        %v7226 = vpack.c.b16 %v7049, %v7046
        %v7227 = vpack.c.b16 %v7053, %v7050
        %v7228 = vpack.c.b16 %v7054, %v7051
        %v7229 = vpack.c.b16 %v7055, %v7052
        %v7230 = vpack.c.b16 %v7059, %v7056
        %v7231 = vpack.c.b16 %v7060, %v7057
        %v7232 = vpack.c.b16 %v7061, %v7058
        %v7233 = vpack.c.b16 %v7065, %v7062
        %v7234 = vpack.c.b16 %v7066, %v7063
        %v7235 = vpack.c.b16 %v7067, %v7064
        %v7236 = vpack.c.b16 %v7071, %v7068
        %v7237 = vpack.c.b16 %v7072, %v7069
        %v7238 = vpack.c.b16 %v7073, %v7070
        %v7239 = vpack.c.b16 %v7077, %v7074
        %v7240 = vpack.c.b16 %v7078, %v7075
        %v7241 = vpack.c.b16 %v7079, %v7076
        %v7242 = vpack.c.b16 %v7083, %v7080
        %v7243 = vpack.c.b16 %v7084, %v7081
        %v7244 = vpack.c.b16 %v7085, %v7082
        %v7245 = vpack.c.b16 %v7089, %v7086
        %v7246 = vpack.c.b16 %v7090, %v7087
        %v7247 = vpack.c.b16 %v7091, %v7088
        %v7248 = vpack.c.b16 %v7095, %v7092
        %v7249 = vpack.c.b16 %v7096, %v7093
        %v7250 = vpack.c.b16 %v7097, %v7094
        %v7251 = vpack.c.b16 %v7101, %v7098
        %v7252 = vpack.c.b16 %v7102, %v7099
        %v7253 = vpack.c.b16 %v7103, %v7100
        %v7254 = vpack.c.b16 %v7107, %v7104
        %v7255 = vpack.c.b16 %v7108, %v7105
        %v7256 = vpack.c.b16 %v7109, %v7106
        %v7257 = vpack.c.b16 %v7113, %v7110
        %v7258 = vpack.c.b16 %v7114, %v7111
        %v7259 = vpack.c.b16 %v7115, %v7112
        %v7260 = vpack.c.b16 %v7119, %v7116
        %v7261 = vpack.c.b16 %v7120, %v7117
        %v7262 = vpack.c.b16 %v7121, %v7118
        %v7263 = vpack.c.b16 %v7125, %v7122
        %v7264 = vpack.c.b16 %v7126, %v7123
        %v7265 = vpack.c.b16 %v7127, %v7124
        %v7266 = vpack.c.b16 %v7131, %v7128
        %v7267 = vpack.c.b16 %v7132, %v7129
        %v7268 = vpack.c.b16 %v7133, %v7130
        %v7269 = vpack.c.b16 %v7137, %v7134
        %v7270 = vpack.c.b16 %v7138, %v7135
        %v7271 = vpack.c.b16 %v7139, %v7136
        %v7272 = vpack.c.b16 %v7143, %v7140
        %v7273 = vpack.c.b16 %v7144, %v7141
        %v7274 = vpack.c.b16 %v7145, %v7142
        %v7275 = vpack.c.b16 %v7149, %v7146
        %v7276 = vpack.c.b16 %v7150, %v7147
        %v7277 = vpack.c.b16 %v7151, %v7148
        %v7278 = vpack.c.b16 %v7155, %v7152
        %v7279 = vpack.c.b16 %v7156, %v7153
        %v7280 = vpack.c.b16 %v7157, %v7154
        %v7281 = vpack.c.b16 %v7161, %v7158
        %v7282 = vpack.c.b16 %v7162, %v7159
        %v7283 = vpack.c.b16 %v7163, %v7160
        %v7284 = vpack.c.b16 %v7167, %v7164
        %v7285 = vpack.c.b16 %v7168, %v7165
        %v7286 = vpack.c.b16 %v7169, %v7166
        %v7287 = vpack.c.b16 %v7173, %v7170
        %v7288 = vpack.c.b16 %v7174, %v7171
        %v7289 = vpack.c.b16 %v7175, %v7172
        %v7290 = vpack.c.b16 %v7179, %v7176
        %v7291 = vpack.c.b16 %v7180, %v7177
        %v7292 = vpack.c.b16 %v7181, %v7178
        %v7293 = vpack.c.b16 %v7185, %v7182
        %v7294 = vpack.c.b16 %v7186, %v7183
        %v7295 = vpack.c.b16 %v7187, %v7184
        %v7296 = vpack.c.b16 %v7191, %v7188
        %v7297 = vpack.c.b16 %v7192, %v7189
        %v7298 = vpack.c.b16 %v7193, %v7190
        %v7299 = vpack.c.b16 %v7197, %v7194
        %v7300 = vpack.c.b16 %v7198, %v7195
        %v7301 = vpack.c.b16 %v7199, %v7196
        %v7302 = vpack.c.b16 %v7203, %v7200
        %v7303 = vpack.c.b16 %v7204, %v7201
        %v7304 = vpack.c.b16 %v7205, %v7202
        %v7305 = vpack.c.b16 %v7209, %v7206
        %v7306 = vpack.c.b16 %v7210, %v7207
        %v7307 = vpack.c.b16 %v7211, %v7208
        %v7308 = vpack.c.b16 %v7215, %v7212
        %v7309 = vpack.c.b16 %v7216, %v7213
        %v7310 = vpack.c.b16 %v7217, %v7214
        %v7311 = vpack.c.b16 %v7221, %v7218
        %v7312 = vpack.c.b16 %v7222, %v7219
        %v7313 = vpack.c.b16 %v7223, %v7220
        %v7405 = vsel %vm5041, %v6802, 0
        %7407 = vmatprep.subr.bf16.mxu0 %v7225
        %7408 = vmatpush1.bf16.msra.mxu0 %v7224
        %7409 = vmatprep.subr.bf16.mxu0 %v7228
        %7410 = vmatpush1.bf16.msra.mxu0 %v7227
        %7411 = vmatprep.subr.bf16.mxu0 %v7231
        %7412 = vmatpush1.bf16.msra.mxu0 %v7230
        %7413 = vmatprep.subr.bf16.mxu0 %v7234
        %7414 = vmatpush1.bf16.msra.mxu0 %v7233
        %7415 = vmatprep.subr.bf16.mxu0 %v7237
        %7416 = vmatpush1.bf16.msra.mxu0 %v7236
        %7417 = vmatprep.subr.bf16.mxu0 %v7240
        %7418 = vmatpush1.bf16.msra.mxu0 %v7239
        %7419 = vmatprep.subr.bf16.mxu0 %v7243
        %7420 = vmatpush1.bf16.msra.mxu0 %v7242
        %7421 = vmatprep.subr.bf16.mxu0 %v7246
        %7422 = vmatpush1.bf16.msra.mxu0 %v7245
        %7423 = vmatprep.subr.bf16.mxu0 %v7249
        %7424 = vmatpush1.bf16.msra.mxu0 %v7248
        %7425 = vmatprep.subr.bf16.mxu0 %v7252
        %7426 = vmatpush1.bf16.msra.mxu0 %v7251
        %7427 = vmatprep.subr.bf16.mxu0 %v7255
        %7428 = vmatpush1.bf16.msra.mxu0 %v7254
        %7429 = vmatprep.subr.bf16.mxu0 %v7258
        %7430 = vmatpush1.bf16.msra.mxu0 %v7257
        %7431 = vmatprep.subr.bf16.mxu0 %v7261
        %7432 = vmatpush1.bf16.msra.mxu0 %v7260
        %7433 = vmatprep.subr.bf16.mxu0 %v7264
        %7434 = vmatpush1.bf16.msra.mxu0 %v7263
        %7435 = vmatprep.subr.bf16.mxu0 %v7267
        %7436 = vmatpush1.bf16.msra.mxu0 %v7266
        %7437 = vmatprep.subr.bf16.mxu0 %v7270
        %7438 = vmatpush1.bf16.msra.mxu0 %v7269
        %7439 = vmatprep.mubr.bf16.mxu0 %v6800
        %7440 = vmatmul.mubr.bf16.gmra.mrb[0].mxu0 %v6799
        %v7441 = vpop.f32.mrb[0].mxu0
        %v7442 = vadd.f32 0.0, %v7441
        %v7443 = vpop.f32.mrb[0].mxu0
        %v7444 = vadd.f32 0.0, %v7443
        %v7445 = vpop.f32.mrb[0].mxu0
        %v7446 = vpop.f32.mrb[0].mxu0
        %7447 = vdwg.mxu0
        %7448 = vmatprep.subr.bf16.mxu0 %v7273
        %7449 = vmatpush1.bf16.msra.mxu0 %v7272
        %7450 = vmatprep.subr.bf16.mxu0 %v7276
        %7451 = vmatpush1.bf16.msra.mxu0 %v7275
        %7452 = vmatprep.subr.bf16.mxu0 %v7279
        %7453 = vmatpush1.bf16.msra.mxu0 %v7278
        %7454 = vmatprep.subr.bf16.mxu0 %v7282
        %7455 = vmatpush1.bf16.msra.mxu0 %v7281
        %7456 = vmatprep.subr.bf16.mxu0 %v7285
        %7457 = vmatpush1.bf16.msra.mxu0 %v7284
        %7458 = vmatprep.subr.bf16.mxu0 %v7288
        %7459 = vmatpush1.bf16.msra.mxu0 %v7287
        %7460 = vmatprep.subr.bf16.mxu0 %v7291
        %7461 = vmatpush1.bf16.msra.mxu0 %v7290
        %7462 = vmatprep.subr.bf16.mxu0 %v7294
        %7463 = vmatpush1.bf16.msra.mxu0 %v7293
        %7464 = vmatprep.subr.bf16.mxu0 %v7297
        %7465 = vmatpush1.bf16.msra.mxu0 %v7296
        %7466 = vmatprep.subr.bf16.mxu0 %v7300
        %7467 = vmatpush1.bf16.msra.mxu0 %v7299
        %7468 = vmatprep.subr.bf16.mxu0 %v7303
        %7469 = vmatpush1.bf16.msra.mxu0 %v7302
        %7470 = vmatprep.subr.bf16.mxu0 %v7306
        %7471 = vmatpush1.bf16.msra.mxu0 %v7305
        %7472 = vmatprep.subr.bf16.mxu0 %v7309
        %7473 = vmatpush1.bf16.msra.mxu0 %v7308
        %7474 = vmatprep.subr.bf16.mxu0 %v7312
        %7475 = vmatpush1.bf16.msra.mxu0 %v7311
        %7476 = vmatprep.subr.bf16.mxu0 0
        %7477 = vmatpush1.bf16.msra.mxu0 0
        %7478 = vmatprep.subr.bf16.mxu0 0
        %7479 = vmatpush1.bf16.msra.mxu0 0
        %7480 = vmatprep.mubr.bf16.mxu0 %v7405
        %7481 = vmatmul.mubr.bf16.gmra.mrb[0].mxu0 %v6801
        %v7482 = vpop.f32.mrb[0].mxu0
        %v7483 = vadd.f32 %v7442, %v7482
        %v7484 = vpop.f32.mrb[0].mxu0
        %v7485 = vadd.f32 %v7444, %v7484
        %v7486 = vpop.f32.mrb[0].mxu0
        %v7487 = vpop.f32.mrb[0].mxu0
        %7488 = vdwg.mxu0
        %7489 = vmatprep.subr.bf16.mxu0 0
        %7490 = vmatpush1.bf16.msra.mxu0 %v7226
        %7491 = vmatprep.subr.bf16.mxu0 0
        %7492 = vmatpush1.bf16.msra.mxu0 %v7229
        %7493 = vmatprep.subr.bf16.mxu0 0
        %7494 = vmatpush1.bf16.msra.mxu0 %v7232
        %7495 = vmatprep.subr.bf16.mxu0 0
        %7496 = vmatpush1.bf16.msra.mxu0 %v7235
        %7497 = vmatprep.subr.bf16.mxu0 0
        %7498 = vmatpush1.bf16.msra.mxu0 %v7238
        %7499 = vmatprep.subr.bf16.mxu0 0
        %7500 = vmatpush1.bf16.msra.mxu0 %v7241
        %7501 = vmatprep.subr.bf16.mxu0 0
        %7502 = vmatpush1.bf16.msra.mxu0 %v7244
        %7503 = vmatprep.subr.bf16.mxu0 0
        %7504 = vmatpush1.bf16.msra.mxu0 %v7247
        %7505 = vmatprep.subr.bf16.mxu0 0
        %7506 = vmatpush1.bf16.msra.mxu0 %v7250
        %7507 = vmatprep.subr.bf16.mxu0 0
        %7508 = vmatpush1.bf16.msra.mxu0 %v7253
        %7509 = vmatprep.subr.bf16.mxu0 0
        %7510 = vmatpush1.bf16.msra.mxu0 %v7256
        %7511 = vmatprep.subr.bf16.mxu0 0
        %7512 = vmatpush1.bf16.msra.mxu0 %v7259
        %7513 = vmatprep.subr.bf16.mxu0 0
        %7514 = vmatpush1.bf16.msra.mxu0 %v7262
        %7515 = vmatprep.subr.bf16.mxu0 0
        %7516 = vmatpush1.bf16.msra.mxu0 %v7265
        %7517 = vmatprep.subr.bf16.mxu0 0
        %7518 = vmatpush1.bf16.msra.mxu0 %v7268
        %7519 = vmatprep.subr.bf16.mxu0 0
        %7520 = vmatpush1.bf16.msra.mxu0 %v7271
        %7521 = vmatprep.mubr.bf16.mxu0 %v6800
        %7522 = vmatmul.mubr.bf16.gmra.mrb[0].mxu0 %v6799
        %v7523 = vpop.f32.mrb[0].mxu0
        %v7524 = vadd.f32 0.0, %v7523
        %v7525 = vpop.f32.mrb[0].mxu0
        %v7526 = vpop.f32.mrb[0].mxu0
        %v7527 = vpop.f32.mrb[0].mxu0
        %7528 = vdwg.mxu0
        %7529 = vmatprep.subr.bf16.mxu0 0
        %7530 = vmatpush1.bf16.msra.mxu0 %v7274
        %7531 = vmatprep.subr.bf16.mxu0 0
        %7532 = vmatpush1.bf16.msra.mxu0 %v7277
        %7533 = vmatprep.subr.bf16.mxu0 0
        %7534 = vmatpush1.bf16.msra.mxu0 %v7280
        %7535 = vmatprep.subr.bf16.mxu0 0
        %7536 = vmatpush1.bf16.msra.mxu0 %v7283
        %7537 = vmatprep.subr.bf16.mxu0 0
        %7538 = vmatpush1.bf16.msra.mxu0 %v7286
        %7539 = vmatprep.subr.bf16.mxu0 0
        %7540 = vmatpush1.bf16.msra.mxu0 %v7289
        %7541 = vmatprep.subr.bf16.mxu0 0
        %7542 = vmatpush1.bf16.msra.mxu0 %v7292
        %7543 = vmatprep.subr.bf16.mxu0 0
        %7544 = vmatpush1.bf16.msra.mxu0 %v7295
        %7545 = vmatprep.subr.bf16.mxu0 0
        %7546 = vmatpush1.bf16.msra.mxu0 %v7298
        %7547 = vmatprep.subr.bf16.mxu0 0
        %7548 = vmatpush1.bf16.msra.mxu0 %v7301
        %7549 = vmatprep.subr.bf16.mxu0 0
        %7550 = vmatpush1.bf16.msra.mxu0 %v7304
        %7551 = vmatprep.subr.bf16.mxu0 0
        %7552 = vmatpush1.bf16.msra.mxu0 %v7307
        %7553 = vmatprep.subr.bf16.mxu0 0
        %7554 = vmatpush1.bf16.msra.mxu0 %v7310
        %7555 = vmatprep.subr.bf16.mxu0 0
        %7556 = vmatpush1.bf16.msra.mxu0 %v7313
        %7557 = vmatprep.subr.bf16.mxu0 0
        %7558 = vmatpush1.bf16.msra.mxu0 0
        %7559 = vmatprep.subr.bf16.mxu0 0
        %7560 = vmatpush1.bf16.msra.mxu0 0
        %7561 = vmatprep.mubr.bf16.mxu0 %v7405
        %7562 = vmatmul.mubr.bf16.gmra.mrb[0].mxu0 %v6801
        %v7563 = vpop.f32.mrb[0].mxu0
        %v7564 = vadd.f32 %v7524, %v7563
        %v7565 = vpop.f32.mrb[0].mxu0
        %v7566 = vpop.f32.mrb[0].mxu0
        %v7567 = vpop.f32.mrb[0].mxu0
        %7568 = vdwg.mxu0
        %v7569 = vadd.f32 %v6709, %v7483
        %v7570 = vadd.f32 %v6710, %v7485
        %v7571 = vadd.f32 %v6711, %v7564
        %v7572 = vld [vmem:[#allocation13] sm:$0x7]
        %v7574 = vlaneseq
        %v7575 = vshrl.u32 %v7574, 7
        %v7576 = vsub.s32 0, %v7575
        %v7577 = vrot.slane %v7572, %v7576
        %v7578 = vlaneseq
        %v7579 = vshrl.u32 %v7578, 7
        %v7580 = vsub.s32 1, %v7579
        %v7581 = vrot.slane %v7572, %v7580
        %v7582 = vlaneseq
        %v7583 = vshrl.u32 %v7582, 7
        %v7584 = vsub.s32 2, %v7583
        %v7585 = vrot.slane %v7572, %v7584
        %v7589 = vadd.f32 %v7569, %v7577
        %v7590 = vadd.f32 %v7570, %v7581
        %v7591 = vadd.f32 %v7571, %v7585
        %v7592 = vmax.f32 %v7589, 0.0
        %v7593 = vmax.f32 %v7590, 0.0
        %v7594 = vmax.f32 %v7591, 0.0
        %v7595 = vpack.c.bf16 %v7592, %v7592
        %v7596 = vpack.c.bf16 %v7593, %v7593
        %v7597 = vpack.c.bf16 %v7594, %v7594
        %v7598 = vld [vmem:[#allocation8] sm:$0xf]
        %v7599 = vld [vmem:[#allocation8 + $0x4] sm:$0xf]
        %v7600 = vld [vmem:[#allocation8 + $0x8] sm:$0xf]
        %v7601 = vld [vmem:[#allocation8 + $0xc] sm:$0xf]
        %v7602 = vld [vmem:[#allocation8 + $0x10] sm:$0xf]
        %v7603 = vld [vmem:[#allocation8 + $0x14] sm:$0xf]
        %v7604 = vld [vmem:[#allocation8 + $0x18] sm:$0xf]
        %v7605 = vld [vmem:[#allocation8 + $0x1c] sm:$0xf]
        %v7606 = vld [vmem:[#allocation8 + $0x20] sm:$0xf]
        %v7607 = vld [vmem:[#allocation8 + $0x24] sm:$0xf]
        %v7608 = vld [vmem:[#allocation8 + $0x28] sm:$0xf]
        %v7609 = vld [vmem:[#allocation8 + $0x2c] sm:$0xf]
        %v7610 = vld [vmem:[#allocation8 + $0x30] sm:$0xf]
        %v7611 = vld [vmem:[#allocation8 + $0x34] sm:$0xf]
        %v7612 = vld [vmem:[#allocation8 + $0x38] sm:$0xf]
        %v7613 = vld [vmem:[#allocation8 + $0x3c] sm:$0xf]
        %v7614 = vld [vmem:[#allocation8 + $0x40] sm:$0xf]
        %v7615 = vld [vmem:[#allocation8 + $0x44] sm:$0xf]
        %v7616 = vld [vmem:[#allocation8 + $0x48] sm:$0xf]
        %v7617 = vld [vmem:[#allocation8 + $0x4c] sm:$0xf]
        %v7618 = vld [vmem:[#allocation8 + $0x50] sm:$0xf]
        %v7619 = vld [vmem:[#allocation8 + $0x54] sm:$0xf]
        %v7620 = vld [vmem:[#allocation8 + $0x58] sm:$0xf]
        %v7621 = vld [vmem:[#allocation8 + $0x5c] sm:$0xf]
        %v7622 = vld [vmem:[#allocation8 + $0x60] sm:$0xf]
        %v7623 = vld [vmem:[#allocation8 + $0x64] sm:$0xf]
        %v7624 = vld [vmem:[#allocation8 + $0x68] sm:$0xf]
        %v7625 = vld [vmem:[#allocation8 + $0x6c] sm:$0xf]
        %v7626 = vld [vmem:[#allocation8 + $0x70] sm:$0xf]
        %v7627 = vld [vmem:[#allocation8 + $0x74] sm:$0xf]
        %v7628 = vld [vmem:[#allocation8 + $0x78] sm:$0xf]
        %v7629 = vld [vmem:[#allocation8 + $0x7c] sm:$0xf]
        %v7630 = vld [vmem:[#allocation8 + $0x80] sm:$0xf]
        %v7631 = vld [vmem:[#allocation8 + $0x84] sm:$0xf]
        %v7632 = vld [vmem:[#allocation8 + $0x88] sm:$0xf]
        %v7633 = vld [vmem:[#allocation8 + $0x8c] sm:$0xf]
        %v7634 = vld [vmem:[#allocation8 + $0x90] sm:$0xf]
        %v7635 = vld [vmem:[#allocation8 + $0x94] sm:$0xf]
        %v7636 = vld [vmem:[#allocation8 + $0x98] sm:$0xf]
        %v7637 = vld [vmem:[#allocation8 + $0x9c] sm:$0xf]
        %v7638 = vld [vmem:[#allocation8 + $0xa0] sm:$0xf]
        %v7639 = vld [vmem:[#allocation8 + $0xa4] sm:$0xf]
        %v7640 = vld [vmem:[#allocation8 + $0xa8] sm:$0xf]
        %v7641 = vld [vmem:[#allocation8 + $0xac] sm:$0xf]
        %v7642 = vld [vmem:[#allocation8 + $0xb0] sm:$0xf]
        %v7643 = vld [vmem:[#allocation8 + $0xb4] sm:$0xf]
        %v7644 = vld [vmem:[#allocation8 + $0xb8] sm:$0xf]
        %v7645 = vld [vmem:[#allocation8 + $0xbc] sm:$0xf]
        %s7646 = scalar_lea.vmem [#allocation8], 192
        %v7647 = vld [vmem:[%s7646] sm:$0xf]
        %v7648 = vld [vmem:[%s7646 + $0x4] sm:$0xf]
        %v7649 = vld [vmem:[%s7646 + $0x8] sm:$0xf]
        %v7650 = vld [vmem:[%s7646 + $0xc] sm:$0xf]
        %v7651 = vld [vmem:[%s7646 + $0x10] sm:$0xf]
        %v7652 = vld [vmem:[%s7646 + $0x14] sm:$0xf]
        %v7653 = vld [vmem:[%s7646 + $0x18] sm:$0xf]
        %v7654 = vld [vmem:[%s7646 + $0x1c] sm:$0xf]
        %v7655 = vld [vmem:[%s7646 + $0x20] sm:$0xf]
        %v7656 = vld [vmem:[%s7646 + $0x24] sm:$0xf]
        %v7657 = vld [vmem:[%s7646 + $0x28] sm:$0xf]
        %v7658 = vld [vmem:[%s7646 + $0x2c] sm:$0xf]
        %v7659 = vld [vmem:[%s7646 + $0x30] sm:$0xf]
        %v7660 = vld [vmem:[%s7646 + $0x34] sm:$0xf]
        %v7661 = vld [vmem:[%s7646 + $0x38] sm:$0xf]
        %v7662 = vld [vmem:[%s7646 + $0x3c] sm:$0xf]
        %v7663 = vld [vmem:[%s7646 + $0x40] sm:$0xf]
        %v7664 = vld [vmem:[%s7646 + $0x44] sm:$0xf]
        %v7665 = vld [vmem:[%s7646 + $0x48] sm:$0xf]
        %v7666 = vld [vmem:[%s7646 + $0x4c] sm:$0xf]
        %v7667 = vld [vmem:[%s7646 + $0x50] sm:$0xf]
        %v7668 = vld [vmem:[%s7646 + $0x54] sm:$0xf]
        %v7669 = vld [vmem:[%s7646 + $0x58] sm:$0xf]
        %v7670 = vld [vmem:[%s7646 + $0x5c] sm:$0xf]
        %v7671 = vld [vmem:[%s7646 + $0x60] sm:$0xf]
        %v7672 = vld [vmem:[%s7646 + $0x64] sm:$0xf]
        %v7673 = vld [vmem:[%s7646 + $0x68] sm:$0xf]
        %v7674 = vld [vmem:[%s7646 + $0x6c] sm:$0xf]
        %v7675 = vld [vmem:[%s7646 + $0x70] sm:$0xf]
        %v7676 = vld [vmem:[%s7646 + $0x74] sm:$0xf]
        %v7677 = vld [vmem:[%s7646 + $0x78] sm:$0xf]
        %v7678 = vld [vmem:[%s7646 + $0x7c] sm:$0xf]
        %v7679 = vld [vmem:[%s7646 + $0x80] sm:$0xf]
        %v7680 = vld [vmem:[%s7646 + $0x84] sm:$0xf]
        %v7681 = vld [vmem:[%s7646 + $0x88] sm:$0xf]
        %v7682 = vld [vmem:[%s7646 + $0x8c] sm:$0xf]
        %v7683 = vld [vmem:[%s7646 + $0x90] sm:$0xf]
        %v7684 = vld [vmem:[%s7646 + $0x94] sm:$0xf]
        %v7685 = vld [vmem:[%s7646 + $0x98] sm:$0xf]
        %v7686 = vld [vmem:[%s7646 + $0x9c] sm:$0xf]
        %v7687 = vld [vmem:[%s7646 + $0xa0] sm:$0xf]
        %v7688 = vld [vmem:[%s7646 + $0xa4] sm:$0xf]
        %v7689 = vld [vmem:[%s7646 + $0xa8] sm:$0xf]
        %v7690 = vld [vmem:[%s7646 + $0xac] sm:$0xf]
        %v7691 = vld [vmem:[%s7646 + $0xb0] sm:$0xf]
        %v7692 = vld [vmem:[%s7646 + $0xb4] sm:$0xf]
        %v7693 = vld [vmem:[%s7646 + $0xb8] sm:$0xf]
        %v7694 = vld [vmem:[%s7646 + $0xbc] sm:$0xf]
        %v7696 = vshrl.u32 %v7595, 16
        %v7698 = vshll.u32 %v7595, 16
        %v7700 = vrot.slane %v7698, 1
        %v7701 = vor.u32 %v7696, %v7700
        %v7703 = vshrl.u32 %v7596, 16
        %v7705 = vshll.u32 %v7596, 16
        %v7707 = vrot.slane %v7705, 1
        %v7708 = vor.u32 %v7703, %v7707
        %v7710 = vshrl.u32 %v7597, 16
        %v7712 = vshll.u32 %v7597, 16
        %v7714 = vrot.slane %v7712, 1
        %v7715 = vor.u32 %v7710, %v7714
        %v7767 = vunpack.c.l.b16 %v7647
        %v7768 = vunpack.c.l.b16 %v7648
        %v7769 = vunpack.c.l.b16 %v7649
        %v7770 = vunpack.c.l.b16 %v7650
        %v7771 = vunpack.c.l.b16 %v7651
        %v7772 = vunpack.c.l.b16 %v7652
        %v7773 = vunpack.c.l.b16 %v7653
        %v7774 = vunpack.c.l.b16 %v7654
        %v7775 = vunpack.c.l.b16 %v7655
        %v7776 = vunpack.c.l.b16 %v7656
        %v7777 = vunpack.c.l.b16 %v7657
        %v7778 = vunpack.c.l.b16 %v7658
        %v7779 = vunpack.c.l.b16 %v7659
        %v7780 = vunpack.c.l.b16 %v7660
        %v7781 = vunpack.c.l.b16 %v7661
        %v7782 = vunpack.c.l.b16 %v7662
        %v7783 = vunpack.c.l.b16 %v7663
        %v7784 = vunpack.c.l.b16 %v7664
        %v7785 = vunpack.c.l.b16 %v7665
        %v7786 = vunpack.c.l.b16 %v7666
        %v7787 = vunpack.c.l.b16 %v7667
        %v7788 = vunpack.c.l.b16 %v7668
        %v7789 = vunpack.c.l.b16 %v7669
        %v7790 = vunpack.c.l.b16 %v7670
        %v7791 = vunpack.c.l.b16 %v7671
        %v7792 = vunpack.c.l.b16 %v7672
        %v7793 = vunpack.c.l.b16 %v7673
        %v7794 = vunpack.c.l.b16 %v7674
        %v7795 = vunpack.c.l.b16 %v7675
        %v7796 = vunpack.c.l.b16 %v7676
        %v7797 = vunpack.c.l.b16 %v7677
        %v7798 = vunpack.c.l.b16 %v7678
        %v7799 = vunpack.c.l.b16 %v7679
        %v7800 = vunpack.c.l.b16 %v7680
        %v7801 = vunpack.c.l.b16 %v7681
        %v7802 = vunpack.c.l.b16 %v7682
        %v7803 = vunpack.c.l.b16 %v7683
        %v7804 = vunpack.c.l.b16 %v7684
        %v7805 = vunpack.c.l.b16 %v7685
        %v7806 = vunpack.c.l.b16 %v7686
        %v7807 = vunpack.c.l.b16 %v7687
        %v7808 = vunpack.c.l.b16 %v7688
        %v7809 = vunpack.c.l.b16 %v7689
        %v7810 = vunpack.c.l.b16 %v7690
        %v7811 = vunpack.c.l.b16 %v7691
        %v7812 = vunpack.c.l.b16 %v7692
        %v7813 = vunpack.c.l.b16 %v7693
        %v7814 = vunpack.c.l.b16 %v7694
        %v7815 = vpack.c.b16 %v7768, %v7767
        %v7816 = vpack.c.b16 %v7770, %v7769
        %v7817 = vpack.c.b16 %v7772, %v7771
        %v7818 = vpack.c.b16 %v7774, %v7773
        %v7819 = vpack.c.b16 %v7776, %v7775
        %v7820 = vpack.c.b16 %v7778, %v7777
        %v7821 = vpack.c.b16 %v7780, %v7779
        %v7822 = vpack.c.b16 %v7782, %v7781
        %v7823 = vpack.c.b16 %v7784, %v7783
        %v7824 = vpack.c.b16 %v7786, %v7785
        %v7825 = vpack.c.b16 %v7788, %v7787
        %v7826 = vpack.c.b16 %v7790, %v7789
        %v7827 = vpack.c.b16 %v7792, %v7791
        %v7828 = vpack.c.b16 %v7794, %v7793
        %v7829 = vpack.c.b16 %v7796, %v7795
        %v7830 = vpack.c.b16 %v7798, %v7797
        %v7831 = vpack.c.b16 %v7800, %v7799
        %v7832 = vpack.c.b16 %v7802, %v7801
        %v7833 = vpack.c.b16 %v7804, %v7803
        %v7834 = vpack.c.b16 %v7806, %v7805
        %v7835 = vpack.c.b16 %v7808, %v7807
        %v7836 = vpack.c.b16 %v7810, %v7809
        %v7837 = vpack.c.b16 %v7812, %v7811
        %v7838 = vpack.c.b16 %v7814, %v7813
        %7863 = vmatprep.subr.bf16.mxu0 0
        %7864 = vmatpush1.bf16.msra.mxu0 %v7815
        %7865 = vmatprep.subr.bf16.mxu0 0
        %7866 = vmatpush1.bf16.msra.mxu0 %v7816
        %7867 = vmatprep.subr.bf16.mxu0 0
        %7868 = vmatpush1.bf16.msra.mxu0 %v7817
        %7869 = vmatprep.subr.bf16.mxu0 0
        %7870 = vmatpush1.bf16.msra.mxu0 %v7818
        %7871 = vmatprep.subr.bf16.mxu0 0
        %7872 = vmatpush1.bf16.msra.mxu0 %v7819
        %7873 = vmatprep.subr.bf16.mxu0 0
        %7874 = vmatpush1.bf16.msra.mxu0 %v7820
        %7875 = vmatprep.subr.bf16.mxu0 0
        %7876 = vmatpush1.bf16.msra.mxu0 %v7821
        %7877 = vmatprep.subr.bf16.mxu0 0
        %7878 = vmatpush1.bf16.msra.mxu0 %v7822
        %7879 = vmatprep.subr.bf16.mxu0 0
        %7880 = vmatpush1.bf16.msra.mxu0 %v7823
        %7881 = vmatprep.subr.bf16.mxu0 0
        %7882 = vmatpush1.bf16.msra.mxu0 %v7824
        %7883 = vmatprep.subr.bf16.mxu0 0
        %7884 = vmatpush1.bf16.msra.mxu0 %v7825
        %7885 = vmatprep.subr.bf16.mxu0 0
        %7886 = vmatpush1.bf16.msra.mxu0 %v7826
        %7887 = vmatprep.subr.bf16.mxu0 0
        %7888 = vmatpush1.bf16.msra.mxu0 %v7827
        %7889 = vmatprep.subr.bf16.mxu0 0
        %7890 = vmatpush1.bf16.msra.mxu0 %v7828
        %7891 = vmatprep.subr.bf16.mxu0 0
        %7892 = vmatpush1.bf16.msra.mxu0 %v7829
        %7893 = vmatprep.subr.bf16.mxu0 0
        %7894 = vmatpush1.bf16.msra.mxu0 %v7830
        %7895 = vmatprep.mubr.bf16.mxu0 %v7708
        %7896 = vmatmul.mubr.bf16.gmra.mrb[0].mxu0 %v7701
        %v7897 = vpop.f32.mrb[0].mxu0
        %v7898 = vadd.f32 0.0, %v7897
        %v7899 = vpop.f32.mrb[0].mxu0
        %v7900 = vpop.f32.mrb[0].mxu0
        %v7901 = vpop.f32.mrb[0].mxu0
        %7902 = vdwg.mxu0
        %7903 = vmatprep.subr.bf16.mxu0 0
        %7904 = vmatpush1.bf16.msra.mxu0 %v7831
        %7905 = vmatprep.subr.bf16.mxu0 0
        %7906 = vmatpush1.bf16.msra.mxu0 %v7832
        %7907 = vmatprep.subr.bf16.mxu0 0
        %7908 = vmatpush1.bf16.msra.mxu0 %v7833
        %7909 = vmatprep.subr.bf16.mxu0 0
        %7910 = vmatpush1.bf16.msra.mxu0 %v7834
        %7911 = vmatprep.subr.bf16.mxu0 0
        %7912 = vmatpush1.bf16.msra.mxu0 %v7835
        %7913 = vmatprep.subr.bf16.mxu0 0
        %7914 = vmatpush1.bf16.msra.mxu0 %v7836
        %7915 = vmatprep.subr.bf16.mxu0 0
        %7916 = vmatpush1.bf16.msra.mxu0 %v7837
        %7917 = vmatprep.subr.bf16.mxu0 0
        %7918 = vmatpush1.bf16.msra.mxu0 %v7838
        %7919 = vmatprep.subr.bf16.mxu0 0
        %7920 = vmatpush1.bf16.msra.mxu0 0
        %7921 = vmatprep.subr.bf16.mxu0 0
        %7922 = vmatpush1.bf16.msra.mxu0 0
        %7923 = vmatprep.subr.bf16.mxu0 0
        %7924 = vmatpush1.bf16.msra.mxu0 0
        %7925 = vmatprep.subr.bf16.mxu0 0
        %7926 = vmatpush1.bf16.msra.mxu0 0
        %7927 = vmatprep.subr.bf16.mxu0 0
        %7928 = vmatpush1.bf16.msra.mxu0 0
        %7929 = vmatprep.subr.bf16.mxu0 0
        %7930 = vmatpush1.bf16.msra.mxu0 0
        %7931 = vmatprep.subr.bf16.mxu0 0
        %7932 = vmatpush1.bf16.msra.mxu0 0
        %7933 = vmatprep.subr.bf16.mxu0 0
        %7934 = vmatpush1.bf16.msra.mxu0 0
        %7935 = vmatprep.mubr.bf16.mxu0 0
        %7936 = vmatmul.mubr.bf16.gmra.mrb[0].mxu0 %v7715
        %v7937 = vpop.f32.mrb[0].mxu0
        %v7938 = vadd.f32 %v7898, %v7937
        %v7939 = vpop.f32.mrb[0].mxu0
        %v7940 = vpop.f32.mrb[0].mxu0
        %v7941 = vpop.f32.mrb[0].mxu0
        %7942 = vdwg.mxu0
        %v7991 = vunpack.c.l.b16 %v7598
        %v7992 = vunpack.c.l.b16 %v7599
        %v7993 = vunpack.c.l.b16 %v7600
        %v7994 = vunpack.c.l.b16 %v7601
        %v7995 = vunpack.c.l.b16 %v7602
        %v7996 = vunpack.c.l.b16 %v7603
        %v7997 = vunpack.c.l.b16 %v7604
        %v7998 = vunpack.c.l.b16 %v7605
        %v7999 = vunpack.c.l.b16 %v7606
        %v8000 = vunpack.c.l.b16 %v7607
        %v8001 = vunpack.c.l.b16 %v7608
        %v8002 = vunpack.c.l.b16 %v7609
        %v8003 = vunpack.c.l.b16 %v7610
        %v8004 = vunpack.c.l.b16 %v7611
        %v8005 = vunpack.c.l.b16 %v7612
        %v8006 = vunpack.c.l.b16 %v7613
        %v8007 = vunpack.c.l.b16 %v7614
        %v8008 = vunpack.c.l.b16 %v7615
        %v8009 = vunpack.c.l.b16 %v7616
        %v8010 = vunpack.c.l.b16 %v7617
        %v8011 = vunpack.c.l.b16 %v7618
        %v8012 = vunpack.c.l.b16 %v7619
        %v8013 = vunpack.c.l.b16 %v7620
        %v8014 = vunpack.c.l.b16 %v7621
        %v8015 = vunpack.c.l.b16 %v7622
        %v8016 = vunpack.c.l.b16 %v7623
        %v8017 = vunpack.c.l.b16 %v7624
        %v8018 = vunpack.c.l.b16 %v7625
        %v8019 = vunpack.c.l.b16 %v7626
        %v8020 = vunpack.c.l.b16 %v7627
        %v8021 = vunpack.c.l.b16 %v7628
        %v8022 = vunpack.c.l.b16 %v7629
        %v8023 = vunpack.c.l.b16 %v7630
        %v8024 = vunpack.c.l.b16 %v7631
        %v8025 = vunpack.c.l.b16 %v7632
        %v8026 = vunpack.c.l.b16 %v7633
        %v8027 = vunpack.c.l.b16 %v7634
        %v8028 = vunpack.c.l.b16 %v7635
        %v8029 = vunpack.c.l.b16 %v7636
        %v8030 = vunpack.c.l.b16 %v7637
        %v8031 = vunpack.c.l.b16 %v7638
        %v8032 = vunpack.c.l.b16 %v7639
        %v8033 = vunpack.c.l.b16 %v7640
        %v8034 = vunpack.c.l.b16 %v7641
        %v8035 = vunpack.c.l.b16 %v7642
        %v8036 = vunpack.c.l.b16 %v7643
        %v8037 = vunpack.c.l.b16 %v7644
        %v8038 = vunpack.c.l.b16 %v7645
        %v8039 = vpack.c.b16 %v7992, %v7991
        %v8040 = vpack.c.b16 %v7994, %v7993
        %v8041 = vpack.c.b16 %v7996, %v7995
        %v8042 = vpack.c.b16 %v7998, %v7997
        %v8043 = vpack.c.b16 %v8000, %v7999
        %v8044 = vpack.c.b16 %v8002, %v8001
        %v8045 = vpack.c.b16 %v8004, %v8003
        %v8046 = vpack.c.b16 %v8006, %v8005
        %v8047 = vpack.c.b16 %v8008, %v8007
        %v8048 = vpack.c.b16 %v8010, %v8009
        %v8049 = vpack.c.b16 %v8012, %v8011
        %v8050 = vpack.c.b16 %v8014, %v8013
        %v8051 = vpack.c.b16 %v8016, %v8015
        %v8052 = vpack.c.b16 %v8018, %v8017
        %v8053 = vpack.c.b16 %v8020, %v8019
        %v8054 = vpack.c.b16 %v8022, %v8021
        %v8055 = vpack.c.b16 %v8024, %v8023
        %v8056 = vpack.c.b16 %v8026, %v8025
        %v8057 = vpack.c.b16 %v8028, %v8027
        %v8058 = vpack.c.b16 %v8030, %v8029
        %v8059 = vpack.c.b16 %v8032, %v8031
        %v8060 = vpack.c.b16 %v8034, %v8033
        %v8061 = vpack.c.b16 %v8036, %v8035
        %v8062 = vpack.c.b16 %v8038, %v8037
        %8087 = vmatprep.subr.bf16.mxu0 0
        %8088 = vmatpush1.bf16.msra.mxu0 %v8039
        %8089 = vmatprep.subr.bf16.mxu0 0
        %8090 = vmatpush1.bf16.msra.mxu0 %v8040
        %8091 = vmatprep.subr.bf16.mxu0 0
        %8092 = vmatpush1.bf16.msra.mxu0 %v8041
        %8093 = vmatprep.subr.bf16.mxu0 0
        %8094 = vmatpush1.bf16.msra.mxu0 %v8042
        %8095 = vmatprep.subr.bf16.mxu0 0
        %8096 = vmatpush1.bf16.msra.mxu0 %v8043
        %8097 = vmatprep.subr.bf16.mxu0 0
        %8098 = vmatpush1.bf16.msra.mxu0 %v8044
        %8099 = vmatprep.subr.bf16.mxu0 0
        %8100 = vmatpush1.bf16.msra.mxu0 %v8045
        %8101 = vmatprep.subr.bf16.mxu0 0
        %8102 = vmatpush1.bf16.msra.mxu0 %v8046
        %8103 = vmatprep.subr.bf16.mxu0 0
        %8104 = vmatpush1.bf16.msra.mxu0 %v8047
        %8105 = vmatprep.subr.bf16.mxu0 0
        %8106 = vmatpush1.bf16.msra.mxu0 %v8048
        %8107 = vmatprep.subr.bf16.mxu0 0
        %8108 = vmatpush1.bf16.msra.mxu0 %v8049
        %8109 = vmatprep.subr.bf16.mxu0 0
        %8110 = vmatpush1.bf16.msra.mxu0 %v8050
        %8111 = vmatprep.subr.bf16.mxu0 0
        %8112 = vmatpush1.bf16.msra.mxu0 %v8051
        %8113 = vmatprep.subr.bf16.mxu0 0
        %8114 = vmatpush1.bf16.msra.mxu0 %v8052
        %8115 = vmatprep.subr.bf16.mxu0 0
        %8116 = vmatpush1.bf16.msra.mxu0 %v8053
        %8117 = vmatprep.subr.bf16.mxu0 0
        %8118 = vmatpush1.bf16.msra.mxu0 %v8054
        %8119 = vmatprep.mubr.bf16.mxu0 %v7596
        %8120 = vmatmul.mubr.bf16.gmra.mrb[0].mxu0 %v7595
        %v8121 = vpop.f32.mrb[0].mxu0
        %v8122 = vadd.f32 %v7938, %v8121
        %v8123 = vpop.f32.mrb[0].mxu0
        %v8124 = vpop.f32.mrb[0].mxu0
        %v8125 = vpop.f32.mrb[0].mxu0
        %8126 = vdwg.mxu0
        %8127 = vmatprep.subr.bf16.mxu0 0
        %8128 = vmatpush1.bf16.msra.mxu0 %v8055
        %8129 = vmatprep.subr.bf16.mxu0 0
        %8130 = vmatpush1.bf16.msra.mxu0 %v8056
        %8131 = vmatprep.subr.bf16.mxu0 0
        %8132 = vmatpush1.bf16.msra.mxu0 %v8057
        %8133 = vmatprep.subr.bf16.mxu0 0
        %8134 = vmatpush1.bf16.msra.mxu0 %v8058
        %8135 = vmatprep.subr.bf16.mxu0 0
        %8136 = vmatpush1.bf16.msra.mxu0 %v8059
        %8137 = vmatprep.subr.bf16.mxu0 0
        %8138 = vmatpush1.bf16.msra.mxu0 %v8060
        %8139 = vmatprep.subr.bf16.mxu0 0
        %8140 = vmatpush1.bf16.msra.mxu0 %v8061
        %8141 = vmatprep.subr.bf16.mxu0 0
        %8142 = vmatpush1.bf16.msra.mxu0 %v8062
        %8143 = vmatprep.subr.bf16.mxu0 0
        %8144 = vmatpush1.bf16.msra.mxu0 0
        %8145 = vmatprep.subr.bf16.mxu0 0
        %8146 = vmatpush1.bf16.msra.mxu0 0
        %8147 = vmatprep.subr.bf16.mxu0 0
        %8148 = vmatpush1.bf16.msra.mxu0 0
        %8149 = vmatprep.subr.bf16.mxu0 0
        %8150 = vmatpush1.bf16.msra.mxu0 0
        %8151 = vmatprep.subr.bf16.mxu0 0
        %8152 = vmatpush1.bf16.msra.mxu0 0
        %8153 = vmatprep.subr.bf16.mxu0 0
        %8154 = vmatpush1.bf16.msra.mxu0 0
        %8155 = vmatprep.subr.bf16.mxu0 0
        %8156 = vmatpush1.bf16.msra.mxu0 0
        %8157 = vmatprep.subr.bf16.mxu0 0
        %8158 = vmatpush1.bf16.msra.mxu0 0
        %8159 = vmatprep.mubr.bf16.mxu0 0
        %8160 = vmatmul.mubr.bf16.gmra.mrb[0].mxu0 %v7597
        %v8161 = vpop.f32.mrb[0].mxu0
        %v8162 = vadd.f32 %v8122, %v8161
        %v8163 = vpop.f32.mrb[0].mxu0
        %v8164 = vpop.f32.mrb[0].mxu0
        %v8165 = vpop.f32.mrb[0].mxu0
        %8166 = vdwg.mxu0
        %s8167 = scalar_lea.vmem [#allocation8], 384
        %v8168 = vld [vmem:[%s8167] sm:$0xf]
        %v8169 = vld [vmem:[%s8167 + $0x4] sm:$0xf]
        %v8170 = vld [vmem:[%s8167 + $0x8] sm:$0xf]
        %v8171 = vld [vmem:[%s8167 + $0xc] sm:$0xf]
        %v8172 = vld [vmem:[%s8167 + $0x10] sm:$0xf]
        %v8173 = vld [vmem:[%s8167 + $0x14] sm:$0xf]
        %v8174 = vld [vmem:[%s8167 + $0x18] sm:$0xf]
        %v8175 = vld [vmem:[%s8167 + $0x1c] sm:$0xf]
        %v8176 = vld [vmem:[%s8167 + $0x20] sm:$0xf]
        %v8177 = vld [vmem:[%s8167 + $0x24] sm:$0xf]
        %v8178 = vld [vmem:[%s8167 + $0x28] sm:$0xf]
        %v8179 = vld [vmem:[%s8167 + $0x2c] sm:$0xf]
        %v8180 = vld [vmem:[%s8167 + $0x30] sm:$0xf]
        %v8181 = vld [vmem:[%s8167 + $0x34] sm:$0xf]
        %v8182 = vld [vmem:[%s8167 + $0x38] sm:$0xf]
        %v8183 = vld [vmem:[%s8167 + $0x3c] sm:$0xf]
        %v8184 = vld [vmem:[%s8167 + $0x40] sm:$0xf]
        %v8185 = vld [vmem:[%s8167 + $0x44] sm:$0xf]
        %v8186 = vld [vmem:[%s8167 + $0x48] sm:$0xf]
        %v8187 = vld [vmem:[%s8167 + $0x4c] sm:$0xf]
        %v8188 = vld [vmem:[%s8167 + $0x50] sm:$0xf]
        %v8189 = vld [vmem:[%s8167 + $0x54] sm:$0xf]
        %v8190 = vld [vmem:[%s8167 + $0x58] sm:$0xf]
        %v8191 = vld [vmem:[%s8167 + $0x5c] sm:$0xf]
        %v8192 = vld [vmem:[%s8167 + $0x60] sm:$0xf]
        %v8193 = vld [vmem:[%s8167 + $0x64] sm:$0xf]
        %v8194 = vld [vmem:[%s8167 + $0x68] sm:$0xf]
        %v8195 = vld [vmem:[%s8167 + $0x6c] sm:$0xf]
        %v8196 = vld [vmem:[%s8167 + $0x70] sm:$0xf]
        %v8197 = vld [vmem:[%s8167 + $0x74] sm:$0xf]
        %v8198 = vld [vmem:[%s8167 + $0x78] sm:$0xf]
        %v8199 = vld [vmem:[%s8167 + $0x7c] sm:$0xf]
        %v8200 = vld [vmem:[%s8167 + $0x80] sm:$0xf]
        %v8201 = vld [vmem:[%s8167 + $0x84] sm:$0xf]
        %v8202 = vld [vmem:[%s8167 + $0x88] sm:$0xf]
        %v8203 = vld [vmem:[%s8167 + $0x8c] sm:$0xf]
        %v8204 = vld [vmem:[%s8167 + $0x90] sm:$0xf]
        %v8205 = vld [vmem:[%s8167 + $0x94] sm:$0xf]
        %v8206 = vld [vmem:[%s8167 + $0x98] sm:$0xf]
        %v8207 = vld [vmem:[%s8167 + $0x9c] sm:$0xf]
        %v8208 = vld [vmem:[%s8167 + $0xa0] sm:$0xf]
        %v8209 = vld [vmem:[%s8167 + $0xa4] sm:$0xf]
        %v8210 = vld [vmem:[%s8167 + $0xa8] sm:$0xf]
        %v8211 = vld [vmem:[%s8167 + $0xac] sm:$0xf]
        %v8212 = vld [vmem:[%s8167 + $0xb0] sm:$0xf]
        %v8213 = vld [vmem:[%s8167 + $0xb4] sm:$0xf]
        %v8214 = vld [vmem:[%s8167 + $0xb8] sm:$0xf]
        %v8215 = vld [vmem:[%s8167 + $0xbc] sm:$0xf]
        %v8219 = vrot.slane %v7595, 1
        %v8220 = vrot.slane %v7596, 1
        %v8221 = vrot.slane %v7597, 1
        %v8273 = vunpack.c.l.b16 %v8168
        %v8274 = vunpack.c.l.b16 %v8169
        %v8275 = vunpack.c.l.b16 %v8170
        %v8276 = vunpack.c.l.b16 %v8171
        %v8277 = vunpack.c.l.b16 %v8172
        %v8278 = vunpack.c.l.b16 %v8173
        %v8279 = vunpack.c.l.b16 %v8174
        %v8280 = vunpack.c.l.b16 %v8175
        %v8281 = vunpack.c.l.b16 %v8176
        %v8282 = vunpack.c.l.b16 %v8177
        %v8283 = vunpack.c.l.b16 %v8178
        %v8284 = vunpack.c.l.b16 %v8179
        %v8285 = vunpack.c.l.b16 %v8180
        %v8286 = vunpack.c.l.b16 %v8181
        %v8287 = vunpack.c.l.b16 %v8182
        %v8288 = vunpack.c.l.b16 %v8183
        %v8289 = vunpack.c.l.b16 %v8184
        %v8290 = vunpack.c.l.b16 %v8185
        %v8291 = vunpack.c.l.b16 %v8186
        %v8292 = vunpack.c.l.b16 %v8187
        %v8293 = vunpack.c.l.b16 %v8188
        %v8294 = vunpack.c.l.b16 %v8189
        %v8295 = vunpack.c.l.b16 %v8190
        %v8296 = vunpack.c.l.b16 %v8191
        %v8297 = vunpack.c.l.b16 %v8192
        %v8298 = vunpack.c.l.b16 %v8193
        %v8299 = vunpack.c.l.b16 %v8194
        %v8300 = vunpack.c.l.b16 %v8195
        %v8301 = vunpack.c.l.b16 %v8196
        %v8302 = vunpack.c.l.b16 %v8197
        %v8303 = vunpack.c.l.b16 %v8198
        %v8304 = vunpack.c.l.b16 %v8199
        %v8305 = vunpack.c.l.b16 %v8200
        %v8306 = vunpack.c.l.b16 %v8201
        %v8307 = vunpack.c.l.b16 %v8202
        %v8308 = vunpack.c.l.b16 %v8203
        %v8309 = vunpack.c.l.b16 %v8204
        %v8310 = vunpack.c.l.b16 %v8205
        %v8311 = vunpack.c.l.b16 %v8206
        %v8312 = vunpack.c.l.b16 %v8207
        %v8313 = vunpack.c.l.b16 %v8208
        %v8314 = vunpack.c.l.b16 %v8209
        %v8315 = vunpack.c.l.b16 %v8210
        %v8316 = vunpack.c.l.b16 %v8211
        %v8317 = vunpack.c.l.b16 %v8212
        %v8318 = vunpack.c.l.b16 %v8213
        %v8319 = vunpack.c.l.b16 %v8214
        %v8320 = vunpack.c.l.b16 %v8215
        %v8321 = vpack.c.b16 %v8274, %v8273
        %v8322 = vpack.c.b16 %v8276, %v8275
        %v8323 = vpack.c.b16 %v8278, %v8277
        %v8324 = vpack.c.b16 %v8280, %v8279
        %v8325 = vpack.c.b16 %v8282, %v8281
        %v8326 = vpack.c.b16 %v8284, %v8283
        %v8327 = vpack.c.b16 %v8286, %v8285
        %v8328 = vpack.c.b16 %v8288, %v8287
        %v8329 = vpack.c.b16 %v8290, %v8289
        %v8330 = vpack.c.b16 %v8292, %v8291
        %v8331 = vpack.c.b16 %v8294, %v8293
        %v8332 = vpack.c.b16 %v8296, %v8295
        %v8333 = vpack.c.b16 %v8298, %v8297
        %v8334 = vpack.c.b16 %v8300, %v8299
        %v8335 = vpack.c.b16 %v8302, %v8301
        %v8336 = vpack.c.b16 %v8304, %v8303
        %v8337 = vpack.c.b16 %v8306, %v8305
        %v8338 = vpack.c.b16 %v8308, %v8307
        %v8339 = vpack.c.b16 %v8310, %v8309
        %v8340 = vpack.c.b16 %v8312, %v8311
        %v8341 = vpack.c.b16 %v8314, %v8313
        %v8342 = vpack.c.b16 %v8316, %v8315
        %v8343 = vpack.c.b16 %v8318, %v8317
        %v8344 = vpack.c.b16 %v8320, %v8319
        %8369 = vmatprep.subr.bf16.mxu0 0
        %8370 = vmatpush1.bf16.msra.mxu0 %v8321
        %8371 = vmatprep.subr.bf16.mxu0 0
        %8372 = vmatpush1.bf16.msra.mxu0 %v8322
        %8373 = vmatprep.subr.bf16.mxu0 0
        %8374 = vmatpush1.bf16.msra.mxu0 %v8323
        %8375 = vmatprep.subr.bf16.mxu0 0
        %8376 = vmatpush1.bf16.msra.mxu0 %v8324
        %8377 = vmatprep.subr.bf16.mxu0 0
        %8378 = vmatpush1.bf16.msra.mxu0 %v8325
        %8379 = vmatprep.subr.bf16.mxu0 0
        %8380 = vmatpush1.bf16.msra.mxu0 %v8326
        %8381 = vmatprep.subr.bf16.mxu0 0
        %8382 = vmatpush1.bf16.msra.mxu0 %v8327
        %8383 = vmatprep.subr.bf16.mxu0 0
        %8384 = vmatpush1.bf16.msra.mxu0 %v8328
        %8385 = vmatprep.subr.bf16.mxu0 0
        %8386 = vmatpush1.bf16.msra.mxu0 %v8329
        %8387 = vmatprep.subr.bf16.mxu0 0
        %8388 = vmatpush1.bf16.msra.mxu0 %v8330
        %8389 = vmatprep.subr.bf16.mxu0 0
        %8390 = vmatpush1.bf16.msra.mxu0 %v8331
        %8391 = vmatprep.subr.bf16.mxu0 0
        %8392 = vmatpush1.bf16.msra.mxu0 %v8332
        %8393 = vmatprep.subr.bf16.mxu0 0
        %8394 = vmatpush1.bf16.msra.mxu0 %v8333
        %8395 = vmatprep.subr.bf16.mxu0 0
        %8396 = vmatpush1.bf16.msra.mxu0 %v8334
        %8397 = vmatprep.subr.bf16.mxu0 0
        %8398 = vmatpush1.bf16.msra.mxu0 %v8335
        %8399 = vmatprep.subr.bf16.mxu0 0
        %8400 = vmatpush1.bf16.msra.mxu0 %v8336
        %8401 = vmatprep.mubr.bf16.mxu0 %v8220
        %8402 = vmatmul.mubr.bf16.gmra.mrb[0].mxu0 %v8219
        %v8403 = vpop.f32.mrb[0].mxu0
        %v8404 = vadd.f32 0.0, %v8403
        %v8405 = vpop.f32.mrb[0].mxu0
        %v8406 = vpop.f32.mrb[0].mxu0
        %v8407 = vpop.f32.mrb[0].mxu0
        %8408 = vdwg.mxu0
        %8409 = vmatprep.subr.bf16.mxu0 0
        %8410 = vmatpush1.bf16.msra.mxu0 %v8337
        %8411 = vmatprep.subr.bf16.mxu0 0
        %8412 = vmatpush1.bf16.msra.mxu0 %v8338
        %8413 = vmatprep.subr.bf16.mxu0 0
        %8414 = vmatpush1.bf16.msra.mxu0 %v8339
        %8415 = vmatprep.subr.bf16.mxu0 0
        %8416 = vmatpush1.bf16.msra.mxu0 %v8340
        %8417 = vmatprep.subr.bf16.mxu0 0
        %8418 = vmatpush1.bf16.msra.mxu0 %v8341
        %8419 = vmatprep.subr.bf16.mxu0 0
        %8420 = vmatpush1.bf16.msra.mxu0 %v8342
        %8421 = vmatprep.subr.bf16.mxu0 0
        %8422 = vmatpush1.bf16.msra.mxu0 %v8343
        %8423 = vmatprep.subr.bf16.mxu0 0
        %8424 = vmatpush1.bf16.msra.mxu0 %v8344
        %8425 = vmatprep.subr.bf16.mxu0 0
        %8426 = vmatpush1.bf16.msra.mxu0 0
        %8427 = vmatprep.subr.bf16.mxu0 0
        %8428 = vmatpush1.bf16.msra.mxu0 0
        %8429 = vmatprep.subr.bf16.mxu0 0
        %8430 = vmatpush1.bf16.msra.mxu0 0
        %8431 = vmatprep.subr.bf16.mxu0 0
        %8432 = vmatpush1.bf16.msra.mxu0 0
        %8433 = vmatprep.subr.bf16.mxu0 0
        %8434 = vmatpush1.bf16.msra.mxu0 0
        %8435 = vmatprep.subr.bf16.mxu0 0
        %8436 = vmatpush1.bf16.msra.mxu0 0
        %8437 = vmatprep.subr.bf16.mxu0 0
        %8438 = vmatpush1.bf16.msra.mxu0 0
        %8439 = vmatprep.subr.bf16.mxu0 0
        %8440 = vmatpush1.bf16.msra.mxu0 0
        %8441 = vmatprep.mubr.bf16.mxu0 0
        %8442 = vmatmul.mubr.bf16.gmra.mrb[0].mxu0 %v8221
        %v8443 = vpop.f32.mrb[0].mxu0
        %v8444 = vadd.f32 %v8404, %v8443
        %v8445 = vpop.f32.mrb[0].mxu0
        %v8446 = vpop.f32.mrb[0].mxu0
        %v8447 = vpop.f32.mrb[0].mxu0
        %8448 = vdwg.mxu0
        %v8449 = vadd.f32 %v8162, %v8444
        %v8450 = vld [vmem:[#allocation14] sm:$0x1]
        %v8452 = vlaneseq
        %v8453 = vshrl.u32 %v8452, 7
        %v8454 = vsub.s32 0, %v8453
        %v8455 = vrot.slane %v8450, %v8454
        %v8457 = vadd.f32 %v8449, %v8455
        %v8458 = vpack.c.bf16 %v8457, %v8457
        %v8459 = vld [vmem:[#allocation10] sm:$0xf]
        %v8460 = vld [vmem:[#allocation10 + $0x4] sm:$0xf]
        %v8461 = vld [vmem:[#allocation10 + $0x8] sm:$0xf]
        %v8462 = vld [vmem:[#allocation10 + $0xc] sm:$0xf]
        %v8463 = vld [vmem:[#allocation10 + $0x10] sm:$0xf]
        %v8464 = vld [vmem:[#allocation10 + $0x14] sm:$0xf]
        %v8465 = vld [vmem:[#allocation10 + $0x18] sm:$0xf]
        %v8466 = vld [vmem:[#allocation10 + $0x1c] sm:$0xf]
        %v8467 = vld [vmem:[#allocation10 + $0x20] sm:$0xf]
        %v8468 = vld [vmem:[#allocation10 + $0x24] sm:$0xf]
        %v8469 = vld [vmem:[#allocation10 + $0x28] sm:$0xf]
        %v8470 = vld [vmem:[#allocation10 + $0x2c] sm:$0xf]
        %v8471 = vld [vmem:[#allocation10 + $0x30] sm:$0xf]
        %v8472 = vld [vmem:[#allocation10 + $0x34] sm:$0xf]
        %v8473 = vld [vmem:[#allocation10 + $0x38] sm:$0xf]
        %v8474 = vld [vmem:[#allocation10 + $0x3c] sm:$0xf]
        %s8475 = scalar_lea.vmem [#allocation10], 64
        %v8476 = vld [vmem:[%s8475] sm:$0xf]
        %v8477 = vld [vmem:[%s8475 + $0x4] sm:$0xf]
        %v8478 = vld [vmem:[%s8475 + $0x8] sm:$0xf]
        %v8479 = vld [vmem:[%s8475 + $0xc] sm:$0xf]
        %v8480 = vld [vmem:[%s8475 + $0x10] sm:$0xf]
        %v8481 = vld [vmem:[%s8475 + $0x14] sm:$0xf]
        %v8482 = vld [vmem:[%s8475 + $0x18] sm:$0xf]
        %v8483 = vld [vmem:[%s8475 + $0x1c] sm:$0xf]
        %v8484 = vld [vmem:[%s8475 + $0x20] sm:$0xf]
        %v8485 = vld [vmem:[%s8475 + $0x24] sm:$0xf]
        %v8486 = vld [vmem:[%s8475 + $0x28] sm:$0xf]
        %v8487 = vld [vmem:[%s8475 + $0x2c] sm:$0xf]
        %v8488 = vld [vmem:[%s8475 + $0x30] sm:$0xf]
        %v8489 = vld [vmem:[%s8475 + $0x34] sm:$0xf]
        %v8490 = vld [vmem:[%s8475 + $0x38] sm:$0xf]
        %v8491 = vld [vmem:[%s8475 + $0x3c] sm:$0xf]
        %v8493 = vshrl.u32 %v8458, 16
        %v8512 = vunpack.c.l.b16 %v8476
        %v8513 = vunpack.c.l.b16 %v8477
        %v8514 = vunpack.c.l.b16 %v8478
        %v8515 = vunpack.c.l.b16 %v8479
        %v8516 = vunpack.c.l.b16 %v8480
        %v8517 = vunpack.c.l.b16 %v8481
        %v8518 = vunpack.c.l.b16 %v8482
        %v8519 = vunpack.c.l.b16 %v8483
        %v8520 = vunpack.c.l.b16 %v8484
        %v8521 = vunpack.c.l.b16 %v8485
        %v8522 = vunpack.c.l.b16 %v8486
        %v8523 = vunpack.c.l.b16 %v8487
        %v8524 = vunpack.c.l.b16 %v8488
        %v8525 = vunpack.c.l.b16 %v8489
        %v8526 = vunpack.c.l.b16 %v8490
        %v8527 = vunpack.c.l.b16 %v8491
        %v8528 = vpack.c.b16 %v8513, %v8512
        %v8529 = vpack.c.b16 %v8515, %v8514
        %v8530 = vpack.c.b16 %v8517, %v8516
        %v8531 = vpack.c.b16 %v8519, %v8518
        %v8532 = vpack.c.b16 %v8521, %v8520
        %v8533 = vpack.c.b16 %v8523, %v8522
        %v8534 = vpack.c.b16 %v8525, %v8524
        %v8535 = vpack.c.b16 %v8527, %v8526
        %8544 = vmatprep.subr.bf16.mxu0 0
        %8545 = vmatpush1.bf16.msra.mxu0 %v8528
        %8546 = vmatprep.subr.bf16.mxu0 0
        %8547 = vmatpush1.bf16.msra.mxu0 %v8529
        %8548 = vmatprep.subr.bf16.mxu0 0
        %8549 = vmatpush1.bf16.msra.mxu0 %v8530
        %8550 = vmatprep.subr.bf16.mxu0 0
        %8551 = vmatpush1.bf16.msra.mxu0 %v8531
        %8552 = vmatprep.subr.bf16.mxu0 0
        %8553 = vmatpush1.bf16.msra.mxu0 %v8532
        %8554 = vmatprep.subr.bf16.mxu0 0
        %8555 = vmatpush1.bf16.msra.mxu0 %v8533
        %8556 = vmatprep.subr.bf16.mxu0 0
        %8557 = vmatpush1.bf16.msra.mxu0 %v8534
        %8558 = vmatprep.subr.bf16.mxu0 0
        %8559 = vmatpush1.bf16.msra.mxu0 %v8535
        %8560 = vmatprep.subr.bf16.mxu0 0
        %8561 = vmatpush1.bf16.msra.mxu0 0
        %8562 = vmatprep.subr.bf16.mxu0 0
        %8563 = vmatpush1.bf16.msra.mxu0 0
        %8564 = vmatprep.subr.bf16.mxu0 0
        %8565 = vmatpush1.bf16.msra.mxu0 0
        %8566 = vmatprep.subr.bf16.mxu0 0
        %8567 = vmatpush1.bf16.msra.mxu0 0
        %8568 = vmatprep.subr.bf16.mxu0 0
        %8569 = vmatpush1.bf16.msra.mxu0 0
        %8570 = vmatprep.subr.bf16.mxu0 0
        %8571 = vmatpush1.bf16.msra.mxu0 0
        %8572 = vmatprep.subr.bf16.mxu0 0
        %8573 = vmatpush1.bf16.msra.mxu0 0
        %8574 = vmatprep.subr.bf16.mxu0 0
        %8575 = vmatpush1.bf16.msra.mxu0 0
        %8576 = vmatprep.mubr.bf16.mxu0 0
        %8577 = vmatmul.mubr.bf16.gmra.mrb[0].mxu0 %v8493
        %v8578 = vpop.f32.mrb[0].mxu0
        %v8579 = vadd.f32 0.0, %v8578
        %v8580 = vpop.f32.mrb[0].mxu0
        %v8581 = vpop.f32.mrb[0].mxu0
        %v8582 = vpop.f32.mrb[0].mxu0
        %8583 = vdwg.mxu0
        %v8600 = vunpack.c.l.b16 %v8459
        %v8601 = vunpack.c.l.b16 %v8460
        %v8602 = vunpack.c.l.b16 %v8461
        %v8603 = vunpack.c.l.b16 %v8462
        %v8604 = vunpack.c.l.b16 %v8463
        %v8605 = vunpack.c.l.b16 %v8464
        %v8606 = vunpack.c.l.b16 %v8465
        %v8607 = vunpack.c.l.b16 %v8466
        %v8608 = vunpack.c.l.b16 %v8467
        %v8609 = vunpack.c.l.b16 %v8468
        %v8610 = vunpack.c.l.b16 %v8469
        %v8611 = vunpack.c.l.b16 %v8470
        %v8612 = vunpack.c.l.b16 %v8471
        %v8613 = vunpack.c.l.b16 %v8472
        %v8614 = vunpack.c.l.b16 %v8473
        %v8615 = vunpack.c.l.b16 %v8474
        %v8616 = vpack.c.b16 %v8601, %v8600
        %v8617 = vpack.c.b16 %v8603, %v8602
        %v8618 = vpack.c.b16 %v8605, %v8604
        %v8619 = vpack.c.b16 %v8607, %v8606
        %v8620 = vpack.c.b16 %v8609, %v8608
        %v8621 = vpack.c.b16 %v8611, %v8610
        %v8622 = vpack.c.b16 %v8613, %v8612
        %v8623 = vpack.c.b16 %v8615, %v8614
        %8632 = vmatprep.subr.bf16.mxu0 0
        %8633 = vmatpush1.bf16.msra.mxu0 %v8616
        %8634 = vmatprep.subr.bf16.mxu0 0
        %8635 = vmatpush1.bf16.msra.mxu0 %v8617
        %8636 = vmatprep.subr.bf16.mxu0 0
        %8637 = vmatpush1.bf16.msra.mxu0 %v8618
        %8638 = vmatprep.subr.bf16.mxu0 0
        %8639 = vmatpush1.bf16.msra.mxu0 %v8619
        %8640 = vmatprep.subr.bf16.mxu0 0
        %8641 = vmatpush1.bf16.msra.mxu0 %v8620
        %8642 = vmatprep.subr.bf16.mxu0 0
        %8643 = vmatpush1.bf16.msra.mxu0 %v8621
        %8644 = vmatprep.subr.bf16.mxu0 0
        %8645 = vmatpush1.bf16.msra.mxu0 %v8622
        %8646 = vmatprep.subr.bf16.mxu0 0
        %8647 = vmatpush1.bf16.msra.mxu0 %v8623
        %8648 = vmatprep.subr.bf16.mxu0 0
        %8649 = vmatpush1.bf16.msra.mxu0 0
        %8650 = vmatprep.subr.bf16.mxu0 0
        %8651 = vmatpush1.bf16.msra.mxu0 0
        %8652 = vmatprep.subr.bf16.mxu0 0
        %8653 = vmatpush1.bf16.msra.mxu0 0
        %8654 = vmatprep.subr.bf16.mxu0 0
        %8655 = vmatpush1.bf16.msra.mxu0 0
        %8656 = vmatprep.subr.bf16.mxu0 0
        %8657 = vmatpush1.bf16.msra.mxu0 0
        %8658 = vmatprep.subr.bf16.mxu0 0
        %8659 = vmatpush1.bf16.msra.mxu0 0
        %8660 = vmatprep.subr.bf16.mxu0 0
        %8661 = vmatpush1.bf16.msra.mxu0 0
        %8662 = vmatprep.subr.bf16.mxu0 0
        %8663 = vmatpush1.bf16.msra.mxu0 0
        %8664 = vmatprep.mubr.bf16.mxu0 0
        %8665 = vmatmul.mubr.bf16.gmra.mrb[0].mxu0 %v8458
        %v8666 = vpop.f32.mrb[0].mxu0
        %v8667 = vadd.f32 %v8579, %v8666
        %v8668 = vpop.f32.mrb[0].mxu0
        %v8669 = vpop.f32.mrb[0].mxu0
        %v8670 = vpop.f32.mrb[0].mxu0
        %8671 = vdwg.mxu0
        %s8672 = scalar_lea.vmem [#allocation10], 128
        %v8673 = vld [vmem:[%s8672] sm:$0xf]
        %v8674 = vld [vmem:[%s8672 + $0x4] sm:$0xf]
        %v8675 = vld [vmem:[%s8672 + $0x8] sm:$0xf]
        %v8676 = vld [vmem:[%s8672 + $0xc] sm:$0xf]
        %v8677 = vld [vmem:[%s8672 + $0x10] sm:$0xf]
        %v8678 = vld [vmem:[%s8672 + $0x14] sm:$0xf]
        %v8679 = vld [vmem:[%s8672 + $0x18] sm:$0xf]
        %v8680 = vld [vmem:[%s8672 + $0x1c] sm:$0xf]
        %v8681 = vld [vmem:[%s8672 + $0x20] sm:$0xf]
        %v8682 = vld [vmem:[%s8672 + $0x24] sm:$0xf]
        %v8683 = vld [vmem:[%s8672 + $0x28] sm:$0xf]
        %v8684 = vld [vmem:[%s8672 + $0x2c] sm:$0xf]
        %v8685 = vld [vmem:[%s8672 + $0x30] sm:$0xf]
        %v8686 = vld [vmem:[%s8672 + $0x34] sm:$0xf]
        %v8687 = vld [vmem:[%s8672 + $0x38] sm:$0xf]
        %v8688 = vld [vmem:[%s8672 + $0x3c] sm:$0xf]
        %v8690 = vrot.slane %v8458, 1
        %v8708 = vunpack.c.l.b16 %v8673
        %v8709 = vunpack.c.l.b16 %v8674
        %v8710 = vunpack.c.l.b16 %v8675
        %v8711 = vunpack.c.l.b16 %v8676
        %v8712 = vunpack.c.l.b16 %v8677
        %v8713 = vunpack.c.l.b16 %v8678
        %v8714 = vunpack.c.l.b16 %v8679
        %v8715 = vunpack.c.l.b16 %v8680
        %v8716 = vunpack.c.l.b16 %v8681
        %v8717 = vunpack.c.l.b16 %v8682
        %v8718 = vunpack.c.l.b16 %v8683
        %v8719 = vunpack.c.l.b16 %v8684
        %v8720 = vunpack.c.l.b16 %v8685
        %v8721 = vunpack.c.l.b16 %v8686
        %v8722 = vunpack.c.l.b16 %v8687
        %v8723 = vunpack.c.l.b16 %v8688
        %v8724 = vpack.c.b16 %v8709, %v8708
        %v8725 = vpack.c.b16 %v8711, %v8710
        %v8726 = vpack.c.b16 %v8713, %v8712
        %v8727 = vpack.c.b16 %v8715, %v8714
        %v8728 = vpack.c.b16 %v8717, %v8716
        %v8729 = vpack.c.b16 %v8719, %v8718
        %v8730 = vpack.c.b16 %v8721, %v8720
        %v8731 = vpack.c.b16 %v8723, %v8722
        %8740 = vmatprep.subr.bf16.mxu0 0
        %8741 = vmatpush1.bf16.msra.mxu0 %v8724
        %8742 = vmatprep.subr.bf16.mxu0 0
        %8743 = vmatpush1.bf16.msra.mxu0 %v8725
        %8744 = vmatprep.subr.bf16.mxu0 0
        %8745 = vmatpush1.bf16.msra.mxu0 %v8726
        %8746 = vmatprep.subr.bf16.mxu0 0
        %8747 = vmatpush1.bf16.msra.mxu0 %v8727
        %8748 = vmatprep.subr.bf16.mxu0 0
        %8749 = vmatpush1.bf16.msra.mxu0 %v8728
        %8750 = vmatprep.subr.bf16.mxu0 0
        %8751 = vmatpush1.bf16.msra.mxu0 %v8729
        %8752 = vmatprep.subr.bf16.mxu0 0
        %8753 = vmatpush1.bf16.msra.mxu0 %v8730
        %8754 = vmatprep.subr.bf16.mxu0 0
        %8755 = vmatpush1.bf16.msra.mxu0 %v8731
        %8756 = vmatprep.subr.bf16.mxu0 0
        %8757 = vmatpush1.bf16.msra.mxu0 0
        %8758 = vmatprep.subr.bf16.mxu0 0
        %8759 = vmatpush1.bf16.msra.mxu0 0
        %8760 = vmatprep.subr.bf16.mxu0 0
        %8761 = vmatpush1.bf16.msra.mxu0 0
        %8762 = vmatprep.subr.bf16.mxu0 0
        %8763 = vmatpush1.bf16.msra.mxu0 0
        %8764 = vmatprep.subr.bf16.mxu0 0
        %8765 = vmatpush1.bf16.msra.mxu0 0
        %8766 = vmatprep.subr.bf16.mxu0 0
        %8767 = vmatpush1.bf16.msra.mxu0 0
        %8768 = vmatprep.subr.bf16.mxu0 0
        %8769 = vmatpush1.bf16.msra.mxu0 0
        %8770 = vmatprep.subr.bf16.mxu0 0
        %8771 = vmatpush1.bf16.msra.mxu0 0
        %8772 = vmatprep.mubr.bf16.mxu0 0
        %8773 = vmatmul.mubr.bf16.gmra.mrb[0].mxu0 %v8690
        %v8774 = vpop.f32.mrb[0].mxu0
        %v8775 = vadd.f32 0.0, %v8774
        %v8776 = vpop.f32.mrb[0].mxu0
        %v8777 = vpop.f32.mrb[0].mxu0
        %v8778 = vpop.f32.mrb[0].mxu0
        %8779 = vdwg.mxu0
        %v8780 = vadd.f32 %v8667, %v8775
        %s8781 = scalar_lea.vmem [#allocation10], 192
        %v8782 = vld [vmem:[%s8781] sm:$0xf]
        %v8783 = vld [vmem:[%s8781 + $0x4] sm:$0xf]
        %v8784 = vld [vmem:[%s8781 + $0x8] sm:$0xf]
        %v8785 = vld [vmem:[%s8781 + $0xc] sm:$0xf]
        %v8786 = vld [vmem:[%s8781 + $0x10] sm:$0xf]
        %v8787 = vld [vmem:[%s8781 + $0x14] sm:$0xf]
        %v8788 = vld [vmem:[%s8781 + $0x18] sm:$0xf]
        %v8789 = vld [vmem:[%s8781 + $0x1c] sm:$0xf]
        %v8790 = vld [vmem:[%s8781 + $0x20] sm:$0xf]
        %v8791 = vld [vmem:[%s8781 + $0x24] sm:$0xf]
        %v8792 = vld [vmem:[%s8781 + $0x28] sm:$0xf]
        %v8793 = vld [vmem:[%s8781 + $0x2c] sm:$0xf]
        %v8794 = vld [vmem:[%s8781 + $0x30] sm:$0xf]
        %v8795 = vld [vmem:[%s8781 + $0x34] sm:$0xf]
        %v8796 = vld [vmem:[%s8781 + $0x38] sm:$0xf]
        %v8797 = vld [vmem:[%s8781 + $0x3c] sm:$0xf]
        %v8798 = vrot.slane %v8493, 1
        %v8816 = vunpack.c.l.b16 %v8782
        %v8817 = vunpack.c.l.b16 %v8783
        %v8818 = vunpack.c.l.b16 %v8784
        %v8819 = vunpack.c.l.b16 %v8785
        %v8820 = vunpack.c.l.b16 %v8786
        %v8821 = vunpack.c.l.b16 %v8787
        %v8822 = vunpack.c.l.b16 %v8788
        %v8823 = vunpack.c.l.b16 %v8789
        %v8824 = vunpack.c.l.b16 %v8790
        %v8825 = vunpack.c.l.b16 %v8791
        %v8826 = vunpack.c.l.b16 %v8792
        %v8827 = vunpack.c.l.b16 %v8793
        %v8828 = vunpack.c.l.b16 %v8794
        %v8829 = vunpack.c.l.b16 %v8795
        %v8830 = vunpack.c.l.b16 %v8796
        %v8831 = vunpack.c.l.b16 %v8797
        %v8832 = vpack.c.b16 %v8817, %v8816
        %v8833 = vpack.c.b16 %v8819, %v8818
        %v8834 = vpack.c.b16 %v8821, %v8820
        %v8835 = vpack.c.b16 %v8823, %v8822
        %v8836 = vpack.c.b16 %v8825, %v8824
        %v8837 = vpack.c.b16 %v8827, %v8826
        %v8838 = vpack.c.b16 %v8829, %v8828
        %v8839 = vpack.c.b16 %v8831, %v8830
        %8848 = vmatprep.subr.bf16.mxu0 0
        %8849 = vmatpush1.bf16.msra.mxu0 %v8832
        %8850 = vmatprep.subr.bf16.mxu0 0
        %8851 = vmatpush1.bf16.msra.mxu0 %v8833
        %8852 = vmatprep.subr.bf16.mxu0 0
        %8853 = vmatpush1.bf16.msra.mxu0 %v8834
        %8854 = vmatprep.subr.bf16.mxu0 0
        %8855 = vmatpush1.bf16.msra.mxu0 %v8835
        %8856 = vmatprep.subr.bf16.mxu0 0
        %8857 = vmatpush1.bf16.msra.mxu0 %v8836
        %8858 = vmatprep.subr.bf16.mxu0 0
        %8859 = vmatpush1.bf16.msra.mxu0 %v8837
        %8860 = vmatprep.subr.bf16.mxu0 0
        %8861 = vmatpush1.bf16.msra.mxu0 %v8838
        %8862 = vmatprep.subr.bf16.mxu0 0
        %8863 = vmatpush1.bf16.msra.mxu0 %v8839
        %8864 = vmatprep.subr.bf16.mxu0 0
        %8865 = vmatpush1.bf16.msra.mxu0 0
        %8866 = vmatprep.subr.bf16.mxu0 0
        %8867 = vmatpush1.bf16.msra.mxu0 0
        %8868 = vmatprep.subr.bf16.mxu0 0
        %8869 = vmatpush1.bf16.msra.mxu0 0
        %8870 = vmatprep.subr.bf16.mxu0 0
        %8871 = vmatpush1.bf16.msra.mxu0 0
        %8872 = vmatprep.subr.bf16.mxu0 0
        %8873 = vmatpush1.bf16.msra.mxu0 0
        %8874 = vmatprep.subr.bf16.mxu0 0
        %8875 = vmatpush1.bf16.msra.mxu0 0
        %8876 = vmatprep.subr.bf16.mxu0 0
        %8877 = vmatpush1.bf16.msra.mxu0 0
        %8878 = vmatprep.subr.bf16.mxu0 0
        %8879 = vmatpush1.bf16.msra.mxu0 0
        %8880 = vmatprep.mubr.bf16.mxu0 0
        %8881 = vmatmul.mubr.bf16.gmra.mrb[0].mxu0 %v8798
        %v8882 = vpop.f32.mrb[0].mxu0
        %v8883 = vadd.f32 0.0, %v8882
        %v8884 = vpop.f32.mrb[0].mxu0
        %v8885 = vpop.f32.mrb[0].mxu0
        %v8886 = vpop.f32.mrb[0].mxu0
        %8887 = vdwg.mxu0
        %v8888 = vadd.f32 %v8780, %v8883
        %v8889 = vld [vmem:[#allocation16] sm:$0x1]
        %v8890 = vadd.f32 %v8888, %v8889
        %v8891 = vmax.f32 %v8890, 0.0
        %8892 = vst [vmem:[%s511] sm:$0x1] %v8891
        %s8893 = sand.u32 %s276, 1
        %s8894 = scalar_lea.sflag [#allocation4], %s8893
        %s8895 = sand.u32 %s276, 1
        %s8896 = scalar_lea.vmem [#allocation17], %s8895
        // Predicated region
        $region101: #{tpu_custom_call.1} parent=63 // pred_check
          %p8897 = pneg %p286
        $region102: #{tpu_custom_call.1} parent=63 // pred_check_branch
          %8899 = sbr.rel (%p8897) target = $region104
        $region103: #{tpu_custom_call.1} parent=63 // pred_region
          %s8901 = ssub.s32 16, 16
          %8902 = vsyncadd %s8894, %s8901
          %s8903 = smul.addr %s32, 16
          %s8904 = scalar_lea.hbm %s11, %s8903
          %s8906 = sshll.u32 %s8896, 4
          %s8907 = int_to_ptr.vmem [resolvable:$true] %s8906
          %8909 = dma.vmem_to_hbm [thread:$0]  %s8907, 16, %s8904, %s8894
        $region104: #{tpu_custom_call.1} parent=63 // pred_fallthru
          _
      $region64: #{tpu_custom_call.1} parent=5 // pred_fallthru
        _
      %p8910 = scmp.le.s32.totalorder 2, %s27
      // Predicated region
      $region105: #{tpu_custom_call.1} parent=5 // pred_check
        %p8911 = pneg %p8910
      $region106: #{tpu_custom_call.1} parent=5 // pred_check_branch
        %8913 = sbr.rel (%p8911) target = $region108
      $region107: #{tpu_custom_call.1} parent=5 // pred_region
        %s8914 = ssub.s32 %s27, 2
        // Predicated region
        $region109: #{tpu_custom_call.1} parent=107 // pred_check
          %p8915 = pneg %p292
        $region110: #{tpu_custom_call.1} parent=107 // pred_check_branch
          %8917 = sbr.rel (%p8915) target = $region112
        $region111: #{tpu_custom_call.1} parent=107 // pred_region
          %s8918 = sand.u32 %s277, 1
          %s8919 = scalar_lea.sflag [#allocation4], %s8918
          %s8920 = sand.u32 %s277, 1
          %s8921 = scalar_lea.vmem [#allocation17], %s8920
          %8922 = dma.done %s8919, 16
        $region112: #{tpu_custom_call.1} parent=107 // pred_fallthru
          _
      $region108: #{tpu_custom_call.1} parent=5 // pred_fallthru
        _
    $region6: #{tpu_custom_call.1} parent=1 // loop_footer
      %s31 = sadd.s32 1, %s27
    $region7: #{tpu_custom_call.1} parent=1 // loop_footer_branch
      %26 = sbr.rel target = $region3
    $region8: #{tpu_custom_call.1} parent=1 // loop_exit
      _
    %8923 = vsyncpa [#allocation3], 1
    %s8924 = scalar_lea.sflag [#allocation3], 1
    %8925 = vsyncpa %s8924, 1
    %8926 = vsyncpa [#allocation6], 1
    %8927 = vsyncpa [#allocation9], 1
    %8928 = vsyncpa [#allocation12], 1
    %8929 = vsyncpa [#allocation15], 1
    %8930 = vsyncpa [#allocation4], 1
    %s8931 = scalar_lea.sflag [#allocation4], 1
    %8932 = vsyncpa %s8931, 1

</llo_original>
